<compile_context>
chip_gen: v5e
topology: v5e:2x2
jax: 0.10.0
libtpu: 0.0.40
codegen_flags: <defaults>
</compile_context>

<pallas_src>
import jax
import jax.numpy as jnp
from jax.experimental import pallas as pl
from jax.experimental.pallas import tpu as pltpu

# ---- model hyperparameters (mirroring the PyTorch module) -------------------
EMBEDDING_SIZE = 128
ATTENTION_HEADS = 4
HEAD_SIZE = EMBEDDING_SIZE // ATTENTION_HEADS   # 32
SAMPLE_SIZE = 128
ATTENTION_BLOCKS = 4
VOCAB_SIZE = 65
VOCAB_PAD = 128                                  # lane-dense padded vocab
FF_HIDDEN = 4 * EMBEDDING_SIZE                   # 512
LN_EPS = 1e-5


# ---- in-kernel helpers -------------------------------------------------------
def _layernorm(x, g, b):
    # x: (T, E) f32, g/b: (1, E) f32
    mu = jnp.mean(x, axis=-1, keepdims=True)
    var = jnp.mean((x - mu) ** 2, axis=-1, keepdims=True)
    return (x - mu) * jax.lax.rsqrt(var + LN_EPS) * g + b


# ---- fully fused forward kernel (all blocks + final LN + linear head) --------
def transformer_kernel(x_ref, ln1g_ref, ln1b_ref, wqkv_ref, wproj_ref, bproj_ref,
                       ln2g_ref, ln2b_ref, w1_ref, b1_ref, w2_ref, b2_ref,
                       lnfg_ref, lnfb_ref, wh_ref, bh_ref, o_ref):
    x = x_ref[0]                                   # (T, E) f32 for one sequence
    T = x.shape[0]
    E = EMBEDDING_SIZE
    D = HEAD_SIZE

    # Causal mask as an additive bias, computed once and reused by every layer/head.
    rows = jax.lax.broadcasted_iota(jnp.int32, (T, T), 0)
    cols = jax.lax.broadcasted_iota(jnp.int32, (T, T), 1)
    causal_bias = jnp.where(rows >= cols, 0.0, -1e30).astype(jnp.float32)

    # NOTE: the reference scales by C**-0.5 with C = embedding_size (not head_size).
    scale = jnp.float32(E ** (-0.5))

    for l in range(ATTENTION_BLOCKS):
        # --- multi-head causal self-attention on LayerNorm'd input ---
        xn = _layernorm(x, ln1g_ref[l], ln1b_ref[l])
        qkv = jnp.dot(xn.astype(jnp.bfloat16), wqkv_ref[l],
                      preferred_element_type=jnp.float32)          # (T, 3E) f32
        q, k, v = qkv[:, :E], qkv[:, E:2 * E], qkv[:, 2 * E:]

        att = jnp.zeros((T, E), jnp.float32)
        for h in range(ATTENTION_HEADS):
            lo = h * D
            qh = q[:, lo:lo + D]                                    # (T, D) f32
            kh = k[:, lo:lo + D]
            vh = v[:, lo:lo + D]
            s = jnp.dot(qh, kh.T, preferred_element_type=jnp.float32) * scale
            s = s + causal_bias
            s = s - jnp.max(s, axis=-1, keepdims=True)
            p = jnp.exp(s)
            p = p * pl.reciprocal(jnp.sum(p, axis=-1, keepdims=True), approx=True)
            # TODO(synk): attention dropout omitted (eval-mode identity).
            oh = jnp.dot(p, vh, preferred_element_type=jnp.float32)  # (T, D)
            # accumulate directly through this head's slice of the output projection
            att = att + jnp.dot(oh.astype(jnp.bfloat16), wproj_ref[l, h],
                                preferred_element_type=jnp.float32)  # (T, E)
        x = x + att + bproj_ref[l]

        # --- feed-forward on LayerNorm'd input ---
        xn2 = _layernorm(x, ln2g_ref[l], ln2b_ref[l])
        hdn = jnp.dot(xn2.astype(jnp.bfloat16), w1_ref[l],
                      preferred_element_type=jnp.float32) + b1_ref[l]
        hdn = jnp.maximum(hdn, 0.0)
        # TODO(synk): FFN dropout omitted (eval-mode identity).
        ff = jnp.dot(hdn.astype(jnp.bfloat16), w2_ref[l],
                     preferred_element_type=jnp.float32) + b2_ref[l]
        x = x + ff

    # --- final LayerNorm + linear head (vocab padded to 128 lanes) ---
    xn = _layernorm(x, lnfg_ref[...], lnfb_ref[...])
    logits = jnp.dot(xn.astype(jnp.bfloat16), wh_ref[...],
                     preferred_element_type=jnp.float32) + bh_ref[...]
    o_ref[0] = logits.astype(o_ref.dtype)


# ---- wrapper -----------------------------------------------------------------
def _const_spec(shape):
    ndim = len(shape)
    return pl.BlockSpec(shape, lambda b, _n=ndim: (0,) * _n)


_WEIGHT_NAMES = ("ln1_g", "ln1_b", "w_qkv", "w_proj", "b_proj",
                 "ln2_g", "ln2_b", "w_ff1", "b_ff1", "w_ff2", "b_ff2",
                 "ln_f_g", "ln_f_b", "w_head", "b_head")


@jax.jit
def transformer_forward(idx, params):
    """idx: int32 [B, T] token ids. Returns (logits [B, T, V], None)."""
    B, T = idx.shape
    tok_emb = jnp.take(params["tok_emb"], idx, axis=0)           # (B, T, E)
    pos_emb = params["pos_emb"][:T]                               # (T, E)
    x = (tok_emb + pos_emb[None, :, :]).astype(jnp.float32)

    weights = [params[name] for name in _WEIGHT_NAMES]
    in_specs = [pl.BlockSpec((1, T, EMBEDDING_SIZE), lambda b: (b, 0, 0))]
    in_specs += [_const_spec(w.shape) for w in weights]

    logits_pad = pl.pallas_call(
        transformer_kernel,
        out_shape=jax.ShapeDtypeStruct((B, T, VOCAB_PAD), jnp.float32),
        grid_spec=pltpu.PrefetchScalarGridSpec(
            num_scalar_prefetch=0,
            grid=(B,),
            in_specs=in_specs,
            out_specs=pl.BlockSpec((1, T, VOCAB_PAD), lambda b: (b, 0, 0)),
        ),
        compiler_params=pltpu.CompilerParams(
            dimension_semantics=("parallel",)),
    )(x, *weights)

    logits = logits_pad[:, :, :VOCAB_SIZE]
    return logits, None


# ---- deterministic parameter construction ------------------------------------
def init_params(key):
    def nrm(k, shape, scale=0.02):
        return (scale * jax.random.normal(k, shape)).astype(jnp.float32)

    keys = jax.random.split(key, 3 + ATTENTION_BLOCKS)

    # head weight, padded to 128 output lanes (extra columns are zero)
    w_head = jnp.zeros((EMBEDDING_SIZE, VOCAB_PAD), jnp.float32)
    w_head = w_head.at[:, :VOCAB_SIZE].set(nrm(keys[2], (EMBEDDING_SIZE, VOCAB_SIZE)))

    params = {
        "tok_emb": nrm(keys[0], (VOCAB_SIZE, EMBEDDING_SIZE)),
        "pos_emb": nrm(keys[1], (SAMPLE_SIZE, EMBEDDING_SIZE)),
        "ln_f_g": jnp.ones((1, EMBEDDING_SIZE), jnp.float32),
        "ln_f_b": jnp.zeros((1, EMBEDDING_SIZE), jnp.float32),
        "w_head": w_head.astype(jnp.bfloat16),
        "b_head": jnp.zeros((1, VOCAB_PAD), jnp.float32),
    }

    per_layer = {n: [] for n in ("ln1_g", "ln1_b", "w_qkv", "w_proj", "b_proj",
                                 "ln2_g", "ln2_b", "w_ff1", "b_ff1", "w_ff2", "b_ff2")}
    for bi in range(ATTENTION_BLOCKS):
        bkeys = jax.random.split(keys[3 + bi], 6)
        # q/k/v weights: per-head (E, head_size) blocks concatenated along output dim,
        # then fused side-by-side into one (E, 3E) matmul operand.
        wq = nrm(bkeys[0], (EMBEDDING_SIZE, EMBEDDING_SIZE))
        wk = nrm(bkeys[1], (EMBEDDING_SIZE, EMBEDDING_SIZE))
        wv = nrm(bkeys[2], (EMBEDDING_SIZE, EMBEDDING_SIZE))
        w_proj = nrm(bkeys[3], (EMBEDDING_SIZE, EMBEDDING_SIZE))

        per_layer["ln1_g"].append(jnp.ones((1, EMBEDDING_SIZE), jnp.float32))
        per_layer["ln1_b"].append(jnp.zeros((1, EMBEDDING_SIZE), jnp.float32))
        per_layer["w_qkv"].append(
            jnp.concatenate([wq, wk, wv], axis=1).astype(jnp.bfloat16))
        per_layer["w_proj"].append(
            w_proj.reshape(ATTENTION_HEADS, HEAD_SIZE, EMBEDDING_SIZE)
            .astype(jnp.bfloat16))
        per_layer["b_proj"].append(jnp.zeros((1, EMBEDDING_SIZE), jnp.float32))
        per_layer["ln2_g"].append(jnp.ones((1, EMBEDDING_SIZE), jnp.float32))
        per_layer["ln2_b"].append(jnp.zeros((1, EMBEDDING_SIZE), jnp.float32))
        per_layer["w_ff1"].append(
            nrm(bkeys[4], (EMBEDDING_SIZE, FF_HIDDEN)).astype(jnp.bfloat16))
        per_layer["b_ff1"].append(jnp.zeros((1, FF_HIDDEN), jnp.float32))
        per_layer["w_ff2"].append(
            nrm(bkeys[5], (FF_HIDDEN, EMBEDDING_SIZE)).astype(jnp.bfloat16))
        per_layer["b_ff2"].append(jnp.zeros((1, EMBEDDING_SIZE), jnp.float32))

    for name, lst in per_layer.items():
        params[name] = jnp.stack(lst, axis=0)     # leading dim = layer index
    return params


if __name__ == "__main__":
    key = jax.random.PRNGKey(0)
    pkey, ikey = jax.random.split(key)
    params = init_params(pkey)

    B, T = 2, 8   # small sequence, T <= SAMPLE_SIZE
    idx = jax.random.randint(ikey, (B, T), 0, VOCAB_SIZE, dtype=jnp.int32)

    logits, loss = transformer_forward(idx, params)
    logits = jax.block_until_ready(logits)
    assert logits.shape == (B, T, VOCAB_SIZE), logits.shape
    assert loss is None
    assert bool(jnp.all(jnp.isfinite(logits)))
    print("KERNEL_OK")
</pallas_src>

<mosaic_0001>
module attributes {stable_mosaic.version = 11 : i64} {
  func.func @transformer_kernel(%arg0: i32, %arg1: memref<1x8x128xf32, #tpu.memory_space<vmem>>, %arg2: memref<4x1x128xf32, #tpu.memory_space<vmem>>, %arg3: memref<4x1x128xf32, #tpu.memory_space<vmem>>, %arg4: memref<4x128x384xbf16, #tpu.memory_space<vmem>>, %arg5: memref<4x4x32x128xbf16, #tpu.memory_space<vmem>>, %arg6: memref<4x1x128xf32, #tpu.memory_space<vmem>>, %arg7: memref<4x1x128xf32, #tpu.memory_space<vmem>>, %arg8: memref<4x1x128xf32, #tpu.memory_space<vmem>>, %arg9: memref<4x128x512xbf16, #tpu.memory_space<vmem>>, %arg10: memref<4x1x512xf32, #tpu.memory_space<vmem>>, %arg11: memref<4x512x128xbf16, #tpu.memory_space<vmem>>, %arg12: memref<4x1x128xf32, #tpu.memory_space<vmem>>, %arg13: memref<1x128xf32, #tpu.memory_space<vmem>>, %arg14: memref<1x128xf32, #tpu.memory_space<vmem>>, %arg15: memref<128x128xbf16, #tpu.memory_space<vmem>>, %arg16: memref<1x128xf32, #tpu.memory_space<vmem>>, %arg17: memref<1x8x128xf32, #tpu.memory_space<vmem>>) attributes {dimension_semantics = [#tpu.dimension_semantics<parallel>], iteration_bounds = array<i64: 2>, scalar_prefetch = 0 : i64, scratch_operands = 0 : i64, tpu.core_type = #tpu.core_type<tc>, window_params = [{transform_indices = @transform_0, window_bounds = array<i64: 1, 8, 128>}, {pipeline_mode = #tpu.pipeline_mode<synchronous>, transform_indices = @transform_1, window_bounds = array<i64: 4, 1, 128>}, {pipeline_mode = #tpu.pipeline_mode<synchronous>, transform_indices = @transform_2, window_bounds = array<i64: 4, 1, 128>}, {pipeline_mode = #tpu.pipeline_mode<synchronous>, transform_indices = @transform_3, window_bounds = array<i64: 4, 128, 384>}, {pipeline_mode = #tpu.pipeline_mode<synchronous>, transform_indices = @transform_4, window_bounds = array<i64: 4, 4, 32, 128>}, {pipeline_mode = #tpu.pipeline_mode<synchronous>, transform_indices = @transform_5, window_bounds = array<i64: 4, 1, 128>}, {pipeline_mode = #tpu.pipeline_mode<synchronous>, transform_indices = @transform_6, window_bounds = array<i64: 4, 1, 128>}, {pipeline_mode = #tpu.pipeline_mode<synchronous>, transform_indices = @transform_7, window_bounds = array<i64: 4, 1, 128>}, {pipeline_mode = #tpu.pipeline_mode<synchronous>, transform_indices = @transform_8, window_bounds = array<i64: 4, 128, 512>}, {pipeline_mode = #tpu.pipeline_mode<synchronous>, transform_indices = @transform_9, window_bounds = array<i64: 4, 1, 512>}, {pipeline_mode = #tpu.pipeline_mode<synchronous>, transform_indices = @transform_10, window_bounds = array<i64: 4, 512, 128>}, {pipeline_mode = #tpu.pipeline_mode<synchronous>, transform_indices = @transform_11, window_bounds = array<i64: 4, 1, 128>}, {pipeline_mode = #tpu.pipeline_mode<synchronous>, transform_indices = @transform_12, window_bounds = array<i64: 1, 128>}, {pipeline_mode = #tpu.pipeline_mode<synchronous>, transform_indices = @transform_13, window_bounds = array<i64: 1, 128>}, {pipeline_mode = #tpu.pipeline_mode<synchronous>, transform_indices = @transform_14, window_bounds = array<i64: 128, 128>}, {pipeline_mode = #tpu.pipeline_mode<synchronous>, transform_indices = @transform_15, window_bounds = array<i64: 1, 128>}, {transform_indices = @transform_16, window_bounds = array<i64: 1, 8, 128>}]} {
    %c0 = arith.constant 0 : index
    %c0_0 = arith.constant 0 : index
    %c0_1 = arith.constant 0 : index
    %0 = vector.load %arg1[%c0, %c0_0, %c0_1] : memref<1x8x128xf32, #tpu.memory_space<vmem>>, vector<1x8x128xf32>
    %1 = vector.shape_cast %0 : vector<1x8x128xf32> to vector<8x128xf32>
    %2 = tpu.iota {dimensions = array<i32: 0>} : vector<8x8xi32>
    %3 = tpu.iota {dimensions = array<i32: 1>} : vector<8x8xi32>
    %4 = arith.cmpi sge, %2, %3 : vector<8x8xi32>
    %cst = arith.constant 0.000000e+00 : f32
    %cst_2 = arith.constant -1.000000e+30 : f32
    %5 = vector.broadcast %cst : f32 to vector<8x8xf32>
    %6 = vector.broadcast %cst_2 : f32 to vector<8x8xf32>
    %7 = arith.select %4, %5, %6 : vector<8x8xi1>, vector<8x8xf32>
    %c0_3 = arith.constant 0 : index
    %c0_4 = arith.constant 0 : index
    %c0_5 = arith.constant 0 : index
    %8 = vector.load %arg2[%c0_3, %c0_4, %c0_5] : memref<4x1x128xf32, #tpu.memory_space<vmem>>, vector<1x1x128xf32>
    %9 = vector.shape_cast %8 : vector<1x1x128xf32> to vector<1x128xf32>
    %c0_6 = arith.constant 0 : index
    %c0_7 = arith.constant 0 : index
    %c0_8 = arith.constant 0 : index
    %10 = vector.load %arg3[%c0_6, %c0_7, %c0_8] : memref<4x1x128xf32, #tpu.memory_space<vmem>>, vector<1x1x128xf32>
    %11 = vector.shape_cast %10 : vector<1x1x128xf32> to vector<1x128xf32>
    %cst_9 = arith.constant dense<0.000000e+00> : vector<8xf32>
    %12 = vector.multi_reduction <add>, %1, %cst_9 [1] : vector<8x128xf32> to vector<8xf32>
    %13 = vector.shape_cast %12 : vector<8xf32> to vector<8x1xf32>
    %cst_10 = arith.constant 1.280000e+02 : f32
    %14 = vector.broadcast %cst_10 : f32 to vector<8x1xf32>
    %15 = arith.divf %13, %14 : vector<8x1xf32>
    %16 = vector.broadcast %15 : vector<8x1xf32> to vector<8x128xf32>
    %17 = arith.subf %1, %16 : vector<8x128xf32>
    %18 = arith.mulf %17, %17 : vector<8x128xf32>
    %cst_11 = arith.constant dense<0.000000e+00> : vector<8xf32>
    %19 = vector.multi_reduction <add>, %18, %cst_11 [1] : vector<8x128xf32> to vector<8xf32>
    %20 = vector.shape_cast %19 : vector<8xf32> to vector<8x1xf32>
    %cst_12 = arith.constant 1.280000e+02 : f32
    %21 = vector.broadcast %cst_12 : f32 to vector<8x1xf32>
    %22 = arith.divf %20, %21 : vector<8x1xf32>
    %23 = vector.broadcast %15 : vector<8x1xf32> to vector<8x128xf32>
    %24 = arith.subf %1, %23 : vector<8x128xf32>
    %cst_13 = arith.constant 9.99999974E-6 : f32
    %25 = vector.broadcast %cst_13 : f32 to vector<8x1xf32>
    %26 = arith.addf %22, %25 : vector<8x1xf32>
    %27 = math.rsqrt %26 : vector<8x1xf32>
    %28 = vector.broadcast %27 : vector<8x1xf32> to vector<8x128xf32>
    %29 = arith.mulf %24, %28 : vector<8x128xf32>
    %30 = vector.broadcast %9 : vector<1x128xf32> to vector<8x128xf32>
    %31 = arith.mulf %29, %30 : vector<8x128xf32>
    %32 = vector.broadcast %11 : vector<1x128xf32> to vector<8x128xf32>
    %33 = arith.addf %31, %32 : vector<8x128xf32>
    %34 = arith.truncf %33 : vector<8x128xf32> to vector<8x128xbf16>
    %c0_14 = arith.constant 0 : index
    %c0_15 = arith.constant 0 : index
    %c0_16 = arith.constant 0 : index
    %35 = vector.load %arg4[%c0_14, %c0_15, %c0_16] : memref<4x128x384xbf16, #tpu.memory_space<vmem>>, vector<1x128x384xbf16>
    %36 = vector.shape_cast %35 : vector<1x128x384xbf16> to vector<128x384xbf16>
    %cst_17 = arith.constant dense<0.000000e+00> : vector<8x384xf32>
    %37 = tpu.matmul %34, %36, %cst_17 {dimension_numbers = #tpu.dot_dimension_numbers<[1], [0], [0], [1], [0, 0, 1, 1], [], []>} : vector<8x128xbf16>, vector<128x384xbf16>, vector<8x384xf32> -> vector<8x384xf32>
    %38 = vector.extract_strided_slice %37 {offsets = [0, 0], sizes = [8, 128], strides = [1, 1]} : vector<8x384xf32> to vector<8x128xf32>
    %39 = vector.extract_strided_slice %37 {offsets = [0, 128], sizes = [8, 128], strides = [1, 1]} : vector<8x384xf32> to vector<8x128xf32>
    %40 = vector.extract_strided_slice %37 {offsets = [0, 256], sizes = [8, 128], strides = [1, 1]} : vector<8x384xf32> to vector<8x128xf32>
    %cst_18 = arith.constant 0.000000e+00 : f32
    %41 = vector.broadcast %cst_18 : f32 to vector<8x128xf32>
    %42 = vector.extract_strided_slice %38 {offsets = [0, 0], sizes = [8, 32], strides = [1, 1]} : vector<8x128xf32> to vector<8x32xf32>
    %43 = vector.extract_strided_slice %39 {offsets = [0, 0], sizes = [8, 32], strides = [1, 1]} : vector<8x128xf32> to vector<8x32xf32>
    %44 = vector.extract_strided_slice %40 {offsets = [0, 0], sizes = [8, 32], strides = [1, 1]} : vector<8x128xf32> to vector<8x32xf32>
    %45 = tpu.transpose %43, [1, 0] : vector<8x32xf32> -> vector<32x8xf32>
    %cst_19 = arith.constant dense<0.000000e+00> : vector<8x8xf32>
    %46 = tpu.matmul %42, %45, %cst_19 {dimension_numbers = #tpu.dot_dimension_numbers<[1], [0], [0], [1], [0, 0, 1, 1], [], []>} : vector<8x32xf32>, vector<32x8xf32>, vector<8x8xf32> -> vector<8x8xf32>
    %cst_20 = arith.constant 0.0883883461 : f32
    %47 = vector.broadcast %cst_20 : f32 to vector<8x8xf32>
    %48 = arith.mulf %46, %47 : vector<8x8xf32>
    %49 = arith.addf %48, %7 : vector<8x8xf32>
    %cst_21 = arith.constant dense<0xFF800000> : vector<8xf32>
    %50 = vector.multi_reduction <maximumf>, %49, %cst_21 [1] : vector<8x8xf32> to vector<8xf32>
    %51 = vector.shape_cast %50 : vector<8xf32> to vector<8x1xf32>
    %52 = vector.broadcast %51 : vector<8x1xf32> to vector<8x8xf32>
    %53 = arith.subf %49, %52 : vector<8x8xf32>
    %54 = math.exp %53 : vector<8x8xf32>
    %cst_22 = arith.constant dense<0.000000e+00> : vector<8xf32>
    %55 = vector.multi_reduction <add>, %54, %cst_22 [1] : vector<8x8xf32> to vector<8xf32>
    %56 = vector.shape_cast %55 : vector<8xf32> to vector<8x1xf32>
    %57 = tpu.reciprocal %56 {approx = true} : vector<8x1xf32> -> vector<8x1xf32>
    %58 = vector.broadcast %57 : vector<8x1xf32> to vector<8x8xf32>
    %59 = arith.mulf %54, %58 : vector<8x8xf32>
    %cst_23 = arith.constant dense<0.000000e+00> : vector<8x32xf32>
    %60 = tpu.matmul %59, %44, %cst_23 {dimension_numbers = #tpu.dot_dimension_numbers<[1], [0], [0], [1], [0, 0, 1, 1], [], []>} : vector<8x8xf32>, vector<8x32xf32>, vector<8x32xf32> -> vector<8x32xf32>
    %61 = arith.truncf %60 : vector<8x32xf32> to vector<8x32xbf16>
    %c0_24 = arith.constant 0 : index
    %c0_25 = arith.constant 0 : index
    %c0_26 = arith.constant 0 : index
    %c0_27 = arith.constant 0 : index
    %62 = vector.load %arg5[%c0_24, %c0_25, %c0_26, %c0_27] : memref<4x4x32x128xbf16, #tpu.memory_space<vmem>>, vector<1x1x32x128xbf16>
    %63 = vector.shape_cast %62 : vector<1x1x32x128xbf16> to vector<32x128xbf16>
    %cst_28 = arith.constant dense<0.000000e+00> : vector<8x128xf32>
    %64 = tpu.matmul %61, %63, %cst_28 {dimension_numbers = #tpu.dot_dimension_numbers<[1], [0], [0], [1], [0, 0, 1, 1], [], []>} : vector<8x32xbf16>, vector<32x128xbf16>, vector<8x128xf32> -> vector<8x128xf32>
    %65 = arith.addf %41, %64 : vector<8x128xf32>
    %66 = vector.extract_strided_slice %38 {offsets = [0, 32], sizes = [8, 32], strides = [1, 1]} : vector<8x128xf32> to vector<8x32xf32>
    %67 = vector.extract_strided_slice %39 {offsets = [0, 32], sizes = [8, 32], strides = [1, 1]} : vector<8x128xf32> to vector<8x32xf32>
    %68 = vector.extract_strided_slice %40 {offsets = [0, 32], sizes = [8, 32], strides = [1, 1]} : vector<8x128xf32> to vector<8x32xf32>
    %69 = tpu.transpose %67, [1, 0] : vector<8x32xf32> -> vector<32x8xf32>
    %cst_29 = arith.constant dense<0.000000e+00> : vector<8x8xf32>
    %70 = tpu.matmul %66, %69, %cst_29 {dimension_numbers = #tpu.dot_dimension_numbers<[1], [0], [0], [1], [0, 0, 1, 1], [], []>} : vector<8x32xf32>, vector<32x8xf32>, vector<8x8xf32> -> vector<8x8xf32>
    %cst_30 = arith.constant 0.0883883461 : f32
    %71 = vector.broadcast %cst_30 : f32 to vector<8x8xf32>
    %72 = arith.mulf %70, %71 : vector<8x8xf32>
    %73 = arith.addf %72, %7 : vector<8x8xf32>
    %cst_31 = arith.constant dense<0xFF800000> : vector<8xf32>
    %74 = vector.multi_reduction <maximumf>, %73, %cst_31 [1] : vector<8x8xf32> to vector<8xf32>
    %75 = vector.shape_cast %74 : vector<8xf32> to vector<8x1xf32>
    %76 = vector.broadcast %75 : vector<8x1xf32> to vector<8x8xf32>
    %77 = arith.subf %73, %76 : vector<8x8xf32>
    %78 = math.exp %77 : vector<8x8xf32>
    %cst_32 = arith.constant dense<0.000000e+00> : vector<8xf32>
    %79 = vector.multi_reduction <add>, %78, %cst_32 [1] : vector<8x8xf32> to vector<8xf32>
    %80 = vector.shape_cast %79 : vector<8xf32> to vector<8x1xf32>
    %81 = tpu.reciprocal %80 {approx = true} : vector<8x1xf32> -> vector<8x1xf32>
    %82 = vector.broadcast %81 : vector<8x1xf32> to vector<8x8xf32>
    %83 = arith.mulf %78, %82 : vector<8x8xf32>
    %cst_33 = arith.constant dense<0.000000e+00> : vector<8x32xf32>
    %84 = tpu.matmul %83, %68, %cst_33 {dimension_numbers = #tpu.dot_dimension_numbers<[1], [0], [0], [1], [0, 0, 1, 1], [], []>} : vector<8x8xf32>, vector<8x32xf32>, vector<8x32xf32> -> vector<8x32xf32>
    %85 = arith.truncf %84 : vector<8x32xf32> to vector<8x32xbf16>
    %c0_34 = arith.constant 0 : index
    %c1 = arith.constant 1 : index
    %c0_35 = arith.constant 0 : index
    %c0_36 = arith.constant 0 : index
    %86 = vector.load %arg5[%c0_34, %c1, %c0_35, %c0_36] : memref<4x4x32x128xbf16, #tpu.memory_space<vmem>>, vector<1x1x32x128xbf16>
    %87 = vector.shape_cast %86 : vector<1x1x32x128xbf16> to vector<32x128xbf16>
    %cst_37 = arith.constant dense<0.000000e+00> : vector<8x128xf32>
    %88 = tpu.matmul %85, %87, %cst_37 {dimension_numbers = #tpu.dot_dimension_numbers<[1], [0], [0], [1], [0, 0, 1, 1], [], []>} : vector<8x32xbf16>, vector<32x128xbf16>, vector<8x128xf32> -> vector<8x128xf32>
    %89 = arith.addf %65, %88 : vector<8x128xf32>
    %90 = vector.extract_strided_slice %38 {offsets = [0, 64], sizes = [8, 32], strides = [1, 1]} : vector<8x128xf32> to vector<8x32xf32>
    %91 = vector.extract_strided_slice %39 {offsets = [0, 64], sizes = [8, 32], strides = [1, 1]} : vector<8x128xf32> to vector<8x32xf32>
    %92 = vector.extract_strided_slice %40 {offsets = [0, 64], sizes = [8, 32], strides = [1, 1]} : vector<8x128xf32> to vector<8x32xf32>
    %93 = tpu.transpose %91, [1, 0] : vector<8x32xf32> -> vector<32x8xf32>
    %cst_38 = arith.constant dense<0.000000e+00> : vector<8x8xf32>
    %94 = tpu.matmul %90, %93, %cst_38 {dimension_numbers = #tpu.dot_dimension_numbers<[1], [0], [0], [1], [0, 0, 1, 1], [], []>} : vector<8x32xf32>, vector<32x8xf32>, vector<8x8xf32> -> vector<8x8xf32>
    %cst_39 = arith.constant 0.0883883461 : f32
    %95 = vector.broadcast %cst_39 : f32 to vector<8x8xf32>
    %96 = arith.mulf %94, %95 : vector<8x8xf32>
    %97 = arith.addf %96, %7 : vector<8x8xf32>
    %cst_40 = arith.constant dense<0xFF800000> : vector<8xf32>
    %98 = vector.multi_reduction <maximumf>, %97, %cst_40 [1] : vector<8x8xf32> to vector<8xf32>
    %99 = vector.shape_cast %98 : vector<8xf32> to vector<8x1xf32>
    %100 = vector.broadcast %99 : vector<8x1xf32> to vector<8x8xf32>
    %101 = arith.subf %97, %100 : vector<8x8xf32>
    %102 = math.exp %101 : vector<8x8xf32>
    %cst_41 = arith.constant dense<0.000000e+00> : vector<8xf32>
    %103 = vector.multi_reduction <add>, %102, %cst_41 [1] : vector<8x8xf32> to vector<8xf32>
    %104 = vector.shape_cast %103 : vector<8xf32> to vector<8x1xf32>
    %105 = tpu.reciprocal %104 {approx = true} : vector<8x1xf32> -> vector<8x1xf32>
    %106 = vector.broadcast %105 : vector<8x1xf32> to vector<8x8xf32>
    %107 = arith.mulf %102, %106 : vector<8x8xf32>
    %cst_42 = arith.constant dense<0.000000e+00> : vector<8x32xf32>
    %108 = tpu.matmul %107, %92, %cst_42 {dimension_numbers = #tpu.dot_dimension_numbers<[1], [0], [0], [1], [0, 0, 1, 1], [], []>} : vector<8x8xf32>, vector<8x32xf32>, vector<8x32xf32> -> vector<8x32xf32>
    %109 = arith.truncf %108 : vector<8x32xf32> to vector<8x32xbf16>
    %c0_43 = arith.constant 0 : index
    %c2 = arith.constant 2 : index
    %c0_44 = arith.constant 0 : index
    %c0_45 = arith.constant 0 : index
    %110 = vector.load %arg5[%c0_43, %c2, %c0_44, %c0_45] : memref<4x4x32x128xbf16, #tpu.memory_space<vmem>>, vector<1x1x32x128xbf16>
    %111 = vector.shape_cast %110 : vector<1x1x32x128xbf16> to vector<32x128xbf16>
    %cst_46 = arith.constant dense<0.000000e+00> : vector<8x128xf32>
    %112 = tpu.matmul %109, %111, %cst_46 {dimension_numbers = #tpu.dot_dimension_numbers<[1], [0], [0], [1], [0, 0, 1, 1], [], []>} : vector<8x32xbf16>, vector<32x128xbf16>, vector<8x128xf32> -> vector<8x128xf32>
    %113 = arith.addf %89, %112 : vector<8x128xf32>
    %114 = vector.extract_strided_slice %38 {offsets = [0, 96], sizes = [8, 32], strides = [1, 1]} : vector<8x128xf32> to vector<8x32xf32>
    %115 = vector.extract_strided_slice %39 {offsets = [0, 96], sizes = [8, 32], strides = [1, 1]} : vector<8x128xf32> to vector<8x32xf32>
    %116 = vector.extract_strided_slice %40 {offsets = [0, 96], sizes = [8, 32], strides = [1, 1]} : vector<8x128xf32> to vector<8x32xf32>
    %117 = tpu.transpose %115, [1, 0] : vector<8x32xf32> -> vector<32x8xf32>
    %cst_47 = arith.constant dense<0.000000e+00> : vector<8x8xf32>
    %118 = tpu.matmul %114, %117, %cst_47 {dimension_numbers = #tpu.dot_dimension_numbers<[1], [0], [0], [1], [0, 0, 1, 1], [], []>} : vector<8x32xf32>, vector<32x8xf32>, vector<8x8xf32> -> vector<8x8xf32>
    %cst_48 = arith.constant 0.0883883461 : f32
    %119 = vector.broadcast %cst_48 : f32 to vector<8x8xf32>
    %120 = arith.mulf %118, %119 : vector<8x8xf32>
    %121 = arith.addf %120, %7 : vector<8x8xf32>
    %cst_49 = arith.constant dense<0xFF800000> : vector<8xf32>
    %122 = vector.multi_reduction <maximumf>, %121, %cst_49 [1] : vector<8x8xf32> to vector<8xf32>
    %123 = vector.shape_cast %122 : vector<8xf32> to vector<8x1xf32>
    %124 = vector.broadcast %123 : vector<8x1xf32> to vector<8x8xf32>
    %125 = arith.subf %121, %124 : vector<8x8xf32>
    %126 = math.exp %125 : vector<8x8xf32>
    %cst_50 = arith.constant dense<0.000000e+00> : vector<8xf32>
    %127 = vector.multi_reduction <add>, %126, %cst_50 [1] : vector<8x8xf32> to vector<8xf32>
    %128 = vector.shape_cast %127 : vector<8xf32> to vector<8x1xf32>
    %129 = tpu.reciprocal %128 {approx = true} : vector<8x1xf32> -> vector<8x1xf32>
    %130 = vector.broadcast %129 : vector<8x1xf32> to vector<8x8xf32>
    %131 = arith.mulf %126, %130 : vector<8x8xf32>
    %cst_51 = arith.constant dense<0.000000e+00> : vector<8x32xf32>
    %132 = tpu.matmul %131, %116, %cst_51 {dimension_numbers = #tpu.dot_dimension_numbers<[1], [0], [0], [1], [0, 0, 1, 1], [], []>} : vector<8x8xf32>, vector<8x32xf32>, vector<8x32xf32> -> vector<8x32xf32>
    %133 = arith.truncf %132 : vector<8x32xf32> to vector<8x32xbf16>
    %c0_52 = arith.constant 0 : index
    %c3 = arith.constant 3 : index
    %c0_53 = arith.constant 0 : index
    %c0_54 = arith.constant 0 : index
    %134 = vector.load %arg5[%c0_52, %c3, %c0_53, %c0_54] : memref<4x4x32x128xbf16, #tpu.memory_space<vmem>>, vector<1x1x32x128xbf16>
    %135 = vector.shape_cast %134 : vector<1x1x32x128xbf16> to vector<32x128xbf16>
    %cst_55 = arith.constant dense<0.000000e+00> : vector<8x128xf32>
    %136 = tpu.matmul %133, %135, %cst_55 {dimension_numbers = #tpu.dot_dimension_numbers<[1], [0], [0], [1], [0, 0, 1, 1], [], []>} : vector<8x32xbf16>, vector<32x128xbf16>, vector<8x128xf32> -> vector<8x128xf32>
    %137 = arith.addf %113, %136 : vector<8x128xf32>
    %138 = arith.addf %1, %137 : vector<8x128xf32>
    %c0_56 = arith.constant 0 : index
    %c0_57 = arith.constant 0 : index
    %c0_58 = arith.constant 0 : index
    %139 = vector.load %arg6[%c0_56, %c0_57, %c0_58] : memref<4x1x128xf32, #tpu.memory_space<vmem>>, vector<1x1x128xf32>
    %140 = vector.shape_cast %139 : vector<1x1x128xf32> to vector<1x128xf32>
    %141 = vector.broadcast %140 : vector<1x128xf32> to vector<8x128xf32>
    %142 = arith.addf %138, %141 : vector<8x128xf32>
    %c0_59 = arith.constant 0 : index
    %c0_60 = arith.constant 0 : index
    %c0_61 = arith.constant 0 : index
    %143 = vector.load %arg7[%c0_59, %c0_60, %c0_61] : memref<4x1x128xf32, #tpu.memory_space<vmem>>, vector<1x1x128xf32>
    %144 = vector.shape_cast %143 : vector<1x1x128xf32> to vector<1x128xf32>
    %c0_62 = arith.constant 0 : index
    %c0_63 = arith.constant 0 : index
    %c0_64 = arith.constant 0 : index
    %145 = vector.load %arg8[%c0_62, %c0_63, %c0_64] : memref<4x1x128xf32, #tpu.memory_space<vmem>>, vector<1x1x128xf32>
    %146 = vector.shape_cast %145 : vector<1x1x128xf32> to vector<1x128xf32>
    %cst_65 = arith.constant dense<0.000000e+00> : vector<8xf32>
    %147 = vector.multi_reduction <add>, %142, %cst_65 [1] : vector<8x128xf32> to vector<8xf32>
    %148 = vector.shape_cast %147 : vector<8xf32> to vector<8x1xf32>
    %cst_66 = arith.constant 1.280000e+02 : f32
    %149 = vector.broadcast %cst_66 : f32 to vector<8x1xf32>
    %150 = arith.divf %148, %149 : vector<8x1xf32>
    %151 = vector.broadcast %150 : vector<8x1xf32> to vector<8x128xf32>
    %152 = arith.subf %142, %151 : vector<8x128xf32>
    %153 = arith.mulf %152, %152 : vector<8x128xf32>
    %cst_67 = arith.constant dense<0.000000e+00> : vector<8xf32>
    %154 = vector.multi_reduction <add>, %153, %cst_67 [1] : vector<8x128xf32> to vector<8xf32>
    %155 = vector.shape_cast %154 : vector<8xf32> to vector<8x1xf32>
    %cst_68 = arith.constant 1.280000e+02 : f32
    %156 = vector.broadcast %cst_68 : f32 to vector<8x1xf32>
    %157 = arith.divf %155, %156 : vector<8x1xf32>
    %158 = vector.broadcast %150 : vector<8x1xf32> to vector<8x128xf32>
    %159 = arith.subf %142, %158 : vector<8x128xf32>
    %cst_69 = arith.constant 9.99999974E-6 : f32
    %160 = vector.broadcast %cst_69 : f32 to vector<8x1xf32>
    %161 = arith.addf %157, %160 : vector<8x1xf32>
    %162 = math.rsqrt %161 : vector<8x1xf32>
    %163 = vector.broadcast %162 : vector<8x1xf32> to vector<8x128xf32>
    %164 = arith.mulf %159, %163 : vector<8x128xf32>
    %165 = vector.broadcast %144 : vector<1x128xf32> to vector<8x128xf32>
    %166 = arith.mulf %164, %165 : vector<8x128xf32>
    %167 = vector.broadcast %146 : vector<1x128xf32> to vector<8x128xf32>
    %168 = arith.addf %166, %167 : vector<8x128xf32>
    %169 = arith.truncf %168 : vector<8x128xf32> to vector<8x128xbf16>
    %c0_70 = arith.constant 0 : index
    %c0_71 = arith.constant 0 : index
    %c0_72 = arith.constant 0 : index
    %170 = vector.load %arg9[%c0_70, %c0_71, %c0_72] : memref<4x128x512xbf16, #tpu.memory_space<vmem>>, vector<1x128x512xbf16>
    %171 = vector.shape_cast %170 : vector<1x128x512xbf16> to vector<128x512xbf16>
    %cst_73 = arith.constant dense<0.000000e+00> : vector<8x512xf32>
    %172 = tpu.matmul %169, %171, %cst_73 {dimension_numbers = #tpu.dot_dimension_numbers<[1], [0], [0], [1], [0, 0, 1, 1], [], []>} : vector<8x128xbf16>, vector<128x512xbf16>, vector<8x512xf32> -> vector<8x512xf32>
    %c0_74 = arith.constant 0 : index
    %c0_75 = arith.constant 0 : index
    %c0_76 = arith.constant 0 : index
    %173 = vector.load %arg10[%c0_74, %c0_75, %c0_76] : memref<4x1x512xf32, #tpu.memory_space<vmem>>, vector<1x1x512xf32>
    %174 = vector.shape_cast %173 : vector<1x1x512xf32> to vector<1x512xf32>
    %175 = vector.broadcast %174 : vector<1x512xf32> to vector<8x512xf32>
    %176 = arith.addf %172, %175 : vector<8x512xf32>
    %cst_77 = arith.constant 0.000000e+00 : f32
    %177 = vector.broadcast %cst_77 : f32 to vector<8x512xf32>
    %178 = arith.maximumf %176, %177 : vector<8x512xf32>
    %179 = arith.truncf %178 : vector<8x512xf32> to vector<8x512xbf16>
    %c0_78 = arith.constant 0 : index
    %c0_79 = arith.constant 0 : index
    %c0_80 = arith.constant 0 : index
    %180 = vector.load %arg11[%c0_78, %c0_79, %c0_80] : memref<4x512x128xbf16, #tpu.memory_space<vmem>>, vector<1x512x128xbf16>
    %181 = vector.shape_cast %180 : vector<1x512x128xbf16> to vector<512x128xbf16>
    %cst_81 = arith.constant dense<0.000000e+00> : vector<8x128xf32>
    %182 = tpu.matmul %179, %181, %cst_81 {dimension_numbers = #tpu.dot_dimension_numbers<[1], [0], [0], [1], [0, 0, 1, 1], [], []>} : vector<8x512xbf16>, vector<512x128xbf16>, vector<8x128xf32> -> vector<8x128xf32>
    %c0_82 = arith.constant 0 : index
    %c0_83 = arith.constant 0 : index
    %c0_84 = arith.constant 0 : index
    %183 = vector.load %arg12[%c0_82, %c0_83, %c0_84] : memref<4x1x128xf32, #tpu.memory_space<vmem>>, vector<1x1x128xf32>
    %184 = vector.shape_cast %183 : vector<1x1x128xf32> to vector<1x128xf32>
    %185 = vector.broadcast %184 : vector<1x128xf32> to vector<8x128xf32>
    %186 = arith.addf %182, %185 : vector<8x128xf32>
    %187 = arith.addf %142, %186 : vector<8x128xf32>
    %c1_85 = arith.constant 1 : index
    %c0_86 = arith.constant 0 : index
    %c0_87 = arith.constant 0 : index
    %188 = vector.load %arg2[%c1_85, %c0_86, %c0_87] : memref<4x1x128xf32, #tpu.memory_space<vmem>>, vector<1x1x128xf32>
    %189 = vector.shape_cast %188 : vector<1x1x128xf32> to vector<1x128xf32>
    %c1_88 = arith.constant 1 : index
    %c0_89 = arith.constant 0 : index
    %c0_90 = arith.constant 0 : index
    %190 = vector.load %arg3[%c1_88, %c0_89, %c0_90] : memref<4x1x128xf32, #tpu.memory_space<vmem>>, vector<1x1x128xf32>
    %191 = vector.shape_cast %190 : vector<1x1x128xf32> to vector<1x128xf32>
    %cst_91 = arith.constant dense<0.000000e+00> : vector<8xf32>
    %192 = vector.multi_reduction <add>, %187, %cst_91 [1] : vector<8x128xf32> to vector<8xf32>
    %193 = vector.shape_cast %192 : vector<8xf32> to vector<8x1xf32>
    %cst_92 = arith.constant 1.280000e+02 : f32
    %194 = vector.broadcast %cst_92 : f32 to vector<8x1xf32>
    %195 = arith.divf %193, %194 : vector<8x1xf32>
    %196 = vector.broadcast %195 : vector<8x1xf32> to vector<8x128xf32>
    %197 = arith.subf %187, %196 : vector<8x128xf32>
    %198 = arith.mulf %197, %197 : vector<8x128xf32>
    %cst_93 = arith.constant dense<0.000000e+00> : vector<8xf32>
    %199 = vector.multi_reduction <add>, %198, %cst_93 [1] : vector<8x128xf32> to vector<8xf32>
    %200 = vector.shape_cast %199 : vector<8xf32> to vector<8x1xf32>
    %cst_94 = arith.constant 1.280000e+02 : f32
    %201 = vector.broadcast %cst_94 : f32 to vector<8x1xf32>
    %202 = arith.divf %200, %201 : vector<8x1xf32>
    %203 = vector.broadcast %195 : vector<8x1xf32> to vector<8x128xf32>
    %204 = arith.subf %187, %203 : vector<8x128xf32>
    %cst_95 = arith.constant 9.99999974E-6 : f32
    %205 = vector.broadcast %cst_95 : f32 to vector<8x1xf32>
    %206 = arith.addf %202, %205 : vector<8x1xf32>
    %207 = math.rsqrt %206 : vector<8x1xf32>
    %208 = vector.broadcast %207 : vector<8x1xf32> to vector<8x128xf32>
    %209 = arith.mulf %204, %208 : vector<8x128xf32>
    %210 = vector.broadcast %189 : vector<1x128xf32> to vector<8x128xf32>
    %211 = arith.mulf %209, %210 : vector<8x128xf32>
    %212 = vector.broadcast %191 : vector<1x128xf32> to vector<8x128xf32>
    %213 = arith.addf %211, %212 : vector<8x128xf32>
    %214 = arith.truncf %213 : vector<8x128xf32> to vector<8x128xbf16>
    %c1_96 = arith.constant 1 : index
    %c0_97 = arith.constant 0 : index
    %c0_98 = arith.constant 0 : index
    %215 = vector.load %arg4[%c1_96, %c0_97, %c0_98] : memref<4x128x384xbf16, #tpu.memory_space<vmem>>, vector<1x128x384xbf16>
    %216 = vector.shape_cast %215 : vector<1x128x384xbf16> to vector<128x384xbf16>
    %cst_99 = arith.constant dense<0.000000e+00> : vector<8x384xf32>
    %217 = tpu.matmul %214, %216, %cst_99 {dimension_numbers = #tpu.dot_dimension_numbers<[1], [0], [0], [1], [0, 0, 1, 1], [], []>} : vector<8x128xbf16>, vector<128x384xbf16>, vector<8x384xf32> -> vector<8x384xf32>
    %218 = vector.extract_strided_slice %217 {offsets = [0, 0], sizes = [8, 128], strides = [1, 1]} : vector<8x384xf32> to vector<8x128xf32>
    %219 = vector.extract_strided_slice %217 {offsets = [0, 128], sizes = [8, 128], strides = [1, 1]} : vector<8x384xf32> to vector<8x128xf32>
    %220 = vector.extract_strided_slice %217 {offsets = [0, 256], sizes = [8, 128], strides = [1, 1]} : vector<8x384xf32> to vector<8x128xf32>
    %cst_100 = arith.constant 0.000000e+00 : f32
    %221 = vector.broadcast %cst_100 : f32 to vector<8x128xf32>
    %222 = vector.extract_strided_slice %218 {offsets = [0, 0], sizes = [8, 32], strides = [1, 1]} : vector<8x128xf32> to vector<8x32xf32>
    %223 = vector.extract_strided_slice %219 {offsets = [0, 0], sizes = [8, 32], strides = [1, 1]} : vector<8x128xf32> to vector<8x32xf32>
    %224 = vector.extract_strided_slice %220 {offsets = [0, 0], sizes = [8, 32], strides = [1, 1]} : vector<8x128xf32> to vector<8x32xf32>
    %225 = tpu.transpose %223, [1, 0] : vector<8x32xf32> -> vector<32x8xf32>
    %cst_101 = arith.constant dense<0.000000e+00> : vector<8x8xf32>
    %226 = tpu.matmul %222, %225, %cst_101 {dimension_numbers = #tpu.dot_dimension_numbers<[1], [0], [0], [1], [0, 0, 1, 1], [], []>} : vector<8x32xf32>, vector<32x8xf32>, vector<8x8xf32> -> vector<8x8xf32>
    %cst_102 = arith.constant 0.0883883461 : f32
    %227 = vector.broadcast %cst_102 : f32 to vector<8x8xf32>
    %228 = arith.mulf %226, %227 : vector<8x8xf32>
    %229 = arith.addf %228, %7 : vector<8x8xf32>
    %cst_103 = arith.constant dense<0xFF800000> : vector<8xf32>
    %230 = vector.multi_reduction <maximumf>, %229, %cst_103 [1] : vector<8x8xf32> to vector<8xf32>
    %231 = vector.shape_cast %230 : vector<8xf32> to vector<8x1xf32>
    %232 = vector.broadcast %231 : vector<8x1xf32> to vector<8x8xf32>
    %233 = arith.subf %229, %232 : vector<8x8xf32>
    %234 = math.exp %233 : vector<8x8xf32>
    %cst_104 = arith.constant dense<0.000000e+00> : vector<8xf32>
    %235 = vector.multi_reduction <add>, %234, %cst_104 [1] : vector<8x8xf32> to vector<8xf32>
    %236 = vector.shape_cast %235 : vector<8xf32> to vector<8x1xf32>
    %237 = tpu.reciprocal %236 {approx = true} : vector<8x1xf32> -> vector<8x1xf32>
    %238 = vector.broadcast %237 : vector<8x1xf32> to vector<8x8xf32>
    %239 = arith.mulf %234, %238 : vector<8x8xf32>
    %cst_105 = arith.constant dense<0.000000e+00> : vector<8x32xf32>
    %240 = tpu.matmul %239, %224, %cst_105 {dimension_numbers = #tpu.dot_dimension_numbers<[1], [0], [0], [1], [0, 0, 1, 1], [], []>} : vector<8x8xf32>, vector<8x32xf32>, vector<8x32xf32> -> vector<8x32xf32>
    %241 = arith.truncf %240 : vector<8x32xf32> to vector<8x32xbf16>
    %c1_106 = arith.constant 1 : index
    %c0_107 = arith.constant 0 : index
    %c0_108 = arith.constant 0 : index
    %c0_109 = arith.constant 0 : index
    %242 = vector.load %arg5[%c1_106, %c0_107, %c0_108, %c0_109] : memref<4x4x32x128xbf16, #tpu.memory_space<vmem>>, vector<1x1x32x128xbf16>
    %243 = vector.shape_cast %242 : vector<1x1x32x128xbf16> to vector<32x128xbf16>
    %cst_110 = arith.constant dense<0.000000e+00> : vector<8x128xf32>
    %244 = tpu.matmul %241, %243, %cst_110 {dimension_numbers = #tpu.dot_dimension_numbers<[1], [0], [0], [1], [0, 0, 1, 1], [], []>} : vector<8x32xbf16>, vector<32x128xbf16>, vector<8x128xf32> -> vector<8x128xf32>
    %245 = arith.addf %221, %244 : vector<8x128xf32>
    %246 = vector.extract_strided_slice %218 {offsets = [0, 32], sizes = [8, 32], strides = [1, 1]} : vector<8x128xf32> to vector<8x32xf32>
    %247 = vector.extract_strided_slice %219 {offsets = [0, 32], sizes = [8, 32], strides = [1, 1]} : vector<8x128xf32> to vector<8x32xf32>
    %248 = vector.extract_strided_slice %220 {offsets = [0, 32], sizes = [8, 32], strides = [1, 1]} : vector<8x128xf32> to vector<8x32xf32>
    %249 = tpu.transpose %247, [1, 0] : vector<8x32xf32> -> vector<32x8xf32>
    %cst_111 = arith.constant dense<0.000000e+00> : vector<8x8xf32>
    %250 = tpu.matmul %246, %249, %cst_111 {dimension_numbers = #tpu.dot_dimension_numbers<[1], [0], [0], [1], [0, 0, 1, 1], [], []>} : vector<8x32xf32>, vector<32x8xf32>, vector<8x8xf32> -> vector<8x8xf32>
    %cst_112 = arith.constant 0.0883883461 : f32
    %251 = vector.broadcast %cst_112 : f32 to vector<8x8xf32>
    %252 = arith.mulf %250, %251 : vector<8x8xf32>
    %253 = arith.addf %252, %7 : vector<8x8xf32>
    %cst_113 = arith.constant dense<0xFF800000> : vector<8xf32>
    %254 = vector.multi_reduction <maximumf>, %253, %cst_113 [1] : vector<8x8xf32> to vector<8xf32>
    %255 = vector.shape_cast %254 : vector<8xf32> to vector<8x1xf32>
    %256 = vector.broadcast %255 : vector<8x1xf32> to vector<8x8xf32>
    %257 = arith.subf %253, %256 : vector<8x8xf32>
    %258 = math.exp %257 : vector<8x8xf32>
    %cst_114 = arith.constant dense<0.000000e+00> : vector<8xf32>
    %259 = vector.multi_reduction <add>, %258, %cst_114 [1] : vector<8x8xf32> to vector<8xf32>
    %260 = vector.shape_cast %259 : vector<8xf32> to vector<8x1xf32>
    %261 = tpu.reciprocal %260 {approx = true} : vector<8x1xf32> -> vector<8x1xf32>
    %262 = vector.broadcast %261 : vector<8x1xf32> to vector<8x8xf32>
    %263 = arith.mulf %258, %262 : vector<8x8xf32>
    %cst_115 = arith.constant dense<0.000000e+00> : vector<8x32xf32>
    %264 = tpu.matmul %263, %248, %cst_115 {dimension_numbers = #tpu.dot_dimension_numbers<[1], [0], [0], [1], [0, 0, 1, 1], [], []>} : vector<8x8xf32>, vector<8x32xf32>, vector<8x32xf32> -> vector<8x32xf32>
    %265 = arith.truncf %264 : vector<8x32xf32> to vector<8x32xbf16>
    %c1_116 = arith.constant 1 : index
    %c1_117 = arith.constant 1 : index
    %c0_118 = arith.constant 0 : index
    %c0_119 = arith.constant 0 : index
    %266 = vector.load %arg5[%c1_116, %c1_117, %c0_118, %c0_119] : memref<4x4x32x128xbf16, #tpu.memory_space<vmem>>, vector<1x1x32x128xbf16>
    %267 = vector.shape_cast %266 : vector<1x1x32x128xbf16> to vector<32x128xbf16>
    %cst_120 = arith.constant dense<0.000000e+00> : vector<8x128xf32>
    %268 = tpu.matmul %265, %267, %cst_120 {dimension_numbers = #tpu.dot_dimension_numbers<[1], [0], [0], [1], [0, 0, 1, 1], [], []>} : vector<8x32xbf16>, vector<32x128xbf16>, vector<8x128xf32> -> vector<8x128xf32>
    %269 = arith.addf %245, %268 : vector<8x128xf32>
    %270 = vector.extract_strided_slice %218 {offsets = [0, 64], sizes = [8, 32], strides = [1, 1]} : vector<8x128xf32> to vector<8x32xf32>
    %271 = vector.extract_strided_slice %219 {offsets = [0, 64], sizes = [8, 32], strides = [1, 1]} : vector<8x128xf32> to vector<8x32xf32>
    %272 = vector.extract_strided_slice %220 {offsets = [0, 64], sizes = [8, 32], strides = [1, 1]} : vector<8x128xf32> to vector<8x32xf32>
    %273 = tpu.transpose %271, [1, 0] : vector<8x32xf32> -> vector<32x8xf32>
    %cst_121 = arith.constant dense<0.000000e+00> : vector<8x8xf32>
    %274 = tpu.matmul %270, %273, %cst_121 {dimension_numbers = #tpu.dot_dimension_numbers<[1], [0], [0], [1], [0, 0, 1, 1], [], []>} : vector<8x32xf32>, vector<32x8xf32>, vector<8x8xf32> -> vector<8x8xf32>
    %cst_122 = arith.constant 0.0883883461 : f32
    %275 = vector.broadcast %cst_122 : f32 to vector<8x8xf32>
    %276 = arith.mulf %274, %275 : vector<8x8xf32>
    %277 = arith.addf %276, %7 : vector<8x8xf32>
    %cst_123 = arith.constant dense<0xFF800000> : vector<8xf32>
    %278 = vector.multi_reduction <maximumf>, %277, %cst_123 [1] : vector<8x8xf32> to vector<8xf32>
    %279 = vector.shape_cast %278 : vector<8xf32> to vector<8x1xf32>
    %280 = vector.broadcast %279 : vector<8x1xf32> to vector<8x8xf32>
    %281 = arith.subf %277, %280 : vector<8x8xf32>
    %282 = math.exp %281 : vector<8x8xf32>
    %cst_124 = arith.constant dense<0.000000e+00> : vector<8xf32>
    %283 = vector.multi_reduction <add>, %282, %cst_124 [1] : vector<8x8xf32> to vector<8xf32>
    %284 = vector.shape_cast %283 : vector<8xf32> to vector<8x1xf32>
    %285 = tpu.reciprocal %284 {approx = true} : vector<8x1xf32> -> vector<8x1xf32>
    %286 = vector.broadcast %285 : vector<8x1xf32> to vector<8x8xf32>
    %287 = arith.mulf %282, %286 : vector<8x8xf32>
    %cst_125 = arith.constant dense<0.000000e+00> : vector<8x32xf32>
    %288 = tpu.matmul %287, %272, %cst_125 {dimension_numbers = #tpu.dot_dimension_numbers<[1], [0], [0], [1], [0, 0, 1, 1], [], []>} : vector<8x8xf32>, vector<8x32xf32>, vector<8x32xf32> -> vector<8x32xf32>
    %289 = arith.truncf %288 : vector<8x32xf32> to vector<8x32xbf16>
    %c1_126 = arith.constant 1 : index
    %c2_127 = arith.constant 2 : index
    %c0_128 = arith.constant 0 : index
    %c0_129 = arith.constant 0 : index
    %290 = vector.load %arg5[%c1_126, %c2_127, %c0_128, %c0_129] : memref<4x4x32x128xbf16, #tpu.memory_space<vmem>>, vector<1x1x32x128xbf16>
    %291 = vector.shape_cast %290 : vector<1x1x32x128xbf16> to vector<32x128xbf16>
    %cst_130 = arith.constant dense<0.000000e+00> : vector<8x128xf32>
    %292 = tpu.matmul %289, %291, %cst_130 {dimension_numbers = #tpu.dot_dimension_numbers<[1], [0], [0], [1], [0, 0, 1, 1], [], []>} : vector<8x32xbf16>, vector<32x128xbf16>, vector<8x128xf32> -> vector<8x128xf32>
    %293 = arith.addf %269, %292 : vector<8x128xf32>
    %294 = vector.extract_strided_slice %218 {offsets = [0, 96], sizes = [8, 32], strides = [1, 1]} : vector<8x128xf32> to vector<8x32xf32>
    %295 = vector.extract_strided_slice %219 {offsets = [0, 96], sizes = [8, 32], strides = [1, 1]} : vector<8x128xf32> to vector<8x32xf32>
    %296 = vector.extract_strided_slice %220 {offsets = [0, 96], sizes = [8, 32], strides = [1, 1]} : vector<8x128xf32> to vector<8x32xf32>
    %297 = tpu.transpose %295, [1, 0] : vector<8x32xf32> -> vector<32x8xf32>
    %cst_131 = arith.constant dense<0.000000e+00> : vector<8x8xf32>
    %298 = tpu.matmul %294, %297, %cst_131 {dimension_numbers = #tpu.dot_dimension_numbers<[1], [0], [0], [1], [0, 0, 1, 1], [], []>} : vector<8x32xf32>, vector<32x8xf32>, vector<8x8xf32> -> vector<8x8xf32>
    %cst_132 = arith.constant 0.0883883461 : f32
    %299 = vector.broadcast %cst_132 : f32 to vector<8x8xf32>
    %300 = arith.mulf %298, %299 : vector<8x8xf32>
    %301 = arith.addf %300, %7 : vector<8x8xf32>
    %cst_133 = arith.constant dense<0xFF800000> : vector<8xf32>
    %302 = vector.multi_reduction <maximumf>, %301, %cst_133 [1] : vector<8x8xf32> to vector<8xf32>
    %303 = vector.shape_cast %302 : vector<8xf32> to vector<8x1xf32>
    %304 = vector.broadcast %303 : vector<8x1xf32> to vector<8x8xf32>
    %305 = arith.subf %301, %304 : vector<8x8xf32>
    %306 = math.exp %305 : vector<8x8xf32>
    %cst_134 = arith.constant dense<0.000000e+00> : vector<8xf32>
    %307 = vector.multi_reduction <add>, %306, %cst_134 [1] : vector<8x8xf32> to vector<8xf32>
    %308 = vector.shape_cast %307 : vector<8xf32> to vector<8x1xf32>
    %309 = tpu.reciprocal %308 {approx = true} : vector<8x1xf32> -> vector<8x1xf32>
    %310 = vector.broadcast %309 : vector<8x1xf32> to vector<8x8xf32>
    %311 = arith.mulf %306, %310 : vector<8x8xf32>
    %cst_135 = arith.constant dense<0.000000e+00> : vector<8x32xf32>
    %312 = tpu.matmul %311, %296, %cst_135 {dimension_numbers = #tpu.dot_dimension_numbers<[1], [0], [0], [1], [0, 0, 1, 1], [], []>} : vector<8x8xf32>, vector<8x32xf32>, vector<8x32xf32> -> vector<8x32xf32>
    %313 = arith.truncf %312 : vector<8x32xf32> to vector<8x32xbf16>
    %c1_136 = arith.constant 1 : index
    %c3_137 = arith.constant 3 : index
    %c0_138 = arith.constant 0 : index
    %c0_139 = arith.constant 0 : index
    %314 = vector.load %arg5[%c1_136, %c3_137, %c0_138, %c0_139] : memref<4x4x32x128xbf16, #tpu.memory_space<vmem>>, vector<1x1x32x128xbf16>
    %315 = vector.shape_cast %314 : vector<1x1x32x128xbf16> to vector<32x128xbf16>
    %cst_140 = arith.constant dense<0.000000e+00> : vector<8x128xf32>
    %316 = tpu.matmul %313, %315, %cst_140 {dimension_numbers = #tpu.dot_dimension_numbers<[1], [0], [0], [1], [0, 0, 1, 1], [], []>} : vector<8x32xbf16>, vector<32x128xbf16>, vector<8x128xf32> -> vector<8x128xf32>
    %317 = arith.addf %293, %316 : vector<8x128xf32>
    %318 = arith.addf %187, %317 : vector<8x128xf32>
    %c1_141 = arith.constant 1 : index
    %c0_142 = arith.constant 0 : index
    %c0_143 = arith.constant 0 : index
    %319 = vector.load %arg6[%c1_141, %c0_142, %c0_143] : memref<4x1x128xf32, #tpu.memory_space<vmem>>, vector<1x1x128xf32>
    %320 = vector.shape_cast %319 : vector<1x1x128xf32> to vector<1x128xf32>
    %321 = vector.broadcast %320 : vector<1x128xf32> to vector<8x128xf32>
    %322 = arith.addf %318, %321 : vector<8x128xf32>
    %c1_144 = arith.constant 1 : index
    %c0_145 = arith.constant 0 : index
    %c0_146 = arith.constant 0 : index
    %323 = vector.load %arg7[%c1_144, %c0_145, %c0_146] : memref<4x1x128xf32, #tpu.memory_space<vmem>>, vector<1x1x128xf32>
    %324 = vector.shape_cast %323 : vector<1x1x128xf32> to vector<1x128xf32>
    %c1_147 = arith.constant 1 : index
    %c0_148 = arith.constant 0 : index
    %c0_149 = arith.constant 0 : index
    %325 = vector.load %arg8[%c1_147, %c0_148, %c0_149] : memref<4x1x128xf32, #tpu.memory_space<vmem>>, vector<1x1x128xf32>
    %326 = vector.shape_cast %325 : vector<1x1x128xf32> to vector<1x128xf32>
    %cst_150 = arith.constant dense<0.000000e+00> : vector<8xf32>
    %327 = vector.multi_reduction <add>, %322, %cst_150 [1] : vector<8x128xf32> to vector<8xf32>
    %328 = vector.shape_cast %327 : vector<8xf32> to vector<8x1xf32>
    %cst_151 = arith.constant 1.280000e+02 : f32
    %329 = vector.broadcast %cst_151 : f32 to vector<8x1xf32>
    %330 = arith.divf %328, %329 : vector<8x1xf32>
    %331 = vector.broadcast %330 : vector<8x1xf32> to vector<8x128xf32>
    %332 = arith.subf %322, %331 : vector<8x128xf32>
    %333 = arith.mulf %332, %332 : vector<8x128xf32>
    %cst_152 = arith.constant dense<0.000000e+00> : vector<8xf32>
    %334 = vector.multi_reduction <add>, %333, %cst_152 [1] : vector<8x128xf32> to vector<8xf32>
    %335 = vector.shape_cast %334 : vector<8xf32> to vector<8x1xf32>
    %cst_153 = arith.constant 1.280000e+02 : f32
    %336 = vector.broadcast %cst_153 : f32 to vector<8x1xf32>
    %337 = arith.divf %335, %336 : vector<8x1xf32>
    %338 = vector.broadcast %330 : vector<8x1xf32> to vector<8x128xf32>
    %339 = arith.subf %322, %338 : vector<8x128xf32>
    %cst_154 = arith.constant 9.99999974E-6 : f32
    %340 = vector.broadcast %cst_154 : f32 to vector<8x1xf32>
    %341 = arith.addf %337, %340 : vector<8x1xf32>
    %342 = math.rsqrt %341 : vector<8x1xf32>
    %343 = vector.broadcast %342 : vector<8x1xf32> to vector<8x128xf32>
    %344 = arith.mulf %339, %343 : vector<8x128xf32>
    %345 = vector.broadcast %324 : vector<1x128xf32> to vector<8x128xf32>
    %346 = arith.mulf %344, %345 : vector<8x128xf32>
    %347 = vector.broadcast %326 : vector<1x128xf32> to vector<8x128xf32>
    %348 = arith.addf %346, %347 : vector<8x128xf32>
    %349 = arith.truncf %348 : vector<8x128xf32> to vector<8x128xbf16>
    %c1_155 = arith.constant 1 : index
    %c0_156 = arith.constant 0 : index
    %c0_157 = arith.constant 0 : index
    %350 = vector.load %arg9[%c1_155, %c0_156, %c0_157] : memref<4x128x512xbf16, #tpu.memory_space<vmem>>, vector<1x128x512xbf16>
    %351 = vector.shape_cast %350 : vector<1x128x512xbf16> to vector<128x512xbf16>
    %cst_158 = arith.constant dense<0.000000e+00> : vector<8x512xf32>
    %352 = tpu.matmul %349, %351, %cst_158 {dimension_numbers = #tpu.dot_dimension_numbers<[1], [0], [0], [1], [0, 0, 1, 1], [], []>} : vector<8x128xbf16>, vector<128x512xbf16>, vector<8x512xf32> -> vector<8x512xf32>
    %c1_159 = arith.constant 1 : index
    %c0_160 = arith.constant 0 : index
    %c0_161 = arith.constant 0 : index
    %353 = vector.load %arg10[%c1_159, %c0_160, %c0_161] : memref<4x1x512xf32, #tpu.memory_space<vmem>>, vector<1x1x512xf32>
    %354 = vector.shape_cast %353 : vector<1x1x512xf32> to vector<1x512xf32>
    %355 = vector.broadcast %354 : vector<1x512xf32> to vector<8x512xf32>
    %356 = arith.addf %352, %355 : vector<8x512xf32>
    %cst_162 = arith.constant 0.000000e+00 : f32
    %357 = vector.broadcast %cst_162 : f32 to vector<8x512xf32>
    %358 = arith.maximumf %356, %357 : vector<8x512xf32>
    %359 = arith.truncf %358 : vector<8x512xf32> to vector<8x512xbf16>
    %c1_163 = arith.constant 1 : index
    %c0_164 = arith.constant 0 : index
    %c0_165 = arith.constant 0 : index
    %360 = vector.load %arg11[%c1_163, %c0_164, %c0_165] : memref<4x512x128xbf16, #tpu.memory_space<vmem>>, vector<1x512x128xbf16>
    %361 = vector.shape_cast %360 : vector<1x512x128xbf16> to vector<512x128xbf16>
    %cst_166 = arith.constant dense<0.000000e+00> : vector<8x128xf32>
    %362 = tpu.matmul %359, %361, %cst_166 {dimension_numbers = #tpu.dot_dimension_numbers<[1], [0], [0], [1], [0, 0, 1, 1], [], []>} : vector<8x512xbf16>, vector<512x128xbf16>, vector<8x128xf32> -> vector<8x128xf32>
    %c1_167 = arith.constant 1 : index
    %c0_168 = arith.constant 0 : index
    %c0_169 = arith.constant 0 : index
    %363 = vector.load %arg12[%c1_167, %c0_168, %c0_169] : memref<4x1x128xf32, #tpu.memory_space<vmem>>, vector<1x1x128xf32>
    %364 = vector.shape_cast %363 : vector<1x1x128xf32> to vector<1x128xf32>
    %365 = vector.broadcast %364 : vector<1x128xf32> to vector<8x128xf32>
    %366 = arith.addf %362, %365 : vector<8x128xf32>
    %367 = arith.addf %322, %366 : vector<8x128xf32>
    %c2_170 = arith.constant 2 : index
    %c0_171 = arith.constant 0 : index
    %c0_172 = arith.constant 0 : index
    %368 = vector.load %arg2[%c2_170, %c0_171, %c0_172] : memref<4x1x128xf32, #tpu.memory_space<vmem>>, vector<1x1x128xf32>
    %369 = vector.shape_cast %368 : vector<1x1x128xf32> to vector<1x128xf32>
    %c2_173 = arith.constant 2 : index
    %c0_174 = arith.constant 0 : index
    %c0_175 = arith.constant 0 : index
    %370 = vector.load %arg3[%c2_173, %c0_174, %c0_175] : memref<4x1x128xf32, #tpu.memory_space<vmem>>, vector<1x1x128xf32>
    %371 = vector.shape_cast %370 : vector<1x1x128xf32> to vector<1x128xf32>
    %cst_176 = arith.constant dense<0.000000e+00> : vector<8xf32>
    %372 = vector.multi_reduction <add>, %367, %cst_176 [1] : vector<8x128xf32> to vector<8xf32>
    %373 = vector.shape_cast %372 : vector<8xf32> to vector<8x1xf32>
    %cst_177 = arith.constant 1.280000e+02 : f32
    %374 = vector.broadcast %cst_177 : f32 to vector<8x1xf32>
    %375 = arith.divf %373, %374 : vector<8x1xf32>
    %376 = vector.broadcast %375 : vector<8x1xf32> to vector<8x128xf32>
    %377 = arith.subf %367, %376 : vector<8x128xf32>
    %378 = arith.mulf %377, %377 : vector<8x128xf32>
    %cst_178 = arith.constant dense<0.000000e+00> : vector<8xf32>
    %379 = vector.multi_reduction <add>, %378, %cst_178 [1] : vector<8x128xf32> to vector<8xf32>
    %380 = vector.shape_cast %379 : vector<8xf32> to vector<8x1xf32>
    %cst_179 = arith.constant 1.280000e+02 : f32
    %381 = vector.broadcast %cst_179 : f32 to vector<8x1xf32>
    %382 = arith.divf %380, %381 : vector<8x1xf32>
    %383 = vector.broadcast %375 : vector<8x1xf32> to vector<8x128xf32>
    %384 = arith.subf %367, %383 : vector<8x128xf32>
    %cst_180 = arith.constant 9.99999974E-6 : f32
    %385 = vector.broadcast %cst_180 : f32 to vector<8x1xf32>
    %386 = arith.addf %382, %385 : vector<8x1xf32>
    %387 = math.rsqrt %386 : vector<8x1xf32>
    %388 = vector.broadcast %387 : vector<8x1xf32> to vector<8x128xf32>
    %389 = arith.mulf %384, %388 : vector<8x128xf32>
    %390 = vector.broadcast %369 : vector<1x128xf32> to vector<8x128xf32>
    %391 = arith.mulf %389, %390 : vector<8x128xf32>
    %392 = vector.broadcast %371 : vector<1x128xf32> to vector<8x128xf32>
    %393 = arith.addf %391, %392 : vector<8x128xf32>
    %394 = arith.truncf %393 : vector<8x128xf32> to vector<8x128xbf16>
    %c2_181 = arith.constant 2 : index
    %c0_182 = arith.constant 0 : index
    %c0_183 = arith.constant 0 : index
    %395 = vector.load %arg4[%c2_181, %c0_182, %c0_183] : memref<4x128x384xbf16, #tpu.memory_space<vmem>>, vector<1x128x384xbf16>
    %396 = vector.shape_cast %395 : vector<1x128x384xbf16> to vector<128x384xbf16>
    %cst_184 = arith.constant dense<0.000000e+00> : vector<8x384xf32>
    %397 = tpu.matmul %394, %396, %cst_184 {dimension_numbers = #tpu.dot_dimension_numbers<[1], [0], [0], [1], [0, 0, 1, 1], [], []>} : vector<8x128xbf16>, vector<128x384xbf16>, vector<8x384xf32> -> vector<8x384xf32>
    %398 = vector.extract_strided_slice %397 {offsets = [0, 0], sizes = [8, 128], strides = [1, 1]} : vector<8x384xf32> to vector<8x128xf32>
    %399 = vector.extract_strided_slice %397 {offsets = [0, 128], sizes = [8, 128], strides = [1, 1]} : vector<8x384xf32> to vector<8x128xf32>
    %400 = vector.extract_strided_slice %397 {offsets = [0, 256], sizes = [8, 128], strides = [1, 1]} : vector<8x384xf32> to vector<8x128xf32>
    %cst_185 = arith.constant 0.000000e+00 : f32
    %401 = vector.broadcast %cst_185 : f32 to vector<8x128xf32>
    %402 = vector.extract_strided_slice %398 {offsets = [0, 0], sizes = [8, 32], strides = [1, 1]} : vector<8x128xf32> to vector<8x32xf32>
    %403 = vector.extract_strided_slice %399 {offsets = [0, 0], sizes = [8, 32], strides = [1, 1]} : vector<8x128xf32> to vector<8x32xf32>
    %404 = vector.extract_strided_slice %400 {offsets = [0, 0], sizes = [8, 32], strides = [1, 1]} : vector<8x128xf32> to vector<8x32xf32>
    %405 = tpu.transpose %403, [1, 0] : vector<8x32xf32> -> vector<32x8xf32>
    %cst_186 = arith.constant dense<0.000000e+00> : vector<8x8xf32>
    %406 = tpu.matmul %402, %405, %cst_186 {dimension_numbers = #tpu.dot_dimension_numbers<[1], [0], [0], [1], [0, 0, 1, 1], [], []>} : vector<8x32xf32>, vector<32x8xf32>, vector<8x8xf32> -> vector<8x8xf32>
    %cst_187 = arith.constant 0.0883883461 : f32
    %407 = vector.broadcast %cst_187 : f32 to vector<8x8xf32>
    %408 = arith.mulf %406, %407 : vector<8x8xf32>
    %409 = arith.addf %408, %7 : vector<8x8xf32>
    %cst_188 = arith.constant dense<0xFF800000> : vector<8xf32>
    %410 = vector.multi_reduction <maximumf>, %409, %cst_188 [1] : vector<8x8xf32> to vector<8xf32>
    %411 = vector.shape_cast %410 : vector<8xf32> to vector<8x1xf32>
    %412 = vector.broadcast %411 : vector<8x1xf32> to vector<8x8xf32>
    %413 = arith.subf %409, %412 : vector<8x8xf32>
    %414 = math.exp %413 : vector<8x8xf32>
    %cst_189 = arith.constant dense<0.000000e+00> : vector<8xf32>
    %415 = vector.multi_reduction <add>, %414, %cst_189 [1] : vector<8x8xf32> to vector<8xf32>
    %416 = vector.shape_cast %415 : vector<8xf32> to vector<8x1xf32>
    %417 = tpu.reciprocal %416 {approx = true} : vector<8x1xf32> -> vector<8x1xf32>
    %418 = vector.broadcast %417 : vector<8x1xf32> to vector<8x8xf32>
    %419 = arith.mulf %414, %418 : vector<8x8xf32>
    %cst_190 = arith.constant dense<0.000000e+00> : vector<8x32xf32>
    %420 = tpu.matmul %419, %404, %cst_190 {dimension_numbers = #tpu.dot_dimension_numbers<[1], [0], [0], [1], [0, 0, 1, 1], [], []>} : vector<8x8xf32>, vector<8x32xf32>, vector<8x32xf32> -> vector<8x32xf32>
    %421 = arith.truncf %420 : vector<8x32xf32> to vector<8x32xbf16>
    %c2_191 = arith.constant 2 : index
    %c0_192 = arith.constant 0 : index
    %c0_193 = arith.constant 0 : index
    %c0_194 = arith.constant 0 : index
    %422 = vector.load %arg5[%c2_191, %c0_192, %c0_193, %c0_194] : memref<4x4x32x128xbf16, #tpu.memory_space<vmem>>, vector<1x1x32x128xbf16>
    %423 = vector.shape_cast %422 : vector<1x1x32x128xbf16> to vector<32x128xbf16>
    %cst_195 = arith.constant dense<0.000000e+00> : vector<8x128xf32>
    %424 = tpu.matmul %421, %423, %cst_195 {dimension_numbers = #tpu.dot_dimension_numbers<[1], [0], [0], [1], [0, 0, 1, 1], [], []>} : vector<8x32xbf16>, vector<32x128xbf16>, vector<8x128xf32> -> vector<8x128xf32>
    %425 = arith.addf %401, %424 : vector<8x128xf32>
    %426 = vector.extract_strided_slice %398 {offsets = [0, 32], sizes = [8, 32], strides = [1, 1]} : vector<8x128xf32> to vector<8x32xf32>
    %427 = vector.extract_strided_slice %399 {offsets = [0, 32], sizes = [8, 32], strides = [1, 1]} : vector<8x128xf32> to vector<8x32xf32>
    %428 = vector.extract_strided_slice %400 {offsets = [0, 32], sizes = [8, 32], strides = [1, 1]} : vector<8x128xf32> to vector<8x32xf32>
    %429 = tpu.transpose %427, [1, 0] : vector<8x32xf32> -> vector<32x8xf32>
    %cst_196 = arith.constant dense<0.000000e+00> : vector<8x8xf32>
    %430 = tpu.matmul %426, %429, %cst_196 {dimension_numbers = #tpu.dot_dimension_numbers<[1], [0], [0], [1], [0, 0, 1, 1], [], []>} : vector<8x32xf32>, vector<32x8xf32>, vector<8x8xf32> -> vector<8x8xf32>
    %cst_197 = arith.constant 0.0883883461 : f32
    %431 = vector.broadcast %cst_197 : f32 to vector<8x8xf32>
    %432 = arith.mulf %430, %431 : vector<8x8xf32>
    %433 = arith.addf %432, %7 : vector<8x8xf32>
    %cst_198 = arith.constant dense<0xFF800000> : vector<8xf32>
    %434 = vector.multi_reduction <maximumf>, %433, %cst_198 [1] : vector<8x8xf32> to vector<8xf32>
    %435 = vector.shape_cast %434 : vector<8xf32> to vector<8x1xf32>
    %436 = vector.broadcast %435 : vector<8x1xf32> to vector<8x8xf32>
    %437 = arith.subf %433, %436 : vector<8x8xf32>
    %438 = math.exp %437 : vector<8x8xf32>
    %cst_199 = arith.constant dense<0.000000e+00> : vector<8xf32>
    %439 = vector.multi_reduction <add>, %438, %cst_199 [1] : vector<8x8xf32> to vector<8xf32>
    %440 = vector.shape_cast %439 : vector<8xf32> to vector<8x1xf32>
    %441 = tpu.reciprocal %440 {approx = true} : vector<8x1xf32> -> vector<8x1xf32>
    %442 = vector.broadcast %441 : vector<8x1xf32> to vector<8x8xf32>
    %443 = arith.mulf %438, %442 : vector<8x8xf32>
    %cst_200 = arith.constant dense<0.000000e+00> : vector<8x32xf32>
    %444 = tpu.matmul %443, %428, %cst_200 {dimension_numbers = #tpu.dot_dimension_numbers<[1], [0], [0], [1], [0, 0, 1, 1], [], []>} : vector<8x8xf32>, vector<8x32xf32>, vector<8x32xf32> -> vector<8x32xf32>
    %445 = arith.truncf %444 : vector<8x32xf32> to vector<8x32xbf16>
    %c2_201 = arith.constant 2 : index
    %c1_202 = arith.constant 1 : index
    %c0_203 = arith.constant 0 : index
    %c0_204 = arith.constant 0 : index
    %446 = vector.load %arg5[%c2_201, %c1_202, %c0_203, %c0_204] : memref<4x4x32x128xbf16, #tpu.memory_space<vmem>>, vector<1x1x32x128xbf16>
    %447 = vector.shape_cast %446 : vector<1x1x32x128xbf16> to vector<32x128xbf16>
    %cst_205 = arith.constant dense<0.000000e+00> : vector<8x128xf32>
    %448 = tpu.matmul %445, %447, %cst_205 {dimension_numbers = #tpu.dot_dimension_numbers<[1], [0], [0], [1], [0, 0, 1, 1], [], []>} : vector<8x32xbf16>, vector<32x128xbf16>, vector<8x128xf32> -> vector<8x128xf32>
    %449 = arith.addf %425, %448 : vector<8x128xf32>
    %450 = vector.extract_strided_slice %398 {offsets = [0, 64], sizes = [8, 32], strides = [1, 1]} : vector<8x128xf32> to vector<8x32xf32>
    %451 = vector.extract_strided_slice %399 {offsets = [0, 64], sizes = [8, 32], strides = [1, 1]} : vector<8x128xf32> to vector<8x32xf32>
    %452 = vector.extract_strided_slice %400 {offsets = [0, 64], sizes = [8, 32], strides = [1, 1]} : vector<8x128xf32> to vector<8x32xf32>
    %453 = tpu.transpose %451, [1, 0] : vector<8x32xf32> -> vector<32x8xf32>
    %cst_206 = arith.constant dense<0.000000e+00> : vector<8x8xf32>
    %454 = tpu.matmul %450, %453, %cst_206 {dimension_numbers = #tpu.dot_dimension_numbers<[1], [0], [0], [1], [0, 0, 1, 1], [], []>} : vector<8x32xf32>, vector<32x8xf32>, vector<8x8xf32> -> vector<8x8xf32>
    %cst_207 = arith.constant 0.0883883461 : f32
    %455 = vector.broadcast %cst_207 : f32 to vector<8x8xf32>
    %456 = arith.mulf %454, %455 : vector<8x8xf32>
    %457 = arith.addf %456, %7 : vector<8x8xf32>
    %cst_208 = arith.constant dense<0xFF800000> : vector<8xf32>
    %458 = vector.multi_reduction <maximumf>, %457, %cst_208 [1] : vector<8x8xf32> to vector<8xf32>
    %459 = vector.shape_cast %458 : vector<8xf32> to vector<8x1xf32>
    %460 = vector.broadcast %459 : vector<8x1xf32> to vector<8x8xf32>
    %461 = arith.subf %457, %460 : vector<8x8xf32>
    %462 = math.exp %461 : vector<8x8xf32>
    %cst_209 = arith.constant dense<0.000000e+00> : vector<8xf32>
    %463 = vector.multi_reduction <add>, %462, %cst_209 [1] : vector<8x8xf32> to vector<8xf32>
    %464 = vector.shape_cast %463 : vector<8xf32> to vector<8x1xf32>
    %465 = tpu.reciprocal %464 {approx = true} : vector<8x1xf32> -> vector<8x1xf32>
    %466 = vector.broadcast %465 : vector<8x1xf32> to vector<8x8xf32>
    %467 = arith.mulf %462, %466 : vector<8x8xf32>
    %cst_210 = arith.constant dense<0.000000e+00> : vector<8x32xf32>
    %468 = tpu.matmul %467, %452, %cst_210 {dimension_numbers = #tpu.dot_dimension_numbers<[1], [0], [0], [1], [0, 0, 1, 1], [], []>} : vector<8x8xf32>, vector<8x32xf32>, vector<8x32xf32> -> vector<8x32xf32>
    %469 = arith.truncf %468 : vector<8x32xf32> to vector<8x32xbf16>
    %c2_211 = arith.constant 2 : index
    %c2_212 = arith.constant 2 : index
    %c0_213 = arith.constant 0 : index
    %c0_214 = arith.constant 0 : index
    %470 = vector.load %arg5[%c2_211, %c2_212, %c0_213, %c0_214] : memref<4x4x32x128xbf16, #tpu.memory_space<vmem>>, vector<1x1x32x128xbf16>
    %471 = vector.shape_cast %470 : vector<1x1x32x128xbf16> to vector<32x128xbf16>
    %cst_215 = arith.constant dense<0.000000e+00> : vector<8x128xf32>
    %472 = tpu.matmul %469, %471, %cst_215 {dimension_numbers = #tpu.dot_dimension_numbers<[1], [0], [0], [1], [0, 0, 1, 1], [], []>} : vector<8x32xbf16>, vector<32x128xbf16>, vector<8x128xf32> -> vector<8x128xf32>
    %473 = arith.addf %449, %472 : vector<8x128xf32>
    %474 = vector.extract_strided_slice %398 {offsets = [0, 96], sizes = [8, 32], strides = [1, 1]} : vector<8x128xf32> to vector<8x32xf32>
    %475 = vector.extract_strided_slice %399 {offsets = [0, 96], sizes = [8, 32], strides = [1, 1]} : vector<8x128xf32> to vector<8x32xf32>
    %476 = vector.extract_strided_slice %400 {offsets = [0, 96], sizes = [8, 32], strides = [1, 1]} : vector<8x128xf32> to vector<8x32xf32>
    %477 = tpu.transpose %475, [1, 0] : vector<8x32xf32> -> vector<32x8xf32>
    %cst_216 = arith.constant dense<0.000000e+00> : vector<8x8xf32>
    %478 = tpu.matmul %474, %477, %cst_216 {dimension_numbers = #tpu.dot_dimension_numbers<[1], [0], [0], [1], [0, 0, 1, 1], [], []>} : vector<8x32xf32>, vector<32x8xf32>, vector<8x8xf32> -> vector<8x8xf32>
    %cst_217 = arith.constant 0.0883883461 : f32
    %479 = vector.broadcast %cst_217 : f32 to vector<8x8xf32>
    %480 = arith.mulf %478, %479 : vector<8x8xf32>
    %481 = arith.addf %480, %7 : vector<8x8xf32>
    %cst_218 = arith.constant dense<0xFF800000> : vector<8xf32>
    %482 = vector.multi_reduction <maximumf>, %481, %cst_218 [1] : vector<8x8xf32> to vector<8xf32>
    %483 = vector.shape_cast %482 : vector<8xf32> to vector<8x1xf32>
    %484 = vector.broadcast %483 : vector<8x1xf32> to vector<8x8xf32>
    %485 = arith.subf %481, %484 : vector<8x8xf32>
    %486 = math.exp %485 : vector<8x8xf32>
    %cst_219 = arith.constant dense<0.000000e+00> : vector<8xf32>
    %487 = vector.multi_reduction <add>, %486, %cst_219 [1] : vector<8x8xf32> to vector<8xf32>
    %488 = vector.shape_cast %487 : vector<8xf32> to vector<8x1xf32>
    %489 = tpu.reciprocal %488 {approx = true} : vector<8x1xf32> -> vector<8x1xf32>
    %490 = vector.broadcast %489 : vector<8x1xf32> to vector<8x8xf32>
    %491 = arith.mulf %486, %490 : vector<8x8xf32>
    %cst_220 = arith.constant dense<0.000000e+00> : vector<8x32xf32>
    %492 = tpu.matmul %491, %476, %cst_220 {dimension_numbers = #tpu.dot_dimension_numbers<[1], [0], [0], [1], [0, 0, 1, 1], [], []>} : vector<8x8xf32>, vector<8x32xf32>, vector<8x32xf32> -> vector<8x32xf32>
    %493 = arith.truncf %492 : vector<8x32xf32> to vector<8x32xbf16>
    %c2_221 = arith.constant 2 : index
    %c3_222 = arith.constant 3 : index
    %c0_223 = arith.constant 0 : index
    %c0_224 = arith.constant 0 : index
    %494 = vector.load %arg5[%c2_221, %c3_222, %c0_223, %c0_224] : memref<4x4x32x128xbf16, #tpu.memory_space<vmem>>, vector<1x1x32x128xbf16>
    %495 = vector.shape_cast %494 : vector<1x1x32x128xbf16> to vector<32x128xbf16>
    %cst_225 = arith.constant dense<0.000000e+00> : vector<8x128xf32>
    %496 = tpu.matmul %493, %495, %cst_225 {dimension_numbers = #tpu.dot_dimension_numbers<[1], [0], [0], [1], [0, 0, 1, 1], [], []>} : vector<8x32xbf16>, vector<32x128xbf16>, vector<8x128xf32> -> vector<8x128xf32>
    %497 = arith.addf %473, %496 : vector<8x128xf32>
    %498 = arith.addf %367, %497 : vector<8x128xf32>
    %c2_226 = arith.constant 2 : index
    %c0_227 = arith.constant 0 : index
    %c0_228 = arith.constant 0 : index
    %499 = vector.load %arg6[%c2_226, %c0_227, %c0_228] : memref<4x1x128xf32, #tpu.memory_space<vmem>>, vector<1x1x128xf32>
    %500 = vector.shape_cast %499 : vector<1x1x128xf32> to vector<1x128xf32>
    %501 = vector.broadcast %500 : vector<1x128xf32> to vector<8x128xf32>
    %502 = arith.addf %498, %501 : vector<8x128xf32>
    %c2_229 = arith.constant 2 : index
    %c0_230 = arith.constant 0 : index
    %c0_231 = arith.constant 0 : index
    %503 = vector.load %arg7[%c2_229, %c0_230, %c0_231] : memref<4x1x128xf32, #tpu.memory_space<vmem>>, vector<1x1x128xf32>
    %504 = vector.shape_cast %503 : vector<1x1x128xf32> to vector<1x128xf32>
    %c2_232 = arith.constant 2 : index
    %c0_233 = arith.constant 0 : index
    %c0_234 = arith.constant 0 : index
    %505 = vector.load %arg8[%c2_232, %c0_233, %c0_234] : memref<4x1x128xf32, #tpu.memory_space<vmem>>, vector<1x1x128xf32>
    %506 = vector.shape_cast %505 : vector<1x1x128xf32> to vector<1x128xf32>
    %cst_235 = arith.constant dense<0.000000e+00> : vector<8xf32>
    %507 = vector.multi_reduction <add>, %502, %cst_235 [1] : vector<8x128xf32> to vector<8xf32>
    %508 = vector.shape_cast %507 : vector<8xf32> to vector<8x1xf32>
    %cst_236 = arith.constant 1.280000e+02 : f32
    %509 = vector.broadcast %cst_236 : f32 to vector<8x1xf32>
    %510 = arith.divf %508, %509 : vector<8x1xf32>
    %511 = vector.broadcast %510 : vector<8x1xf32> to vector<8x128xf32>
    %512 = arith.subf %502, %511 : vector<8x128xf32>
    %513 = arith.mulf %512, %512 : vector<8x128xf32>
    %cst_237 = arith.constant dense<0.000000e+00> : vector<8xf32>
    %514 = vector.multi_reduction <add>, %513, %cst_237 [1] : vector<8x128xf32> to vector<8xf32>
    %515 = vector.shape_cast %514 : vector<8xf32> to vector<8x1xf32>
    %cst_238 = arith.constant 1.280000e+02 : f32
    %516 = vector.broadcast %cst_238 : f32 to vector<8x1xf32>
    %517 = arith.divf %515, %516 : vector<8x1xf32>
    %518 = vector.broadcast %510 : vector<8x1xf32> to vector<8x128xf32>
    %519 = arith.subf %502, %518 : vector<8x128xf32>
    %cst_239 = arith.constant 9.99999974E-6 : f32
    %520 = vector.broadcast %cst_239 : f32 to vector<8x1xf32>
    %521 = arith.addf %517, %520 : vector<8x1xf32>
    %522 = math.rsqrt %521 : vector<8x1xf32>
    %523 = vector.broadcast %522 : vector<8x1xf32> to vector<8x128xf32>
    %524 = arith.mulf %519, %523 : vector<8x128xf32>
    %525 = vector.broadcast %504 : vector<1x128xf32> to vector<8x128xf32>
    %526 = arith.mulf %524, %525 : vector<8x128xf32>
    %527 = vector.broadcast %506 : vector<1x128xf32> to vector<8x128xf32>
    %528 = arith.addf %526, %527 : vector<8x128xf32>
    %529 = arith.truncf %528 : vector<8x128xf32> to vector<8x128xbf16>
    %c2_240 = arith.constant 2 : index
    %c0_241 = arith.constant 0 : index
    %c0_242 = arith.constant 0 : index
    %530 = vector.load %arg9[%c2_240, %c0_241, %c0_242] : memref<4x128x512xbf16, #tpu.memory_space<vmem>>, vector<1x128x512xbf16>
    %531 = vector.shape_cast %530 : vector<1x128x512xbf16> to vector<128x512xbf16>
    %cst_243 = arith.constant dense<0.000000e+00> : vector<8x512xf32>
    %532 = tpu.matmul %529, %531, %cst_243 {dimension_numbers = #tpu.dot_dimension_numbers<[1], [0], [0], [1], [0, 0, 1, 1], [], []>} : vector<8x128xbf16>, vector<128x512xbf16>, vector<8x512xf32> -> vector<8x512xf32>
    %c2_244 = arith.constant 2 : index
    %c0_245 = arith.constant 0 : index
    %c0_246 = arith.constant 0 : index
    %533 = vector.load %arg10[%c2_244, %c0_245, %c0_246] : memref<4x1x512xf32, #tpu.memory_space<vmem>>, vector<1x1x512xf32>
    %534 = vector.shape_cast %533 : vector<1x1x512xf32> to vector<1x512xf32>
    %535 = vector.broadcast %534 : vector<1x512xf32> to vector<8x512xf32>
    %536 = arith.addf %532, %535 : vector<8x512xf32>
    %cst_247 = arith.constant 0.000000e+00 : f32
    %537 = vector.broadcast %cst_247 : f32 to vector<8x512xf32>
    %538 = arith.maximumf %536, %537 : vector<8x512xf32>
    %539 = arith.truncf %538 : vector<8x512xf32> to vector<8x512xbf16>
    %c2_248 = arith.constant 2 : index
    %c0_249 = arith.constant 0 : index
    %c0_250 = arith.constant 0 : index
    %540 = vector.load %arg11[%c2_248, %c0_249, %c0_250] : memref<4x512x128xbf16, #tpu.memory_space<vmem>>, vector<1x512x128xbf16>
    %541 = vector.shape_cast %540 : vector<1x512x128xbf16> to vector<512x128xbf16>
    %cst_251 = arith.constant dense<0.000000e+00> : vector<8x128xf32>
    %542 = tpu.matmul %539, %541, %cst_251 {dimension_numbers = #tpu.dot_dimension_numbers<[1], [0], [0], [1], [0, 0, 1, 1], [], []>} : vector<8x512xbf16>, vector<512x128xbf16>, vector<8x128xf32> -> vector<8x128xf32>
    %c2_252 = arith.constant 2 : index
    %c0_253 = arith.constant 0 : index
    %c0_254 = arith.constant 0 : index
    %543 = vector.load %arg12[%c2_252, %c0_253, %c0_254] : memref<4x1x128xf32, #tpu.memory_space<vmem>>, vector<1x1x128xf32>
    %544 = vector.shape_cast %543 : vector<1x1x128xf32> to vector<1x128xf32>
    %545 = vector.broadcast %544 : vector<1x128xf32> to vector<8x128xf32>
    %546 = arith.addf %542, %545 : vector<8x128xf32>
    %547 = arith.addf %502, %546 : vector<8x128xf32>
    %c3_255 = arith.constant 3 : index
    %c0_256 = arith.constant 0 : index
    %c0_257 = arith.constant 0 : index
    %548 = vector.load %arg2[%c3_255, %c0_256, %c0_257] : memref<4x1x128xf32, #tpu.memory_space<vmem>>, vector<1x1x128xf32>
    %549 = vector.shape_cast %548 : vector<1x1x128xf32> to vector<1x128xf32>
    %c3_258 = arith.constant 3 : index
    %c0_259 = arith.constant 0 : index
    %c0_260 = arith.constant 0 : index
    %550 = vector.load %arg3[%c3_258, %c0_259, %c0_260] : memref<4x1x128xf32, #tpu.memory_space<vmem>>, vector<1x1x128xf32>
    %551 = vector.shape_cast %550 : vector<1x1x128xf32> to vector<1x128xf32>
    %cst_261 = arith.constant dense<0.000000e+00> : vector<8xf32>
    %552 = vector.multi_reduction <add>, %547, %cst_261 [1] : vector<8x128xf32> to vector<8xf32>
    %553 = vector.shape_cast %552 : vector<8xf32> to vector<8x1xf32>
    %cst_262 = arith.constant 1.280000e+02 : f32
    %554 = vector.broadcast %cst_262 : f32 to vector<8x1xf32>
    %555 = arith.divf %553, %554 : vector<8x1xf32>
    %556 = vector.broadcast %555 : vector<8x1xf32> to vector<8x128xf32>
    %557 = arith.subf %547, %556 : vector<8x128xf32>
    %558 = arith.mulf %557, %557 : vector<8x128xf32>
    %cst_263 = arith.constant dense<0.000000e+00> : vector<8xf32>
    %559 = vector.multi_reduction <add>, %558, %cst_263 [1] : vector<8x128xf32> to vector<8xf32>
    %560 = vector.shape_cast %559 : vector<8xf32> to vector<8x1xf32>
    %cst_264 = arith.constant 1.280000e+02 : f32
    %561 = vector.broadcast %cst_264 : f32 to vector<8x1xf32>
    %562 = arith.divf %560, %561 : vector<8x1xf32>
    %563 = vector.broadcast %555 : vector<8x1xf32> to vector<8x128xf32>
    %564 = arith.subf %547, %563 : vector<8x128xf32>
    %cst_265 = arith.constant 9.99999974E-6 : f32
    %565 = vector.broadcast %cst_265 : f32 to vector<8x1xf32>
    %566 = arith.addf %562, %565 : vector<8x1xf32>
    %567 = math.rsqrt %566 : vector<8x1xf32>
    %568 = vector.broadcast %567 : vector<8x1xf32> to vector<8x128xf32>
    %569 = arith.mulf %564, %568 : vector<8x128xf32>
    %570 = vector.broadcast %549 : vector<1x128xf32> to vector<8x128xf32>
    %571 = arith.mulf %569, %570 : vector<8x128xf32>
    %572 = vector.broadcast %551 : vector<1x128xf32> to vector<8x128xf32>
    %573 = arith.addf %571, %572 : vector<8x128xf32>
    %574 = arith.truncf %573 : vector<8x128xf32> to vector<8x128xbf16>
    %c3_266 = arith.constant 3 : index
    %c0_267 = arith.constant 0 : index
    %c0_268 = arith.constant 0 : index
    %575 = vector.load %arg4[%c3_266, %c0_267, %c0_268] : memref<4x128x384xbf16, #tpu.memory_space<vmem>>, vector<1x128x384xbf16>
    %576 = vector.shape_cast %575 : vector<1x128x384xbf16> to vector<128x384xbf16>
    %cst_269 = arith.constant dense<0.000000e+00> : vector<8x384xf32>
    %577 = tpu.matmul %574, %576, %cst_269 {dimension_numbers = #tpu.dot_dimension_numbers<[1], [0], [0], [1], [0, 0, 1, 1], [], []>} : vector<8x128xbf16>, vector<128x384xbf16>, vector<8x384xf32> -> vector<8x384xf32>
    %578 = vector.extract_strided_slice %577 {offsets = [0, 0], sizes = [8, 128], strides = [1, 1]} : vector<8x384xf32> to vector<8x128xf32>
    %579 = vector.extract_strided_slice %577 {offsets = [0, 128], sizes = [8, 128], strides = [1, 1]} : vector<8x384xf32> to vector<8x128xf32>
    %580 = vector.extract_strided_slice %577 {offsets = [0, 256], sizes = [8, 128], strides = [1, 1]} : vector<8x384xf32> to vector<8x128xf32>
    %cst_270 = arith.constant 0.000000e+00 : f32
    %581 = vector.broadcast %cst_270 : f32 to vector<8x128xf32>
    %582 = vector.extract_strided_slice %578 {offsets = [0, 0], sizes = [8, 32], strides = [1, 1]} : vector<8x128xf32> to vector<8x32xf32>
    %583 = vector.extract_strided_slice %579 {offsets = [0, 0], sizes = [8, 32], strides = [1, 1]} : vector<8x128xf32> to vector<8x32xf32>
    %584 = vector.extract_strided_slice %580 {offsets = [0, 0], sizes = [8, 32], strides = [1, 1]} : vector<8x128xf32> to vector<8x32xf32>
    %585 = tpu.transpose %583, [1, 0] : vector<8x32xf32> -> vector<32x8xf32>
    %cst_271 = arith.constant dense<0.000000e+00> : vector<8x8xf32>
    %586 = tpu.matmul %582, %585, %cst_271 {dimension_numbers = #tpu.dot_dimension_numbers<[1], [0], [0], [1], [0, 0, 1, 1], [], []>} : vector<8x32xf32>, vector<32x8xf32>, vector<8x8xf32> -> vector<8x8xf32>
    %cst_272 = arith.constant 0.0883883461 : f32
    %587 = vector.broadcast %cst_272 : f32 to vector<8x8xf32>
    %588 = arith.mulf %586, %587 : vector<8x8xf32>
    %589 = arith.addf %588, %7 : vector<8x8xf32>
    %cst_273 = arith.constant dense<0xFF800000> : vector<8xf32>
    %590 = vector.multi_reduction <maximumf>, %589, %cst_273 [1] : vector<8x8xf32> to vector<8xf32>
    %591 = vector.shape_cast %590 : vector<8xf32> to vector<8x1xf32>
    %592 = vector.broadcast %591 : vector<8x1xf32> to vector<8x8xf32>
    %593 = arith.subf %589, %592 : vector<8x8xf32>
    %594 = math.exp %593 : vector<8x8xf32>
    %cst_274 = arith.constant dense<0.000000e+00> : vector<8xf32>
    %595 = vector.multi_reduction <add>, %594, %cst_274 [1] : vector<8x8xf32> to vector<8xf32>
    %596 = vector.shape_cast %595 : vector<8xf32> to vector<8x1xf32>
    %597 = tpu.reciprocal %596 {approx = true} : vector<8x1xf32> -> vector<8x1xf32>
    %598 = vector.broadcast %597 : vector<8x1xf32> to vector<8x8xf32>
    %599 = arith.mulf %594, %598 : vector<8x8xf32>
    %cst_275 = arith.constant dense<0.000000e+00> : vector<8x32xf32>
    %600 = tpu.matmul %599, %584, %cst_275 {dimension_numbers = #tpu.dot_dimension_numbers<[1], [0], [0], [1], [0, 0, 1, 1], [], []>} : vector<8x8xf32>, vector<8x32xf32>, vector<8x32xf32> -> vector<8x32xf32>
    %601 = arith.truncf %600 : vector<8x32xf32> to vector<8x32xbf16>
    %c3_276 = arith.constant 3 : index
    %c0_277 = arith.constant 0 : index
    %c0_278 = arith.constant 0 : index
    %c0_279 = arith.constant 0 : index
    %602 = vector.load %arg5[%c3_276, %c0_277, %c0_278, %c0_279] : memref<4x4x32x128xbf16, #tpu.memory_space<vmem>>, vector<1x1x32x128xbf16>
    %603 = vector.shape_cast %602 : vector<1x1x32x128xbf16> to vector<32x128xbf16>
    %cst_280 = arith.constant dense<0.000000e+00> : vector<8x128xf32>
    %604 = tpu.matmul %601, %603, %cst_280 {dimension_numbers = #tpu.dot_dimension_numbers<[1], [0], [0], [1], [0, 0, 1, 1], [], []>} : vector<8x32xbf16>, vector<32x128xbf16>, vector<8x128xf32> -> vector<8x128xf32>
    %605 = arith.addf %581, %604 : vector<8x128xf32>
    %606 = vector.extract_strided_slice %578 {offsets = [0, 32], sizes = [8, 32], strides = [1, 1]} : vector<8x128xf32> to vector<8x32xf32>
    %607 = vector.extract_strided_slice %579 {offsets = [0, 32], sizes = [8, 32], strides = [1, 1]} : vector<8x128xf32> to vector<8x32xf32>
    %608 = vector.extract_strided_slice %580 {offsets = [0, 32], sizes = [8, 32], strides = [1, 1]} : vector<8x128xf32> to vector<8x32xf32>
    %609 = tpu.transpose %607, [1, 0] : vector<8x32xf32> -> vector<32x8xf32>
    %cst_281 = arith.constant dense<0.000000e+00> : vector<8x8xf32>
    %610 = tpu.matmul %606, %609, %cst_281 {dimension_numbers = #tpu.dot_dimension_numbers<[1], [0], [0], [1], [0, 0, 1, 1], [], []>} : vector<8x32xf32>, vector<32x8xf32>, vector<8x8xf32> -> vector<8x8xf32>
    %cst_282 = arith.constant 0.0883883461 : f32
    %611 = vector.broadcast %cst_282 : f32 to vector<8x8xf32>
    %612 = arith.mulf %610, %611 : vector<8x8xf32>
    %613 = arith.addf %612, %7 : vector<8x8xf32>
    %cst_283 = arith.constant dense<0xFF800000> : vector<8xf32>
    %614 = vector.multi_reduction <maximumf>, %613, %cst_283 [1] : vector<8x8xf32> to vector<8xf32>
    %615 = vector.shape_cast %614 : vector<8xf32> to vector<8x1xf32>
    %616 = vector.broadcast %615 : vector<8x1xf32> to vector<8x8xf32>
    %617 = arith.subf %613, %616 : vector<8x8xf32>
    %618 = math.exp %617 : vector<8x8xf32>
    %cst_284 = arith.constant dense<0.000000e+00> : vector<8xf32>
    %619 = vector.multi_reduction <add>, %618, %cst_284 [1] : vector<8x8xf32> to vector<8xf32>
    %620 = vector.shape_cast %619 : vector<8xf32> to vector<8x1xf32>
    %621 = tpu.reciprocal %620 {approx = true} : vector<8x1xf32> -> vector<8x1xf32>
    %622 = vector.broadcast %621 : vector<8x1xf32> to vector<8x8xf32>
    %623 = arith.mulf %618, %622 : vector<8x8xf32>
    %cst_285 = arith.constant dense<0.000000e+00> : vector<8x32xf32>
    %624 = tpu.matmul %623, %608, %cst_285 {dimension_numbers = #tpu.dot_dimension_numbers<[1], [0], [0], [1], [0, 0, 1, 1], [], []>} : vector<8x8xf32>, vector<8x32xf32>, vector<8x32xf32> -> vector<8x32xf32>
    %625 = arith.truncf %624 : vector<8x32xf32> to vector<8x32xbf16>
    %c3_286 = arith.constant 3 : index
    %c1_287 = arith.constant 1 : index
    %c0_288 = arith.constant 0 : index
    %c0_289 = arith.constant 0 : index
    %626 = vector.load %arg5[%c3_286, %c1_287, %c0_288, %c0_289] : memref<4x4x32x128xbf16, #tpu.memory_space<vmem>>, vector<1x1x32x128xbf16>
    %627 = vector.shape_cast %626 : vector<1x1x32x128xbf16> to vector<32x128xbf16>
    %cst_290 = arith.constant dense<0.000000e+00> : vector<8x128xf32>
    %628 = tpu.matmul %625, %627, %cst_290 {dimension_numbers = #tpu.dot_dimension_numbers<[1], [0], [0], [1], [0, 0, 1, 1], [], []>} : vector<8x32xbf16>, vector<32x128xbf16>, vector<8x128xf32> -> vector<8x128xf32>
    %629 = arith.addf %605, %628 : vector<8x128xf32>
    %630 = vector.extract_strided_slice %578 {offsets = [0, 64], sizes = [8, 32], strides = [1, 1]} : vector<8x128xf32> to vector<8x32xf32>
    %631 = vector.extract_strided_slice %579 {offsets = [0, 64], sizes = [8, 32], strides = [1, 1]} : vector<8x128xf32> to vector<8x32xf32>
    %632 = vector.extract_strided_slice %580 {offsets = [0, 64], sizes = [8, 32], strides = [1, 1]} : vector<8x128xf32> to vector<8x32xf32>
    %633 = tpu.transpose %631, [1, 0] : vector<8x32xf32> -> vector<32x8xf32>
    %cst_291 = arith.constant dense<0.000000e+00> : vector<8x8xf32>
    %634 = tpu.matmul %630, %633, %cst_291 {dimension_numbers = #tpu.dot_dimension_numbers<[1], [0], [0], [1], [0, 0, 1, 1], [], []>} : vector<8x32xf32>, vector<32x8xf32>, vector<8x8xf32> -> vector<8x8xf32>
    %cst_292 = arith.constant 0.0883883461 : f32
    %635 = vector.broadcast %cst_292 : f32 to vector<8x8xf32>
    %636 = arith.mulf %634, %635 : vector<8x8xf32>
    %637 = arith.addf %636, %7 : vector<8x8xf32>
    %cst_293 = arith.constant dense<0xFF800000> : vector<8xf32>
    %638 = vector.multi_reduction <maximumf>, %637, %cst_293 [1] : vector<8x8xf32> to vector<8xf32>
    %639 = vector.shape_cast %638 : vector<8xf32> to vector<8x1xf32>
    %640 = vector.broadcast %639 : vector<8x1xf32> to vector<8x8xf32>
    %641 = arith.subf %637, %640 : vector<8x8xf32>
    %642 = math.exp %641 : vector<8x8xf32>
    %cst_294 = arith.constant dense<0.000000e+00> : vector<8xf32>
    %643 = vector.multi_reduction <add>, %642, %cst_294 [1] : vector<8x8xf32> to vector<8xf32>
    %644 = vector.shape_cast %643 : vector<8xf32> to vector<8x1xf32>
    %645 = tpu.reciprocal %644 {approx = true} : vector<8x1xf32> -> vector<8x1xf32>
    %646 = vector.broadcast %645 : vector<8x1xf32> to vector<8x8xf32>
    %647 = arith.mulf %642, %646 : vector<8x8xf32>
    %cst_295 = arith.constant dense<0.000000e+00> : vector<8x32xf32>
    %648 = tpu.matmul %647, %632, %cst_295 {dimension_numbers = #tpu.dot_dimension_numbers<[1], [0], [0], [1], [0, 0, 1, 1], [], []>} : vector<8x8xf32>, vector<8x32xf32>, vector<8x32xf32> -> vector<8x32xf32>
    %649 = arith.truncf %648 : vector<8x32xf32> to vector<8x32xbf16>
    %c3_296 = arith.constant 3 : index
    %c2_297 = arith.constant 2 : index
    %c0_298 = arith.constant 0 : index
    %c0_299 = arith.constant 0 : index
    %650 = vector.load %arg5[%c3_296, %c2_297, %c0_298, %c0_299] : memref<4x4x32x128xbf16, #tpu.memory_space<vmem>>, vector<1x1x32x128xbf16>
    %651 = vector.shape_cast %650 : vector<1x1x32x128xbf16> to vector<32x128xbf16>
    %cst_300 = arith.constant dense<0.000000e+00> : vector<8x128xf32>
    %652 = tpu.matmul %649, %651, %cst_300 {dimension_numbers = #tpu.dot_dimension_numbers<[1], [0], [0], [1], [0, 0, 1, 1], [], []>} : vector<8x32xbf16>, vector<32x128xbf16>, vector<8x128xf32> -> vector<8x128xf32>
    %653 = arith.addf %629, %652 : vector<8x128xf32>
    %654 = vector.extract_strided_slice %578 {offsets = [0, 96], sizes = [8, 32], strides = [1, 1]} : vector<8x128xf32> to vector<8x32xf32>
    %655 = vector.extract_strided_slice %579 {offsets = [0, 96], sizes = [8, 32], strides = [1, 1]} : vector<8x128xf32> to vector<8x32xf32>
    %656 = vector.extract_strided_slice %580 {offsets = [0, 96], sizes = [8, 32], strides = [1, 1]} : vector<8x128xf32> to vector<8x32xf32>
    %657 = tpu.transpose %655, [1, 0] : vector<8x32xf32> -> vector<32x8xf32>
    %cst_301 = arith.constant dense<0.000000e+00> : vector<8x8xf32>
    %658 = tpu.matmul %654, %657, %cst_301 {dimension_numbers = #tpu.dot_dimension_numbers<[1], [0], [0], [1], [0, 0, 1, 1], [], []>} : vector<8x32xf32>, vector<32x8xf32>, vector<8x8xf32> -> vector<8x8xf32>
    %cst_302 = arith.constant 0.0883883461 : f32
    %659 = vector.broadcast %cst_302 : f32 to vector<8x8xf32>
    %660 = arith.mulf %658, %659 : vector<8x8xf32>
    %661 = arith.addf %660, %7 : vector<8x8xf32>
    %cst_303 = arith.constant dense<0xFF800000> : vector<8xf32>
    %662 = vector.multi_reduction <maximumf>, %661, %cst_303 [1] : vector<8x8xf32> to vector<8xf32>
    %663 = vector.shape_cast %662 : vector<8xf32> to vector<8x1xf32>
    %664 = vector.broadcast %663 : vector<8x1xf32> to vector<8x8xf32>
    %665 = arith.subf %661, %664 : vector<8x8xf32>
    %666 = math.exp %665 : vector<8x8xf32>
    %cst_304 = arith.constant dense<0.000000e+00> : vector<8xf32>
    %667 = vector.multi_reduction <add>, %666, %cst_304 [1] : vector<8x8xf32> to vector<8xf32>
    %668 = vector.shape_cast %667 : vector<8xf32> to vector<8x1xf32>
    %669 = tpu.reciprocal %668 {approx = true} : vector<8x1xf32> -> vector<8x1xf32>
    %670 = vector.broadcast %669 : vector<8x1xf32> to vector<8x8xf32>
    %671 = arith.mulf %666, %670 : vector<8x8xf32>
    %cst_305 = arith.constant dense<0.000000e+00> : vector<8x32xf32>
    %672 = tpu.matmul %671, %656, %cst_305 {dimension_numbers = #tpu.dot_dimension_numbers<[1], [0], [0], [1], [0, 0, 1, 1], [], []>} : vector<8x8xf32>, vector<8x32xf32>, vector<8x32xf32> -> vector<8x32xf32>
    %673 = arith.truncf %672 : vector<8x32xf32> to vector<8x32xbf16>
    %c3_306 = arith.constant 3 : index
    %c3_307 = arith.constant 3 : index
    %c0_308 = arith.constant 0 : index
    %c0_309 = arith.constant 0 : index
    %674 = vector.load %arg5[%c3_306, %c3_307, %c0_308, %c0_309] : memref<4x4x32x128xbf16, #tpu.memory_space<vmem>>, vector<1x1x32x128xbf16>
    %675 = vector.shape_cast %674 : vector<1x1x32x128xbf16> to vector<32x128xbf16>
    %cst_310 = arith.constant dense<0.000000e+00> : vector<8x128xf32>
    %676 = tpu.matmul %673, %675, %cst_310 {dimension_numbers = #tpu.dot_dimension_numbers<[1], [0], [0], [1], [0, 0, 1, 1], [], []>} : vector<8x32xbf16>, vector<32x128xbf16>, vector<8x128xf32> -> vector<8x128xf32>
    %677 = arith.addf %653, %676 : vector<8x128xf32>
    %678 = arith.addf %547, %677 : vector<8x128xf32>
    %c3_311 = arith.constant 3 : index
    %c0_312 = arith.constant 0 : index
    %c0_313 = arith.constant 0 : index
    %679 = vector.load %arg6[%c3_311, %c0_312, %c0_313] : memref<4x1x128xf32, #tpu.memory_space<vmem>>, vector<1x1x128xf32>
    %680 = vector.shape_cast %679 : vector<1x1x128xf32> to vector<1x128xf32>
    %681 = vector.broadcast %680 : vector<1x128xf32> to vector<8x128xf32>
    %682 = arith.addf %678, %681 : vector<8x128xf32>
    %c3_314 = arith.constant 3 : index
    %c0_315 = arith.constant 0 : index
    %c0_316 = arith.constant 0 : index
    %683 = vector.load %arg7[%c3_314, %c0_315, %c0_316] : memref<4x1x128xf32, #tpu.memory_space<vmem>>, vector<1x1x128xf32>
    %684 = vector.shape_cast %683 : vector<1x1x128xf32> to vector<1x128xf32>
    %c3_317 = arith.constant 3 : index
    %c0_318 = arith.constant 0 : index
    %c0_319 = arith.constant 0 : index
    %685 = vector.load %arg8[%c3_317, %c0_318, %c0_319] : memref<4x1x128xf32, #tpu.memory_space<vmem>>, vector<1x1x128xf32>
    %686 = vector.shape_cast %685 : vector<1x1x128xf32> to vector<1x128xf32>
    %cst_320 = arith.constant dense<0.000000e+00> : vector<8xf32>
    %687 = vector.multi_reduction <add>, %682, %cst_320 [1] : vector<8x128xf32> to vector<8xf32>
    %688 = vector.shape_cast %687 : vector<8xf32> to vector<8x1xf32>
    %cst_321 = arith.constant 1.280000e+02 : f32
    %689 = vector.broadcast %cst_321 : f32 to vector<8x1xf32>
    %690 = arith.divf %688, %689 : vector<8x1xf32>
    %691 = vector.broadcast %690 : vector<8x1xf32> to vector<8x128xf32>
    %692 = arith.subf %682, %691 : vector<8x128xf32>
    %693 = arith.mulf %692, %692 : vector<8x128xf32>
    %cst_322 = arith.constant dense<0.000000e+00> : vector<8xf32>
    %694 = vector.multi_reduction <add>, %693, %cst_322 [1] : vector<8x128xf32> to vector<8xf32>
    %695 = vector.shape_cast %694 : vector<8xf32> to vector<8x1xf32>
    %cst_323 = arith.constant 1.280000e+02 : f32
    %696 = vector.broadcast %cst_323 : f32 to vector<8x1xf32>
    %697 = arith.divf %695, %696 : vector<8x1xf32>
    %698 = vector.broadcast %690 : vector<8x1xf32> to vector<8x128xf32>
    %699 = arith.subf %682, %698 : vector<8x128xf32>
    %cst_324 = arith.constant 9.99999974E-6 : f32
    %700 = vector.broadcast %cst_324 : f32 to vector<8x1xf32>
    %701 = arith.addf %697, %700 : vector<8x1xf32>
    %702 = math.rsqrt %701 : vector<8x1xf32>
    %703 = vector.broadcast %702 : vector<8x1xf32> to vector<8x128xf32>
    %704 = arith.mulf %699, %703 : vector<8x128xf32>
    %705 = vector.broadcast %684 : vector<1x128xf32> to vector<8x128xf32>
    %706 = arith.mulf %704, %705 : vector<8x128xf32>
    %707 = vector.broadcast %686 : vector<1x128xf32> to vector<8x128xf32>
    %708 = arith.addf %706, %707 : vector<8x128xf32>
    %709 = arith.truncf %708 : vector<8x128xf32> to vector<8x128xbf16>
    %c3_325 = arith.constant 3 : index
    %c0_326 = arith.constant 0 : index
    %c0_327 = arith.constant 0 : index
    %710 = vector.load %arg9[%c3_325, %c0_326, %c0_327] : memref<4x128x512xbf16, #tpu.memory_space<vmem>>, vector<1x128x512xbf16>
    %711 = vector.shape_cast %710 : vector<1x128x512xbf16> to vector<128x512xbf16>
    %cst_328 = arith.constant dense<0.000000e+00> : vector<8x512xf32>
    %712 = tpu.matmul %709, %711, %cst_328 {dimension_numbers = #tpu.dot_dimension_numbers<[1], [0], [0], [1], [0, 0, 1, 1], [], []>} : vector<8x128xbf16>, vector<128x512xbf16>, vector<8x512xf32> -> vector<8x512xf32>
    %c3_329 = arith.constant 3 : index
    %c0_330 = arith.constant 0 : index
    %c0_331 = arith.constant 0 : index
    %713 = vector.load %arg10[%c3_329, %c0_330, %c0_331] : memref<4x1x512xf32, #tpu.memory_space<vmem>>, vector<1x1x512xf32>
    %714 = vector.shape_cast %713 : vector<1x1x512xf32> to vector<1x512xf32>
    %715 = vector.broadcast %714 : vector<1x512xf32> to vector<8x512xf32>
    %716 = arith.addf %712, %715 : vector<8x512xf32>
    %cst_332 = arith.constant 0.000000e+00 : f32
    %717 = vector.broadcast %cst_332 : f32 to vector<8x512xf32>
    %718 = arith.maximumf %716, %717 : vector<8x512xf32>
    %719 = arith.truncf %718 : vector<8x512xf32> to vector<8x512xbf16>
    %c3_333 = arith.constant 3 : index
    %c0_334 = arith.constant 0 : index
    %c0_335 = arith.constant 0 : index
    %720 = vector.load %arg11[%c3_333, %c0_334, %c0_335] : memref<4x512x128xbf16, #tpu.memory_space<vmem>>, vector<1x512x128xbf16>
    %721 = vector.shape_cast %720 : vector<1x512x128xbf16> to vector<512x128xbf16>
    %cst_336 = arith.constant dense<0.000000e+00> : vector<8x128xf32>
    %722 = tpu.matmul %719, %721, %cst_336 {dimension_numbers = #tpu.dot_dimension_numbers<[1], [0], [0], [1], [0, 0, 1, 1], [], []>} : vector<8x512xbf16>, vector<512x128xbf16>, vector<8x128xf32> -> vector<8x128xf32>
    %c3_337 = arith.constant 3 : index
    %c0_338 = arith.constant 0 : index
    %c0_339 = arith.constant 0 : index
    %723 = vector.load %arg12[%c3_337, %c0_338, %c0_339] : memref<4x1x128xf32, #tpu.memory_space<vmem>>, vector<1x1x128xf32>
    %724 = vector.shape_cast %723 : vector<1x1x128xf32> to vector<1x128xf32>
    %725 = vector.broadcast %724 : vector<1x128xf32> to vector<8x128xf32>
    %726 = arith.addf %722, %725 : vector<8x128xf32>
    %727 = arith.addf %682, %726 : vector<8x128xf32>
    %c0_340 = arith.constant 0 : index
    %c0_341 = arith.constant 0 : index
    %728 = vector.load %arg13[%c0_340, %c0_341] : memref<1x128xf32, #tpu.memory_space<vmem>>, vector<1x128xf32>
    %c0_342 = arith.constant 0 : index
    %c0_343 = arith.constant 0 : index
    %729 = vector.load %arg14[%c0_342, %c0_343] : memref<1x128xf32, #tpu.memory_space<vmem>>, vector<1x128xf32>
    %cst_344 = arith.constant dense<0.000000e+00> : vector<8xf32>
    %730 = vector.multi_reduction <add>, %727, %cst_344 [1] : vector<8x128xf32> to vector<8xf32>
    %731 = vector.shape_cast %730 : vector<8xf32> to vector<8x1xf32>
    %cst_345 = arith.constant 1.280000e+02 : f32
    %732 = vector.broadcast %cst_345 : f32 to vector<8x1xf32>
    %733 = arith.divf %731, %732 : vector<8x1xf32>
    %734 = vector.broadcast %733 : vector<8x1xf32> to vector<8x128xf32>
    %735 = arith.subf %727, %734 : vector<8x128xf32>
    %736 = arith.mulf %735, %735 : vector<8x128xf32>
    %cst_346 = arith.constant dense<0.000000e+00> : vector<8xf32>
    %737 = vector.multi_reduction <add>, %736, %cst_346 [1] : vector<8x128xf32> to vector<8xf32>
    %738 = vector.shape_cast %737 : vector<8xf32> to vector<8x1xf32>
    %cst_347 = arith.constant 1.280000e+02 : f32
    %739 = vector.broadcast %cst_347 : f32 to vector<8x1xf32>
    %740 = arith.divf %738, %739 : vector<8x1xf32>
    %741 = vector.broadcast %733 : vector<8x1xf32> to vector<8x128xf32>
    %742 = arith.subf %727, %741 : vector<8x128xf32>
    %cst_348 = arith.constant 9.99999974E-6 : f32
    %743 = vector.broadcast %cst_348 : f32 to vector<8x1xf32>
    %744 = arith.addf %740, %743 : vector<8x1xf32>
    %745 = math.rsqrt %744 : vector<8x1xf32>
    %746 = vector.broadcast %745 : vector<8x1xf32> to vector<8x128xf32>
    %747 = arith.mulf %742, %746 : vector<8x128xf32>
    %748 = vector.broadcast %728 : vector<1x128xf32> to vector<8x128xf32>
    %749 = arith.mulf %747, %748 : vector<8x128xf32>
    %750 = vector.broadcast %729 : vector<1x128xf32> to vector<8x128xf32>
    %751 = arith.addf %749, %750 : vector<8x128xf32>
    %752 = arith.truncf %751 : vector<8x128xf32> to vector<8x128xbf16>
    %c0_349 = arith.constant 0 : index
    %c0_350 = arith.constant 0 : index
    %753 = vector.load %arg15[%c0_349, %c0_350] : memref<128x128xbf16, #tpu.memory_space<vmem>>, vector<128x128xbf16>
    %cst_351 = arith.constant dense<0.000000e+00> : vector<8x128xf32>
    %754 = tpu.matmul %752, %753, %cst_351 {dimension_numbers = #tpu.dot_dimension_numbers<[1], [0], [0], [1], [0, 0, 1, 1], [], []>} : vector<8x128xbf16>, vector<128x128xbf16>, vector<8x128xf32> -> vector<8x128xf32>
    %c0_352 = arith.constant 0 : index
    %c0_353 = arith.constant 0 : index
    %755 = vector.load %arg16[%c0_352, %c0_353] : memref<1x128xf32, #tpu.memory_space<vmem>>, vector<1x128xf32>
    %756 = vector.broadcast %755 : vector<1x128xf32> to vector<8x128xf32>
    %757 = arith.addf %754, %756 : vector<8x128xf32>
    %c0_354 = arith.constant 0 : index
    %c0_355 = arith.constant 0 : index
    %c0_356 = arith.constant 0 : index
    %758 = vector.load %arg17[%c0_354, %c0_355, %c0_356] : memref<1x8x128xf32, #tpu.memory_space<vmem>>, vector<1x8x128xf32>
    %759 = vector.shape_cast %758 : vector<1x8x128xf32> to vector<8x128xf32>
    %760 = vector.shape_cast %757 : vector<8x128xf32> to vector<1x8x128xf32>
    tpu.vector_store %arg17[%c0_354, %c0_355, %c0_356], %760 {strides = array<i32>} : memref<1x8x128xf32, #tpu.memory_space<vmem>>, vector<1x8x128xf32>,
    return
  }
  func.func @transform_0(%arg0: i32) -> (i32, i32, i32) {
    %c0_i32 = arith.constant 0 : i32
    %c0_i32_0 = arith.constant 0 : i32
    %c0_i32_1 = arith.constant 0 : i32
    return %arg0, %c0_i32, %c0_i32_0 : i32, i32, i32
  }
  func.func @transform_1(%arg0: i32) -> (i32, i32, i32) {
    %c0_i32 = arith.constant 0 : i32
    %c0_i32_0 = arith.constant 0 : i32
    %c0_i32_1 = arith.constant 0 : i32
    %c0_i32_2 = arith.constant 0 : i32
    return %c0_i32, %c0_i32_0, %c0_i32_1 : i32, i32, i32
  }
  func.func @transform_2(%arg0: i32) -> (i32, i32, i32) {
    %c0_i32 = arith.constant 0 : i32
    %c0_i32_0 = arith.constant 0 : i32
    %c0_i32_1 = arith.constant 0 : i32
    %c0_i32_2 = arith.constant 0 : i32
    return %c0_i32, %c0_i32_0, %c0_i32_1 : i32, i32, i32
  }
  func.func @transform_3(%arg0: i32) -> (i32, i32, i32) {
    %c0_i32 = arith.constant 0 : i32
    %c0_i32_0 = arith.constant 0 : i32
    %c0_i32_1 = arith.constant 0 : i32
    %c0_i32_2 = arith.constant 0 : i32
    return %c0_i32, %c0_i32_0, %c0_i32_1 : i32, i32, i32
  }
  func.func @transform_4(%arg0: i32) -> (i32, i32, i32, i32) {
    %c0_i32 = arith.constant 0 : i32
    %c0_i32_0 = arith.constant 0 : i32
    %c0_i32_1 = arith.constant 0 : i32
    %c0_i32_2 = arith.constant 0 : i32
    %c0_i32_3 = arith.constant 0 : i32
    return %c0_i32, %c0_i32_0, %c0_i32_1, %c0_i32_2 : i32, i32, i32, i32
  }
  func.func @transform_5(%arg0: i32) -> (i32, i32, i32) {
    %c0_i32 = arith.constant 0 : i32
    %c0_i32_0 = arith.constant 0 : i32
    %c0_i32_1 = arith.constant 0 : i32
    %c0_i32_2 = arith.constant 0 : i32
    return %c0_i32, %c0_i32_0, %c0_i32_1 : i32, i32, i32
  }
  func.func @transform_6(%arg0: i32) -> (i32, i32, i32) {
    %c0_i32 = arith.constant 0 : i32
    %c0_i32_0 = arith.constant 0 : i32
    %c0_i32_1 = arith.constant 0 : i32
    %c0_i32_2 = arith.constant 0 : i32
    return %c0_i32, %c0_i32_0, %c0_i32_1 : i32, i32, i32
  }
  func.func @transform_7(%arg0: i32) -> (i32, i32, i32) {
    %c0_i32 = arith.constant 0 : i32
    %c0_i32_0 = arith.constant 0 : i32
    %c0_i32_1 = arith.constant 0 : i32
    %c0_i32_2 = arith.constant 0 : i32
    return %c0_i32, %c0_i32_0, %c0_i32_1 : i32, i32, i32
  }
  func.func @transform_8(%arg0: i32) -> (i32, i32, i32) {
    %c0_i32 = arith.constant 0 : i32
    %c0_i32_0 = arith.constant 0 : i32
    %c0_i32_1 = arith.constant 0 : i32
    %c0_i32_2 = arith.constant 0 : i32
    return %c0_i32, %c0_i32_0, %c0_i32_1 : i32, i32, i32
  }
  func.func @transform_9(%arg0: i32) -> (i32, i32, i32) {
    %c0_i32 = arith.constant 0 : i32
    %c0_i32_0 = arith.constant 0 : i32
    %c0_i32_1 = arith.constant 0 : i32
    %c0_i32_2 = arith.constant 0 : i32
    return %c0_i32, %c0_i32_0, %c0_i32_1 : i32, i32, i32
  }
  func.func @transform_10(%arg0: i32) -> (i32, i32, i32) {
    %c0_i32 = arith.constant 0 : i32
    %c0_i32_0 = arith.constant 0 : i32
    %c0_i32_1 = arith.constant 0 : i32
    %c0_i32_2 = arith.constant 0 : i32
    return %c0_i32, %c0_i32_0, %c0_i32_1 : i32, i32, i32
  }
  func.func @transform_11(%arg0: i32) -> (i32, i32, i32) {
    %c0_i32 = arith.constant 0 : i32
    %c0_i32_0 = arith.constant 0 : i32
    %c0_i32_1 = arith.constant 0 : i32
    %c0_i32_2 = arith.constant 0 : i32
    return %c0_i32, %c0_i32_0, %c0_i32_1 : i32, i32, i32
  }
  func.func @transform_12(%arg0: i32) -> (i32, i32) {
    %c0_i32 = arith.constant 0 : i32
    %c0_i32_0 = arith.constant 0 : i32
    %c0_i32_1 = arith.constant 0 : i32
    return %c0_i32, %c0_i32_0 : i32, i32
  }
  func.func @transform_13(%arg0: i32) -> (i32, i32) {
    %c0_i32 = arith.constant 0 : i32
    %c0_i32_0 = arith.constant 0 : i32
    %c0_i32_1 = arith.constant 0 : i32
    return %c0_i32, %c0_i32_0 : i32, i32
  }
  func.func @transform_14(%arg0: i32) -> (i32, i32) {
    %c0_i32 = arith.constant 0 : i32
    %c0_i32_0 = arith.constant 0 : i32
    %c0_i32_1 = arith.constant 0 : i32
    return %c0_i32, %c0_i32_0 : i32, i32
  }
  func.func @transform_15(%arg0: i32) -> (i32, i32) {
    %c0_i32 = arith.constant 0 : i32
    %c0_i32_0 = arith.constant 0 : i32
    %c0_i32_1 = arith.constant 0 : i32
    return %c0_i32, %c0_i32_0 : i32, i32
  }
  func.func @transform_16(%arg0: i32) -> (i32, i32, i32) {
    %c0_i32 = arith.constant 0 : i32
    %c0_i32_0 = arith.constant 0 : i32
    %c0_i32_1 = arith.constant 0 : i32
    return %arg0, %c0_i32, %c0_i32_0 : i32, i32, i32
  }
}

</mosaic_0001>

<llo_original>
// kernel: transformer_forward.1
$region0: #{transformer_forward.1}
  #allocation0 [shape = 'u32[]', space=smem, size = 0x4, offset = 0x4, fixed_abs, tag = 'smem constant byte address 0x4 - core index']
  #allocation1 [shape = 'u32[72,128]{1,0:T(1,128)}', space=vmem, size = 0x9000, scoped, tag = 'internal scratch']
  %s0 = inlined_call_operand.vmem [shape: f32[2,8,128], index: 0, kind: input, shape index: {}]
  %s1 = inlined_call_operand.vmem [shape: f32[4,1,128], index: 1, kind: input, shape index: {}]
  %s2 = inlined_call_operand.vmem [shape: f32[4,1,128], index: 2, kind: input, shape index: {}]
  %s3 = inlined_call_operand.hbm [shape: bf16[4,128,384], index: 3, kind: input, shape index: {}]
  %s4 = inlined_call_operand.hbm [shape: bf16[4,4,32,128], index: 4, kind: input, shape index: {}]
  %s5 = inlined_call_operand.vmem [shape: f32[4,1,128], index: 5, kind: input, shape index: {}]
  %s6 = inlined_call_operand.vmem [shape: f32[4,1,128], index: 6, kind: input, shape index: {}]
  %s7 = inlined_call_operand.vmem [shape: f32[4,1,128], index: 7, kind: input, shape index: {}]
  %s8 = inlined_call_operand.hbm [shape: bf16[4,128,512], index: 8, kind: input, shape index: {}]
  %s9 = inlined_call_operand.vmem [shape: f32[4,1,512], index: 9, kind: input, shape index: {}]
  %s10 = inlined_call_operand.hbm [shape: bf16[4,512,128], index: 10, kind: input, shape index: {}]
  %s11 = inlined_call_operand.vmem [shape: f32[4,1,128], index: 11, kind: input, shape index: {}]
  %s12 = inlined_call_operand.vmem [shape: f32[1,128], index: 12, kind: input, shape index: {}]
  %s13 = inlined_call_operand.vmem [shape: f32[1,128], index: 13, kind: input, shape index: {}]
  %s14 = inlined_call_operand.vmem [shape: bf16[128,128], index: 14, kind: input, shape index: {}]
  %s15 = inlined_call_operand.vmem [shape: f32[1,128], index: 15, kind: input, shape index: {}]
  %s16 = inlined_call_operand.hbm [shape: f32[2,8,128], index: 16, kind: output, shape index: {}]
  %s17 = sld [smem:[#allocation0]]
  $region113: #{transformer_forward.1} parent=0
    _
  %s19 = ssub.s32 1, %s17
  %s20 = scalar_select 0, %s19, %s17
  $region1: #{transformer_forward.1} parent=0
    #allocation2 [shape = 'u8[393216]{0}', space=vmem, size = 0x60000, scoped, tag = 'input window, operand 3, single buffered']
    #allocation3 [shape = 's32[2]{0}', space=sflag, size = 0x8, scoped, tag = 'scoped memory for transformer_forward.1']
    #allocation4 [shape = 's32[2]{0}', space=sflag, size = 0x8, scoped, tag = 'scoped memory for transformer_forward.1']
    #allocation5 [shape = 'u8[131072]{0}', space=vmem, size = 0x20000, scoped, tag = 'input window, operand 4, single buffered']
    #allocation6 [shape = 's32[1]{0}', space=sflag, size = 0x4, scoped, tag = 'scoped memory for transformer_forward.1']
    #allocation7 [shape = 'u8[524288]{0}', space=vmem, size = 0x80000, scoped, tag = 'input window, operand 8, single buffered']
    #allocation8 [shape = 'u8[524288]{0}', space=vmem, size = 0x80000, scoped, tag = 'input window, operand 10, single buffered']
    #allocation9 [shape = 's32[1]{0}', space=sflag, size = 0x4, scoped, tag = 'scoped memory for transformer_forward.1']
    #allocation10 [shape = 'u8[8192]{0}', space=vmem, size = 0x2000, scoped, tag = 'output window, operand 0']
    %21 = vsyncpa [#allocation3], 0
    %22 = vsyncpa [#allocation6], 0
    %23 = vsyncpa [#allocation9], 0
    %24 = vsyncpa [#allocation4], 0
    %s25 = scalar_lea.sflag [#allocation4], 1
    %26 = vsyncpa %s25, 0
    loop: start=0, step=1, limit=4
    $region2: #{transformer_forward.1} parent=1 // loop_pre_header
      _
    $region3: #{transformer_forward.1} parent=1 // loop_header
      %s28 = sphi 0, %s32
      %p29 = scmp.ge.s32.totalorder %s28, 4
      %s38 = sphi 0, %s40
      %s41 = sphi 0, %s38
      %s42 = sphi 0, %s41
      %s58 = sphi 0, %s42
      %s62 = sphi 0, %s62
      %s64 = sphi 0, %s62
      %s65 = sphi 0, %s64
      %s79 = sphi 0, %s65
      %s83 = sphi 0, %s83
      %s85 = sphi 0, %s83
      %s86 = sphi 0, %s85
      %s100 = sphi 0, %s86
      %s104 = sphi 0, %s104
      %s106 = sphi 0, %s104
      %s107 = sphi 0, %s106
      %s121 = sphi 0, %s107
      %s125 = sphi 0, %s125
      %s127 = sphi 0, %s125
      %s128 = sphi 0, %s127
      %s142 = sphi 0, %s128
      %s146 = sphi 0, %s146
      %s148 = sphi 0, %s146
      %s149 = sphi 0, %s148
      %s163 = sphi 0, %s149
      %s167 = sphi 0, %s167
      %s169 = sphi 0, %s167
      %s170 = sphi 0, %s169
      %s184 = sphi 0, %s170
      %s188 = sphi 0, %s188
      %s190 = sphi 0, %s188
      %s191 = sphi 0, %s190
      %s205 = sphi 0, %s191
      %s209 = sphi 0, %s209
      %s211 = sphi 0, %s209
      %s212 = sphi 0, %s211
      %s226 = sphi 0, %s212
      %s230 = sphi 0, %s230
      %s232 = sphi 0, %s230
      %s233 = sphi 0, %s232
      %s247 = sphi 0, %s233
      %s251 = sphi 0, %s251
      %s253 = sphi 0, %s251
      %s254 = sphi 0, %s253
      %s268 = sphi 0, %s254
      %s272 = sphi 0, %s272
      %s274 = sphi 0, %s272
      %s275 = sphi 0, %s274
      %s289 = sphi 0, %s275
      %s293 = sphi 0, %s293
      %s295 = sphi 0, %s293
      %s296 = sphi 0, %s295
      %s310 = sphi 0, %s296
      %s314 = sphi 0, %s314
      %s316 = sphi 0, %s314
      %s317 = sphi 0, %s316
      %s331 = sphi 0, %s317
      %s335 = sphi 0, %s335
      %s337 = sphi 0, %s335
      %s338 = sphi 0, %s337
      %s352 = sphi 0, %s338
      %s356 = sphi 0, %s356
      %s358 = sphi 0, %s356
      %s359 = sphi 0, %s358
      %s373 = sphi 0, %s359
      %s379 = sphi 0, %s381
      %s382 = sphi 0, %s379
      %s383 = sphi 0, %s382
      %s399 = sphi 0, %s383
    $region4: #{transformer_forward.1} parent=1 // loop_header_branch
      %31 = sbr.rel (%p29) target = $region8
    $region5: #{transformer_forward.1} parent=1 // loop_body
      %s33 = ssub.s32 %s28, 1
      %s34 = ssub.s32 %s28, 2
      %s35 = sadd.s32 %s28, 1
      %s36 = ssub.s32 %s28, %s35
      %p37 = scmp.eq.s32.totalorder %s36, 0
      %s39 = sadd.s32 %s38, 1
      %s40 = scalar_select %p37, %s38, %s39
      %p43 = pneg %p37
      %p44 = scmp.eq.s32.totalorder %s28, 1
      %p45 = por %p43, %p44
      %p46 = scmp.ne.s32.totalorder %s38, %s41
      %p47 = scmp.eq.s32.totalorder %s28, 0
      %p48 = por %p46, %p47
      %p49 = scmp.ne.s32.totalorder %s38, %s41
      %p50 = scmp.eq.s32.totalorder %s33, 1
      %p51 = por %p49, %p50
      %p52 = scmp.ne.s32.totalorder %s41, %s42
      %p53 = scmp.eq.s32.totalorder %s33, 0
      %p54 = por %p52, %p53
      %p55 = scmp.ne.s32.totalorder %s41, %s42
      %p56 = scmp.eq.s32.totalorder %s34, 1
      %p57 = por %p55, %p56
      %p59 = scmp.ne.s32.totalorder %s42, %s58
      %p60 = scmp.eq.s32.totalorder %s34, 0
      %p61 = por %p59, %p60
      %s63 = sadd.s32 %s62, 1
      %p66 = scmp.eq.s32.totalorder %s28, 1
      %p67 = scmp.ne.s32.totalorder %s62, %s64
      %p68 = scmp.eq.s32.totalorder %s28, 0
      %p69 = por %p67, %p68
      %p70 = scmp.ne.s32.totalorder %s62, %s64
      %p71 = scmp.eq.s32.totalorder %s33, 1
      %p72 = por %p70, %p71
      %p73 = scmp.ne.s32.totalorder %s64, %s65
      %p74 = scmp.eq.s32.totalorder %s33, 0
      %p75 = por %p73, %p74
      %p76 = scmp.ne.s32.totalorder %s64, %s65
      %p77 = scmp.eq.s32.totalorder %s34, 1
      %p78 = por %p76, %p77
      %p80 = scmp.ne.s32.totalorder %s65, %s79
      %p81 = scmp.eq.s32.totalorder %s34, 0
      %p82 = por %p80, %p81
      %s84 = sadd.s32 %s83, 1
      %p87 = scmp.eq.s32.totalorder %s28, 1
      %p88 = scmp.ne.s32.totalorder %s83, %s85
      %p89 = scmp.eq.s32.totalorder %s28, 0
      %p90 = por %p88, %p89
      %p91 = scmp.ne.s32.totalorder %s83, %s85
      %p92 = scmp.eq.s32.totalorder %s33, 1
      %p93 = por %p91, %p92
      %p94 = scmp.ne.s32.totalorder %s85, %s86
      %p95 = scmp.eq.s32.totalorder %s33, 0
      %p96 = por %p94, %p95
      %p97 = scmp.ne.s32.totalorder %s85, %s86
      %p98 = scmp.eq.s32.totalorder %s34, 1
      %p99 = por %p97, %p98
      %p101 = scmp.ne.s32.totalorder %s86, %s100
      %p102 = scmp.eq.s32.totalorder %s34, 0
      %p103 = por %p101, %p102
      %s105 = sadd.s32 %s104, 1
      %p108 = scmp.eq.s32.totalorder %s28, 1
      %p109 = scmp.ne.s32.totalorder %s104, %s106
      %p110 = scmp.eq.s32.totalorder %s28, 0
      %p111 = por %p109, %p110
      %p112 = scmp.ne.s32.totalorder %s104, %s106
      %p113 = scmp.eq.s32.totalorder %s33, 1
      %p114 = por %p112, %p113
      %p115 = scmp.ne.s32.totalorder %s106, %s107
      %p116 = scmp.eq.s32.totalorder %s33, 0
      %p117 = por %p115, %p116
      %p118 = scmp.ne.s32.totalorder %s106, %s107
      %p119 = scmp.eq.s32.totalorder %s34, 1
      %p120 = por %p118, %p119
      %p122 = scmp.ne.s32.totalorder %s107, %s121
      %p123 = scmp.eq.s32.totalorder %s34, 0
      %p124 = por %p122, %p123
      %s126 = sadd.s32 %s125, 1
      %p129 = scmp.eq.s32.totalorder %s28, 1
      %p130 = scmp.ne.s32.totalorder %s125, %s127
      %p131 = scmp.eq.s32.totalorder %s28, 0
      %p132 = por %p130, %p131
      %p133 = scmp.ne.s32.totalorder %s125, %s127
      %p134 = scmp.eq.s32.totalorder %s33, 1
      %p135 = por %p133, %p134
      %p136 = scmp.ne.s32.totalorder %s127, %s128
      %p137 = scmp.eq.s32.totalorder %s33, 0
      %p138 = por %p136, %p137
      %p139 = scmp.ne.s32.totalorder %s127, %s128
      %p140 = scmp.eq.s32.totalorder %s34, 1
      %p141 = por %p139, %p140
      %p143 = scmp.ne.s32.totalorder %s128, %s142
      %p144 = scmp.eq.s32.totalorder %s34, 0
      %p145 = por %p143, %p144
      %s147 = sadd.s32 %s146, 1
      %p150 = scmp.eq.s32.totalorder %s28, 1
      %p151 = scmp.ne.s32.totalorder %s146, %s148
      %p152 = scmp.eq.s32.totalorder %s28, 0
      %p153 = por %p151, %p152
      %p154 = scmp.ne.s32.totalorder %s146, %s148
      %p155 = scmp.eq.s32.totalorder %s33, 1
      %p156 = por %p154, %p155
      %p157 = scmp.ne.s32.totalorder %s148, %s149
      %p158 = scmp.eq.s32.totalorder %s33, 0
      %p159 = por %p157, %p158
      %p160 = scmp.ne.s32.totalorder %s148, %s149
      %p161 = scmp.eq.s32.totalorder %s34, 1
      %p162 = por %p160, %p161
      %p164 = scmp.ne.s32.totalorder %s149, %s163
      %p165 = scmp.eq.s32.totalorder %s34, 0
      %p166 = por %p164, %p165
      %s168 = sadd.s32 %s167, 1
      %p171 = scmp.eq.s32.totalorder %s28, 1
      %p172 = scmp.ne.s32.totalorder %s167, %s169
      %p173 = scmp.eq.s32.totalorder %s28, 0
      %p174 = por %p172, %p173
      %p175 = scmp.ne.s32.totalorder %s167, %s169
      %p176 = scmp.eq.s32.totalorder %s33, 1
      %p177 = por %p175, %p176
      %p178 = scmp.ne.s32.totalorder %s169, %s170
      %p179 = scmp.eq.s32.totalorder %s33, 0
      %p180 = por %p178, %p179
      %p181 = scmp.ne.s32.totalorder %s169, %s170
      %p182 = scmp.eq.s32.totalorder %s34, 1
      %p183 = por %p181, %p182
      %p185 = scmp.ne.s32.totalorder %s170, %s184
      %p186 = scmp.eq.s32.totalorder %s34, 0
      %p187 = por %p185, %p186
      %s189 = sadd.s32 %s188, 1
      %p192 = scmp.eq.s32.totalorder %s28, 1
      %p193 = scmp.ne.s32.totalorder %s188, %s190
      %p194 = scmp.eq.s32.totalorder %s28, 0
      %p195 = por %p193, %p194
      %p196 = scmp.ne.s32.totalorder %s188, %s190
      %p197 = scmp.eq.s32.totalorder %s33, 1
      %p198 = por %p196, %p197
      %p199 = scmp.ne.s32.totalorder %s190, %s191
      %p200 = scmp.eq.s32.totalorder %s33, 0
      %p201 = por %p199, %p200
      %p202 = scmp.ne.s32.totalorder %s190, %s191
      %p203 = scmp.eq.s32.totalorder %s34, 1
      %p204 = por %p202, %p203
      %p206 = scmp.ne.s32.totalorder %s191, %s205
      %p207 = scmp.eq.s32.totalorder %s34, 0
      %p208 = por %p206, %p207
      %s210 = sadd.s32 %s209, 1
      %p213 = scmp.eq.s32.totalorder %s28, 1
      %p214 = scmp.ne.s32.totalorder %s209, %s211
      %p215 = scmp.eq.s32.totalorder %s28, 0
      %p216 = por %p214, %p215
      %p217 = scmp.ne.s32.totalorder %s209, %s211
      %p218 = scmp.eq.s32.totalorder %s33, 1
      %p219 = por %p217, %p218
      %p220 = scmp.ne.s32.totalorder %s211, %s212
      %p221 = scmp.eq.s32.totalorder %s33, 0
      %p222 = por %p220, %p221
      %p223 = scmp.ne.s32.totalorder %s211, %s212
      %p224 = scmp.eq.s32.totalorder %s34, 1
      %p225 = por %p223, %p224
      %p227 = scmp.ne.s32.totalorder %s212, %s226
      %p228 = scmp.eq.s32.totalorder %s34, 0
      %p229 = por %p227, %p228
      %s231 = sadd.s32 %s230, 1
      %p234 = scmp.eq.s32.totalorder %s28, 1
      %p235 = scmp.ne.s32.totalorder %s230, %s232
      %p236 = scmp.eq.s32.totalorder %s28, 0
      %p237 = por %p235, %p236
      %p238 = scmp.ne.s32.totalorder %s230, %s232
      %p239 = scmp.eq.s32.totalorder %s33, 1
      %p240 = por %p238, %p239
      %p241 = scmp.ne.s32.totalorder %s232, %s233
      %p242 = scmp.eq.s32.totalorder %s33, 0
      %p243 = por %p241, %p242
      %p244 = scmp.ne.s32.totalorder %s232, %s233
      %p245 = scmp.eq.s32.totalorder %s34, 1
      %p246 = por %p244, %p245
      %p248 = scmp.ne.s32.totalorder %s233, %s247
      %p249 = scmp.eq.s32.totalorder %s34, 0
      %p250 = por %p248, %p249
      %s252 = sadd.s32 %s251, 1
      %p255 = scmp.eq.s32.totalorder %s28, 1
      %p256 = scmp.ne.s32.totalorder %s251, %s253
      %p257 = scmp.eq.s32.totalorder %s28, 0
      %p258 = por %p256, %p257
      %p259 = scmp.ne.s32.totalorder %s251, %s253
      %p260 = scmp.eq.s32.totalorder %s33, 1
      %p261 = por %p259, %p260
      %p262 = scmp.ne.s32.totalorder %s253, %s254
      %p263 = scmp.eq.s32.totalorder %s33, 0
      %p264 = por %p262, %p263
      %p265 = scmp.ne.s32.totalorder %s253, %s254
      %p266 = scmp.eq.s32.totalorder %s34, 1
      %p267 = por %p265, %p266
      %p269 = scmp.ne.s32.totalorder %s254, %s268
      %p270 = scmp.eq.s32.totalorder %s34, 0
      %p271 = por %p269, %p270
      %s273 = sadd.s32 %s272, 1
      %p276 = scmp.eq.s32.totalorder %s28, 1
      %p277 = scmp.ne.s32.totalorder %s272, %s274
      %p278 = scmp.eq.s32.totalorder %s28, 0
      %p279 = por %p277, %p278
      %p280 = scmp.ne.s32.totalorder %s272, %s274
      %p281 = scmp.eq.s32.totalorder %s33, 1
      %p282 = por %p280, %p281
      %p283 = scmp.ne.s32.totalorder %s274, %s275
      %p284 = scmp.eq.s32.totalorder %s33, 0
      %p285 = por %p283, %p284
      %p286 = scmp.ne.s32.totalorder %s274, %s275
      %p287 = scmp.eq.s32.totalorder %s34, 1
      %p288 = por %p286, %p287
      %p290 = scmp.ne.s32.totalorder %s275, %s289
      %p291 = scmp.eq.s32.totalorder %s34, 0
      %p292 = por %p290, %p291
      %s294 = sadd.s32 %s293, 1
      %p297 = scmp.eq.s32.totalorder %s28, 1
      %p298 = scmp.ne.s32.totalorder %s293, %s295
      %p299 = scmp.eq.s32.totalorder %s28, 0
      %p300 = por %p298, %p299
      %p301 = scmp.ne.s32.totalorder %s293, %s295
      %p302 = scmp.eq.s32.totalorder %s33, 1
      %p303 = por %p301, %p302
      %p304 = scmp.ne.s32.totalorder %s295, %s296
      %p305 = scmp.eq.s32.totalorder %s33, 0
      %p306 = por %p304, %p305
      %p307 = scmp.ne.s32.totalorder %s295, %s296
      %p308 = scmp.eq.s32.totalorder %s34, 1
      %p309 = por %p307, %p308
      %p311 = scmp.ne.s32.totalorder %s296, %s310
      %p312 = scmp.eq.s32.totalorder %s34, 0
      %p313 = por %p311, %p312
      %s315 = sadd.s32 %s314, 1
      %p318 = scmp.eq.s32.totalorder %s28, 1
      %p319 = scmp.ne.s32.totalorder %s314, %s316
      %p320 = scmp.eq.s32.totalorder %s28, 0
      %p321 = por %p319, %p320
      %p322 = scmp.ne.s32.totalorder %s314, %s316
      %p323 = scmp.eq.s32.totalorder %s33, 1
      %p324 = por %p322, %p323
      %p325 = scmp.ne.s32.totalorder %s316, %s317
      %p326 = scmp.eq.s32.totalorder %s33, 0
      %p327 = por %p325, %p326
      %p328 = scmp.ne.s32.totalorder %s316, %s317
      %p329 = scmp.eq.s32.totalorder %s34, 1
      %p330 = por %p328, %p329
      %p332 = scmp.ne.s32.totalorder %s317, %s331
      %p333 = scmp.eq.s32.totalorder %s34, 0
      %p334 = por %p332, %p333
      %s336 = sadd.s32 %s335, 1
      %p339 = scmp.eq.s32.totalorder %s28, 1
      %p340 = scmp.ne.s32.totalorder %s335, %s337
      %p341 = scmp.eq.s32.totalorder %s28, 0
      %p342 = por %p340, %p341
      %p343 = scmp.ne.s32.totalorder %s335, %s337
      %p344 = scmp.eq.s32.totalorder %s33, 1
      %p345 = por %p343, %p344
      %p346 = scmp.ne.s32.totalorder %s337, %s338
      %p347 = scmp.eq.s32.totalorder %s33, 0
      %p348 = por %p346, %p347
      %p349 = scmp.ne.s32.totalorder %s337, %s338
      %p350 = scmp.eq.s32.totalorder %s34, 1
      %p351 = por %p349, %p350
      %p353 = scmp.ne.s32.totalorder %s338, %s352
      %p354 = scmp.eq.s32.totalorder %s34, 0
      %p355 = por %p353, %p354
      %s357 = sadd.s32 %s356, 1
      %p360 = scmp.eq.s32.totalorder %s28, 1
      %p361 = scmp.ne.s32.totalorder %s356, %s358
      %p362 = scmp.eq.s32.totalorder %s28, 0
      %p363 = por %p361, %p362
      %p364 = scmp.ne.s32.totalorder %s356, %s358
      %p365 = scmp.eq.s32.totalorder %s33, 1
      %p366 = por %p364, %p365
      %p367 = scmp.ne.s32.totalorder %s358, %s359
      %p368 = scmp.eq.s32.totalorder %s33, 0
      %p369 = por %p367, %p368
      %p370 = scmp.ne.s32.totalorder %s358, %s359
      %p371 = scmp.eq.s32.totalorder %s34, 1
      %p372 = por %p370, %p371
      %p374 = scmp.ne.s32.totalorder %s359, %s373
      %p375 = scmp.eq.s32.totalorder %s34, 0
      %p376 = por %p374, %p375
      %s377 = ssub.s32 %s28, %s35
      %p378 = scmp.eq.s32.totalorder %s377, 0
      %s380 = sadd.s32 %s379, 1
      %s381 = scalar_select %p378, %s379, %s380
      %p384 = pneg %p378
      %p385 = scmp.eq.s32.totalorder %s28, 1
      %p386 = por %p384, %p385
      %p387 = scmp.ne.s32.totalorder %s379, %s382
      %p388 = scmp.eq.s32.totalorder %s28, 0
      %p389 = por %p387, %p388
      %p390 = scmp.ne.s32.totalorder %s379, %s382
      %p391 = scmp.eq.s32.totalorder %s33, 1
      %p392 = por %p390, %p391
      %p393 = scmp.ne.s32.totalorder %s382, %s383
      %p394 = scmp.eq.s32.totalorder %s33, 0
      %p395 = por %p393, %p394
      %p396 = scmp.ne.s32.totalorder %s382, %s383
      %p397 = scmp.eq.s32.totalorder %s34, 1
      %p398 = por %p396, %p397
      %p400 = scmp.ne.s32.totalorder %s383, %s399
      %p401 = scmp.eq.s32.totalorder %s34, 0
      %p402 = por %p400, %p401
      %p403 = scmp.le.s32.totalorder 1, %s28
      %p404 = scmp.lt.s32.totalorder %s28, 3
      %p405 = pnand %p403, %p404
      %p406 = pneg %p405
      // Predicated region
      $region9: #{transformer_forward.1} parent=5 // pred_check
        _
      $region10: #{transformer_forward.1} parent=5 // pred_check_branch
        %408 = sbr.rel (%p405) target = $region12
      $region11: #{transformer_forward.1} parent=5 // pred_region
        %s409 = ssub.s32 %s28, 1
        // Predicated region
        $region13: #{transformer_forward.1} parent=11 // pred_check
          %p410 = pneg %p75
        $region14: #{transformer_forward.1} parent=11 // pred_check_branch
          %412 = sbr.rel (%p410) target = $region16
        $region15: #{transformer_forward.1} parent=11 // pred_region
          _
        $region16: #{transformer_forward.1} parent=11 // pred_fallthru
          _
        // Predicated region
        $region17: #{transformer_forward.1} parent=11 // pred_check
          %p413 = pneg %p96
        $region18: #{transformer_forward.1} parent=11 // pred_check_branch
          %415 = sbr.rel (%p413) target = $region20
        $region19: #{transformer_forward.1} parent=11 // pred_region
          _
        $region20: #{transformer_forward.1} parent=11 // pred_fallthru
          _
        // Predicated region
        $region21: #{transformer_forward.1} parent=11 // pred_check
          %p416 = pneg %p117
        $region22: #{transformer_forward.1} parent=11 // pred_check_branch
          %418 = sbr.rel (%p416) target = $region24
        $region23: #{transformer_forward.1} parent=11 // pred_region
          %420 = vsyncadd [#allocation3], 0
          %s421 = sshll.u32 %s3, 4
          %s422 = int_to_ptr.hbm [resolvable:$true] %s421
          %s423 = sshll.u32 [#allocation2], 4
          %s424 = int_to_ptr.vmem [resolvable:$true] %s423
          %429 = dma.hbm_to_vmem [thread:$0]  %s422, 12288, %s424, [#allocation3], 192, 192, 12
        $region24: #{transformer_forward.1} parent=11 // pred_fallthru
          _
        // Predicated region
        $region25: #{transformer_forward.1} parent=11 // pred_check
          %p430 = pneg %p138
        $region26: #{transformer_forward.1} parent=11 // pred_check_branch
          %432 = sbr.rel (%p430) target = $region28
        $region27: #{transformer_forward.1} parent=11 // pred_region
          %434 = vsyncadd [#allocation6], 0
          %s435 = sshll.u32 %s4, 4
          %s436 = int_to_ptr.hbm [resolvable:$true] %s435
          %s437 = sshll.u32 [#allocation5], 4
          %s438 = int_to_ptr.vmem [resolvable:$true] %s437
          %443 = dma.hbm_to_vmem [thread:$0]  %s436, 4096, %s438, [#allocation6], 64, 64, 4
        $region28: #{transformer_forward.1} parent=11 // pred_fallthru
          _
        // Predicated region
        $region29: #{transformer_forward.1} parent=11 // pred_check
          %p444 = pneg %p159
        $region30: #{transformer_forward.1} parent=11 // pred_check_branch
          %446 = sbr.rel (%p444) target = $region32
        $region31: #{transformer_forward.1} parent=11 // pred_region
          _
        $region32: #{transformer_forward.1} parent=11 // pred_fallthru
          _
        // Predicated region
        $region33: #{transformer_forward.1} parent=11 // pred_check
          %p447 = pneg %p180
        $region34: #{transformer_forward.1} parent=11 // pred_check_branch
          %449 = sbr.rel (%p447) target = $region36
        $region35: #{transformer_forward.1} parent=11 // pred_region
          _
        $region36: #{transformer_forward.1} parent=11 // pred_fallthru
          _
        // Predicated region
        $region37: #{transformer_forward.1} parent=11 // pred_check
          %p450 = pneg %p201
        $region38: #{transformer_forward.1} parent=11 // pred_check_branch
          %452 = sbr.rel (%p450) target = $region40
        $region39: #{transformer_forward.1} parent=11 // pred_region
          _
        $region40: #{transformer_forward.1} parent=11 // pred_fallthru
          _
        // Predicated region
        $region41: #{transformer_forward.1} parent=11 // pred_check
          %p453 = pneg %p222
        $region42: #{transformer_forward.1} parent=11 // pred_check_branch
          %455 = sbr.rel (%p453) target = $region44
        $region43: #{transformer_forward.1} parent=11 // pred_region
          %457 = vsyncadd [#allocation6], 0
          %s458 = sshll.u32 %s8, 4
          %s459 = int_to_ptr.hbm [resolvable:$true] %s458
          %s460 = sshll.u32 [#allocation7], 4
          %s461 = int_to_ptr.vmem [resolvable:$true] %s460
          %466 = dma.hbm_to_vmem [thread:$0]  %s459, 16384, %s461, [#allocation6], 256, 256, 16
        $region44: #{transformer_forward.1} parent=11 // pred_fallthru
          _
        // Predicated region
        $region45: #{transformer_forward.1} parent=11 // pred_check
          %p467 = pneg %p243
        $region46: #{transformer_forward.1} parent=11 // pred_check_branch
          %469 = sbr.rel (%p467) target = $region48
        $region47: #{transformer_forward.1} parent=11 // pred_region
          _
        $region48: #{transformer_forward.1} parent=11 // pred_fallthru
          _
        // Predicated region
        $region49: #{transformer_forward.1} parent=11 // pred_check
          %p470 = pneg %p264
        $region50: #{transformer_forward.1} parent=11 // pred_check_branch
          %472 = sbr.rel (%p470) target = $region52
        $region51: #{transformer_forward.1} parent=11 // pred_region
          %474 = vsyncadd [#allocation9], 0
          %s475 = sshll.u32 %s10, 4
          %s476 = int_to_ptr.hbm [resolvable:$true] %s475
          %s477 = sshll.u32 [#allocation8], 4
          %s478 = int_to_ptr.vmem [resolvable:$true] %s477
          %483 = dma.hbm_to_vmem [thread:$0]  %s476, 16384, %s478, [#allocation9], 64, 64, 4
        $region52: #{transformer_forward.1} parent=11 // pred_fallthru
          _
        // Predicated region
        $region53: #{transformer_forward.1} parent=11 // pred_check
          %p484 = pneg %p285
        $region54: #{transformer_forward.1} parent=11 // pred_check_branch
          %486 = sbr.rel (%p484) target = $region56
        $region55: #{transformer_forward.1} parent=11 // pred_region
          _
        $region56: #{transformer_forward.1} parent=11 // pred_fallthru
          _
        // Predicated region
        $region57: #{transformer_forward.1} parent=11 // pred_check
          %p487 = pneg %p306
        $region58: #{transformer_forward.1} parent=11 // pred_check_branch
          %489 = sbr.rel (%p487) target = $region60
        $region59: #{transformer_forward.1} parent=11 // pred_region
          _
        $region60: #{transformer_forward.1} parent=11 // pred_fallthru
          _
        // Predicated region
        $region61: #{transformer_forward.1} parent=11 // pred_check
          %p490 = pneg %p327
        $region62: #{transformer_forward.1} parent=11 // pred_check_branch
          %492 = sbr.rel (%p490) target = $region64
        $region63: #{transformer_forward.1} parent=11 // pred_region
          _
        $region64: #{transformer_forward.1} parent=11 // pred_fallthru
          _
        // Predicated region
        $region65: #{transformer_forward.1} parent=11 // pred_check
          %p493 = pneg %p348
        $region66: #{transformer_forward.1} parent=11 // pred_check_branch
          %495 = sbr.rel (%p493) target = $region68
        $region67: #{transformer_forward.1} parent=11 // pred_region
          _
        $region68: #{transformer_forward.1} parent=11 // pred_fallthru
          _
        // Predicated region
        $region69: #{transformer_forward.1} parent=11 // pred_check
          %p496 = pneg %p369
        $region70: #{transformer_forward.1} parent=11 // pred_check_branch
          %498 = sbr.rel (%p496) target = $region72
        $region71: #{transformer_forward.1} parent=11 // pred_region
          _
        $region72: #{transformer_forward.1} parent=11 // pred_fallthru
          _
      $region12: #{transformer_forward.1} parent=5 // pred_fallthru
        _
      %p499 = scmp.lt.s32.totalorder %s28, 2
      // Predicated region
      $region73: #{transformer_forward.1} parent=5 // pred_check
        %p500 = pneg %p499
      $region74: #{transformer_forward.1} parent=5 // pred_check_branch
        %502 = sbr.rel (%p500) target = $region76
      $region75: #{transformer_forward.1} parent=5 // pred_region
        // Predicated region
        $region77: #{transformer_forward.1} parent=75 // pred_check
          %p503 = pneg %p48
        $region78: #{transformer_forward.1} parent=75 // pred_check_branch
          %505 = sbr.rel (%p503) target = $region80
        $region79: #{transformer_forward.1} parent=75 // pred_region
          %p506 = scmp.lt.s32.totalorder %s28, 1
          %s507 = scalar_select %p506, %s28, 1
          %s508 = smul.addr %s507, 8
          %s509 = scalar_lea.vmem %s0, %s508
        $region80: #{transformer_forward.1} parent=75 // pred_fallthru
          _
      $region76: #{transformer_forward.1} parent=5 // pred_fallthru
        _
      %p510 = scmp.le.s32.totalorder 1, %s28
      %p511 = scmp.lt.s32.totalorder %s28, 3
      %p512 = pnand %p510, %p511
      %p513 = pneg %p512
      // Predicated region
      $region81: #{transformer_forward.1} parent=5 // pred_check
        _
      $region82: #{transformer_forward.1} parent=5 // pred_check_branch
        %515 = sbr.rel (%p512) target = $region84
      $region83: #{transformer_forward.1} parent=5 // pred_region
        %s516 = ssub.s32 %s28, 1
        // Predicated region
        $region85: #{transformer_forward.1} parent=83 // pred_check
          %p517 = pneg %p117
        $region86: #{transformer_forward.1} parent=83 // pred_check_branch
          %519 = sbr.rel (%p517) target = $region88
        $region87: #{transformer_forward.1} parent=83 // pred_region
          %521 = dma.done [#allocation3], 12288
        $region88: #{transformer_forward.1} parent=83 // pred_fallthru
          _
        // Predicated region
        $region89: #{transformer_forward.1} parent=83 // pred_check
          %p522 = pneg %p138
        $region90: #{transformer_forward.1} parent=83 // pred_check_branch
          %524 = sbr.rel (%p522) target = $region92
        $region91: #{transformer_forward.1} parent=83 // pred_region
          %526 = dma.done [#allocation6], 4096
        $region92: #{transformer_forward.1} parent=83 // pred_fallthru
          _
        // Predicated region
        $region93: #{transformer_forward.1} parent=83 // pred_check
          %p527 = pneg %p222
        $region94: #{transformer_forward.1} parent=83 // pred_check_branch
          %529 = sbr.rel (%p527) target = $region96
        $region95: #{transformer_forward.1} parent=83 // pred_region
          %531 = dma.done [#allocation6], 16384
        $region96: #{transformer_forward.1} parent=83 // pred_fallthru
          _
        // Predicated region
        $region97: #{transformer_forward.1} parent=83 // pred_check
          %p532 = pneg %p264
        $region98: #{transformer_forward.1} parent=83 // pred_check_branch
          %534 = sbr.rel (%p532) target = $region100
        $region99: #{transformer_forward.1} parent=83 // pred_region
          %536 = dma.done [#allocation9], 16384
        $region100: #{transformer_forward.1} parent=83 // pred_fallthru
          _
        %p537 = scmp.lt.s32.totalorder %s33, 1
        %s538 = scalar_select %p537, %s33, 1
        %s539 = smul.addr %s538, 8
        %s540 = scalar_lea.vmem %s0, %s539
        %p541 = pneg %p54
        %p542 = pneg %p51
        %p543 = pneg %p75
        %p544 = pneg %p72
        %p545 = pneg %p96
        %p546 = pneg %p93
        %p547 = pneg %p117
        %p548 = pneg %p114
        %p549 = pneg %p138
        %p550 = pneg %p135
        %p551 = pneg %p159
        %p552 = pneg %p156
        %p553 = pneg %p180
        %p554 = pneg %p177
        %p555 = pneg %p201
        %p556 = pneg %p198
        %p557 = pneg %p222
        %p558 = pneg %p219
        %p559 = pneg %p243
        %p560 = pneg %p240
        %p561 = pneg %p264
        %p562 = pneg %p261
        %p563 = pneg %p285
        %p564 = pneg %p282
        %p565 = pneg %p306
        %p566 = pneg %p303
        %p567 = pneg %p327
        %p568 = pneg %p324
        %p569 = pneg %p348
        %p570 = pneg %p345
        %p571 = pneg %p369
        %p572 = pneg %p366
        %p573 = pneg %p395
        %p574 = pneg %p392
        %s575 = sand.u32 %s382, 1
        %s576 = scalar_lea.sflag [#allocation4], %s575
        %s577 = sand.u32 %s382, 1
        %s578 = smul.addr %s577, 8
        %s579 = scalar_lea.vmem [#allocation10], %s578
        %p580 = scmp.lt.s32.totalorder %s33, 1
        %s581 = scalar_select %p580, %s33, 1
        %s582 = smul.addr %s581, 8
        %s583 = scalar_lea.vmem %s0, %s582
        %v585 = vld [vmem:[%s583] sm:$0xff]
        %v586 = vlaneseq
        %v587 = vshrl.u32 %v586, 7
        %v588 = vlaneseq
        %v589 = vand.u32 %v588, 127
        %vm590 = vcmp.ge.s32.totalorder %v587, %v589
        %v591 = vsel %vm590, 0.0, -1e+30
        %v592 = vld [vmem:[%s1] sm:$0x1]
        %v593 = vld [vmem:[%s2] sm:$0x1]
        %594 = vadd.xlane.f32.xlu0 %v585
        %v595 = vpop.xlane.xlu0 %594
        %v596 = vrcp.pop 128.0
        %v597 = vmul.f32 128.0, %v596
        %v598 = vsub.f32 1.0, %v597
        %v599 = vmul.f32 %v596, %v598
        %v600 = vadd.f32 %v596, %v599
        %vm601 = vweird.f32 %v596
        %v602 = vsel %vm601, %v596, %v600
        %v603 = vmul.f32 %v595, %v602
        %v604 = vsub.f32 %v585, %v603
        %v605 = vmul.f32 %v604, %v604
        %606 = vadd.xlane.f32.xlu0 %v605
        %v607 = vpop.xlane.xlu0 %606
        %v608 = vmul.f32 %v607, %v602
        %v609 = vadd.f32 %v608, 1e-05
        %v610 = vrsqrt.pop %v609
        %v611 = vmul.f32 %v610, %v609
        %v612 = vmul.f32 %v611, %v610
        %v613 = vmul.f32 0.5, %v612
        %v614 = vsub.f32 1.5, %v613
        %v615 = vmul.f32 %v610, %v614
        %vm616 = vweird.f32 %v609
        %vm617 = vweird.f32 %v610
        %vm618 = vmor %vm616, %vm617
        %v619 = vsel %vm618, %v610, %v615
        %v620 = vmul.f32 %v604, %v619
        %v622 = vperm.slane %v592, 0
        %v624 = vmul.f32 %v620, %v622
        %v626 = vperm.slane %v593, 0
        %v628 = vadd.f32 %v624, %v626
        %v629 = vpack.c.bf16 %v628, %v628
        %v630 = vld [vmem:[#allocation2] sm:$0xff]
        %v631 = vld [vmem:[#allocation2 + $0x8] sm:$0xf]
        %v632 = vld [vmem:[#allocation2 + $0xc] sm:$0xff]
        %v633 = vld [vmem:[#allocation2 + $0x14] sm:$0xf]
        %v634 = vld [vmem:[#allocation2 + $0x18] sm:$0xff]
        %v635 = vld [vmem:[#allocation2 + $0x20] sm:$0xf]
        %v636 = vld [vmem:[#allocation2 + $0x24] sm:$0xff]
        %v637 = vld [vmem:[#allocation2 + $0x2c] sm:$0xf]
        %v638 = vld [vmem:[#allocation2 + $0x30] sm:$0xff]
        %v639 = vld [vmem:[#allocation2 + $0x38] sm:$0xf]
        %v640 = vld [vmem:[#allocation2 + $0x3c] sm:$0xff]
        %v641 = vld [vmem:[#allocation2 + $0x44] sm:$0xf]
        %v642 = vld [vmem:[#allocation2 + $0x48] sm:$0xff]
        %v643 = vld [vmem:[#allocation2 + $0x50] sm:$0xf]
        %v644 = vld [vmem:[#allocation2 + $0x54] sm:$0xff]
        %v645 = vld [vmem:[#allocation2 + $0x5c] sm:$0xf]
        %v646 = vld [vmem:[#allocation2 + $0x60] sm:$0xff]
        %v647 = vld [vmem:[#allocation2 + $0x68] sm:$0xf]
        %v648 = vld [vmem:[#allocation2 + $0x6c] sm:$0xff]
        %v649 = vld [vmem:[#allocation2 + $0x74] sm:$0xf]
        %v650 = vld [vmem:[#allocation2 + $0x78] sm:$0xff]
        %v651 = vld [vmem:[#allocation2 + $0x80] sm:$0xf]
        %v652 = vld [vmem:[#allocation2 + $0x84] sm:$0xff]
        %v653 = vld [vmem:[#allocation2 + $0x8c] sm:$0xf]
        %v654 = vld [vmem:[#allocation2 + $0x90] sm:$0xff]
        %v655 = vld [vmem:[#allocation2 + $0x98] sm:$0xf]
        %v656 = vld [vmem:[#allocation2 + $0x9c] sm:$0xff]
        %v657 = vld [vmem:[#allocation2 + $0xa4] sm:$0xf]
        %v658 = vld [vmem:[#allocation2 + $0xa8] sm:$0xff]
        %v659 = vld [vmem:[#allocation2 + $0xb0] sm:$0xf]
        %v660 = vld [vmem:[#allocation2 + $0xb4] sm:$0xff]
        %v661 = vld [vmem:[#allocation2 + $0xbc] sm:$0xf]
        %v694 = vunpack.c.l.b16 %v630
        %v695 = vunpack.c.h.b16 %v630
        %v696 = vunpack.c.l.b16 %v631
        %v697 = vunpack.c.l.b16 %v632
        %v698 = vunpack.c.h.b16 %v632
        %v699 = vunpack.c.l.b16 %v633
        %v700 = vunpack.c.l.b16 %v634
        %v701 = vunpack.c.h.b16 %v634
        %v702 = vunpack.c.l.b16 %v635
        %v703 = vunpack.c.l.b16 %v636
        %v704 = vunpack.c.h.b16 %v636
        %v705 = vunpack.c.l.b16 %v637
        %v706 = vunpack.c.l.b16 %v638
        %v707 = vunpack.c.h.b16 %v638
        %v708 = vunpack.c.l.b16 %v639
        %v709 = vunpack.c.l.b16 %v640
        %v710 = vunpack.c.h.b16 %v640
        %v711 = vunpack.c.l.b16 %v641
        %v712 = vunpack.c.l.b16 %v642
        %v713 = vunpack.c.h.b16 %v642
        %v714 = vunpack.c.l.b16 %v643
        %v715 = vunpack.c.l.b16 %v644
        %v716 = vunpack.c.h.b16 %v644
        %v717 = vunpack.c.l.b16 %v645
        %v718 = vunpack.c.l.b16 %v646
        %v719 = vunpack.c.h.b16 %v646
        %v720 = vunpack.c.l.b16 %v647
        %v721 = vunpack.c.l.b16 %v648
        %v722 = vunpack.c.h.b16 %v648
        %v723 = vunpack.c.l.b16 %v649
        %v724 = vunpack.c.l.b16 %v650
        %v725 = vunpack.c.h.b16 %v650
        %v726 = vunpack.c.l.b16 %v651
        %v727 = vunpack.c.l.b16 %v652
        %v728 = vunpack.c.h.b16 %v652
        %v729 = vunpack.c.l.b16 %v653
        %v730 = vunpack.c.l.b16 %v654
        %v731 = vunpack.c.h.b16 %v654
        %v732 = vunpack.c.l.b16 %v655
        %v733 = vunpack.c.l.b16 %v656
        %v734 = vunpack.c.h.b16 %v656
        %v735 = vunpack.c.l.b16 %v657
        %v736 = vunpack.c.l.b16 %v658
        %v737 = vunpack.c.h.b16 %v658
        %v738 = vunpack.c.l.b16 %v659
        %v739 = vunpack.c.l.b16 %v660
        %v740 = vunpack.c.h.b16 %v660
        %v741 = vunpack.c.l.b16 %v661
        %v742 = vpack.c.b16 %v697, %v694
        %v743 = vpack.c.b16 %v698, %v695
        %v744 = vpack.c.b16 %v699, %v696
        %v745 = vpack.c.b16 %v703, %v700
        %v746 = vpack.c.b16 %v704, %v701
        %v747 = vpack.c.b16 %v705, %v702
        %v748 = vpack.c.b16 %v709, %v706
        %v749 = vpack.c.b16 %v710, %v707
        %v750 = vpack.c.b16 %v711, %v708
        %v751 = vpack.c.b16 %v715, %v712
        %v752 = vpack.c.b16 %v716, %v713
        %v753 = vpack.c.b16 %v717, %v714
        %v754 = vpack.c.b16 %v721, %v718
        %v755 = vpack.c.b16 %v722, %v719
        %v756 = vpack.c.b16 %v723, %v720
        %v757 = vpack.c.b16 %v727, %v724
        %v758 = vpack.c.b16 %v728, %v725
        %v759 = vpack.c.b16 %v729, %v726
        %v760 = vpack.c.b16 %v733, %v730
        %v761 = vpack.c.b16 %v734, %v731
        %v762 = vpack.c.b16 %v735, %v732
        %v763 = vpack.c.b16 %v739, %v736
        %v764 = vpack.c.b16 %v740, %v737
        %v765 = vpack.c.b16 %v741, %v738
        %790 = vmatpush.bf16.msra.mxu0 %v763
        %791 = vmatpush.bf16.msra.mxu0 %v760
        %792 = vmatpush.bf16.msra.mxu0 %v757
        %793 = vmatpush.bf16.msra.mxu0 %v754
        %794 = vmatpush.bf16.msra.mxu0 %v751
        %795 = vmatpush.bf16.msra.mxu0 %v748
        %796 = vmatpush.bf16.msra.mxu0 %v745
        %797 = vmatpush.bf16.msra.mxu0 %v742
        %798 = vmatmul.bf16.gmra.mxu0 %v629
        %v799 = vpop.f32.mrf.mxu0
        %v800 = vadd.f32 0.0, %v799
        %v801 = vpop.f32.mrf.mxu0
        %802 = vdwg.mxu0
        %803 = vmatpush.bf16.msra.mxu0 %v764
        %804 = vmatpush.bf16.msra.mxu0 %v761
        %805 = vmatpush.bf16.msra.mxu0 %v758
        %806 = vmatpush.bf16.msra.mxu0 %v755
        %807 = vmatpush.bf16.msra.mxu0 %v752
        %808 = vmatpush.bf16.msra.mxu0 %v749
        %809 = vmatpush.bf16.msra.mxu0 %v746
        %810 = vmatpush.bf16.msra.mxu0 %v743
        %811 = vmatmul.bf16.gmra.mxu0 %v629
        %v812 = vpop.f32.mrf.mxu0
        %v813 = vadd.f32 0.0, %v812
        %v814 = vpop.f32.mrf.mxu0
        %815 = vdwg.mxu0
        %816 = vmatpush.bf16.msra.mxu0 %v765
        %817 = vmatpush.bf16.msra.mxu0 %v762
        %818 = vmatpush.bf16.msra.mxu0 %v759
        %819 = vmatpush.bf16.msra.mxu0 %v756
        %820 = vmatpush.bf16.msra.mxu0 %v753
        %821 = vmatpush.bf16.msra.mxu0 %v750
        %822 = vmatpush.bf16.msra.mxu0 %v747
        %823 = vmatpush.bf16.msra.mxu0 %v744
        %824 = vmatmul.bf16.gmra.mxu0 %v629
        %v825 = vpop.f32.mrf.mxu0
        %v826 = vadd.f32 0.0, %v825
        %v827 = vpop.f32.mrf.mxu0
        %828 = vdwg.mxu0
        %vm829 = vcmask 261120
        %v831 = vsel %vm829, %v800, 0
        %v834 = vsel %vm829, %v813, 0
        %836 = vmatpush.xpose.msra.mxu0 0.0
        %837 = vmatpush.xpose.msra.mxu0 0.0
        %838 = vmatpush.xpose.msra.mxu0 0.0
        %839 = vmatpush.xpose.msra.mxu0 0.0
        %840 = vmatpush.xpose.msra.mxu0 0.0
        %841 = vmatpush.xpose.msra.mxu0 0.0
        %842 = vmatpush.xpose.msra.mxu0 0.0
        %843 = vmatpush.xpose.msra.mxu0 0.0
        %844 = vmatpush.xpose.msra.mxu0 0.0
        %845 = vmatpush.xpose.msra.mxu0 0.0
        %846 = vmatpush.xpose.msra.mxu0 0.0
        %847 = vmatpush.xpose.msra.mxu0 0.0
        %848 = vmatpush.xpose.msra.mxu0 0.0
        %849 = vmatpush.xpose.msra.mxu0 0.0
        %850 = vmatpush.xpose.msra.mxu0 0.0
        %851 = vmatpush.xpose.msra.mxu0 %v834
        %852 = vmatmul.f32.gmra.mxu0 %v831
        %v853 = vpop.f32.mrf.mxu0
        %v854 = vadd.f32 0.0, %v853
        %855 = vdwg.mxu0
        %v856 = vmul.f32 %v854, 0.088388346
        %v857 = vadd.f32 %v856, %v591
        %vm858 = vcmask 64512
        %v859 = vsel %vm858, %v857, -inf
        %860 = vmax.xlane.f32.xlu0 %v859
        %v861 = vpop.xlane.xlu0 %860
        %v862 = vsub.f32 %v857, %v861
        %v863 = vmul.f32 %v862, 1.442695
        %v864 = vpow.pop %v863
        %v865 = vsel %vm858, %v864, 0.0
        %866 = vadd.xlane.f32.xlu0 %v865
        %v867 = vpop.xlane.xlu0 %866
        %v868 = vrcp.pop %v867
        %v869 = vmul.f32 %v864, %v868
        %v871 = vsel %vm858, %v869, 0
        %873 = vmatpush.msra.mxu0 0.0
        %874 = vmatpush.msra.mxu0 0.0
        %875 = vmatpush.msra.mxu0 0.0
        %876 = vmatpush.msra.mxu0 0.0
        %877 = vmatpush.msra.mxu0 0.0
        %878 = vmatpush.msra.mxu0 0.0
        %879 = vmatpush.msra.mxu0 0.0
        %880 = vmatpush.msra.mxu0 0.0
        %881 = vmatpush.msra.mxu0 0.0
        %882 = vmatpush.msra.mxu0 0.0
        %883 = vmatpush.msra.mxu0 0.0
        %884 = vmatpush.msra.mxu0 0.0
        %885 = vmatpush.msra.mxu0 0.0
        %886 = vmatpush.msra.mxu0 0.0
        %887 = vmatpush.msra.mxu0 0.0
        %888 = vmatpush.msra.mxu0 %v826
        %889 = vmatmul.f32.gmra.mxu0 %v871
        %v890 = vpop.f32.mrf.mxu0
        %v891 = vadd.f32 0.0, %v890
        %892 = vdwg.mxu0
        %v893 = vpack.c.bf16 %v891, %v891
        %v894 = vld [vmem:[#allocation5] sm:$0xf]
        %v895 = vld [vmem:[#allocation5 + $0x4] sm:$0xf]
        %v896 = vld [vmem:[#allocation5 + $0x8] sm:$0xf]
        %v897 = vld [vmem:[#allocation5 + $0xc] sm:$0xf]
        %898 = vrot.lane.b32.xlu0 %v800, 96
        %v899 = vpop.permute.xlu0 %898
        %900 = vrot.lane.b32.xlu0 %v813, 96
        %v901 = vpop.permute.xlu0 %900
        %v902 = vsel %vm829, %v899, 0
        %v904 = vsel %vm829, %v901, 0
        %906 = vmatpush.xpose.msra.mxu0 0.0
        %907 = vmatpush.xpose.msra.mxu0 0.0
        %908 = vmatpush.xpose.msra.mxu0 0.0
        %909 = vmatpush.xpose.msra.mxu0 0.0
        %910 = vmatpush.xpose.msra.mxu0 0.0
        %911 = vmatpush.xpose.msra.mxu0 0.0
        %912 = vmatpush.xpose.msra.mxu0 0.0
        %913 = vmatpush.xpose.msra.mxu0 0.0
        %914 = vmatpush.xpose.msra.mxu0 0.0
        %915 = vmatpush.xpose.msra.mxu0 0.0
        %916 = vmatpush.xpose.msra.mxu0 0.0
        %917 = vmatpush.xpose.msra.mxu0 0.0
        %918 = vmatpush.xpose.msra.mxu0 0.0
        %919 = vmatpush.xpose.msra.mxu0 0.0
        %920 = vmatpush.xpose.msra.mxu0 0.0
        %921 = vmatpush.xpose.msra.mxu0 %v904
        %922 = vmatmul.f32.gmra.mxu0 %v902
        %v923 = vpop.f32.mrf.mxu0
        %v924 = vadd.f32 0.0, %v923
        %925 = vdwg.mxu0
        %v926 = vmul.f32 %v924, 0.088388346
        %v927 = vadd.f32 %v926, %v591
        %v928 = vsel %vm858, %v927, -inf
        %929 = vmax.xlane.f32.xlu0 %v928
        %v930 = vpop.xlane.xlu0 %929
        %v931 = vsub.f32 %v927, %v930
        %v932 = vmul.f32 %v931, 1.442695
        %v933 = vpow.pop %v932
        %v934 = vsel %vm858, %v933, 0.0
        %935 = vadd.xlane.f32.xlu0 %v934
        %v936 = vpop.xlane.xlu0 %935
        %v937 = vrcp.pop %v936
        %v938 = vmul.f32 %v933, %v937
        %940 = vrot.lane.b32.xlu0 %v826, 96
        %v941 = vpop.permute.xlu0 %940
        %v944 = vsel %vm858, %v938, 0
        %946 = vmatpush.msra.mxu0 0.0
        %947 = vmatpush.msra.mxu0 0.0
        %948 = vmatpush.msra.mxu0 0.0
        %949 = vmatpush.msra.mxu0 0.0
        %950 = vmatpush.msra.mxu0 0.0
        %951 = vmatpush.msra.mxu0 0.0
        %952 = vmatpush.msra.mxu0 0.0
        %953 = vmatpush.msra.mxu0 0.0
        %954 = vmatpush.msra.mxu0 0.0
        %955 = vmatpush.msra.mxu0 0.0
        %956 = vmatpush.msra.mxu0 0.0
        %957 = vmatpush.msra.mxu0 0.0
        %958 = vmatpush.msra.mxu0 0.0
        %959 = vmatpush.msra.mxu0 0.0
        %960 = vmatpush.msra.mxu0 0.0
        %961 = vmatpush.msra.mxu0 %v941
        %962 = vmatmul.f32.gmra.mxu0 %v944
        %v963 = vpop.f32.mrf.mxu0
        %v964 = vadd.f32 0.0, %v963
        %965 = vdwg.mxu0
        %v966 = vpack.c.bf16 %v964, %v964
        %s967 = scalar_lea.vmem [#allocation5], 16
        %v968 = vld [vmem:[%s967] sm:$0xf]
        %v969 = vld [vmem:[%s967 + $0x4] sm:$0xf]
        %v970 = vld [vmem:[%s967 + $0x8] sm:$0xf]
        %v971 = vld [vmem:[%s967 + $0xc] sm:$0xf]
        %v976 = vunpack.c.l.b16 %v968
        %v977 = vunpack.c.l.b16 %v969
        %v978 = vunpack.c.l.b16 %v970
        %v979 = vunpack.c.l.b16 %v971
        %v980 = vpack.c.b16 %v977, %v976
        %v981 = vpack.c.b16 %v979, %v978
        %v985 = vsel %vm829, %v966, 0
        %987 = vmatpush.bf16.msra.mxu0 0
        %988 = vmatpush.bf16.msra.mxu0 0
        %989 = vmatpush.bf16.msra.mxu0 0
        %990 = vmatpush.bf16.msra.mxu0 0
        %991 = vmatpush.bf16.msra.mxu0 0
        %992 = vmatpush.bf16.msra.mxu0 0
        %993 = vmatpush.bf16.msra.mxu0 %v981
        %994 = vmatpush.bf16.msra.mxu0 %v980
        %995 = vmatmul.bf16.gmra.mxu0 %v985
        %v996 = vpop.f32.mrf.mxu0
        %v997 = vadd.f32 0.0, %v996
        %v998 = vpop.f32.mrf.mxu0
        %999 = vdwg.mxu0
        %v1004 = vunpack.c.l.b16 %v894
        %v1005 = vunpack.c.l.b16 %v895
        %v1006 = vunpack.c.l.b16 %v896
        %v1007 = vunpack.c.l.b16 %v897
        %v1008 = vpack.c.b16 %v1005, %v1004
        %v1009 = vpack.c.b16 %v1007, %v1006
        %v1013 = vsel %vm829, %v893, 0
        %1015 = vmatpush.bf16.msra.mxu0 0
        %1016 = vmatpush.bf16.msra.mxu0 0
        %1017 = vmatpush.bf16.msra.mxu0 0
        %1018 = vmatpush.bf16.msra.mxu0 0
        %1019 = vmatpush.bf16.msra.mxu0 0
        %1020 = vmatpush.bf16.msra.mxu0 0
        %1021 = vmatpush.bf16.msra.mxu0 %v1009
        %1022 = vmatpush.bf16.msra.mxu0 %v1008
        %1023 = vmatmul.bf16.gmra.mxu0 %v1013
        %v1024 = vpop.f32.mrf.mxu0
        %v1025 = vadd.f32 %v997, %v1024
        %v1026 = vpop.f32.mrf.mxu0
        %1027 = vdwg.mxu0
        %1028 = vrot.lane.b32.xlu0 %v800, 64
        %v1029 = vpop.permute.xlu0 %1028
        %1030 = vrot.lane.b32.xlu0 %v813, 64
        %v1031 = vpop.permute.xlu0 %1030
        %v1032 = vsel %vm829, %v1029, 0
        %v1034 = vsel %vm829, %v1031, 0
        %1036 = vmatpush.xpose.msra.mxu0 0.0
        %1037 = vmatpush.xpose.msra.mxu0 0.0
        %1038 = vmatpush.xpose.msra.mxu0 0.0
        %1039 = vmatpush.xpose.msra.mxu0 0.0
        %1040 = vmatpush.xpose.msra.mxu0 0.0
        %1041 = vmatpush.xpose.msra.mxu0 0.0
        %1042 = vmatpush.xpose.msra.mxu0 0.0
        %1043 = vmatpush.xpose.msra.mxu0 0.0
        %1044 = vmatpush.xpose.msra.mxu0 0.0
        %1045 = vmatpush.xpose.msra.mxu0 0.0
        %1046 = vmatpush.xpose.msra.mxu0 0.0
        %1047 = vmatpush.xpose.msra.mxu0 0.0
        %1048 = vmatpush.xpose.msra.mxu0 0.0
        %1049 = vmatpush.xpose.msra.mxu0 0.0
        %1050 = vmatpush.xpose.msra.mxu0 0.0
        %1051 = vmatpush.xpose.msra.mxu0 %v1034
        %1052 = vmatmul.f32.gmra.mxu0 %v1032
        %v1053 = vpop.f32.mrf.mxu0
        %v1054 = vadd.f32 0.0, %v1053
        %1055 = vdwg.mxu0
        %v1056 = vmul.f32 %v1054, 0.088388346
        %v1057 = vadd.f32 %v1056, %v591
        %v1058 = vsel %vm858, %v1057, -inf
        %1059 = vmax.xlane.f32.xlu0 %v1058
        %v1060 = vpop.xlane.xlu0 %1059
        %v1061 = vsub.f32 %v1057, %v1060
        %v1062 = vmul.f32 %v1061, 1.442695
        %v1063 = vpow.pop %v1062
        %v1064 = vsel %vm858, %v1063, 0.0
        %1065 = vadd.xlane.f32.xlu0 %v1064
        %v1066 = vpop.xlane.xlu0 %1065
        %v1067 = vrcp.pop %v1066
        %v1068 = vmul.f32 %v1063, %v1067
        %1069 = vrot.lane.b32.xlu0 %v826, 64
        %v1070 = vpop.permute.xlu0 %1069
        %v1073 = vsel %vm858, %v1068, 0
        %1075 = vmatpush.msra.mxu0 0.0
        %1076 = vmatpush.msra.mxu0 0.0
        %1077 = vmatpush.msra.mxu0 0.0
        %1078 = vmatpush.msra.mxu0 0.0
        %1079 = vmatpush.msra.mxu0 0.0
        %1080 = vmatpush.msra.mxu0 0.0
        %1081 = vmatpush.msra.mxu0 0.0
        %1082 = vmatpush.msra.mxu0 0.0
        %1083 = vmatpush.msra.mxu0 0.0
        %1084 = vmatpush.msra.mxu0 0.0
        %1085 = vmatpush.msra.mxu0 0.0
        %1086 = vmatpush.msra.mxu0 0.0
        %1087 = vmatpush.msra.mxu0 0.0
        %1088 = vmatpush.msra.mxu0 0.0
        %1089 = vmatpush.msra.mxu0 0.0
        %1090 = vmatpush.msra.mxu0 %v1070
        %1091 = vmatmul.f32.gmra.mxu0 %v1073
        %v1092 = vpop.f32.mrf.mxu0
        %v1093 = vadd.f32 0.0, %v1092
        %1094 = vdwg.mxu0
        %v1095 = vpack.c.bf16 %v1093, %v1093
        %s1096 = scalar_lea.vmem [#allocation5], 32
        %v1097 = vld [vmem:[%s1096] sm:$0xf]
        %v1098 = vld [vmem:[%s1096 + $0x4] sm:$0xf]
        %v1099 = vld [vmem:[%s1096 + $0x8] sm:$0xf]
        %v1100 = vld [vmem:[%s1096 + $0xc] sm:$0xf]
        %v1105 = vunpack.c.l.b16 %v1097
        %v1106 = vunpack.c.l.b16 %v1098
        %v1107 = vunpack.c.l.b16 %v1099
        %v1108 = vunpack.c.l.b16 %v1100
        %v1109 = vpack.c.b16 %v1106, %v1105
        %v1110 = vpack.c.b16 %v1108, %v1107
        %v1114 = vsel %vm829, %v1095, 0
        %1116 = vmatpush.bf16.msra.mxu0 0
        %1117 = vmatpush.bf16.msra.mxu0 0
        %1118 = vmatpush.bf16.msra.mxu0 0
        %1119 = vmatpush.bf16.msra.mxu0 0
        %1120 = vmatpush.bf16.msra.mxu0 0
        %1121 = vmatpush.bf16.msra.mxu0 0
        %1122 = vmatpush.bf16.msra.mxu0 %v1110
        %1123 = vmatpush.bf16.msra.mxu0 %v1109
        %1124 = vmatmul.bf16.gmra.mxu0 %v1114
        %v1125 = vpop.f32.mrf.mxu0
        %v1126 = vadd.f32 0.0, %v1125
        %v1127 = vpop.f32.mrf.mxu0
        %1128 = vdwg.mxu0
        %v1129 = vadd.f32 %v1025, %v1126
        %1130 = vrot.lane.b32.xlu0 %v800, 32
        %v1131 = vpop.permute.xlu0 %1130
        %1132 = vrot.lane.b32.xlu0 %v813, 32
        %v1133 = vpop.permute.xlu0 %1132
        %v1134 = vsel %vm829, %v1131, 0
        %v1136 = vsel %vm829, %v1133, 0
        %1138 = vmatpush.xpose.msra.mxu0 0.0
        %1139 = vmatpush.xpose.msra.mxu0 0.0
        %1140 = vmatpush.xpose.msra.mxu0 0.0
        %1141 = vmatpush.xpose.msra.mxu0 0.0
        %1142 = vmatpush.xpose.msra.mxu0 0.0
        %1143 = vmatpush.xpose.msra.mxu0 0.0
        %1144 = vmatpush.xpose.msra.mxu0 0.0
        %1145 = vmatpush.xpose.msra.mxu0 0.0
        %1146 = vmatpush.xpose.msra.mxu0 0.0
        %1147 = vmatpush.xpose.msra.mxu0 0.0
        %1148 = vmatpush.xpose.msra.mxu0 0.0
        %1149 = vmatpush.xpose.msra.mxu0 0.0
        %1150 = vmatpush.xpose.msra.mxu0 0.0
        %1151 = vmatpush.xpose.msra.mxu0 0.0
        %1152 = vmatpush.xpose.msra.mxu0 0.0
        %1153 = vmatpush.xpose.msra.mxu0 %v1136
        %1154 = vmatmul.f32.gmra.mxu0 %v1134
        %v1155 = vpop.f32.mrf.mxu0
        %v1156 = vadd.f32 0.0, %v1155
        %1157 = vdwg.mxu0
        %v1158 = vmul.f32 %v1156, 0.088388346
        %v1159 = vadd.f32 %v1158, %v591
        %v1160 = vsel %vm858, %v1159, -inf
        %1161 = vmax.xlane.f32.xlu0 %v1160
        %v1162 = vpop.xlane.xlu0 %1161
        %v1163 = vsub.f32 %v1159, %v1162
        %v1164 = vmul.f32 %v1163, 1.442695
        %v1165 = vpow.pop %v1164
        %v1166 = vsel %vm858, %v1165, 0.0
        %1167 = vadd.xlane.f32.xlu0 %v1166
        %v1168 = vpop.xlane.xlu0 %1167
        %v1169 = vrcp.pop %v1168
        %v1170 = vmul.f32 %v1165, %v1169
        %1171 = vrot.lane.b32.xlu0 %v826, 32
        %v1172 = vpop.permute.xlu0 %1171
        %v1175 = vsel %vm858, %v1170, 0
        %1177 = vmatpush.msra.mxu0 0.0
        %1178 = vmatpush.msra.mxu0 0.0
        %1179 = vmatpush.msra.mxu0 0.0
        %1180 = vmatpush.msra.mxu0 0.0
        %1181 = vmatpush.msra.mxu0 0.0
        %1182 = vmatpush.msra.mxu0 0.0
        %1183 = vmatpush.msra.mxu0 0.0
        %1184 = vmatpush.msra.mxu0 0.0
        %1185 = vmatpush.msra.mxu0 0.0
        %1186 = vmatpush.msra.mxu0 0.0
        %1187 = vmatpush.msra.mxu0 0.0
        %1188 = vmatpush.msra.mxu0 0.0
        %1189 = vmatpush.msra.mxu0 0.0
        %1190 = vmatpush.msra.mxu0 0.0
        %1191 = vmatpush.msra.mxu0 0.0
        %1192 = vmatpush.msra.mxu0 %v1172
        %1193 = vmatmul.f32.gmra.mxu0 %v1175
        %v1194 = vpop.f32.mrf.mxu0
        %v1195 = vadd.f32 0.0, %v1194
        %1196 = vdwg.mxu0
        %v1197 = vpack.c.bf16 %v1195, %v1195
        %s1198 = scalar_lea.vmem [#allocation5], 48
        %v1199 = vld [vmem:[%s1198] sm:$0xf]
        %v1200 = vld [vmem:[%s1198 + $0x4] sm:$0xf]
        %v1201 = vld [vmem:[%s1198 + $0x8] sm:$0xf]
        %v1202 = vld [vmem:[%s1198 + $0xc] sm:$0xf]
        %v1207 = vunpack.c.l.b16 %v1199
        %v1208 = vunpack.c.l.b16 %v1200
        %v1209 = vunpack.c.l.b16 %v1201
        %v1210 = vunpack.c.l.b16 %v1202
        %v1211 = vpack.c.b16 %v1208, %v1207
        %v1212 = vpack.c.b16 %v1210, %v1209
        %v1216 = vsel %vm829, %v1197, 0
        %1218 = vmatpush.bf16.msra.mxu0 0
        %1219 = vmatpush.bf16.msra.mxu0 0
        %1220 = vmatpush.bf16.msra.mxu0 0
        %1221 = vmatpush.bf16.msra.mxu0 0
        %1222 = vmatpush.bf16.msra.mxu0 0
        %1223 = vmatpush.bf16.msra.mxu0 0
        %1224 = vmatpush.bf16.msra.mxu0 %v1212
        %1225 = vmatpush.bf16.msra.mxu0 %v1211
        %1226 = vmatmul.bf16.gmra.mxu0 %v1216
        %v1227 = vpop.f32.mrf.mxu0
        %v1228 = vadd.f32 0.0, %v1227
        %v1229 = vpop.f32.mrf.mxu0
        %1230 = vdwg.mxu0
        %v1231 = vadd.f32 %v1129, %v1228
        %v1232 = vadd.f32 %v585, %v1231
        %v1233 = vld [vmem:[%s5] sm:$0x1]
        %v1235 = vperm.slane %v1233, 0
        %v1237 = vadd.f32 %v1232, %v1235
        %v1238 = vld [vmem:[%s6] sm:$0x1]
        %v1239 = vld [vmem:[%s7] sm:$0x1]
        %1240 = vadd.xlane.f32.xlu0 %v1237
        %v1241 = vpop.xlane.xlu0 %1240
        %v1242 = vmul.f32 %v1241, %v602
        %v1243 = vsub.f32 %v1237, %v1242
        %v1244 = vmul.f32 %v1243, %v1243
        %1245 = vadd.xlane.f32.xlu0 %v1244
        %v1246 = vpop.xlane.xlu0 %1245
        %v1247 = vmul.f32 %v1246, %v602
        %v1248 = vadd.f32 %v1247, 1e-05
        %v1249 = vrsqrt.pop %v1248
        %v1250 = vmul.f32 %v1249, %v1248
        %v1251 = vmul.f32 %v1250, %v1249
        %v1252 = vmul.f32 0.5, %v1251
        %v1253 = vsub.f32 1.5, %v1252
        %v1254 = vmul.f32 %v1249, %v1253
        %vm1255 = vweird.f32 %v1248
        %vm1256 = vweird.f32 %v1249
        %vm1257 = vmor %vm1255, %vm1256
        %v1258 = vsel %vm1257, %v1249, %v1254
        %v1259 = vmul.f32 %v1243, %v1258
        %v1261 = vperm.slane %v1238, 0
        %v1263 = vmul.f32 %v1259, %v1261
        %v1265 = vperm.slane %v1239, 0
        %v1267 = vadd.f32 %v1263, %v1265
        %v1268 = vpack.c.bf16 %v1267, %v1267
        %v1269 = vld [vmem:[#allocation7] sm:$0xff]
        %v1270 = vld [vmem:[#allocation7 + $0x8] sm:$0xff]
        %v1271 = vld [vmem:[#allocation7 + $0x10] sm:$0xff]
        %v1272 = vld [vmem:[#allocation7 + $0x18] sm:$0xff]
        %v1273 = vld [vmem:[#allocation7 + $0x20] sm:$0xff]
        %v1274 = vld [vmem:[#allocation7 + $0x28] sm:$0xff]
        %v1275 = vld [vmem:[#allocation7 + $0x30] sm:$0xff]
        %v1276 = vld [vmem:[#allocation7 + $0x38] sm:$0xff]
        %v1277 = vld [vmem:[#allocation7 + $0x40] sm:$0xff]
        %v1278 = vld [vmem:[#allocation7 + $0x48] sm:$0xff]
        %v1279 = vld [vmem:[#allocation7 + $0x50] sm:$0xff]
        %v1280 = vld [vmem:[#allocation7 + $0x58] sm:$0xff]
        %v1281 = vld [vmem:[#allocation7 + $0x60] sm:$0xff]
        %v1282 = vld [vmem:[#allocation7 + $0x68] sm:$0xff]
        %v1283 = vld [vmem:[#allocation7 + $0x70] sm:$0xff]
        %v1284 = vld [vmem:[#allocation7 + $0x78] sm:$0xff]
        %v1285 = vld [vmem:[#allocation7 + $0x80] sm:$0xff]
        %v1286 = vld [vmem:[#allocation7 + $0x88] sm:$0xff]
        %v1287 = vld [vmem:[#allocation7 + $0x90] sm:$0xff]
        %v1288 = vld [vmem:[#allocation7 + $0x98] sm:$0xff]
        %v1289 = vld [vmem:[#allocation7 + $0xa0] sm:$0xff]
        %v1290 = vld [vmem:[#allocation7 + $0xa8] sm:$0xff]
        %v1291 = vld [vmem:[#allocation7 + $0xb0] sm:$0xff]
        %v1292 = vld [vmem:[#allocation7 + $0xb8] sm:$0xff]
        %v1293 = vld [vmem:[#allocation7 + $0xc0] sm:$0xff]
        %v1294 = vld [vmem:[#allocation7 + $0xc8] sm:$0xff]
        %v1295 = vld [vmem:[#allocation7 + $0xd0] sm:$0xff]
        %v1296 = vld [vmem:[#allocation7 + $0xd8] sm:$0xff]
        %v1297 = vld [vmem:[#allocation7 + $0xe0] sm:$0xff]
        %v1298 = vld [vmem:[#allocation7 + $0xe8] sm:$0xff]
        %v1299 = vld [vmem:[#allocation7 + $0xf0] sm:$0xff]
        %v1300 = vld [vmem:[#allocation7 + $0xf8] sm:$0xff]
        %v1301 = vld [vmem:[%s9] sm:$0xf]
        %v1303 = vperm.slane %v1301, 0
        %v1304 = vperm.slane %v1301, 1
        %v1305 = vperm.slane %v1301, 2
        %v1306 = vperm.slane %v1301, 3
        %v1343 = vunpack.c.l.b16 %v1269
        %v1344 = vunpack.c.h.b16 %v1269
        %v1345 = vunpack.c.l.b16 %v1270
        %v1346 = vunpack.c.h.b16 %v1270
        %v1347 = vunpack.c.l.b16 %v1271
        %v1348 = vunpack.c.h.b16 %v1271
        %v1349 = vunpack.c.l.b16 %v1272
        %v1350 = vunpack.c.h.b16 %v1272
        %v1351 = vunpack.c.l.b16 %v1273
        %v1352 = vunpack.c.h.b16 %v1273
        %v1353 = vunpack.c.l.b16 %v1274
        %v1354 = vunpack.c.h.b16 %v1274
        %v1355 = vunpack.c.l.b16 %v1275
        %v1356 = vunpack.c.h.b16 %v1275
        %v1357 = vunpack.c.l.b16 %v1276
        %v1358 = vunpack.c.h.b16 %v1276
        %v1359 = vunpack.c.l.b16 %v1277
        %v1360 = vunpack.c.h.b16 %v1277
        %v1361 = vunpack.c.l.b16 %v1278
        %v1362 = vunpack.c.h.b16 %v1278
        %v1363 = vunpack.c.l.b16 %v1279
        %v1364 = vunpack.c.h.b16 %v1279
        %v1365 = vunpack.c.l.b16 %v1280
        %v1366 = vunpack.c.h.b16 %v1280
        %v1367 = vunpack.c.l.b16 %v1281
        %v1368 = vunpack.c.h.b16 %v1281
        %v1369 = vunpack.c.l.b16 %v1282
        %v1370 = vunpack.c.h.b16 %v1282
        %v1371 = vunpack.c.l.b16 %v1283
        %v1372 = vunpack.c.h.b16 %v1283
        %v1373 = vunpack.c.l.b16 %v1284
        %v1374 = vunpack.c.h.b16 %v1284
        %v1375 = vunpack.c.l.b16 %v1285
        %v1376 = vunpack.c.h.b16 %v1285
        %v1377 = vunpack.c.l.b16 %v1286
        %v1378 = vunpack.c.h.b16 %v1286
        %v1379 = vunpack.c.l.b16 %v1287
        %v1380 = vunpack.c.h.b16 %v1287
        %v1381 = vunpack.c.l.b16 %v1288
        %v1382 = vunpack.c.h.b16 %v1288
        %v1383 = vunpack.c.l.b16 %v1289
        %v1384 = vunpack.c.h.b16 %v1289
        %v1385 = vunpack.c.l.b16 %v1290
        %v1386 = vunpack.c.h.b16 %v1290
        %v1387 = vunpack.c.l.b16 %v1291
        %v1388 = vunpack.c.h.b16 %v1291
        %v1389 = vunpack.c.l.b16 %v1292
        %v1390 = vunpack.c.h.b16 %v1292
        %v1391 = vunpack.c.l.b16 %v1293
        %v1392 = vunpack.c.h.b16 %v1293
        %v1393 = vunpack.c.l.b16 %v1294
        %v1394 = vunpack.c.h.b16 %v1294
        %v1395 = vunpack.c.l.b16 %v1295
        %v1396 = vunpack.c.h.b16 %v1295
        %v1397 = vunpack.c.l.b16 %v1296
        %v1398 = vunpack.c.h.b16 %v1296
        %v1399 = vunpack.c.l.b16 %v1297
        %v1400 = vunpack.c.h.b16 %v1297
        %v1401 = vunpack.c.l.b16 %v1298
        %v1402 = vunpack.c.h.b16 %v1298
        %v1403 = vunpack.c.l.b16 %v1299
        %v1404 = vunpack.c.h.b16 %v1299
        %v1405 = vunpack.c.l.b16 %v1300
        %v1406 = vunpack.c.h.b16 %v1300
        %v1407 = vpack.c.b16 %v1347, %v1343
        %v1408 = vpack.c.b16 %v1348, %v1344
        %v1409 = vpack.c.b16 %v1349, %v1345
        %v1410 = vpack.c.b16 %v1350, %v1346
        %v1411 = vpack.c.b16 %v1355, %v1351
        %v1412 = vpack.c.b16 %v1356, %v1352
        %v1413 = vpack.c.b16 %v1357, %v1353
        %v1414 = vpack.c.b16 %v1358, %v1354
        %v1415 = vpack.c.b16 %v1363, %v1359
        %v1416 = vpack.c.b16 %v1364, %v1360
        %v1417 = vpack.c.b16 %v1365, %v1361
        %v1418 = vpack.c.b16 %v1366, %v1362
        %v1419 = vpack.c.b16 %v1371, %v1367
        %v1420 = vpack.c.b16 %v1372, %v1368
        %v1421 = vpack.c.b16 %v1373, %v1369
        %v1422 = vpack.c.b16 %v1374, %v1370
        %v1423 = vpack.c.b16 %v1379, %v1375
        %v1424 = vpack.c.b16 %v1380, %v1376
        %v1425 = vpack.c.b16 %v1381, %v1377
        %v1426 = vpack.c.b16 %v1382, %v1378
        %v1427 = vpack.c.b16 %v1387, %v1383
        %v1428 = vpack.c.b16 %v1388, %v1384
        %v1429 = vpack.c.b16 %v1389, %v1385
        %v1430 = vpack.c.b16 %v1390, %v1386
        %v1431 = vpack.c.b16 %v1395, %v1391
        %v1432 = vpack.c.b16 %v1396, %v1392
        %v1433 = vpack.c.b16 %v1397, %v1393
        %v1434 = vpack.c.b16 %v1398, %v1394
        %v1435 = vpack.c.b16 %v1403, %v1399
        %v1436 = vpack.c.b16 %v1404, %v1400
        %v1437 = vpack.c.b16 %v1405, %v1401
        %v1438 = vpack.c.b16 %v1406, %v1402
        %1471 = vmatpush.bf16.msra.mxu0 %v1435
        %1472 = vmatpush.bf16.msra.mxu0 %v1431
        %1473 = vmatpush.bf16.msra.mxu0 %v1427
        %1474 = vmatpush.bf16.msra.mxu0 %v1423
        %1475 = vmatpush.bf16.msra.mxu0 %v1419
        %1476 = vmatpush.bf16.msra.mxu0 %v1415
        %1477 = vmatpush.bf16.msra.mxu0 %v1411
        %1478 = vmatpush.bf16.msra.mxu0 %v1407
        %1479 = vmatmul.bf16.gmra.mxu0 %v1268
        %v1480 = vpop.f32.mrf.mxu0
        %v1481 = vadd.f32 %v1303, %v1480
        %v1482 = vpop.f32.mrf.mxu0
        %1483 = vdwg.mxu0
        %1484 = vmatpush.bf16.msra.mxu0 %v1436
        %1485 = vmatpush.bf16.msra.mxu0 %v1432
        %1486 = vmatpush.bf16.msra.mxu0 %v1428
        %1487 = vmatpush.bf16.msra.mxu0 %v1424
        %1488 = vmatpush.bf16.msra.mxu0 %v1420
        %1489 = vmatpush.bf16.msra.mxu0 %v1416
        %1490 = vmatpush.bf16.msra.mxu0 %v1412
        %1491 = vmatpush.bf16.msra.mxu0 %v1408
        %1492 = vmatmul.bf16.gmra.mxu0 %v1268
        %v1493 = vpop.f32.mrf.mxu0
        %v1494 = vadd.f32 %v1304, %v1493
        %v1495 = vpop.f32.mrf.mxu0
        %1496 = vdwg.mxu0
        %1497 = vmatpush.bf16.msra.mxu0 %v1437
        %1498 = vmatpush.bf16.msra.mxu0 %v1433
        %1499 = vmatpush.bf16.msra.mxu0 %v1429
        %1500 = vmatpush.bf16.msra.mxu0 %v1425
        %1501 = vmatpush.bf16.msra.mxu0 %v1421
        %1502 = vmatpush.bf16.msra.mxu0 %v1417
        %1503 = vmatpush.bf16.msra.mxu0 %v1413
        %1504 = vmatpush.bf16.msra.mxu0 %v1409
        %1505 = vmatmul.bf16.gmra.mxu0 %v1268
        %v1506 = vpop.f32.mrf.mxu0
        %v1507 = vadd.f32 %v1305, %v1506
        %v1508 = vpop.f32.mrf.mxu0
        %1509 = vdwg.mxu0
        %1510 = vmatpush.bf16.msra.mxu0 %v1438
        %1511 = vmatpush.bf16.msra.mxu0 %v1434
        %1512 = vmatpush.bf16.msra.mxu0 %v1430
        %1513 = vmatpush.bf16.msra.mxu0 %v1426
        %1514 = vmatpush.bf16.msra.mxu0 %v1422
        %1515 = vmatpush.bf16.msra.mxu0 %v1418
        %1516 = vmatpush.bf16.msra.mxu0 %v1414
        %1517 = vmatpush.bf16.msra.mxu0 %v1410
        %1518 = vmatmul.bf16.gmra.mxu0 %v1268
        %v1519 = vpop.f32.mrf.mxu0
        %v1520 = vadd.f32 %v1306, %v1519
        %v1521 = vpop.f32.mrf.mxu0
        %1522 = vdwg.mxu0
        %v1523 = vmax.f32 %v1481, 0.0
        %v1524 = vmax.f32 %v1494, 0.0
        %v1525 = vmax.f32 %v1507, 0.0
        %v1526 = vmax.f32 %v1520, 0.0
        %v1527 = vpack.c.bf16 %v1523, %v1523
        %v1528 = vpack.c.bf16 %v1524, %v1524
        %v1529 = vpack.c.bf16 %v1525, %v1525
        %v1530 = vpack.c.bf16 %v1526, %v1526
        %v1531 = vld [vmem:[#allocation8] sm:$0xf]
        %v1532 = vld [vmem:[#allocation8 + $0x4] sm:$0xf]
        %v1533 = vld [vmem:[#allocation8 + $0x8] sm:$0xf]
        %v1534 = vld [vmem:[#allocation8 + $0xc] sm:$0xf]
        %v1535 = vld [vmem:[#allocation8 + $0x10] sm:$0xf]
        %v1536 = vld [vmem:[#allocation8 + $0x14] sm:$0xf]
        %v1537 = vld [vmem:[#allocation8 + $0x18] sm:$0xf]
        %v1538 = vld [vmem:[#allocation8 + $0x1c] sm:$0xf]
        %v1539 = vld [vmem:[#allocation8 + $0x20] sm:$0xf]
        %v1540 = vld [vmem:[#allocation8 + $0x24] sm:$0xf]
        %v1541 = vld [vmem:[#allocation8 + $0x28] sm:$0xf]
        %v1542 = vld [vmem:[#allocation8 + $0x2c] sm:$0xf]
        %v1543 = vld [vmem:[#allocation8 + $0x30] sm:$0xf]
        %v1544 = vld [vmem:[#allocation8 + $0x34] sm:$0xf]
        %v1545 = vld [vmem:[#allocation8 + $0x38] sm:$0xf]
        %v1546 = vld [vmem:[#allocation8 + $0x3c] sm:$0xf]
        %v1547 = vld [vmem:[#allocation8 + $0x40] sm:$0xf]
        %v1548 = vld [vmem:[#allocation8 + $0x44] sm:$0xf]
        %v1549 = vld [vmem:[#allocation8 + $0x48] sm:$0xf]
        %v1550 = vld [vmem:[#allocation8 + $0x4c] sm:$0xf]
        %v1551 = vld [vmem:[#allocation8 + $0x50] sm:$0xf]
        %v1552 = vld [vmem:[#allocation8 + $0x54] sm:$0xf]
        %v1553 = vld [vmem:[#allocation8 + $0x58] sm:$0xf]
        %v1554 = vld [vmem:[#allocation8 + $0x5c] sm:$0xf]
        %v1555 = vld [vmem:[#allocation8 + $0x60] sm:$0xf]
        %v1556 = vld [vmem:[#allocation8 + $0x64] sm:$0xf]
        %v1557 = vld [vmem:[#allocation8 + $0x68] sm:$0xf]
        %v1558 = vld [vmem:[#allocation8 + $0x6c] sm:$0xf]
        %v1559 = vld [vmem:[#allocation8 + $0x70] sm:$0xf]
        %v1560 = vld [vmem:[#allocation8 + $0x74] sm:$0xf]
        %v1561 = vld [vmem:[#allocation8 + $0x78] sm:$0xf]
        %v1562 = vld [vmem:[#allocation8 + $0x7c] sm:$0xf]
        %v1563 = vld [vmem:[#allocation8 + $0x80] sm:$0xf]
        %v1564 = vld [vmem:[#allocation8 + $0x84] sm:$0xf]
        %v1565 = vld [vmem:[#allocation8 + $0x88] sm:$0xf]
        %v1566 = vld [vmem:[#allocation8 + $0x8c] sm:$0xf]
        %v1567 = vld [vmem:[#allocation8 + $0x90] sm:$0xf]
        %v1568 = vld [vmem:[#allocation8 + $0x94] sm:$0xf]
        %v1569 = vld [vmem:[#allocation8 + $0x98] sm:$0xf]
        %v1570 = vld [vmem:[#allocation8 + $0x9c] sm:$0xf]
        %v1571 = vld [vmem:[#allocation8 + $0xa0] sm:$0xf]
        %v1572 = vld [vmem:[#allocation8 + $0xa4] sm:$0xf]
        %v1573 = vld [vmem:[#allocation8 + $0xa8] sm:$0xf]
        %v1574 = vld [vmem:[#allocation8 + $0xac] sm:$0xf]
        %v1575 = vld [vmem:[#allocation8 + $0xb0] sm:$0xf]
        %v1576 = vld [vmem:[#allocation8 + $0xb4] sm:$0xf]
        %v1577 = vld [vmem:[#allocation8 + $0xb8] sm:$0xf]
        %v1578 = vld [vmem:[#allocation8 + $0xbc] sm:$0xf]
        %v1579 = vld [vmem:[#allocation8 + $0xc0] sm:$0xf]
        %v1580 = vld [vmem:[#allocation8 + $0xc4] sm:$0xf]
        %v1581 = vld [vmem:[#allocation8 + $0xc8] sm:$0xf]
        %v1582 = vld [vmem:[#allocation8 + $0xcc] sm:$0xf]
        %v1583 = vld [vmem:[#allocation8 + $0xd0] sm:$0xf]
        %v1584 = vld [vmem:[#allocation8 + $0xd4] sm:$0xf]
        %v1585 = vld [vmem:[#allocation8 + $0xd8] sm:$0xf]
        %v1586 = vld [vmem:[#allocation8 + $0xdc] sm:$0xf]
        %v1587 = vld [vmem:[#allocation8 + $0xe0] sm:$0xf]
        %v1588 = vld [vmem:[#allocation8 + $0xe4] sm:$0xf]
        %v1589 = vld [vmem:[#allocation8 + $0xe8] sm:$0xf]
        %v1590 = vld [vmem:[#allocation8 + $0xec] sm:$0xf]
        %v1591 = vld [vmem:[#allocation8 + $0xf0] sm:$0xf]
        %v1592 = vld [vmem:[#allocation8 + $0xf4] sm:$0xf]
        %v1593 = vld [vmem:[#allocation8 + $0xf8] sm:$0xf]
        %v1594 = vld [vmem:[#allocation8 + $0xfc] sm:$0xf]
        %v1595 = vld [vmem:[%s11] sm:$0x1]
        %v1597 = vperm.slane %v1595, 0
        %v1663 = vunpack.c.l.b16 %v1531
        %v1664 = vunpack.c.l.b16 %v1532
        %v1665 = vunpack.c.l.b16 %v1533
        %v1666 = vunpack.c.l.b16 %v1534
        %v1667 = vunpack.c.l.b16 %v1535
        %v1668 = vunpack.c.l.b16 %v1536
        %v1669 = vunpack.c.l.b16 %v1537
        %v1670 = vunpack.c.l.b16 %v1538
        %v1671 = vunpack.c.l.b16 %v1539
        %v1672 = vunpack.c.l.b16 %v1540
        %v1673 = vunpack.c.l.b16 %v1541
        %v1674 = vunpack.c.l.b16 %v1542
        %v1675 = vunpack.c.l.b16 %v1543
        %v1676 = vunpack.c.l.b16 %v1544
        %v1677 = vunpack.c.l.b16 %v1545
        %v1678 = vunpack.c.l.b16 %v1546
        %v1679 = vunpack.c.l.b16 %v1547
        %v1680 = vunpack.c.l.b16 %v1548
        %v1681 = vunpack.c.l.b16 %v1549
        %v1682 = vunpack.c.l.b16 %v1550
        %v1683 = vunpack.c.l.b16 %v1551
        %v1684 = vunpack.c.l.b16 %v1552
        %v1685 = vunpack.c.l.b16 %v1553
        %v1686 = vunpack.c.l.b16 %v1554
        %v1687 = vunpack.c.l.b16 %v1555
        %v1688 = vunpack.c.l.b16 %v1556
        %v1689 = vunpack.c.l.b16 %v1557
        %v1690 = vunpack.c.l.b16 %v1558
        %v1691 = vunpack.c.l.b16 %v1559
        %v1692 = vunpack.c.l.b16 %v1560
        %v1693 = vunpack.c.l.b16 %v1561
        %v1694 = vunpack.c.l.b16 %v1562
        %v1695 = vunpack.c.l.b16 %v1563
        %v1696 = vunpack.c.l.b16 %v1564
        %v1697 = vunpack.c.l.b16 %v1565
        %v1698 = vunpack.c.l.b16 %v1566
        %v1699 = vunpack.c.l.b16 %v1567
        %v1700 = vunpack.c.l.b16 %v1568
        %v1701 = vunpack.c.l.b16 %v1569
        %v1702 = vunpack.c.l.b16 %v1570
        %v1703 = vunpack.c.l.b16 %v1571
        %v1704 = vunpack.c.l.b16 %v1572
        %v1705 = vunpack.c.l.b16 %v1573
        %v1706 = vunpack.c.l.b16 %v1574
        %v1707 = vunpack.c.l.b16 %v1575
        %v1708 = vunpack.c.l.b16 %v1576
        %v1709 = vunpack.c.l.b16 %v1577
        %v1710 = vunpack.c.l.b16 %v1578
        %v1711 = vunpack.c.l.b16 %v1579
        %v1712 = vunpack.c.l.b16 %v1580
        %v1713 = vunpack.c.l.b16 %v1581
        %v1714 = vunpack.c.l.b16 %v1582
        %v1715 = vunpack.c.l.b16 %v1583
        %v1716 = vunpack.c.l.b16 %v1584
        %v1717 = vunpack.c.l.b16 %v1585
        %v1718 = vunpack.c.l.b16 %v1586
        %v1719 = vunpack.c.l.b16 %v1587
        %v1720 = vunpack.c.l.b16 %v1588
        %v1721 = vunpack.c.l.b16 %v1589
        %v1722 = vunpack.c.l.b16 %v1590
        %v1723 = vunpack.c.l.b16 %v1591
        %v1724 = vunpack.c.l.b16 %v1592
        %v1725 = vunpack.c.l.b16 %v1593
        %v1726 = vunpack.c.l.b16 %v1594
        %v1727 = vpack.c.b16 %v1664, %v1663
        %v1728 = vpack.c.b16 %v1666, %v1665
        %v1729 = vpack.c.b16 %v1668, %v1667
        %v1730 = vpack.c.b16 %v1670, %v1669
        %v1731 = vpack.c.b16 %v1672, %v1671
        %v1732 = vpack.c.b16 %v1674, %v1673
        %v1733 = vpack.c.b16 %v1676, %v1675
        %v1734 = vpack.c.b16 %v1678, %v1677
        %v1735 = vpack.c.b16 %v1680, %v1679
        %v1736 = vpack.c.b16 %v1682, %v1681
        %v1737 = vpack.c.b16 %v1684, %v1683
        %v1738 = vpack.c.b16 %v1686, %v1685
        %v1739 = vpack.c.b16 %v1688, %v1687
        %v1740 = vpack.c.b16 %v1690, %v1689
        %v1741 = vpack.c.b16 %v1692, %v1691
        %v1742 = vpack.c.b16 %v1694, %v1693
        %v1743 = vpack.c.b16 %v1696, %v1695
        %v1744 = vpack.c.b16 %v1698, %v1697
        %v1745 = vpack.c.b16 %v1700, %v1699
        %v1746 = vpack.c.b16 %v1702, %v1701
        %v1747 = vpack.c.b16 %v1704, %v1703
        %v1748 = vpack.c.b16 %v1706, %v1705
        %v1749 = vpack.c.b16 %v1708, %v1707
        %v1750 = vpack.c.b16 %v1710, %v1709
        %v1751 = vpack.c.b16 %v1712, %v1711
        %v1752 = vpack.c.b16 %v1714, %v1713
        %v1753 = vpack.c.b16 %v1716, %v1715
        %v1754 = vpack.c.b16 %v1718, %v1717
        %v1755 = vpack.c.b16 %v1720, %v1719
        %v1756 = vpack.c.b16 %v1722, %v1721
        %v1757 = vpack.c.b16 %v1724, %v1723
        %v1758 = vpack.c.b16 %v1726, %v1725
        %1791 = vmatpush.bf16.msra.mxu0 %v1734
        %1792 = vmatpush.bf16.msra.mxu0 %v1733
        %1793 = vmatpush.bf16.msra.mxu0 %v1732
        %1794 = vmatpush.bf16.msra.mxu0 %v1731
        %1795 = vmatpush.bf16.msra.mxu0 %v1730
        %1796 = vmatpush.bf16.msra.mxu0 %v1729
        %1797 = vmatpush.bf16.msra.mxu0 %v1728
        %1798 = vmatpush.bf16.msra.mxu0 %v1727
        %1799 = vmatmul.bf16.gmra.mxu0 %v1527
        %v1800 = vpop.f32.mrf.mxu0
        %v1801 = vadd.f32 %v1597, %v1800
        %v1802 = vpop.f32.mrf.mxu0
        %1803 = vdwg.mxu0
        %1804 = vmatpush.bf16.msra.mxu0 %v1742
        %1805 = vmatpush.bf16.msra.mxu0 %v1741
        %1806 = vmatpush.bf16.msra.mxu0 %v1740
        %1807 = vmatpush.bf16.msra.mxu0 %v1739
        %1808 = vmatpush.bf16.msra.mxu0 %v1738
        %1809 = vmatpush.bf16.msra.mxu0 %v1737
        %1810 = vmatpush.bf16.msra.mxu0 %v1736
        %1811 = vmatpush.bf16.msra.mxu0 %v1735
        %1812 = vmatmul.bf16.gmra.mxu0 %v1528
        %v1813 = vpop.f32.mrf.mxu0
        %v1814 = vadd.f32 %v1801, %v1813
        %v1815 = vpop.f32.mrf.mxu0
        %1816 = vdwg.mxu0
        %1817 = vmatpush.bf16.msra.mxu0 %v1750
        %1818 = vmatpush.bf16.msra.mxu0 %v1749
        %1819 = vmatpush.bf16.msra.mxu0 %v1748
        %1820 = vmatpush.bf16.msra.mxu0 %v1747
        %1821 = vmatpush.bf16.msra.mxu0 %v1746
        %1822 = vmatpush.bf16.msra.mxu0 %v1745
        %1823 = vmatpush.bf16.msra.mxu0 %v1744
        %1824 = vmatpush.bf16.msra.mxu0 %v1743
        %1825 = vmatmul.bf16.gmra.mxu0 %v1529
        %v1826 = vpop.f32.mrf.mxu0
        %v1827 = vadd.f32 %v1814, %v1826
        %v1828 = vpop.f32.mrf.mxu0
        %1829 = vdwg.mxu0
        %1830 = vmatpush.bf16.msra.mxu0 %v1758
        %1831 = vmatpush.bf16.msra.mxu0 %v1757
        %1832 = vmatpush.bf16.msra.mxu0 %v1756
        %1833 = vmatpush.bf16.msra.mxu0 %v1755
        %1834 = vmatpush.bf16.msra.mxu0 %v1754
        %1835 = vmatpush.bf16.msra.mxu0 %v1753
        %1836 = vmatpush.bf16.msra.mxu0 %v1752
        %1837 = vmatpush.bf16.msra.mxu0 %v1751
        %1838 = vmatmul.bf16.gmra.mxu0 %v1530
        %v1839 = vpop.f32.mrf.mxu0
        %v1840 = vadd.f32 %v1827, %v1839
        %v1841 = vpop.f32.mrf.mxu0
        %1842 = vdwg.mxu0
        %v1843 = vadd.f32 %v1237, %v1840
        %s1844 = scalar_lea.vmem %s1, 1
        %v1845 = vld [vmem:[%s1844] sm:$0x1]
        %s1846 = scalar_lea.vmem %s2, 1
        %v1847 = vld [vmem:[%s1846] sm:$0x1]
        %1848 = vadd.xlane.f32.xlu0 %v1843
        %v1849 = vpop.xlane.xlu0 %1848
        %v1850 = vmul.f32 %v1849, %v602
        %v1851 = vsub.f32 %v1843, %v1850
        %v1852 = vmul.f32 %v1851, %v1851
        %1853 = vadd.xlane.f32.xlu0 %v1852
        %v1854 = vpop.xlane.xlu0 %1853
        %v1855 = vmul.f32 %v1854, %v602
        %v1856 = vadd.f32 %v1855, 1e-05
        %v1857 = vrsqrt.pop %v1856
        %v1858 = vmul.f32 %v1857, %v1856
        %v1859 = vmul.f32 %v1858, %v1857
        %v1860 = vmul.f32 0.5, %v1859
        %v1861 = vsub.f32 1.5, %v1860
        %v1862 = vmul.f32 %v1857, %v1861
        %vm1863 = vweird.f32 %v1856
        %vm1864 = vweird.f32 %v1857
        %vm1865 = vmor %vm1863, %vm1864
        %v1866 = vsel %vm1865, %v1857, %v1862
        %v1867 = vmul.f32 %v1851, %v1866
        %v1869 = vperm.slane %v1845, 0
        %v1871 = vmul.f32 %v1867, %v1869
        %v1873 = vperm.slane %v1847, 0
        %v1875 = vadd.f32 %v1871, %v1873
        %v1876 = vpack.c.bf16 %v1875, %v1875
        %s1877 = scalar_lea.vmem [#allocation2], 192
        %v1878 = vld [vmem:[%s1877] sm:$0xff]
        %v1879 = vld [vmem:[%s1877 + $0x8] sm:$0xf]
        %v1880 = vld [vmem:[%s1877 + $0xc] sm:$0xff]
        %v1881 = vld [vmem:[%s1877 + $0x14] sm:$0xf]
        %v1882 = vld [vmem:[%s1877 + $0x18] sm:$0xff]
        %v1883 = vld [vmem:[%s1877 + $0x20] sm:$0xf]
        %v1884 = vld [vmem:[%s1877 + $0x24] sm:$0xff]
        %v1885 = vld [vmem:[%s1877 + $0x2c] sm:$0xf]
        %v1886 = vld [vmem:[%s1877 + $0x30] sm:$0xff]
        %v1887 = vld [vmem:[%s1877 + $0x38] sm:$0xf]
        %v1888 = vld [vmem:[%s1877 + $0x3c] sm:$0xff]
        %v1889 = vld [vmem:[%s1877 + $0x44] sm:$0xf]
        %v1890 = vld [vmem:[%s1877 + $0x48] sm:$0xff]
        %v1891 = vld [vmem:[%s1877 + $0x50] sm:$0xf]
        %v1892 = vld [vmem:[%s1877 + $0x54] sm:$0xff]
        %v1893 = vld [vmem:[%s1877 + $0x5c] sm:$0xf]
        %v1894 = vld [vmem:[%s1877 + $0x60] sm:$0xff]
        %v1895 = vld [vmem:[%s1877 + $0x68] sm:$0xf]
        %v1896 = vld [vmem:[%s1877 + $0x6c] sm:$0xff]
        %v1897 = vld [vmem:[%s1877 + $0x74] sm:$0xf]
        %v1898 = vld [vmem:[%s1877 + $0x78] sm:$0xff]
        %v1899 = vld [vmem:[%s1877 + $0x80] sm:$0xf]
        %v1900 = vld [vmem:[%s1877 + $0x84] sm:$0xff]
        %v1901 = vld [vmem:[%s1877 + $0x8c] sm:$0xf]
        %v1902 = vld [vmem:[%s1877 + $0x90] sm:$0xff]
        %v1903 = vld [vmem:[%s1877 + $0x98] sm:$0xf]
        %v1904 = vld [vmem:[%s1877 + $0x9c] sm:$0xff]
        %v1905 = vld [vmem:[%s1877 + $0xa4] sm:$0xf]
        %v1906 = vld [vmem:[%s1877 + $0xa8] sm:$0xff]
        %v1907 = vld [vmem:[%s1877 + $0xb0] sm:$0xf]
        %v1908 = vld [vmem:[%s1877 + $0xb4] sm:$0xff]
        %v1909 = vld [vmem:[%s1877 + $0xbc] sm:$0xf]
        %v1942 = vunpack.c.l.b16 %v1878
        %v1943 = vunpack.c.h.b16 %v1878
        %v1944 = vunpack.c.l.b16 %v1879
        %v1945 = vunpack.c.l.b16 %v1880
        %v1946 = vunpack.c.h.b16 %v1880
        %v1947 = vunpack.c.l.b16 %v1881
        %v1948 = vunpack.c.l.b16 %v1882
        %v1949 = vunpack.c.h.b16 %v1882
        %v1950 = vunpack.c.l.b16 %v1883
        %v1951 = vunpack.c.l.b16 %v1884
        %v1952 = vunpack.c.h.b16 %v1884
        %v1953 = vunpack.c.l.b16 %v1885
        %v1954 = vunpack.c.l.b16 %v1886
        %v1955 = vunpack.c.h.b16 %v1886
        %v1956 = vunpack.c.l.b16 %v1887
        %v1957 = vunpack.c.l.b16 %v1888
        %v1958 = vunpack.c.h.b16 %v1888
        %v1959 = vunpack.c.l.b16 %v1889
        %v1960 = vunpack.c.l.b16 %v1890
        %v1961 = vunpack.c.h.b16 %v1890
        %v1962 = vunpack.c.l.b16 %v1891
        %v1963 = vunpack.c.l.b16 %v1892
        %v1964 = vunpack.c.h.b16 %v1892
        %v1965 = vunpack.c.l.b16 %v1893
        %v1966 = vunpack.c.l.b16 %v1894
        %v1967 = vunpack.c.h.b16 %v1894
        %v1968 = vunpack.c.l.b16 %v1895
        %v1969 = vunpack.c.l.b16 %v1896
        %v1970 = vunpack.c.h.b16 %v1896
        %v1971 = vunpack.c.l.b16 %v1897
        %v1972 = vunpack.c.l.b16 %v1898
        %v1973 = vunpack.c.h.b16 %v1898
        %v1974 = vunpack.c.l.b16 %v1899
        %v1975 = vunpack.c.l.b16 %v1900
        %v1976 = vunpack.c.h.b16 %v1900
        %v1977 = vunpack.c.l.b16 %v1901
        %v1978 = vunpack.c.l.b16 %v1902
        %v1979 = vunpack.c.h.b16 %v1902
        %v1980 = vunpack.c.l.b16 %v1903
        %v1981 = vunpack.c.l.b16 %v1904
        %v1982 = vunpack.c.h.b16 %v1904
        %v1983 = vunpack.c.l.b16 %v1905
        %v1984 = vunpack.c.l.b16 %v1906
        %v1985 = vunpack.c.h.b16 %v1906
        %v1986 = vunpack.c.l.b16 %v1907
        %v1987 = vunpack.c.l.b16 %v1908
        %v1988 = vunpack.c.h.b16 %v1908
        %v1989 = vunpack.c.l.b16 %v1909
        %v1990 = vpack.c.b16 %v1945, %v1942
        %v1991 = vpack.c.b16 %v1946, %v1943
        %v1992 = vpack.c.b16 %v1947, %v1944
        %v1993 = vpack.c.b16 %v1951, %v1948
        %v1994 = vpack.c.b16 %v1952, %v1949
        %v1995 = vpack.c.b16 %v1953, %v1950
        %v1996 = vpack.c.b16 %v1957, %v1954
        %v1997 = vpack.c.b16 %v1958, %v1955
        %v1998 = vpack.c.b16 %v1959, %v1956
        %v1999 = vpack.c.b16 %v1963, %v1960
        %v2000 = vpack.c.b16 %v1964, %v1961
        %v2001 = vpack.c.b16 %v1965, %v1962
        %v2002 = vpack.c.b16 %v1969, %v1966
        %v2003 = vpack.c.b16 %v1970, %v1967
        %v2004 = vpack.c.b16 %v1971, %v1968
        %v2005 = vpack.c.b16 %v1975, %v1972
        %v2006 = vpack.c.b16 %v1976, %v1973
        %v2007 = vpack.c.b16 %v1977, %v1974
        %v2008 = vpack.c.b16 %v1981, %v1978
        %v2009 = vpack.c.b16 %v1982, %v1979
        %v2010 = vpack.c.b16 %v1983, %v1980
        %v2011 = vpack.c.b16 %v1987, %v1984
        %v2012 = vpack.c.b16 %v1988, %v1985
        %v2013 = vpack.c.b16 %v1989, %v1986
        %2038 = vmatpush.bf16.msra.mxu0 %v2011
        %2039 = vmatpush.bf16.msra.mxu0 %v2008
        %2040 = vmatpush.bf16.msra.mxu0 %v2005
        %2041 = vmatpush.bf16.msra.mxu0 %v2002
        %2042 = vmatpush.bf16.msra.mxu0 %v1999
        %2043 = vmatpush.bf16.msra.mxu0 %v1996
        %2044 = vmatpush.bf16.msra.mxu0 %v1993
        %2045 = vmatpush.bf16.msra.mxu0 %v1990
        %2046 = vmatmul.bf16.gmra.mxu0 %v1876
        %v2047 = vpop.f32.mrf.mxu0
        %v2048 = vadd.f32 0.0, %v2047
        %v2049 = vpop.f32.mrf.mxu0
        %2050 = vdwg.mxu0
        %2051 = vmatpush.bf16.msra.mxu0 %v2012
        %2052 = vmatpush.bf16.msra.mxu0 %v2009
        %2053 = vmatpush.bf16.msra.mxu0 %v2006
        %2054 = vmatpush.bf16.msra.mxu0 %v2003
        %2055 = vmatpush.bf16.msra.mxu0 %v2000
        %2056 = vmatpush.bf16.msra.mxu0 %v1997
        %2057 = vmatpush.bf16.msra.mxu0 %v1994
        %2058 = vmatpush.bf16.msra.mxu0 %v1991
        %2059 = vmatmul.bf16.gmra.mxu0 %v1876
        %v2060 = vpop.f32.mrf.mxu0
        %v2061 = vadd.f32 0.0, %v2060
        %v2062 = vpop.f32.mrf.mxu0
        %2063 = vdwg.mxu0
        %2064 = vmatpush.bf16.msra.mxu0 %v2013
        %2065 = vmatpush.bf16.msra.mxu0 %v2010
        %2066 = vmatpush.bf16.msra.mxu0 %v2007
        %2067 = vmatpush.bf16.msra.mxu0 %v2004
        %2068 = vmatpush.bf16.msra.mxu0 %v2001
        %2069 = vmatpush.bf16.msra.mxu0 %v1998
        %2070 = vmatpush.bf16.msra.mxu0 %v1995
        %2071 = vmatpush.bf16.msra.mxu0 %v1992
        %2072 = vmatmul.bf16.gmra.mxu0 %v1876
        %v2073 = vpop.f32.mrf.mxu0
        %v2074 = vadd.f32 0.0, %v2073
        %v2075 = vpop.f32.mrf.mxu0
        %2076 = vdwg.mxu0
        %v2078 = vsel %vm829, %v2048, 0
        %v2081 = vsel %vm829, %v2061, 0
        %2083 = vmatpush.xpose.msra.mxu0 0.0
        %2084 = vmatpush.xpose.msra.mxu0 0.0
        %2085 = vmatpush.xpose.msra.mxu0 0.0
        %2086 = vmatpush.xpose.msra.mxu0 0.0
        %2087 = vmatpush.xpose.msra.mxu0 0.0
        %2088 = vmatpush.xpose.msra.mxu0 0.0
        %2089 = vmatpush.xpose.msra.mxu0 0.0
        %2090 = vmatpush.xpose.msra.mxu0 0.0
        %2091 = vmatpush.xpose.msra.mxu0 0.0
        %2092 = vmatpush.xpose.msra.mxu0 0.0
        %2093 = vmatpush.xpose.msra.mxu0 0.0
        %2094 = vmatpush.xpose.msra.mxu0 0.0
        %2095 = vmatpush.xpose.msra.mxu0 0.0
        %2096 = vmatpush.xpose.msra.mxu0 0.0
        %2097 = vmatpush.xpose.msra.mxu0 0.0
        %2098 = vmatpush.xpose.msra.mxu0 %v2081
        %2099 = vmatmul.f32.gmra.mxu0 %v2078
        %v2100 = vpop.f32.mrf.mxu0
        %v2101 = vadd.f32 0.0, %v2100
        %2102 = vdwg.mxu0
        %v2103 = vmul.f32 %v2101, 0.088388346
        %v2104 = vadd.f32 %v2103, %v591
        %v2105 = vsel %vm858, %v2104, -inf
        %2106 = vmax.xlane.f32.xlu0 %v2105
        %v2107 = vpop.xlane.xlu0 %2106
        %v2108 = vsub.f32 %v2104, %v2107
        %v2109 = vmul.f32 %v2108, 1.442695
        %v2110 = vpow.pop %v2109
        %v2111 = vsel %vm858, %v2110, 0.0
        %2112 = vadd.xlane.f32.xlu0 %v2111
        %v2113 = vpop.xlane.xlu0 %2112
        %v2114 = vrcp.pop %v2113
        %v2115 = vmul.f32 %v2110, %v2114
        %v2117 = vsel %vm858, %v2115, 0
        %2119 = vmatpush.msra.mxu0 0.0
        %2120 = vmatpush.msra.mxu0 0.0
        %2121 = vmatpush.msra.mxu0 0.0
        %2122 = vmatpush.msra.mxu0 0.0
        %2123 = vmatpush.msra.mxu0 0.0
        %2124 = vmatpush.msra.mxu0 0.0
        %2125 = vmatpush.msra.mxu0 0.0
        %2126 = vmatpush.msra.mxu0 0.0
        %2127 = vmatpush.msra.mxu0 0.0
        %2128 = vmatpush.msra.mxu0 0.0
        %2129 = vmatpush.msra.mxu0 0.0
        %2130 = vmatpush.msra.mxu0 0.0
        %2131 = vmatpush.msra.mxu0 0.0
        %2132 = vmatpush.msra.mxu0 0.0
        %2133 = vmatpush.msra.mxu0 0.0
        %2134 = vmatpush.msra.mxu0 %v2074
        %2135 = vmatmul.f32.gmra.mxu0 %v2117
        %v2136 = vpop.f32.mrf.mxu0
        %v2137 = vadd.f32 0.0, %v2136
        %2138 = vdwg.mxu0
        %v2139 = vpack.c.bf16 %v2137, %v2137
        %s2140 = scalar_lea.vmem [#allocation5], 64
        %v2141 = vld [vmem:[%s2140] sm:$0xf]
        %v2142 = vld [vmem:[%s2140 + $0x4] sm:$0xf]
        %v2143 = vld [vmem:[%s2140 + $0x8] sm:$0xf]
        %v2144 = vld [vmem:[%s2140 + $0xc] sm:$0xf]
        %2145 = vrot.lane.b32.xlu0 %v2048, 96
        %v2146 = vpop.permute.xlu0 %2145
        %2147 = vrot.lane.b32.xlu0 %v2061, 96
        %v2148 = vpop.permute.xlu0 %2147
        %v2149 = vsel %vm829, %v2146, 0
        %v2151 = vsel %vm829, %v2148, 0
        %2153 = vmatpush.xpose.msra.mxu0 0.0
        %2154 = vmatpush.xpose.msra.mxu0 0.0
        %2155 = vmatpush.xpose.msra.mxu0 0.0
        %2156 = vmatpush.xpose.msra.mxu0 0.0
        %2157 = vmatpush.xpose.msra.mxu0 0.0
        %2158 = vmatpush.xpose.msra.mxu0 0.0
        %2159 = vmatpush.xpose.msra.mxu0 0.0
        %2160 = vmatpush.xpose.msra.mxu0 0.0
        %2161 = vmatpush.xpose.msra.mxu0 0.0
        %2162 = vmatpush.xpose.msra.mxu0 0.0
        %2163 = vmatpush.xpose.msra.mxu0 0.0
        %2164 = vmatpush.xpose.msra.mxu0 0.0
        %2165 = vmatpush.xpose.msra.mxu0 0.0
        %2166 = vmatpush.xpose.msra.mxu0 0.0
        %2167 = vmatpush.xpose.msra.mxu0 0.0
        %2168 = vmatpush.xpose.msra.mxu0 %v2151
        %2169 = vmatmul.f32.gmra.mxu0 %v2149
        %v2170 = vpop.f32.mrf.mxu0
        %v2171 = vadd.f32 0.0, %v2170
        %2172 = vdwg.mxu0
        %v2173 = vmul.f32 %v2171, 0.088388346
        %v2174 = vadd.f32 %v2173, %v591
        %v2175 = vsel %vm858, %v2174, -inf
        %2176 = vmax.xlane.f32.xlu0 %v2175
        %v2177 = vpop.xlane.xlu0 %2176
        %v2178 = vsub.f32 %v2174, %v2177
        %v2179 = vmul.f32 %v2178, 1.442695
        %v2180 = vpow.pop %v2179
        %v2181 = vsel %vm858, %v2180, 0.0
        %2182 = vadd.xlane.f32.xlu0 %v2181
        %v2183 = vpop.xlane.xlu0 %2182
        %v2184 = vrcp.pop %v2183
        %v2185 = vmul.f32 %v2180, %v2184
        %2187 = vrot.lane.b32.xlu0 %v2074, 96
        %v2188 = vpop.permute.xlu0 %2187
        %v2191 = vsel %vm858, %v2185, 0
        %2193 = vmatpush.msra.mxu0 0.0
        %2194 = vmatpush.msra.mxu0 0.0
        %2195 = vmatpush.msra.mxu0 0.0
        %2196 = vmatpush.msra.mxu0 0.0
        %2197 = vmatpush.msra.mxu0 0.0
        %2198 = vmatpush.msra.mxu0 0.0
        %2199 = vmatpush.msra.mxu0 0.0
        %2200 = vmatpush.msra.mxu0 0.0
        %2201 = vmatpush.msra.mxu0 0.0
        %2202 = vmatpush.msra.mxu0 0.0
        %2203 = vmatpush.msra.mxu0 0.0
        %2204 = vmatpush.msra.mxu0 0.0
        %2205 = vmatpush.msra.mxu0 0.0
        %2206 = vmatpush.msra.mxu0 0.0
        %2207 = vmatpush.msra.mxu0 0.0
        %2208 = vmatpush.msra.mxu0 %v2188
        %2209 = vmatmul.f32.gmra.mxu0 %v2191
        %v2210 = vpop.f32.mrf.mxu0
        %v2211 = vadd.f32 0.0, %v2210
        %2212 = vdwg.mxu0
        %v2213 = vpack.c.bf16 %v2211, %v2211
        %s2214 = scalar_lea.vmem [#allocation5], 80
        %v2215 = vld [vmem:[%s2214] sm:$0xf]
        %v2216 = vld [vmem:[%s2214 + $0x4] sm:$0xf]
        %v2217 = vld [vmem:[%s2214 + $0x8] sm:$0xf]
        %v2218 = vld [vmem:[%s2214 + $0xc] sm:$0xf]
        %v2223 = vunpack.c.l.b16 %v2215
        %v2224 = vunpack.c.l.b16 %v2216
        %v2225 = vunpack.c.l.b16 %v2217
        %v2226 = vunpack.c.l.b16 %v2218
        %v2227 = vpack.c.b16 %v2224, %v2223
        %v2228 = vpack.c.b16 %v2226, %v2225
        %v2232 = vsel %vm829, %v2213, 0
        %2234 = vmatpush.bf16.msra.mxu0 0
        %2235 = vmatpush.bf16.msra.mxu0 0
        %2236 = vmatpush.bf16.msra.mxu0 0
        %2237 = vmatpush.bf16.msra.mxu0 0
        %2238 = vmatpush.bf16.msra.mxu0 0
        %2239 = vmatpush.bf16.msra.mxu0 0
        %2240 = vmatpush.bf16.msra.mxu0 %v2228
        %2241 = vmatpush.bf16.msra.mxu0 %v2227
        %2242 = vmatmul.bf16.gmra.mxu0 %v2232
        %v2243 = vpop.f32.mrf.mxu0
        %v2244 = vadd.f32 0.0, %v2243
        %v2245 = vpop.f32.mrf.mxu0
        %2246 = vdwg.mxu0
        %v2251 = vunpack.c.l.b16 %v2141
        %v2252 = vunpack.c.l.b16 %v2142
        %v2253 = vunpack.c.l.b16 %v2143
        %v2254 = vunpack.c.l.b16 %v2144
        %v2255 = vpack.c.b16 %v2252, %v2251
        %v2256 = vpack.c.b16 %v2254, %v2253
        %v2260 = vsel %vm829, %v2139, 0
        %2262 = vmatpush.bf16.msra.mxu0 0
        %2263 = vmatpush.bf16.msra.mxu0 0
        %2264 = vmatpush.bf16.msra.mxu0 0
        %2265 = vmatpush.bf16.msra.mxu0 0
        %2266 = vmatpush.bf16.msra.mxu0 0
        %2267 = vmatpush.bf16.msra.mxu0 0
        %2268 = vmatpush.bf16.msra.mxu0 %v2256
        %2269 = vmatpush.bf16.msra.mxu0 %v2255
        %2270 = vmatmul.bf16.gmra.mxu0 %v2260
        %v2271 = vpop.f32.mrf.mxu0
        %v2272 = vadd.f32 %v2244, %v2271
        %v2273 = vpop.f32.mrf.mxu0
        %2274 = vdwg.mxu0
        %2275 = vrot.lane.b32.xlu0 %v2048, 64
        %v2276 = vpop.permute.xlu0 %2275
        %2277 = vrot.lane.b32.xlu0 %v2061, 64
        %v2278 = vpop.permute.xlu0 %2277
        %v2279 = vsel %vm829, %v2276, 0
        %v2281 = vsel %vm829, %v2278, 0
        %2283 = vmatpush.xpose.msra.mxu0 0.0
        %2284 = vmatpush.xpose.msra.mxu0 0.0
        %2285 = vmatpush.xpose.msra.mxu0 0.0
        %2286 = vmatpush.xpose.msra.mxu0 0.0
        %2287 = vmatpush.xpose.msra.mxu0 0.0
        %2288 = vmatpush.xpose.msra.mxu0 0.0
        %2289 = vmatpush.xpose.msra.mxu0 0.0
        %2290 = vmatpush.xpose.msra.mxu0 0.0
        %2291 = vmatpush.xpose.msra.mxu0 0.0
        %2292 = vmatpush.xpose.msra.mxu0 0.0
        %2293 = vmatpush.xpose.msra.mxu0 0.0
        %2294 = vmatpush.xpose.msra.mxu0 0.0
        %2295 = vmatpush.xpose.msra.mxu0 0.0
        %2296 = vmatpush.xpose.msra.mxu0 0.0
        %2297 = vmatpush.xpose.msra.mxu0 0.0
        %2298 = vmatpush.xpose.msra.mxu0 %v2281
        %2299 = vmatmul.f32.gmra.mxu0 %v2279
        %v2300 = vpop.f32.mrf.mxu0
        %v2301 = vadd.f32 0.0, %v2300
        %2302 = vdwg.mxu0
        %v2303 = vmul.f32 %v2301, 0.088388346
        %v2304 = vadd.f32 %v2303, %v591
        %v2305 = vsel %vm858, %v2304, -inf
        %2306 = vmax.xlane.f32.xlu0 %v2305
        %v2307 = vpop.xlane.xlu0 %2306
        %v2308 = vsub.f32 %v2304, %v2307
        %v2309 = vmul.f32 %v2308, 1.442695
        %v2310 = vpow.pop %v2309
        %v2311 = vsel %vm858, %v2310, 0.0
        %2312 = vadd.xlane.f32.xlu0 %v2311
        %v2313 = vpop.xlane.xlu0 %2312
        %v2314 = vrcp.pop %v2313
        %v2315 = vmul.f32 %v2310, %v2314
        %2316 = vrot.lane.b32.xlu0 %v2074, 64
        %v2317 = vpop.permute.xlu0 %2316
        %v2320 = vsel %vm858, %v2315, 0
        %2322 = vmatpush.msra.mxu0 0.0
        %2323 = vmatpush.msra.mxu0 0.0
        %2324 = vmatpush.msra.mxu0 0.0
        %2325 = vmatpush.msra.mxu0 0.0
        %2326 = vmatpush.msra.mxu0 0.0
        %2327 = vmatpush.msra.mxu0 0.0
        %2328 = vmatpush.msra.mxu0 0.0
        %2329 = vmatpush.msra.mxu0 0.0
        %2330 = vmatpush.msra.mxu0 0.0
        %2331 = vmatpush.msra.mxu0 0.0
        %2332 = vmatpush.msra.mxu0 0.0
        %2333 = vmatpush.msra.mxu0 0.0
        %2334 = vmatpush.msra.mxu0 0.0
        %2335 = vmatpush.msra.mxu0 0.0
        %2336 = vmatpush.msra.mxu0 0.0
        %2337 = vmatpush.msra.mxu0 %v2317
        %2338 = vmatmul.f32.gmra.mxu0 %v2320
        %v2339 = vpop.f32.mrf.mxu0
        %v2340 = vadd.f32 0.0, %v2339
        %2341 = vdwg.mxu0
        %v2342 = vpack.c.bf16 %v2340, %v2340
        %s2343 = scalar_lea.vmem [#allocation5], 96
        %v2344 = vld [vmem:[%s2343] sm:$0xf]
        %v2345 = vld [vmem:[%s2343 + $0x4] sm:$0xf]
        %v2346 = vld [vmem:[%s2343 + $0x8] sm:$0xf]
        %v2347 = vld [vmem:[%s2343 + $0xc] sm:$0xf]
        %v2352 = vunpack.c.l.b16 %v2344
        %v2353 = vunpack.c.l.b16 %v2345
        %v2354 = vunpack.c.l.b16 %v2346
        %v2355 = vunpack.c.l.b16 %v2347
        %v2356 = vpack.c.b16 %v2353, %v2352
        %v2357 = vpack.c.b16 %v2355, %v2354
        %v2361 = vsel %vm829, %v2342, 0
        %2363 = vmatpush.bf16.msra.mxu0 0
        %2364 = vmatpush.bf16.msra.mxu0 0
        %2365 = vmatpush.bf16.msra.mxu0 0
        %2366 = vmatpush.bf16.msra.mxu0 0
        %2367 = vmatpush.bf16.msra.mxu0 0
        %2368 = vmatpush.bf16.msra.mxu0 0
        %2369 = vmatpush.bf16.msra.mxu0 %v2357
        %2370 = vmatpush.bf16.msra.mxu0 %v2356
        %2371 = vmatmul.bf16.gmra.mxu0 %v2361
        %v2372 = vpop.f32.mrf.mxu0
        %v2373 = vadd.f32 0.0, %v2372
        %v2374 = vpop.f32.mrf.mxu0
        %2375 = vdwg.mxu0
        %v2376 = vadd.f32 %v2272, %v2373
        %2377 = vrot.lane.b32.xlu0 %v2048, 32
        %v2378 = vpop.permute.xlu0 %2377
        %2379 = vrot.lane.b32.xlu0 %v2061, 32
        %v2380 = vpop.permute.xlu0 %2379
        %v2381 = vsel %vm829, %v2378, 0
        %v2383 = vsel %vm829, %v2380, 0
        %2385 = vmatpush.xpose.msra.mxu0 0.0
        %2386 = vmatpush.xpose.msra.mxu0 0.0
        %2387 = vmatpush.xpose.msra.mxu0 0.0
        %2388 = vmatpush.xpose.msra.mxu0 0.0
        %2389 = vmatpush.xpose.msra.mxu0 0.0
        %2390 = vmatpush.xpose.msra.mxu0 0.0
        %2391 = vmatpush.xpose.msra.mxu0 0.0
        %2392 = vmatpush.xpose.msra.mxu0 0.0
        %2393 = vmatpush.xpose.msra.mxu0 0.0
        %2394 = vmatpush.xpose.msra.mxu0 0.0
        %2395 = vmatpush.xpose.msra.mxu0 0.0
        %2396 = vmatpush.xpose.msra.mxu0 0.0
        %2397 = vmatpush.xpose.msra.mxu0 0.0
        %2398 = vmatpush.xpose.msra.mxu0 0.0
        %2399 = vmatpush.xpose.msra.mxu0 0.0
        %2400 = vmatpush.xpose.msra.mxu0 %v2383
        %2401 = vmatmul.f32.gmra.mxu0 %v2381
        %v2402 = vpop.f32.mrf.mxu0
        %v2403 = vadd.f32 0.0, %v2402
        %2404 = vdwg.mxu0
        %v2405 = vmul.f32 %v2403, 0.088388346
        %v2406 = vadd.f32 %v2405, %v591
        %v2407 = vsel %vm858, %v2406, -inf
        %2408 = vmax.xlane.f32.xlu0 %v2407
        %v2409 = vpop.xlane.xlu0 %2408
        %v2410 = vsub.f32 %v2406, %v2409
        %v2411 = vmul.f32 %v2410, 1.442695
        %v2412 = vpow.pop %v2411
        %v2413 = vsel %vm858, %v2412, 0.0
        %2414 = vadd.xlane.f32.xlu0 %v2413
        %v2415 = vpop.xlane.xlu0 %2414
        %v2416 = vrcp.pop %v2415
        %v2417 = vmul.f32 %v2412, %v2416
        %2418 = vrot.lane.b32.xlu0 %v2074, 32
        %v2419 = vpop.permute.xlu0 %2418
        %v2422 = vsel %vm858, %v2417, 0
        %2424 = vmatpush.msra.mxu0 0.0
        %2425 = vmatpush.msra.mxu0 0.0
        %2426 = vmatpush.msra.mxu0 0.0
        %2427 = vmatpush.msra.mxu0 0.0
        %2428 = vmatpush.msra.mxu0 0.0
        %2429 = vmatpush.msra.mxu0 0.0
        %2430 = vmatpush.msra.mxu0 0.0
        %2431 = vmatpush.msra.mxu0 0.0
        %2432 = vmatpush.msra.mxu0 0.0
        %2433 = vmatpush.msra.mxu0 0.0
        %2434 = vmatpush.msra.mxu0 0.0
        %2435 = vmatpush.msra.mxu0 0.0
        %2436 = vmatpush.msra.mxu0 0.0
        %2437 = vmatpush.msra.mxu0 0.0
        %2438 = vmatpush.msra.mxu0 0.0
        %2439 = vmatpush.msra.mxu0 %v2419
        %2440 = vmatmul.f32.gmra.mxu0 %v2422
        %v2441 = vpop.f32.mrf.mxu0
        %v2442 = vadd.f32 0.0, %v2441
        %2443 = vdwg.mxu0
        %v2444 = vpack.c.bf16 %v2442, %v2442
        %s2445 = scalar_lea.vmem [#allocation5], 112
        %v2446 = vld [vmem:[%s2445] sm:$0xf]
        %v2447 = vld [vmem:[%s2445 + $0x4] sm:$0xf]
        %v2448 = vld [vmem:[%s2445 + $0x8] sm:$0xf]
        %v2449 = vld [vmem:[%s2445 + $0xc] sm:$0xf]
        %v2454 = vunpack.c.l.b16 %v2446
        %v2455 = vunpack.c.l.b16 %v2447
        %v2456 = vunpack.c.l.b16 %v2448
        %v2457 = vunpack.c.l.b16 %v2449
        %v2458 = vpack.c.b16 %v2455, %v2454
        %v2459 = vpack.c.b16 %v2457, %v2456
        %v2463 = vsel %vm829, %v2444, 0
        %2465 = vmatpush.bf16.msra.mxu0 0
        %2466 = vmatpush.bf16.msra.mxu0 0
        %2467 = vmatpush.bf16.msra.mxu0 0
        %2468 = vmatpush.bf16.msra.mxu0 0
        %2469 = vmatpush.bf16.msra.mxu0 0
        %2470 = vmatpush.bf16.msra.mxu0 0
        %2471 = vmatpush.bf16.msra.mxu0 %v2459
        %2472 = vmatpush.bf16.msra.mxu0 %v2458
        %2473 = vmatmul.bf16.gmra.mxu0 %v2463
        %v2474 = vpop.f32.mrf.mxu0
        %v2475 = vadd.f32 0.0, %v2474
        %v2476 = vpop.f32.mrf.mxu0
        %2477 = vdwg.mxu0
        %v2478 = vadd.f32 %v2376, %v2475
        %v2479 = vadd.f32 %v1843, %v2478
        %s2480 = scalar_lea.vmem %s5, 1
        %v2481 = vld [vmem:[%s2480] sm:$0x1]
        %v2483 = vperm.slane %v2481, 0
        %v2485 = vadd.f32 %v2479, %v2483
        %s2486 = scalar_lea.vmem %s6, 1
        %v2487 = vld [vmem:[%s2486] sm:$0x1]
        %s2488 = scalar_lea.vmem %s7, 1
        %v2489 = vld [vmem:[%s2488] sm:$0x1]
        %2490 = vadd.xlane.f32.xlu0 %v2485
        %v2491 = vpop.xlane.xlu0 %2490
        %v2492 = vmul.f32 %v2491, %v602
        %v2493 = vsub.f32 %v2485, %v2492
        %v2494 = vmul.f32 %v2493, %v2493
        %2495 = vadd.xlane.f32.xlu0 %v2494
        %v2496 = vpop.xlane.xlu0 %2495
        %v2497 = vmul.f32 %v2496, %v602
        %v2498 = vadd.f32 %v2497, 1e-05
        %v2499 = vrsqrt.pop %v2498
        %v2500 = vmul.f32 %v2499, %v2498
        %v2501 = vmul.f32 %v2500, %v2499
        %v2502 = vmul.f32 0.5, %v2501
        %v2503 = vsub.f32 1.5, %v2502
        %v2504 = vmul.f32 %v2499, %v2503
        %vm2505 = vweird.f32 %v2498
        %vm2506 = vweird.f32 %v2499
        %vm2507 = vmor %vm2505, %vm2506
        %v2508 = vsel %vm2507, %v2499, %v2504
        %v2509 = vmul.f32 %v2493, %v2508
        %v2511 = vperm.slane %v2487, 0
        %v2513 = vmul.f32 %v2509, %v2511
        %v2515 = vperm.slane %v2489, 0
        %v2517 = vadd.f32 %v2513, %v2515
        %v2518 = vpack.c.bf16 %v2517, %v2517
        %s2519 = scalar_lea.vmem [#allocation7], 256
        %v2520 = vld [vmem:[%s2519] sm:$0xff]
        %v2521 = vld [vmem:[%s2519 + $0x8] sm:$0xff]
        %v2522 = vld [vmem:[%s2519 + $0x10] sm:$0xff]
        %v2523 = vld [vmem:[%s2519 + $0x18] sm:$0xff]
        %v2524 = vld [vmem:[%s2519 + $0x20] sm:$0xff]
        %v2525 = vld [vmem:[%s2519 + $0x28] sm:$0xff]
        %v2526 = vld [vmem:[%s2519 + $0x30] sm:$0xff]
        %v2527 = vld [vmem:[%s2519 + $0x38] sm:$0xff]
        %v2528 = vld [vmem:[%s2519 + $0x40] sm:$0xff]
        %v2529 = vld [vmem:[%s2519 + $0x48] sm:$0xff]
        %v2530 = vld [vmem:[%s2519 + $0x50] sm:$0xff]
        %v2531 = vld [vmem:[%s2519 + $0x58] sm:$0xff]
        %v2532 = vld [vmem:[%s2519 + $0x60] sm:$0xff]
        %v2533 = vld [vmem:[%s2519 + $0x68] sm:$0xff]
        %v2534 = vld [vmem:[%s2519 + $0x70] sm:$0xff]
        %v2535 = vld [vmem:[%s2519 + $0x78] sm:$0xff]
        %v2536 = vld [vmem:[%s2519 + $0x80] sm:$0xff]
        %v2537 = vld [vmem:[%s2519 + $0x88] sm:$0xff]
        %v2538 = vld [vmem:[%s2519 + $0x90] sm:$0xff]
        %v2539 = vld [vmem:[%s2519 + $0x98] sm:$0xff]
        %v2540 = vld [vmem:[%s2519 + $0xa0] sm:$0xff]
        %v2541 = vld [vmem:[%s2519 + $0xa8] sm:$0xff]
        %v2542 = vld [vmem:[%s2519 + $0xb0] sm:$0xff]
        %v2543 = vld [vmem:[%s2519 + $0xb8] sm:$0xff]
        %v2544 = vld [vmem:[%s2519 + $0xc0] sm:$0xff]
        %v2545 = vld [vmem:[%s2519 + $0xc8] sm:$0xff]
        %v2546 = vld [vmem:[%s2519 + $0xd0] sm:$0xff]
        %v2547 = vld [vmem:[%s2519 + $0xd8] sm:$0xff]
        %v2548 = vld [vmem:[%s2519 + $0xe0] sm:$0xff]
        %v2549 = vld [vmem:[%s2519 + $0xe8] sm:$0xff]
        %v2550 = vld [vmem:[%s2519 + $0xf0] sm:$0xff]
        %v2551 = vld [vmem:[%s2519 + $0xf8] sm:$0xff]
        %s2552 = scalar_lea.vmem %s9, 4
        %v2553 = vld [vmem:[%s2552] sm:$0xf]
        %v2555 = vperm.slane %v2553, 0
        %v2556 = vperm.slane %v2553, 1
        %v2557 = vperm.slane %v2553, 2
        %v2558 = vperm.slane %v2553, 3
        %v2595 = vunpack.c.l.b16 %v2520
        %v2596 = vunpack.c.h.b16 %v2520
        %v2597 = vunpack.c.l.b16 %v2521
        %v2598 = vunpack.c.h.b16 %v2521
        %v2599 = vunpack.c.l.b16 %v2522
        %v2600 = vunpack.c.h.b16 %v2522
        %v2601 = vunpack.c.l.b16 %v2523
        %v2602 = vunpack.c.h.b16 %v2523
        %v2603 = vunpack.c.l.b16 %v2524
        %v2604 = vunpack.c.h.b16 %v2524
        %v2605 = vunpack.c.l.b16 %v2525
        %v2606 = vunpack.c.h.b16 %v2525
        %v2607 = vunpack.c.l.b16 %v2526
        %v2608 = vunpack.c.h.b16 %v2526
        %v2609 = vunpack.c.l.b16 %v2527
        %v2610 = vunpack.c.h.b16 %v2527
        %v2611 = vunpack.c.l.b16 %v2528
        %v2612 = vunpack.c.h.b16 %v2528
        %v2613 = vunpack.c.l.b16 %v2529
        %v2614 = vunpack.c.h.b16 %v2529
        %v2615 = vunpack.c.l.b16 %v2530
        %v2616 = vunpack.c.h.b16 %v2530
        %v2617 = vunpack.c.l.b16 %v2531
        %v2618 = vunpack.c.h.b16 %v2531
        %v2619 = vunpack.c.l.b16 %v2532
        %v2620 = vunpack.c.h.b16 %v2532
        %v2621 = vunpack.c.l.b16 %v2533
        %v2622 = vunpack.c.h.b16 %v2533
        %v2623 = vunpack.c.l.b16 %v2534
        %v2624 = vunpack.c.h.b16 %v2534
        %v2625 = vunpack.c.l.b16 %v2535
        %v2626 = vunpack.c.h.b16 %v2535
        %v2627 = vunpack.c.l.b16 %v2536
        %v2628 = vunpack.c.h.b16 %v2536
        %v2629 = vunpack.c.l.b16 %v2537
        %v2630 = vunpack.c.h.b16 %v2537
        %v2631 = vunpack.c.l.b16 %v2538
        %v2632 = vunpack.c.h.b16 %v2538
        %v2633 = vunpack.c.l.b16 %v2539
        %v2634 = vunpack.c.h.b16 %v2539
        %v2635 = vunpack.c.l.b16 %v2540
        %v2636 = vunpack.c.h.b16 %v2540
        %v2637 = vunpack.c.l.b16 %v2541
        %v2638 = vunpack.c.h.b16 %v2541
        %v2639 = vunpack.c.l.b16 %v2542
        %v2640 = vunpack.c.h.b16 %v2542
        %v2641 = vunpack.c.l.b16 %v2543
        %v2642 = vunpack.c.h.b16 %v2543
        %v2643 = vunpack.c.l.b16 %v2544
        %v2644 = vunpack.c.h.b16 %v2544
        %v2645 = vunpack.c.l.b16 %v2545
        %v2646 = vunpack.c.h.b16 %v2545
        %v2647 = vunpack.c.l.b16 %v2546
        %v2648 = vunpack.c.h.b16 %v2546
        %v2649 = vunpack.c.l.b16 %v2547
        %v2650 = vunpack.c.h.b16 %v2547
        %v2651 = vunpack.c.l.b16 %v2548
        %v2652 = vunpack.c.h.b16 %v2548
        %v2653 = vunpack.c.l.b16 %v2549
        %v2654 = vunpack.c.h.b16 %v2549
        %v2655 = vunpack.c.l.b16 %v2550
        %v2656 = vunpack.c.h.b16 %v2550
        %v2657 = vunpack.c.l.b16 %v2551
        %v2658 = vunpack.c.h.b16 %v2551
        %v2659 = vpack.c.b16 %v2599, %v2595
        %v2660 = vpack.c.b16 %v2600, %v2596
        %v2661 = vpack.c.b16 %v2601, %v2597
        %v2662 = vpack.c.b16 %v2602, %v2598
        %v2663 = vpack.c.b16 %v2607, %v2603
        %v2664 = vpack.c.b16 %v2608, %v2604
        %v2665 = vpack.c.b16 %v2609, %v2605
        %v2666 = vpack.c.b16 %v2610, %v2606
        %v2667 = vpack.c.b16 %v2615, %v2611
        %v2668 = vpack.c.b16 %v2616, %v2612
        %v2669 = vpack.c.b16 %v2617, %v2613
        %v2670 = vpack.c.b16 %v2618, %v2614
        %v2671 = vpack.c.b16 %v2623, %v2619
        %v2672 = vpack.c.b16 %v2624, %v2620
        %v2673 = vpack.c.b16 %v2625, %v2621
        %v2674 = vpack.c.b16 %v2626, %v2622
        %v2675 = vpack.c.b16 %v2631, %v2627
        %v2676 = vpack.c.b16 %v2632, %v2628
        %v2677 = vpack.c.b16 %v2633, %v2629
        %v2678 = vpack.c.b16 %v2634, %v2630
        %v2679 = vpack.c.b16 %v2639, %v2635
        %v2680 = vpack.c.b16 %v2640, %v2636
        %v2681 = vpack.c.b16 %v2641, %v2637
        %v2682 = vpack.c.b16 %v2642, %v2638
        %v2683 = vpack.c.b16 %v2647, %v2643
        %v2684 = vpack.c.b16 %v2648, %v2644
        %v2685 = vpack.c.b16 %v2649, %v2645
        %v2686 = vpack.c.b16 %v2650, %v2646
        %v2687 = vpack.c.b16 %v2655, %v2651
        %v2688 = vpack.c.b16 %v2656, %v2652
        %v2689 = vpack.c.b16 %v2657, %v2653
        %v2690 = vpack.c.b16 %v2658, %v2654
        %2723 = vmatpush.bf16.msra.mxu0 %v2687
        %2724 = vmatpush.bf16.msra.mxu0 %v2683
        %2725 = vmatpush.bf16.msra.mxu0 %v2679
        %2726 = vmatpush.bf16.msra.mxu0 %v2675
        %2727 = vmatpush.bf16.msra.mxu0 %v2671
        %2728 = vmatpush.bf16.msra.mxu0 %v2667
        %2729 = vmatpush.bf16.msra.mxu0 %v2663
        %2730 = vmatpush.bf16.msra.mxu0 %v2659
        %2731 = vmatmul.bf16.gmra.mxu0 %v2518
        %v2732 = vpop.f32.mrf.mxu0
        %v2733 = vadd.f32 %v2555, %v2732
        %v2734 = vpop.f32.mrf.mxu0
        %2735 = vdwg.mxu0
        %2736 = vmatpush.bf16.msra.mxu0 %v2688
        %2737 = vmatpush.bf16.msra.mxu0 %v2684
        %2738 = vmatpush.bf16.msra.mxu0 %v2680
        %2739 = vmatpush.bf16.msra.mxu0 %v2676
        %2740 = vmatpush.bf16.msra.mxu0 %v2672
        %2741 = vmatpush.bf16.msra.mxu0 %v2668
        %2742 = vmatpush.bf16.msra.mxu0 %v2664
        %2743 = vmatpush.bf16.msra.mxu0 %v2660
        %2744 = vmatmul.bf16.gmra.mxu0 %v2518
        %v2745 = vpop.f32.mrf.mxu0
        %v2746 = vadd.f32 %v2556, %v2745
        %v2747 = vpop.f32.mrf.mxu0
        %2748 = vdwg.mxu0
        %2749 = vmatpush.bf16.msra.mxu0 %v2689
        %2750 = vmatpush.bf16.msra.mxu0 %v2685
        %2751 = vmatpush.bf16.msra.mxu0 %v2681
        %2752 = vmatpush.bf16.msra.mxu0 %v2677
        %2753 = vmatpush.bf16.msra.mxu0 %v2673
        %2754 = vmatpush.bf16.msra.mxu0 %v2669
        %2755 = vmatpush.bf16.msra.mxu0 %v2665
        %2756 = vmatpush.bf16.msra.mxu0 %v2661
        %2757 = vmatmul.bf16.gmra.mxu0 %v2518
        %v2758 = vpop.f32.mrf.mxu0
        %v2759 = vadd.f32 %v2557, %v2758
        %v2760 = vpop.f32.mrf.mxu0
        %2761 = vdwg.mxu0
        %2762 = vmatpush.bf16.msra.mxu0 %v2690
        %2763 = vmatpush.bf16.msra.mxu0 %v2686
        %2764 = vmatpush.bf16.msra.mxu0 %v2682
        %2765 = vmatpush.bf16.msra.mxu0 %v2678
        %2766 = vmatpush.bf16.msra.mxu0 %v2674
        %2767 = vmatpush.bf16.msra.mxu0 %v2670
        %2768 = vmatpush.bf16.msra.mxu0 %v2666
        %2769 = vmatpush.bf16.msra.mxu0 %v2662
        %2770 = vmatmul.bf16.gmra.mxu0 %v2518
        %v2771 = vpop.f32.mrf.mxu0
        %v2772 = vadd.f32 %v2558, %v2771
        %v2773 = vpop.f32.mrf.mxu0
        %2774 = vdwg.mxu0
        %v2775 = vmax.f32 %v2733, 0.0
        %v2776 = vmax.f32 %v2746, 0.0
        %v2777 = vmax.f32 %v2759, 0.0
        %v2778 = vmax.f32 %v2772, 0.0
        %v2779 = vpack.c.bf16 %v2775, %v2775
        %v2780 = vpack.c.bf16 %v2776, %v2776
        %v2781 = vpack.c.bf16 %v2777, %v2777
        %v2782 = vpack.c.bf16 %v2778, %v2778
        %s2783 = scalar_lea.vmem [#allocation8], 256
        %v2784 = vld [vmem:[%s2783] sm:$0xf]
        %v2785 = vld [vmem:[%s2783 + $0x4] sm:$0xf]
        %v2786 = vld [vmem:[%s2783 + $0x8] sm:$0xf]
        %v2787 = vld [vmem:[%s2783 + $0xc] sm:$0xf]
        %v2788 = vld [vmem:[%s2783 + $0x10] sm:$0xf]
        %v2789 = vld [vmem:[%s2783 + $0x14] sm:$0xf]
        %v2790 = vld [vmem:[%s2783 + $0x18] sm:$0xf]
        %v2791 = vld [vmem:[%s2783 + $0x1c] sm:$0xf]
        %v2792 = vld [vmem:[%s2783 + $0x20] sm:$0xf]
        %v2793 = vld [vmem:[%s2783 + $0x24] sm:$0xf]
        %v2794 = vld [vmem:[%s2783 + $0x28] sm:$0xf]
        %v2795 = vld [vmem:[%s2783 + $0x2c] sm:$0xf]
        %v2796 = vld [vmem:[%s2783 + $0x30] sm:$0xf]
        %v2797 = vld [vmem:[%s2783 + $0x34] sm:$0xf]
        %v2798 = vld [vmem:[%s2783 + $0x38] sm:$0xf]
        %v2799 = vld [vmem:[%s2783 + $0x3c] sm:$0xf]
        %v2800 = vld [vmem:[%s2783 + $0x40] sm:$0xf]
        %v2801 = vld [vmem:[%s2783 + $0x44] sm:$0xf]
        %v2802 = vld [vmem:[%s2783 + $0x48] sm:$0xf]
        %v2803 = vld [vmem:[%s2783 + $0x4c] sm:$0xf]
        %v2804 = vld [vmem:[%s2783 + $0x50] sm:$0xf]
        %v2805 = vld [vmem:[%s2783 + $0x54] sm:$0xf]
        %v2806 = vld [vmem:[%s2783 + $0x58] sm:$0xf]
        %v2807 = vld [vmem:[%s2783 + $0x5c] sm:$0xf]
        %v2808 = vld [vmem:[%s2783 + $0x60] sm:$0xf]
        %v2809 = vld [vmem:[%s2783 + $0x64] sm:$0xf]
        %v2810 = vld [vmem:[%s2783 + $0x68] sm:$0xf]
        %v2811 = vld [vmem:[%s2783 + $0x6c] sm:$0xf]
        %v2812 = vld [vmem:[%s2783 + $0x70] sm:$0xf]
        %v2813 = vld [vmem:[%s2783 + $0x74] sm:$0xf]
        %v2814 = vld [vmem:[%s2783 + $0x78] sm:$0xf]
        %v2815 = vld [vmem:[%s2783 + $0x7c] sm:$0xf]
        %v2816 = vld [vmem:[%s2783 + $0x80] sm:$0xf]
        %v2817 = vld [vmem:[%s2783 + $0x84] sm:$0xf]
        %v2818 = vld [vmem:[%s2783 + $0x88] sm:$0xf]
        %v2819 = vld [vmem:[%s2783 + $0x8c] sm:$0xf]
        %v2820 = vld [vmem:[%s2783 + $0x90] sm:$0xf]
        %v2821 = vld [vmem:[%s2783 + $0x94] sm:$0xf]
        %v2822 = vld [vmem:[%s2783 + $0x98] sm:$0xf]
        %v2823 = vld [vmem:[%s2783 + $0x9c] sm:$0xf]
        %v2824 = vld [vmem:[%s2783 + $0xa0] sm:$0xf]
        %v2825 = vld [vmem:[%s2783 + $0xa4] sm:$0xf]
        %v2826 = vld [vmem:[%s2783 + $0xa8] sm:$0xf]
        %v2827 = vld [vmem:[%s2783 + $0xac] sm:$0xf]
        %v2828 = vld [vmem:[%s2783 + $0xb0] sm:$0xf]
        %v2829 = vld [vmem:[%s2783 + $0xb4] sm:$0xf]
        %v2830 = vld [vmem:[%s2783 + $0xb8] sm:$0xf]
        %v2831 = vld [vmem:[%s2783 + $0xbc] sm:$0xf]
        %v2832 = vld [vmem:[%s2783 + $0xc0] sm:$0xf]
        %v2833 = vld [vmem:[%s2783 + $0xc4] sm:$0xf]
        %v2834 = vld [vmem:[%s2783 + $0xc8] sm:$0xf]
        %v2835 = vld [vmem:[%s2783 + $0xcc] sm:$0xf]
        %v2836 = vld [vmem:[%s2783 + $0xd0] sm:$0xf]
        %v2837 = vld [vmem:[%s2783 + $0xd4] sm:$0xf]
        %v2838 = vld [vmem:[%s2783 + $0xd8] sm:$0xf]
        %v2839 = vld [vmem:[%s2783 + $0xdc] sm:$0xf]
        %v2840 = vld [vmem:[%s2783 + $0xe0] sm:$0xf]
        %v2841 = vld [vmem:[%s2783 + $0xe4] sm:$0xf]
        %v2842 = vld [vmem:[%s2783 + $0xe8] sm:$0xf]
        %v2843 = vld [vmem:[%s2783 + $0xec] sm:$0xf]
        %v2844 = vld [vmem:[%s2783 + $0xf0] sm:$0xf]
        %v2845 = vld [vmem:[%s2783 + $0xf4] sm:$0xf]
        %v2846 = vld [vmem:[%s2783 + $0xf8] sm:$0xf]
        %v2847 = vld [vmem:[%s2783 + $0xfc] sm:$0xf]
        %s2848 = scalar_lea.vmem %s11, 1
        %v2849 = vld [vmem:[%s2848] sm:$0x1]
        %v2851 = vperm.slane %v2849, 0
        %v2917 = vunpack.c.l.b16 %v2784
        %v2918 = vunpack.c.l.b16 %v2785
        %v2919 = vunpack.c.l.b16 %v2786
        %v2920 = vunpack.c.l.b16 %v2787
        %v2921 = vunpack.c.l.b16 %v2788
        %v2922 = vunpack.c.l.b16 %v2789
        %v2923 = vunpack.c.l.b16 %v2790
        %v2924 = vunpack.c.l.b16 %v2791
        %v2925 = vunpack.c.l.b16 %v2792
        %v2926 = vunpack.c.l.b16 %v2793
        %v2927 = vunpack.c.l.b16 %v2794
        %v2928 = vunpack.c.l.b16 %v2795
        %v2929 = vunpack.c.l.b16 %v2796
        %v2930 = vunpack.c.l.b16 %v2797
        %v2931 = vunpack.c.l.b16 %v2798
        %v2932 = vunpack.c.l.b16 %v2799
        %v2933 = vunpack.c.l.b16 %v2800
        %v2934 = vunpack.c.l.b16 %v2801
        %v2935 = vunpack.c.l.b16 %v2802
        %v2936 = vunpack.c.l.b16 %v2803
        %v2937 = vunpack.c.l.b16 %v2804
        %v2938 = vunpack.c.l.b16 %v2805
        %v2939 = vunpack.c.l.b16 %v2806
        %v2940 = vunpack.c.l.b16 %v2807
        %v2941 = vunpack.c.l.b16 %v2808
        %v2942 = vunpack.c.l.b16 %v2809
        %v2943 = vunpack.c.l.b16 %v2810
        %v2944 = vunpack.c.l.b16 %v2811
        %v2945 = vunpack.c.l.b16 %v2812
        %v2946 = vunpack.c.l.b16 %v2813
        %v2947 = vunpack.c.l.b16 %v2814
        %v2948 = vunpack.c.l.b16 %v2815
        %v2949 = vunpack.c.l.b16 %v2816
        %v2950 = vunpack.c.l.b16 %v2817
        %v2951 = vunpack.c.l.b16 %v2818
        %v2952 = vunpack.c.l.b16 %v2819
        %v2953 = vunpack.c.l.b16 %v2820
        %v2954 = vunpack.c.l.b16 %v2821
        %v2955 = vunpack.c.l.b16 %v2822
        %v2956 = vunpack.c.l.b16 %v2823
        %v2957 = vunpack.c.l.b16 %v2824
        %v2958 = vunpack.c.l.b16 %v2825
        %v2959 = vunpack.c.l.b16 %v2826
        %v2960 = vunpack.c.l.b16 %v2827
        %v2961 = vunpack.c.l.b16 %v2828
        %v2962 = vunpack.c.l.b16 %v2829
        %v2963 = vunpack.c.l.b16 %v2830
        %v2964 = vunpack.c.l.b16 %v2831
        %v2965 = vunpack.c.l.b16 %v2832
        %v2966 = vunpack.c.l.b16 %v2833
        %v2967 = vunpack.c.l.b16 %v2834
        %v2968 = vunpack.c.l.b16 %v2835
        %v2969 = vunpack.c.l.b16 %v2836
        %v2970 = vunpack.c.l.b16 %v2837
        %v2971 = vunpack.c.l.b16 %v2838
        %v2972 = vunpack.c.l.b16 %v2839
        %v2973 = vunpack.c.l.b16 %v2840
        %v2974 = vunpack.c.l.b16 %v2841
        %v2975 = vunpack.c.l.b16 %v2842
        %v2976 = vunpack.c.l.b16 %v2843
        %v2977 = vunpack.c.l.b16 %v2844
        %v2978 = vunpack.c.l.b16 %v2845
        %v2979 = vunpack.c.l.b16 %v2846
        %v2980 = vunpack.c.l.b16 %v2847
        %v2981 = vpack.c.b16 %v2918, %v2917
        %v2982 = vpack.c.b16 %v2920, %v2919
        %v2983 = vpack.c.b16 %v2922, %v2921
        %v2984 = vpack.c.b16 %v2924, %v2923
        %v2985 = vpack.c.b16 %v2926, %v2925
        %v2986 = vpack.c.b16 %v2928, %v2927
        %v2987 = vpack.c.b16 %v2930, %v2929
        %v2988 = vpack.c.b16 %v2932, %v2931
        %v2989 = vpack.c.b16 %v2934, %v2933
        %v2990 = vpack.c.b16 %v2936, %v2935
        %v2991 = vpack.c.b16 %v2938, %v2937
        %v2992 = vpack.c.b16 %v2940, %v2939
        %v2993 = vpack.c.b16 %v2942, %v2941
        %v2994 = vpack.c.b16 %v2944, %v2943
        %v2995 = vpack.c.b16 %v2946, %v2945
        %v2996 = vpack.c.b16 %v2948, %v2947
        %v2997 = vpack.c.b16 %v2950, %v2949
        %v2998 = vpack.c.b16 %v2952, %v2951
        %v2999 = vpack.c.b16 %v2954, %v2953
        %v3000 = vpack.c.b16 %v2956, %v2955
        %v3001 = vpack.c.b16 %v2958, %v2957
        %v3002 = vpack.c.b16 %v2960, %v2959
        %v3003 = vpack.c.b16 %v2962, %v2961
        %v3004 = vpack.c.b16 %v2964, %v2963
        %v3005 = vpack.c.b16 %v2966, %v2965
        %v3006 = vpack.c.b16 %v2968, %v2967
        %v3007 = vpack.c.b16 %v2970, %v2969
        %v3008 = vpack.c.b16 %v2972, %v2971
        %v3009 = vpack.c.b16 %v2974, %v2973
        %v3010 = vpack.c.b16 %v2976, %v2975
        %v3011 = vpack.c.b16 %v2978, %v2977
        %v3012 = vpack.c.b16 %v2980, %v2979
        %3045 = vmatpush.bf16.msra.mxu0 %v2988
        %3046 = vmatpush.bf16.msra.mxu0 %v2987
        %3047 = vmatpush.bf16.msra.mxu0 %v2986
        %3048 = vmatpush.bf16.msra.mxu0 %v2985
        %3049 = vmatpush.bf16.msra.mxu0 %v2984
        %3050 = vmatpush.bf16.msra.mxu0 %v2983
        %3051 = vmatpush.bf16.msra.mxu0 %v2982
        %3052 = vmatpush.bf16.msra.mxu0 %v2981
        %3053 = vmatmul.bf16.gmra.mxu0 %v2779
        %v3054 = vpop.f32.mrf.mxu0
        %v3055 = vadd.f32 %v2851, %v3054
        %v3056 = vpop.f32.mrf.mxu0
        %3057 = vdwg.mxu0
        %3058 = vmatpush.bf16.msra.mxu0 %v2996
        %3059 = vmatpush.bf16.msra.mxu0 %v2995
        %3060 = vmatpush.bf16.msra.mxu0 %v2994
        %3061 = vmatpush.bf16.msra.mxu0 %v2993
        %3062 = vmatpush.bf16.msra.mxu0 %v2992
        %3063 = vmatpush.bf16.msra.mxu0 %v2991
        %3064 = vmatpush.bf16.msra.mxu0 %v2990
        %3065 = vmatpush.bf16.msra.mxu0 %v2989
        %3066 = vmatmul.bf16.gmra.mxu0 %v2780
        %v3067 = vpop.f32.mrf.mxu0
        %v3068 = vadd.f32 %v3055, %v3067
        %v3069 = vpop.f32.mrf.mxu0
        %3070 = vdwg.mxu0
        %3071 = vmatpush.bf16.msra.mxu0 %v3004
        %3072 = vmatpush.bf16.msra.mxu0 %v3003
        %3073 = vmatpush.bf16.msra.mxu0 %v3002
        %3074 = vmatpush.bf16.msra.mxu0 %v3001
        %3075 = vmatpush.bf16.msra.mxu0 %v3000
        %3076 = vmatpush.bf16.msra.mxu0 %v2999
        %3077 = vmatpush.bf16.msra.mxu0 %v2998
        %3078 = vmatpush.bf16.msra.mxu0 %v2997
        %3079 = vmatmul.bf16.gmra.mxu0 %v2781
        %v3080 = vpop.f32.mrf.mxu0
        %v3081 = vadd.f32 %v3068, %v3080
        %v3082 = vpop.f32.mrf.mxu0
        %3083 = vdwg.mxu0
        %3084 = vmatpush.bf16.msra.mxu0 %v3012
        %3085 = vmatpush.bf16.msra.mxu0 %v3011
        %3086 = vmatpush.bf16.msra.mxu0 %v3010
        %3087 = vmatpush.bf16.msra.mxu0 %v3009
        %3088 = vmatpush.bf16.msra.mxu0 %v3008
        %3089 = vmatpush.bf16.msra.mxu0 %v3007
        %3090 = vmatpush.bf16.msra.mxu0 %v3006
        %3091 = vmatpush.bf16.msra.mxu0 %v3005
        %3092 = vmatmul.bf16.gmra.mxu0 %v2782
        %v3093 = vpop.f32.mrf.mxu0
        %v3094 = vadd.f32 %v3081, %v3093
        %v3095 = vpop.f32.mrf.mxu0
        %3096 = vdwg.mxu0
        %v3097 = vadd.f32 %v2485, %v3094
        %s3098 = scalar_lea.vmem %s1, 2
        %v3099 = vld [vmem:[%s3098] sm:$0x1]
        %s3100 = scalar_lea.vmem %s2, 2
        %v3101 = vld [vmem:[%s3100] sm:$0x1]
        %3102 = vadd.xlane.f32.xlu0 %v3097
        %v3103 = vpop.xlane.xlu0 %3102
        %v3104 = vmul.f32 %v3103, %v602
        %v3105 = vsub.f32 %v3097, %v3104
        %v3106 = vmul.f32 %v3105, %v3105
        %3107 = vadd.xlane.f32.xlu0 %v3106
        %v3108 = vpop.xlane.xlu0 %3107
        %v3109 = vmul.f32 %v3108, %v602
        %v3110 = vadd.f32 %v3109, 1e-05
        %v3111 = vrsqrt.pop %v3110
        %v3112 = vmul.f32 %v3111, %v3110
        %v3113 = vmul.f32 %v3112, %v3111
        %v3114 = vmul.f32 0.5, %v3113
        %v3115 = vsub.f32 1.5, %v3114
        %v3116 = vmul.f32 %v3111, %v3115
        %vm3117 = vweird.f32 %v3110
        %vm3118 = vweird.f32 %v3111
        %vm3119 = vmor %vm3117, %vm3118
        %v3120 = vsel %vm3119, %v3111, %v3116
        %v3121 = vmul.f32 %v3105, %v3120
        %v3123 = vperm.slane %v3099, 0
        %v3125 = vmul.f32 %v3121, %v3123
        %v3127 = vperm.slane %v3101, 0
        %v3129 = vadd.f32 %v3125, %v3127
        %v3130 = vpack.c.bf16 %v3129, %v3129
        %s3131 = scalar_lea.vmem [#allocation2], 384
        %v3132 = vld [vmem:[%s3131] sm:$0xff]
        %v3133 = vld [vmem:[%s3131 + $0x8] sm:$0xf]
        %v3134 = vld [vmem:[%s3131 + $0xc] sm:$0xff]
        %v3135 = vld [vmem:[%s3131 + $0x14] sm:$0xf]
        %v3136 = vld [vmem:[%s3131 + $0x18] sm:$0xff]
        %v3137 = vld [vmem:[%s3131 + $0x20] sm:$0xf]
        %v3138 = vld [vmem:[%s3131 + $0x24] sm:$0xff]
        %v3139 = vld [vmem:[%s3131 + $0x2c] sm:$0xf]
        %v3140 = vld [vmem:[%s3131 + $0x30] sm:$0xff]
        %v3141 = vld [vmem:[%s3131 + $0x38] sm:$0xf]
        %v3142 = vld [vmem:[%s3131 + $0x3c] sm:$0xff]
        %v3143 = vld [vmem:[%s3131 + $0x44] sm:$0xf]
        %v3144 = vld [vmem:[%s3131 + $0x48] sm:$0xff]
        %v3145 = vld [vmem:[%s3131 + $0x50] sm:$0xf]
        %v3146 = vld [vmem:[%s3131 + $0x54] sm:$0xff]
        %v3147 = vld [vmem:[%s3131 + $0x5c] sm:$0xf]
        %v3148 = vld [vmem:[%s3131 + $0x60] sm:$0xff]
        %v3149 = vld [vmem:[%s3131 + $0x68] sm:$0xf]
        %v3150 = vld [vmem:[%s3131 + $0x6c] sm:$0xff]
        %v3151 = vld [vmem:[%s3131 + $0x74] sm:$0xf]
        %v3152 = vld [vmem:[%s3131 + $0x78] sm:$0xff]
        %v3153 = vld [vmem:[%s3131 + $0x80] sm:$0xf]
        %v3154 = vld [vmem:[%s3131 + $0x84] sm:$0xff]
        %v3155 = vld [vmem:[%s3131 + $0x8c] sm:$0xf]
        %v3156 = vld [vmem:[%s3131 + $0x90] sm:$0xff]
        %v3157 = vld [vmem:[%s3131 + $0x98] sm:$0xf]
        %v3158 = vld [vmem:[%s3131 + $0x9c] sm:$0xff]
        %v3159 = vld [vmem:[%s3131 + $0xa4] sm:$0xf]
        %v3160 = vld [vmem:[%s3131 + $0xa8] sm:$0xff]
        %v3161 = vld [vmem:[%s3131 + $0xb0] sm:$0xf]
        %v3162 = vld [vmem:[%s3131 + $0xb4] sm:$0xff]
        %v3163 = vld [vmem:[%s3131 + $0xbc] sm:$0xf]
        %v3196 = vunpack.c.l.b16 %v3132
        %v3197 = vunpack.c.h.b16 %v3132
        %v3198 = vunpack.c.l.b16 %v3133
        %v3199 = vunpack.c.l.b16 %v3134
        %v3200 = vunpack.c.h.b16 %v3134
        %v3201 = vunpack.c.l.b16 %v3135
        %v3202 = vunpack.c.l.b16 %v3136
        %v3203 = vunpack.c.h.b16 %v3136
        %v3204 = vunpack.c.l.b16 %v3137
        %v3205 = vunpack.c.l.b16 %v3138
        %v3206 = vunpack.c.h.b16 %v3138
        %v3207 = vunpack.c.l.b16 %v3139
        %v3208 = vunpack.c.l.b16 %v3140
        %v3209 = vunpack.c.h.b16 %v3140
        %v3210 = vunpack.c.l.b16 %v3141
        %v3211 = vunpack.c.l.b16 %v3142
        %v3212 = vunpack.c.h.b16 %v3142
        %v3213 = vunpack.c.l.b16 %v3143
        %v3214 = vunpack.c.l.b16 %v3144
        %v3215 = vunpack.c.h.b16 %v3144
        %v3216 = vunpack.c.l.b16 %v3145
        %v3217 = vunpack.c.l.b16 %v3146
        %v3218 = vunpack.c.h.b16 %v3146
        %v3219 = vunpack.c.l.b16 %v3147
        %v3220 = vunpack.c.l.b16 %v3148
        %v3221 = vunpack.c.h.b16 %v3148
        %v3222 = vunpack.c.l.b16 %v3149
        %v3223 = vunpack.c.l.b16 %v3150
        %v3224 = vunpack.c.h.b16 %v3150
        %v3225 = vunpack.c.l.b16 %v3151
        %v3226 = vunpack.c.l.b16 %v3152
        %v3227 = vunpack.c.h.b16 %v3152
        %v3228 = vunpack.c.l.b16 %v3153
        %v3229 = vunpack.c.l.b16 %v3154
        %v3230 = vunpack.c.h.b16 %v3154
        %v3231 = vunpack.c.l.b16 %v3155
        %v3232 = vunpack.c.l.b16 %v3156
        %v3233 = vunpack.c.h.b16 %v3156
        %v3234 = vunpack.c.l.b16 %v3157
        %v3235 = vunpack.c.l.b16 %v3158
        %v3236 = vunpack.c.h.b16 %v3158
        %v3237 = vunpack.c.l.b16 %v3159
        %v3238 = vunpack.c.l.b16 %v3160
        %v3239 = vunpack.c.h.b16 %v3160
        %v3240 = vunpack.c.l.b16 %v3161
        %v3241 = vunpack.c.l.b16 %v3162
        %v3242 = vunpack.c.h.b16 %v3162
        %v3243 = vunpack.c.l.b16 %v3163
        %v3244 = vpack.c.b16 %v3199, %v3196
        %v3245 = vpack.c.b16 %v3200, %v3197
        %v3246 = vpack.c.b16 %v3201, %v3198
        %v3247 = vpack.c.b16 %v3205, %v3202
        %v3248 = vpack.c.b16 %v3206, %v3203
        %v3249 = vpack.c.b16 %v3207, %v3204
        %v3250 = vpack.c.b16 %v3211, %v3208
        %v3251 = vpack.c.b16 %v3212, %v3209
        %v3252 = vpack.c.b16 %v3213, %v3210
        %v3253 = vpack.c.b16 %v3217, %v3214
        %v3254 = vpack.c.b16 %v3218, %v3215
        %v3255 = vpack.c.b16 %v3219, %v3216
        %v3256 = vpack.c.b16 %v3223, %v3220
        %v3257 = vpack.c.b16 %v3224, %v3221
        %v3258 = vpack.c.b16 %v3225, %v3222
        %v3259 = vpack.c.b16 %v3229, %v3226
        %v3260 = vpack.c.b16 %v3230, %v3227
        %v3261 = vpack.c.b16 %v3231, %v3228
        %v3262 = vpack.c.b16 %v3235, %v3232
        %v3263 = vpack.c.b16 %v3236, %v3233
        %v3264 = vpack.c.b16 %v3237, %v3234
        %v3265 = vpack.c.b16 %v3241, %v3238
        %v3266 = vpack.c.b16 %v3242, %v3239
        %v3267 = vpack.c.b16 %v3243, %v3240
        %3292 = vmatpush.bf16.msra.mxu0 %v3265
        %3293 = vmatpush.bf16.msra.mxu0 %v3262
        %3294 = vmatpush.bf16.msra.mxu0 %v3259
        %3295 = vmatpush.bf16.msra.mxu0 %v3256
        %3296 = vmatpush.bf16.msra.mxu0 %v3253
        %3297 = vmatpush.bf16.msra.mxu0 %v3250
        %3298 = vmatpush.bf16.msra.mxu0 %v3247
        %3299 = vmatpush.bf16.msra.mxu0 %v3244
        %3300 = vmatmul.bf16.gmra.mxu0 %v3130
        %v3301 = vpop.f32.mrf.mxu0
        %v3302 = vadd.f32 0.0, %v3301
        %v3303 = vpop.f32.mrf.mxu0
        %3304 = vdwg.mxu0
        %3305 = vmatpush.bf16.msra.mxu0 %v3266
        %3306 = vmatpush.bf16.msra.mxu0 %v3263
        %3307 = vmatpush.bf16.msra.mxu0 %v3260
        %3308 = vmatpush.bf16.msra.mxu0 %v3257
        %3309 = vmatpush.bf16.msra.mxu0 %v3254
        %3310 = vmatpush.bf16.msra.mxu0 %v3251
        %3311 = vmatpush.bf16.msra.mxu0 %v3248
        %3312 = vmatpush.bf16.msra.mxu0 %v3245
        %3313 = vmatmul.bf16.gmra.mxu0 %v3130
        %v3314 = vpop.f32.mrf.mxu0
        %v3315 = vadd.f32 0.0, %v3314
        %v3316 = vpop.f32.mrf.mxu0
        %3317 = vdwg.mxu0
        %3318 = vmatpush.bf16.msra.mxu0 %v3267
        %3319 = vmatpush.bf16.msra.mxu0 %v3264
        %3320 = vmatpush.bf16.msra.mxu0 %v3261
        %3321 = vmatpush.bf16.msra.mxu0 %v3258
        %3322 = vmatpush.bf16.msra.mxu0 %v3255
        %3323 = vmatpush.bf16.msra.mxu0 %v3252
        %3324 = vmatpush.bf16.msra.mxu0 %v3249
        %3325 = vmatpush.bf16.msra.mxu0 %v3246
        %3326 = vmatmul.bf16.gmra.mxu0 %v3130
        %v3327 = vpop.f32.mrf.mxu0
        %v3328 = vadd.f32 0.0, %v3327
        %v3329 = vpop.f32.mrf.mxu0
        %3330 = vdwg.mxu0
        %v3332 = vsel %vm829, %v3302, 0
        %v3335 = vsel %vm829, %v3315, 0
        %3337 = vmatpush.xpose.msra.mxu0 0.0
        %3338 = vmatpush.xpose.msra.mxu0 0.0
        %3339 = vmatpush.xpose.msra.mxu0 0.0
        %3340 = vmatpush.xpose.msra.mxu0 0.0
        %3341 = vmatpush.xpose.msra.mxu0 0.0
        %3342 = vmatpush.xpose.msra.mxu0 0.0
        %3343 = vmatpush.xpose.msra.mxu0 0.0
        %3344 = vmatpush.xpose.msra.mxu0 0.0
        %3345 = vmatpush.xpose.msra.mxu0 0.0
        %3346 = vmatpush.xpose.msra.mxu0 0.0
        %3347 = vmatpush.xpose.msra.mxu0 0.0
        %3348 = vmatpush.xpose.msra.mxu0 0.0
        %3349 = vmatpush.xpose.msra.mxu0 0.0
        %3350 = vmatpush.xpose.msra.mxu0 0.0
        %3351 = vmatpush.xpose.msra.mxu0 0.0
        %3352 = vmatpush.xpose.msra.mxu0 %v3335
        %3353 = vmatmul.f32.gmra.mxu0 %v3332
        %v3354 = vpop.f32.mrf.mxu0
        %v3355 = vadd.f32 0.0, %v3354
        %3356 = vdwg.mxu0
        %v3357 = vmul.f32 %v3355, 0.088388346
        %v3358 = vadd.f32 %v3357, %v591
        %v3359 = vsel %vm858, %v3358, -inf
        %3360 = vmax.xlane.f32.xlu0 %v3359
        %v3361 = vpop.xlane.xlu0 %3360
        %v3362 = vsub.f32 %v3358, %v3361
        %v3363 = vmul.f32 %v3362, 1.442695
        %v3364 = vpow.pop %v3363
        %v3365 = vsel %vm858, %v3364, 0.0
        %3366 = vadd.xlane.f32.xlu0 %v3365
        %v3367 = vpop.xlane.xlu0 %3366
        %v3368 = vrcp.pop %v3367
        %v3369 = vmul.f32 %v3364, %v3368
        %v3371 = vsel %vm858, %v3369, 0
        %3373 = vmatpush.msra.mxu0 0.0
        %3374 = vmatpush.msra.mxu0 0.0
        %3375 = vmatpush.msra.mxu0 0.0
        %3376 = vmatpush.msra.mxu0 0.0
        %3377 = vmatpush.msra.mxu0 0.0
        %3378 = vmatpush.msra.mxu0 0.0
        %3379 = vmatpush.msra.mxu0 0.0
        %3380 = vmatpush.msra.mxu0 0.0
        %3381 = vmatpush.msra.mxu0 0.0
        %3382 = vmatpush.msra.mxu0 0.0
        %3383 = vmatpush.msra.mxu0 0.0
        %3384 = vmatpush.msra.mxu0 0.0
        %3385 = vmatpush.msra.mxu0 0.0
        %3386 = vmatpush.msra.mxu0 0.0
        %3387 = vmatpush.msra.mxu0 0.0
        %3388 = vmatpush.msra.mxu0 %v3328
        %3389 = vmatmul.f32.gmra.mxu0 %v3371
        %v3390 = vpop.f32.mrf.mxu0
        %v3391 = vadd.f32 0.0, %v3390
        %3392 = vdwg.mxu0
        %v3393 = vpack.c.bf16 %v3391, %v3391
        %s3394 = scalar_lea.vmem [#allocation5], 128
        %v3395 = vld [vmem:[%s3394] sm:$0xf]
        %v3396 = vld [vmem:[%s3394 + $0x4] sm:$0xf]
        %v3397 = vld [vmem:[%s3394 + $0x8] sm:$0xf]
        %v3398 = vld [vmem:[%s3394 + $0xc] sm:$0xf]
        %3399 = vrot.lane.b32.xlu0 %v3302, 96
        %v3400 = vpop.permute.xlu0 %3399
        %3401 = vrot.lane.b32.xlu0 %v3315, 96
        %v3402 = vpop.permute.xlu0 %3401
        %v3403 = vsel %vm829, %v3400, 0
        %v3405 = vsel %vm829, %v3402, 0
        %3407 = vmatpush.xpose.msra.mxu0 0.0
        %3408 = vmatpush.xpose.msra.mxu0 0.0
        %3409 = vmatpush.xpose.msra.mxu0 0.0
        %3410 = vmatpush.xpose.msra.mxu0 0.0
        %3411 = vmatpush.xpose.msra.mxu0 0.0
        %3412 = vmatpush.xpose.msra.mxu0 0.0
        %3413 = vmatpush.xpose.msra.mxu0 0.0
        %3414 = vmatpush.xpose.msra.mxu0 0.0
        %3415 = vmatpush.xpose.msra.mxu0 0.0
        %3416 = vmatpush.xpose.msra.mxu0 0.0
        %3417 = vmatpush.xpose.msra.mxu0 0.0
        %3418 = vmatpush.xpose.msra.mxu0 0.0
        %3419 = vmatpush.xpose.msra.mxu0 0.0
        %3420 = vmatpush.xpose.msra.mxu0 0.0
        %3421 = vmatpush.xpose.msra.mxu0 0.0
        %3422 = vmatpush.xpose.msra.mxu0 %v3405
        %3423 = vmatmul.f32.gmra.mxu0 %v3403
        %v3424 = vpop.f32.mrf.mxu0
        %v3425 = vadd.f32 0.0, %v3424
        %3426 = vdwg.mxu0
        %v3427 = vmul.f32 %v3425, 0.088388346
        %v3428 = vadd.f32 %v3427, %v591
        %v3429 = vsel %vm858, %v3428, -inf
        %3430 = vmax.xlane.f32.xlu0 %v3429
        %v3431 = vpop.xlane.xlu0 %3430
        %v3432 = vsub.f32 %v3428, %v3431
        %v3433 = vmul.f32 %v3432, 1.442695
        %v3434 = vpow.pop %v3433
        %v3435 = vsel %vm858, %v3434, 0.0
        %3436 = vadd.xlane.f32.xlu0 %v3435
        %v3437 = vpop.xlane.xlu0 %3436
        %v3438 = vrcp.pop %v3437
        %v3439 = vmul.f32 %v3434, %v3438
        %3441 = vrot.lane.b32.xlu0 %v3328, 96
        %v3442 = vpop.permute.xlu0 %3441
        %v3445 = vsel %vm858, %v3439, 0
        %3447 = vmatpush.msra.mxu0 0.0
        %3448 = vmatpush.msra.mxu0 0.0
        %3449 = vmatpush.msra.mxu0 0.0
        %3450 = vmatpush.msra.mxu0 0.0
        %3451 = vmatpush.msra.mxu0 0.0
        %3452 = vmatpush.msra.mxu0 0.0
        %3453 = vmatpush.msra.mxu0 0.0
        %3454 = vmatpush.msra.mxu0 0.0
        %3455 = vmatpush.msra.mxu0 0.0
        %3456 = vmatpush.msra.mxu0 0.0
        %3457 = vmatpush.msra.mxu0 0.0
        %3458 = vmatpush.msra.mxu0 0.0
        %3459 = vmatpush.msra.mxu0 0.0
        %3460 = vmatpush.msra.mxu0 0.0
        %3461 = vmatpush.msra.mxu0 0.0
        %3462 = vmatpush.msra.mxu0 %v3442
        %3463 = vmatmul.f32.gmra.mxu0 %v3445
        %v3464 = vpop.f32.mrf.mxu0
        %v3465 = vadd.f32 0.0, %v3464
        %3466 = vdwg.mxu0
        %v3467 = vpack.c.bf16 %v3465, %v3465
        %s3468 = scalar_lea.vmem [#allocation5], 144
        %v3469 = vld [vmem:[%s3468] sm:$0xf]
        %v3470 = vld [vmem:[%s3468 + $0x4] sm:$0xf]
        %v3471 = vld [vmem:[%s3468 + $0x8] sm:$0xf]
        %v3472 = vld [vmem:[%s3468 + $0xc] sm:$0xf]
        %v3477 = vunpack.c.l.b16 %v3469
        %v3478 = vunpack.c.l.b16 %v3470
        %v3479 = vunpack.c.l.b16 %v3471
        %v3480 = vunpack.c.l.b16 %v3472
        %v3481 = vpack.c.b16 %v3478, %v3477
        %v3482 = vpack.c.b16 %v3480, %v3479
        %v3486 = vsel %vm829, %v3467, 0
        %3488 = vmatpush.bf16.msra.mxu0 0
        %3489 = vmatpush.bf16.msra.mxu0 0
        %3490 = vmatpush.bf16.msra.mxu0 0
        %3491 = vmatpush.bf16.msra.mxu0 0
        %3492 = vmatpush.bf16.msra.mxu0 0
        %3493 = vmatpush.bf16.msra.mxu0 0
        %3494 = vmatpush.bf16.msra.mxu0 %v3482
        %3495 = vmatpush.bf16.msra.mxu0 %v3481
        %3496 = vmatmul.bf16.gmra.mxu0 %v3486
        %v3497 = vpop.f32.mrf.mxu0
        %v3498 = vadd.f32 0.0, %v3497
        %v3499 = vpop.f32.mrf.mxu0
        %3500 = vdwg.mxu0
        %v3505 = vunpack.c.l.b16 %v3395
        %v3506 = vunpack.c.l.b16 %v3396
        %v3507 = vunpack.c.l.b16 %v3397
        %v3508 = vunpack.c.l.b16 %v3398
        %v3509 = vpack.c.b16 %v3506, %v3505
        %v3510 = vpack.c.b16 %v3508, %v3507
        %v3514 = vsel %vm829, %v3393, 0
        %3516 = vmatpush.bf16.msra.mxu0 0
        %3517 = vmatpush.bf16.msra.mxu0 0
        %3518 = vmatpush.bf16.msra.mxu0 0
        %3519 = vmatpush.bf16.msra.mxu0 0
        %3520 = vmatpush.bf16.msra.mxu0 0
        %3521 = vmatpush.bf16.msra.mxu0 0
        %3522 = vmatpush.bf16.msra.mxu0 %v3510
        %3523 = vmatpush.bf16.msra.mxu0 %v3509
        %3524 = vmatmul.bf16.gmra.mxu0 %v3514
        %v3525 = vpop.f32.mrf.mxu0
        %v3526 = vadd.f32 %v3498, %v3525
        %v3527 = vpop.f32.mrf.mxu0
        %3528 = vdwg.mxu0
        %3529 = vrot.lane.b32.xlu0 %v3302, 64
        %v3530 = vpop.permute.xlu0 %3529
        %3531 = vrot.lane.b32.xlu0 %v3315, 64
        %v3532 = vpop.permute.xlu0 %3531
        %v3533 = vsel %vm829, %v3530, 0
        %v3535 = vsel %vm829, %v3532, 0
        %3537 = vmatpush.xpose.msra.mxu0 0.0
        %3538 = vmatpush.xpose.msra.mxu0 0.0
        %3539 = vmatpush.xpose.msra.mxu0 0.0
        %3540 = vmatpush.xpose.msra.mxu0 0.0
        %3541 = vmatpush.xpose.msra.mxu0 0.0
        %3542 = vmatpush.xpose.msra.mxu0 0.0
        %3543 = vmatpush.xpose.msra.mxu0 0.0
        %3544 = vmatpush.xpose.msra.mxu0 0.0
        %3545 = vmatpush.xpose.msra.mxu0 0.0
        %3546 = vmatpush.xpose.msra.mxu0 0.0
        %3547 = vmatpush.xpose.msra.mxu0 0.0
        %3548 = vmatpush.xpose.msra.mxu0 0.0
        %3549 = vmatpush.xpose.msra.mxu0 0.0
        %3550 = vmatpush.xpose.msra.mxu0 0.0
        %3551 = vmatpush.xpose.msra.mxu0 0.0
        %3552 = vmatpush.xpose.msra.mxu0 %v3535
        %3553 = vmatmul.f32.gmra.mxu0 %v3533
        %v3554 = vpop.f32.mrf.mxu0
        %v3555 = vadd.f32 0.0, %v3554
        %3556 = vdwg.mxu0
        %v3557 = vmul.f32 %v3555, 0.088388346
        %v3558 = vadd.f32 %v3557, %v591
        %v3559 = vsel %vm858, %v3558, -inf
        %3560 = vmax.xlane.f32.xlu0 %v3559
        %v3561 = vpop.xlane.xlu0 %3560
        %v3562 = vsub.f32 %v3558, %v3561
        %v3563 = vmul.f32 %v3562, 1.442695
        %v3564 = vpow.pop %v3563
        %v3565 = vsel %vm858, %v3564, 0.0
        %3566 = vadd.xlane.f32.xlu0 %v3565
        %v3567 = vpop.xlane.xlu0 %3566
        %v3568 = vrcp.pop %v3567
        %v3569 = vmul.f32 %v3564, %v3568
        %3570 = vrot.lane.b32.xlu0 %v3328, 64
        %v3571 = vpop.permute.xlu0 %3570
        %v3574 = vsel %vm858, %v3569, 0
        %3576 = vmatpush.msra.mxu0 0.0
        %3577 = vmatpush.msra.mxu0 0.0
        %3578 = vmatpush.msra.mxu0 0.0
        %3579 = vmatpush.msra.mxu0 0.0
        %3580 = vmatpush.msra.mxu0 0.0
        %3581 = vmatpush.msra.mxu0 0.0
        %3582 = vmatpush.msra.mxu0 0.0
        %3583 = vmatpush.msra.mxu0 0.0
        %3584 = vmatpush.msra.mxu0 0.0
        %3585 = vmatpush.msra.mxu0 0.0
        %3586 = vmatpush.msra.mxu0 0.0
        %3587 = vmatpush.msra.mxu0 0.0
        %3588 = vmatpush.msra.mxu0 0.0
        %3589 = vmatpush.msra.mxu0 0.0
        %3590 = vmatpush.msra.mxu0 0.0
        %3591 = vmatpush.msra.mxu0 %v3571
        %3592 = vmatmul.f32.gmra.mxu0 %v3574
        %v3593 = vpop.f32.mrf.mxu0
        %v3594 = vadd.f32 0.0, %v3593
        %3595 = vdwg.mxu0
        %v3596 = vpack.c.bf16 %v3594, %v3594
        %s3597 = scalar_lea.vmem [#allocation5], 160
        %v3598 = vld [vmem:[%s3597] sm:$0xf]
        %v3599 = vld [vmem:[%s3597 + $0x4] sm:$0xf]
        %v3600 = vld [vmem:[%s3597 + $0x8] sm:$0xf]
        %v3601 = vld [vmem:[%s3597 + $0xc] sm:$0xf]
        %v3606 = vunpack.c.l.b16 %v3598
        %v3607 = vunpack.c.l.b16 %v3599
        %v3608 = vunpack.c.l.b16 %v3600
        %v3609 = vunpack.c.l.b16 %v3601
        %v3610 = vpack.c.b16 %v3607, %v3606
        %v3611 = vpack.c.b16 %v3609, %v3608
        %v3615 = vsel %vm829, %v3596, 0
        %3617 = vmatpush.bf16.msra.mxu0 0
        %3618 = vmatpush.bf16.msra.mxu0 0
        %3619 = vmatpush.bf16.msra.mxu0 0
        %3620 = vmatpush.bf16.msra.mxu0 0
        %3621 = vmatpush.bf16.msra.mxu0 0
        %3622 = vmatpush.bf16.msra.mxu0 0
        %3623 = vmatpush.bf16.msra.mxu0 %v3611
        %3624 = vmatpush.bf16.msra.mxu0 %v3610
        %3625 = vmatmul.bf16.gmra.mxu0 %v3615
        %v3626 = vpop.f32.mrf.mxu0
        %v3627 = vadd.f32 0.0, %v3626
        %v3628 = vpop.f32.mrf.mxu0
        %3629 = vdwg.mxu0
        %v3630 = vadd.f32 %v3526, %v3627
        %3631 = vrot.lane.b32.xlu0 %v3302, 32
        %v3632 = vpop.permute.xlu0 %3631
        %3633 = vrot.lane.b32.xlu0 %v3315, 32
        %v3634 = vpop.permute.xlu0 %3633
        %v3635 = vsel %vm829, %v3632, 0
        %v3637 = vsel %vm829, %v3634, 0
        %3639 = vmatpush.xpose.msra.mxu0 0.0
        %3640 = vmatpush.xpose.msra.mxu0 0.0
        %3641 = vmatpush.xpose.msra.mxu0 0.0
        %3642 = vmatpush.xpose.msra.mxu0 0.0
        %3643 = vmatpush.xpose.msra.mxu0 0.0
        %3644 = vmatpush.xpose.msra.mxu0 0.0
        %3645 = vmatpush.xpose.msra.mxu0 0.0
        %3646 = vmatpush.xpose.msra.mxu0 0.0
        %3647 = vmatpush.xpose.msra.mxu0 0.0
        %3648 = vmatpush.xpose.msra.mxu0 0.0
        %3649 = vmatpush.xpose.msra.mxu0 0.0
        %3650 = vmatpush.xpose.msra.mxu0 0.0
        %3651 = vmatpush.xpose.msra.mxu0 0.0
        %3652 = vmatpush.xpose.msra.mxu0 0.0
        %3653 = vmatpush.xpose.msra.mxu0 0.0
        %3654 = vmatpush.xpose.msra.mxu0 %v3637
        %3655 = vmatmul.f32.gmra.mxu0 %v3635
        %v3656 = vpop.f32.mrf.mxu0
        %v3657 = vadd.f32 0.0, %v3656
        %3658 = vdwg.mxu0
        %v3659 = vmul.f32 %v3657, 0.088388346
        %v3660 = vadd.f32 %v3659, %v591
        %v3661 = vsel %vm858, %v3660, -inf
        %3662 = vmax.xlane.f32.xlu0 %v3661
        %v3663 = vpop.xlane.xlu0 %3662
        %v3664 = vsub.f32 %v3660, %v3663
        %v3665 = vmul.f32 %v3664, 1.442695
        %v3666 = vpow.pop %v3665
        %v3667 = vsel %vm858, %v3666, 0.0
        %3668 = vadd.xlane.f32.xlu0 %v3667
        %v3669 = vpop.xlane.xlu0 %3668
        %v3670 = vrcp.pop %v3669
        %v3671 = vmul.f32 %v3666, %v3670
        %3672 = vrot.lane.b32.xlu0 %v3328, 32
        %v3673 = vpop.permute.xlu0 %3672
        %v3676 = vsel %vm858, %v3671, 0
        %3678 = vmatpush.msra.mxu0 0.0
        %3679 = vmatpush.msra.mxu0 0.0
        %3680 = vmatpush.msra.mxu0 0.0
        %3681 = vmatpush.msra.mxu0 0.0
        %3682 = vmatpush.msra.mxu0 0.0
        %3683 = vmatpush.msra.mxu0 0.0
        %3684 = vmatpush.msra.mxu0 0.0
        %3685 = vmatpush.msra.mxu0 0.0
        %3686 = vmatpush.msra.mxu0 0.0
        %3687 = vmatpush.msra.mxu0 0.0
        %3688 = vmatpush.msra.mxu0 0.0
        %3689 = vmatpush.msra.mxu0 0.0
        %3690 = vmatpush.msra.mxu0 0.0
        %3691 = vmatpush.msra.mxu0 0.0
        %3692 = vmatpush.msra.mxu0 0.0
        %3693 = vmatpush.msra.mxu0 %v3673
        %3694 = vmatmul.f32.gmra.mxu0 %v3676
        %v3695 = vpop.f32.mrf.mxu0
        %v3696 = vadd.f32 0.0, %v3695
        %3697 = vdwg.mxu0
        %v3698 = vpack.c.bf16 %v3696, %v3696
        %s3699 = scalar_lea.vmem [#allocation5], 176
        %v3700 = vld [vmem:[%s3699] sm:$0xf]
        %v3701 = vld [vmem:[%s3699 + $0x4] sm:$0xf]
        %v3702 = vld [vmem:[%s3699 + $0x8] sm:$0xf]
        %v3703 = vld [vmem:[%s3699 + $0xc] sm:$0xf]
        %v3708 = vunpack.c.l.b16 %v3700
        %v3709 = vunpack.c.l.b16 %v3701
        %v3710 = vunpack.c.l.b16 %v3702
        %v3711 = vunpack.c.l.b16 %v3703
        %v3712 = vpack.c.b16 %v3709, %v3708
        %v3713 = vpack.c.b16 %v3711, %v3710
        %v3717 = vsel %vm829, %v3698, 0
        %3719 = vmatpush.bf16.msra.mxu0 0
        %3720 = vmatpush.bf16.msra.mxu0 0
        %3721 = vmatpush.bf16.msra.mxu0 0
        %3722 = vmatpush.bf16.msra.mxu0 0
        %3723 = vmatpush.bf16.msra.mxu0 0
        %3724 = vmatpush.bf16.msra.mxu0 0
        %3725 = vmatpush.bf16.msra.mxu0 %v3713
        %3726 = vmatpush.bf16.msra.mxu0 %v3712
        %3727 = vmatmul.bf16.gmra.mxu0 %v3717
        %v3728 = vpop.f32.mrf.mxu0
        %v3729 = vadd.f32 0.0, %v3728
        %v3730 = vpop.f32.mrf.mxu0
        %3731 = vdwg.mxu0
        %v3732 = vadd.f32 %v3630, %v3729
        %v3733 = vadd.f32 %v3097, %v3732
        %s3734 = scalar_lea.vmem %s5, 2
        %v3735 = vld [vmem:[%s3734] sm:$0x1]
        %v3737 = vperm.slane %v3735, 0
        %v3739 = vadd.f32 %v3733, %v3737
        %s3740 = scalar_lea.vmem %s6, 2
        %v3741 = vld [vmem:[%s3740] sm:$0x1]
        %s3742 = scalar_lea.vmem %s7, 2
        %v3743 = vld [vmem:[%s3742] sm:$0x1]
        %3744 = vadd.xlane.f32.xlu0 %v3739
        %v3745 = vpop.xlane.xlu0 %3744
        %v3746 = vmul.f32 %v3745, %v602
        %v3747 = vsub.f32 %v3739, %v3746
        %v3748 = vmul.f32 %v3747, %v3747
        %3749 = vadd.xlane.f32.xlu0 %v3748
        %v3750 = vpop.xlane.xlu0 %3749
        %v3751 = vmul.f32 %v3750, %v602
        %v3752 = vadd.f32 %v3751, 1e-05
        %v3753 = vrsqrt.pop %v3752
        %v3754 = vmul.f32 %v3753, %v3752
        %v3755 = vmul.f32 %v3754, %v3753
        %v3756 = vmul.f32 0.5, %v3755
        %v3757 = vsub.f32 1.5, %v3756
        %v3758 = vmul.f32 %v3753, %v3757
        %vm3759 = vweird.f32 %v3752
        %vm3760 = vweird.f32 %v3753
        %vm3761 = vmor %vm3759, %vm3760
        %v3762 = vsel %vm3761, %v3753, %v3758
        %v3763 = vmul.f32 %v3747, %v3762
        %v3765 = vperm.slane %v3741, 0
        %v3767 = vmul.f32 %v3763, %v3765
        %v3769 = vperm.slane %v3743, 0
        %v3771 = vadd.f32 %v3767, %v3769
        %v3772 = vpack.c.bf16 %v3771, %v3771
        %s3773 = scalar_lea.vmem [#allocation7], 512
        %v3774 = vld [vmem:[%s3773] sm:$0xff]
        %v3775 = vld [vmem:[%s3773 + $0x8] sm:$0xff]
        %v3776 = vld [vmem:[%s3773 + $0x10] sm:$0xff]
        %v3777 = vld [vmem:[%s3773 + $0x18] sm:$0xff]
        %v3778 = vld [vmem:[%s3773 + $0x20] sm:$0xff]
        %v3779 = vld [vmem:[%s3773 + $0x28] sm:$0xff]
        %v3780 = vld [vmem:[%s3773 + $0x30] sm:$0xff]
        %v3781 = vld [vmem:[%s3773 + $0x38] sm:$0xff]
        %v3782 = vld [vmem:[%s3773 + $0x40] sm:$0xff]
        %v3783 = vld [vmem:[%s3773 + $0x48] sm:$0xff]
        %v3784 = vld [vmem:[%s3773 + $0x50] sm:$0xff]
        %v3785 = vld [vmem:[%s3773 + $0x58] sm:$0xff]
        %v3786 = vld [vmem:[%s3773 + $0x60] sm:$0xff]
        %v3787 = vld [vmem:[%s3773 + $0x68] sm:$0xff]
        %v3788 = vld [vmem:[%s3773 + $0x70] sm:$0xff]
        %v3789 = vld [vmem:[%s3773 + $0x78] sm:$0xff]
        %v3790 = vld [vmem:[%s3773 + $0x80] sm:$0xff]
        %v3791 = vld [vmem:[%s3773 + $0x88] sm:$0xff]
        %v3792 = vld [vmem:[%s3773 + $0x90] sm:$0xff]
        %v3793 = vld [vmem:[%s3773 + $0x98] sm:$0xff]
        %v3794 = vld [vmem:[%s3773 + $0xa0] sm:$0xff]
        %v3795 = vld [vmem:[%s3773 + $0xa8] sm:$0xff]
        %v3796 = vld [vmem:[%s3773 + $0xb0] sm:$0xff]
        %v3797 = vld [vmem:[%s3773 + $0xb8] sm:$0xff]
        %v3798 = vld [vmem:[%s3773 + $0xc0] sm:$0xff]
        %v3799 = vld [vmem:[%s3773 + $0xc8] sm:$0xff]
        %v3800 = vld [vmem:[%s3773 + $0xd0] sm:$0xff]
        %v3801 = vld [vmem:[%s3773 + $0xd8] sm:$0xff]
        %v3802 = vld [vmem:[%s3773 + $0xe0] sm:$0xff]
        %v3803 = vld [vmem:[%s3773 + $0xe8] sm:$0xff]
        %v3804 = vld [vmem:[%s3773 + $0xf0] sm:$0xff]
        %v3805 = vld [vmem:[%s3773 + $0xf8] sm:$0xff]
        %s3806 = scalar_lea.vmem %s9, 8
        %v3807 = vld [vmem:[%s3806] sm:$0xf]
        %v3809 = vperm.slane %v3807, 0
        %v3810 = vperm.slane %v3807, 1
        %v3811 = vperm.slane %v3807, 2
        %v3812 = vperm.slane %v3807, 3
        %v3849 = vunpack.c.l.b16 %v3774
        %v3850 = vunpack.c.h.b16 %v3774
        %v3851 = vunpack.c.l.b16 %v3775
        %v3852 = vunpack.c.h.b16 %v3775
        %v3853 = vunpack.c.l.b16 %v3776
        %v3854 = vunpack.c.h.b16 %v3776
        %v3855 = vunpack.c.l.b16 %v3777
        %v3856 = vunpack.c.h.b16 %v3777
        %v3857 = vunpack.c.l.b16 %v3778
        %v3858 = vunpack.c.h.b16 %v3778
        %v3859 = vunpack.c.l.b16 %v3779
        %v3860 = vunpack.c.h.b16 %v3779
        %v3861 = vunpack.c.l.b16 %v3780
        %v3862 = vunpack.c.h.b16 %v3780
        %v3863 = vunpack.c.l.b16 %v3781
        %v3864 = vunpack.c.h.b16 %v3781
        %v3865 = vunpack.c.l.b16 %v3782
        %v3866 = vunpack.c.h.b16 %v3782
        %v3867 = vunpack.c.l.b16 %v3783
        %v3868 = vunpack.c.h.b16 %v3783
        %v3869 = vunpack.c.l.b16 %v3784
        %v3870 = vunpack.c.h.b16 %v3784
        %v3871 = vunpack.c.l.b16 %v3785
        %v3872 = vunpack.c.h.b16 %v3785
        %v3873 = vunpack.c.l.b16 %v3786
        %v3874 = vunpack.c.h.b16 %v3786
        %v3875 = vunpack.c.l.b16 %v3787
        %v3876 = vunpack.c.h.b16 %v3787
        %v3877 = vunpack.c.l.b16 %v3788
        %v3878 = vunpack.c.h.b16 %v3788
        %v3879 = vunpack.c.l.b16 %v3789
        %v3880 = vunpack.c.h.b16 %v3789
        %v3881 = vunpack.c.l.b16 %v3790
        %v3882 = vunpack.c.h.b16 %v3790
        %v3883 = vunpack.c.l.b16 %v3791
        %v3884 = vunpack.c.h.b16 %v3791
        %v3885 = vunpack.c.l.b16 %v3792
        %v3886 = vunpack.c.h.b16 %v3792
        %v3887 = vunpack.c.l.b16 %v3793
        %v3888 = vunpack.c.h.b16 %v3793
        %v3889 = vunpack.c.l.b16 %v3794
        %v3890 = vunpack.c.h.b16 %v3794
        %v3891 = vunpack.c.l.b16 %v3795
        %v3892 = vunpack.c.h.b16 %v3795
        %v3893 = vunpack.c.l.b16 %v3796
        %v3894 = vunpack.c.h.b16 %v3796
        %v3895 = vunpack.c.l.b16 %v3797
        %v3896 = vunpack.c.h.b16 %v3797
        %v3897 = vunpack.c.l.b16 %v3798
        %v3898 = vunpack.c.h.b16 %v3798
        %v3899 = vunpack.c.l.b16 %v3799
        %v3900 = vunpack.c.h.b16 %v3799
        %v3901 = vunpack.c.l.b16 %v3800
        %v3902 = vunpack.c.h.b16 %v3800
        %v3903 = vunpack.c.l.b16 %v3801
        %v3904 = vunpack.c.h.b16 %v3801
        %v3905 = vunpack.c.l.b16 %v3802
        %v3906 = vunpack.c.h.b16 %v3802
        %v3907 = vunpack.c.l.b16 %v3803
        %v3908 = vunpack.c.h.b16 %v3803
        %v3909 = vunpack.c.l.b16 %v3804
        %v3910 = vunpack.c.h.b16 %v3804
        %v3911 = vunpack.c.l.b16 %v3805
        %v3912 = vunpack.c.h.b16 %v3805
        %v3913 = vpack.c.b16 %v3853, %v3849
        %v3914 = vpack.c.b16 %v3854, %v3850
        %v3915 = vpack.c.b16 %v3855, %v3851
        %v3916 = vpack.c.b16 %v3856, %v3852
        %v3917 = vpack.c.b16 %v3861, %v3857
        %v3918 = vpack.c.b16 %v3862, %v3858
        %v3919 = vpack.c.b16 %v3863, %v3859
        %v3920 = vpack.c.b16 %v3864, %v3860
        %v3921 = vpack.c.b16 %v3869, %v3865
        %v3922 = vpack.c.b16 %v3870, %v3866
        %v3923 = vpack.c.b16 %v3871, %v3867
        %v3924 = vpack.c.b16 %v3872, %v3868
        %v3925 = vpack.c.b16 %v3877, %v3873
        %v3926 = vpack.c.b16 %v3878, %v3874
        %v3927 = vpack.c.b16 %v3879, %v3875
        %v3928 = vpack.c.b16 %v3880, %v3876
        %v3929 = vpack.c.b16 %v3885, %v3881
        %v3930 = vpack.c.b16 %v3886, %v3882
        %v3931 = vpack.c.b16 %v3887, %v3883
        %v3932 = vpack.c.b16 %v3888, %v3884
        %v3933 = vpack.c.b16 %v3893, %v3889
        %v3934 = vpack.c.b16 %v3894, %v3890
        %v3935 = vpack.c.b16 %v3895, %v3891
        %v3936 = vpack.c.b16 %v3896, %v3892
        %v3937 = vpack.c.b16 %v3901, %v3897
        %v3938 = vpack.c.b16 %v3902, %v3898
        %v3939 = vpack.c.b16 %v3903, %v3899
        %v3940 = vpack.c.b16 %v3904, %v3900
        %v3941 = vpack.c.b16 %v3909, %v3905
        %v3942 = vpack.c.b16 %v3910, %v3906
        %v3943 = vpack.c.b16 %v3911, %v3907
        %v3944 = vpack.c.b16 %v3912, %v3908
        %3977 = vmatpush.bf16.msra.mxu0 %v3941
        %3978 = vmatpush.bf16.msra.mxu0 %v3937
        %3979 = vmatpush.bf16.msra.mxu0 %v3933
        %3980 = vmatpush.bf16.msra.mxu0 %v3929
        %3981 = vmatpush.bf16.msra.mxu0 %v3925
        %3982 = vmatpush.bf16.msra.mxu0 %v3921
        %3983 = vmatpush.bf16.msra.mxu0 %v3917
        %3984 = vmatpush.bf16.msra.mxu0 %v3913
        %3985 = vmatmul.bf16.gmra.mxu0 %v3772
        %v3986 = vpop.f32.mrf.mxu0
        %v3987 = vadd.f32 %v3809, %v3986
        %v3988 = vpop.f32.mrf.mxu0
        %3989 = vdwg.mxu0
        %3990 = vmatpush.bf16.msra.mxu0 %v3942
        %3991 = vmatpush.bf16.msra.mxu0 %v3938
        %3992 = vmatpush.bf16.msra.mxu0 %v3934
        %3993 = vmatpush.bf16.msra.mxu0 %v3930
        %3994 = vmatpush.bf16.msra.mxu0 %v3926
        %3995 = vmatpush.bf16.msra.mxu0 %v3922
        %3996 = vmatpush.bf16.msra.mxu0 %v3918
        %3997 = vmatpush.bf16.msra.mxu0 %v3914
        %3998 = vmatmul.bf16.gmra.mxu0 %v3772
        %v3999 = vpop.f32.mrf.mxu0
        %v4000 = vadd.f32 %v3810, %v3999
        %v4001 = vpop.f32.mrf.mxu0
        %4002 = vdwg.mxu0
        %4003 = vmatpush.bf16.msra.mxu0 %v3943
        %4004 = vmatpush.bf16.msra.mxu0 %v3939
        %4005 = vmatpush.bf16.msra.mxu0 %v3935
        %4006 = vmatpush.bf16.msra.mxu0 %v3931
        %4007 = vmatpush.bf16.msra.mxu0 %v3927
        %4008 = vmatpush.bf16.msra.mxu0 %v3923
        %4009 = vmatpush.bf16.msra.mxu0 %v3919
        %4010 = vmatpush.bf16.msra.mxu0 %v3915
        %4011 = vmatmul.bf16.gmra.mxu0 %v3772
        %v4012 = vpop.f32.mrf.mxu0
        %v4013 = vadd.f32 %v3811, %v4012
        %v4014 = vpop.f32.mrf.mxu0
        %4015 = vdwg.mxu0
        %4016 = vmatpush.bf16.msra.mxu0 %v3944
        %4017 = vmatpush.bf16.msra.mxu0 %v3940
        %4018 = vmatpush.bf16.msra.mxu0 %v3936
        %4019 = vmatpush.bf16.msra.mxu0 %v3932
        %4020 = vmatpush.bf16.msra.mxu0 %v3928
        %4021 = vmatpush.bf16.msra.mxu0 %v3924
        %4022 = vmatpush.bf16.msra.mxu0 %v3920
        %4023 = vmatpush.bf16.msra.mxu0 %v3916
        %4024 = vmatmul.bf16.gmra.mxu0 %v3772
        %v4025 = vpop.f32.mrf.mxu0
        %v4026 = vadd.f32 %v3812, %v4025
        %v4027 = vpop.f32.mrf.mxu0
        %4028 = vdwg.mxu0
        %v4029 = vmax.f32 %v3987, 0.0
        %v4030 = vmax.f32 %v4000, 0.0
        %v4031 = vmax.f32 %v4013, 0.0
        %v4032 = vmax.f32 %v4026, 0.0
        %v4033 = vpack.c.bf16 %v4029, %v4029
        %v4034 = vpack.c.bf16 %v4030, %v4030
        %v4035 = vpack.c.bf16 %v4031, %v4031
        %v4036 = vpack.c.bf16 %v4032, %v4032
        %s4037 = scalar_lea.vmem [#allocation8], 512
        %v4038 = vld [vmem:[%s4037] sm:$0xf]
        %v4039 = vld [vmem:[%s4037 + $0x4] sm:$0xf]
        %v4040 = vld [vmem:[%s4037 + $0x8] sm:$0xf]
        %v4041 = vld [vmem:[%s4037 + $0xc] sm:$0xf]
        %v4042 = vld [vmem:[%s4037 + $0x10] sm:$0xf]
        %v4043 = vld [vmem:[%s4037 + $0x14] sm:$0xf]
        %v4044 = vld [vmem:[%s4037 + $0x18] sm:$0xf]
        %v4045 = vld [vmem:[%s4037 + $0x1c] sm:$0xf]
        %v4046 = vld [vmem:[%s4037 + $0x20] sm:$0xf]
        %v4047 = vld [vmem:[%s4037 + $0x24] sm:$0xf]
        %v4048 = vld [vmem:[%s4037 + $0x28] sm:$0xf]
        %v4049 = vld [vmem:[%s4037 + $0x2c] sm:$0xf]
        %v4050 = vld [vmem:[%s4037 + $0x30] sm:$0xf]
        %v4051 = vld [vmem:[%s4037 + $0x34] sm:$0xf]
        %v4052 = vld [vmem:[%s4037 + $0x38] sm:$0xf]
        %v4053 = vld [vmem:[%s4037 + $0x3c] sm:$0xf]
        %v4054 = vld [vmem:[%s4037 + $0x40] sm:$0xf]
        %v4055 = vld [vmem:[%s4037 + $0x44] sm:$0xf]
        %v4056 = vld [vmem:[%s4037 + $0x48] sm:$0xf]
        %v4057 = vld [vmem:[%s4037 + $0x4c] sm:$0xf]
        %v4058 = vld [vmem:[%s4037 + $0x50] sm:$0xf]
        %v4059 = vld [vmem:[%s4037 + $0x54] sm:$0xf]
        %v4060 = vld [vmem:[%s4037 + $0x58] sm:$0xf]
        %v4061 = vld [vmem:[%s4037 + $0x5c] sm:$0xf]
        %v4062 = vld [vmem:[%s4037 + $0x60] sm:$0xf]
        %v4063 = vld [vmem:[%s4037 + $0x64] sm:$0xf]
        %v4064 = vld [vmem:[%s4037 + $0x68] sm:$0xf]
        %v4065 = vld [vmem:[%s4037 + $0x6c] sm:$0xf]
        %v4066 = vld [vmem:[%s4037 + $0x70] sm:$0xf]
        %v4067 = vld [vmem:[%s4037 + $0x74] sm:$0xf]
        %v4068 = vld [vmem:[%s4037 + $0x78] sm:$0xf]
        %v4069 = vld [vmem:[%s4037 + $0x7c] sm:$0xf]
        %v4070 = vld [vmem:[%s4037 + $0x80] sm:$0xf]
        %v4071 = vld [vmem:[%s4037 + $0x84] sm:$0xf]
        %v4072 = vld [vmem:[%s4037 + $0x88] sm:$0xf]
        %v4073 = vld [vmem:[%s4037 + $0x8c] sm:$0xf]
        %v4074 = vld [vmem:[%s4037 + $0x90] sm:$0xf]
        %v4075 = vld [vmem:[%s4037 + $0x94] sm:$0xf]
        %v4076 = vld [vmem:[%s4037 + $0x98] sm:$0xf]
        %v4077 = vld [vmem:[%s4037 + $0x9c] sm:$0xf]
        %v4078 = vld [vmem:[%s4037 + $0xa0] sm:$0xf]
        %v4079 = vld [vmem:[%s4037 + $0xa4] sm:$0xf]
        %v4080 = vld [vmem:[%s4037 + $0xa8] sm:$0xf]
        %v4081 = vld [vmem:[%s4037 + $0xac] sm:$0xf]
        %v4082 = vld [vmem:[%s4037 + $0xb0] sm:$0xf]
        %v4083 = vld [vmem:[%s4037 + $0xb4] sm:$0xf]
        %v4084 = vld [vmem:[%s4037 + $0xb8] sm:$0xf]
        %v4085 = vld [vmem:[%s4037 + $0xbc] sm:$0xf]
        %v4086 = vld [vmem:[%s4037 + $0xc0] sm:$0xf]
        %v4087 = vld [vmem:[%s4037 + $0xc4] sm:$0xf]
        %v4088 = vld [vmem:[%s4037 + $0xc8] sm:$0xf]
        %v4089 = vld [vmem:[%s4037 + $0xcc] sm:$0xf]
        %v4090 = vld [vmem:[%s4037 + $0xd0] sm:$0xf]
        %v4091 = vld [vmem:[%s4037 + $0xd4] sm:$0xf]
        %v4092 = vld [vmem:[%s4037 + $0xd8] sm:$0xf]
        %v4093 = vld [vmem:[%s4037 + $0xdc] sm:$0xf]
        %v4094 = vld [vmem:[%s4037 + $0xe0] sm:$0xf]
        %v4095 = vld [vmem:[%s4037 + $0xe4] sm:$0xf]
        %v4096 = vld [vmem:[%s4037 + $0xe8] sm:$0xf]
        %v4097 = vld [vmem:[%s4037 + $0xec] sm:$0xf]
        %v4098 = vld [vmem:[%s4037 + $0xf0] sm:$0xf]
        %v4099 = vld [vmem:[%s4037 + $0xf4] sm:$0xf]
        %v4100 = vld [vmem:[%s4037 + $0xf8] sm:$0xf]
        %v4101 = vld [vmem:[%s4037 + $0xfc] sm:$0xf]
        %s4102 = scalar_lea.vmem %s11, 2
        %v4103 = vld [vmem:[%s4102] sm:$0x1]
        %v4105 = vperm.slane %v4103, 0
        %v4171 = vunpack.c.l.b16 %v4038
        %v4172 = vunpack.c.l.b16 %v4039
        %v4173 = vunpack.c.l.b16 %v4040
        %v4174 = vunpack.c.l.b16 %v4041
        %v4175 = vunpack.c.l.b16 %v4042
        %v4176 = vunpack.c.l.b16 %v4043
        %v4177 = vunpack.c.l.b16 %v4044
        %v4178 = vunpack.c.l.b16 %v4045
        %v4179 = vunpack.c.l.b16 %v4046
        %v4180 = vunpack.c.l.b16 %v4047
        %v4181 = vunpack.c.l.b16 %v4048
        %v4182 = vunpack.c.l.b16 %v4049
        %v4183 = vunpack.c.l.b16 %v4050
        %v4184 = vunpack.c.l.b16 %v4051
        %v4185 = vunpack.c.l.b16 %v4052
        %v4186 = vunpack.c.l.b16 %v4053
        %v4187 = vunpack.c.l.b16 %v4054
        %v4188 = vunpack.c.l.b16 %v4055
        %v4189 = vunpack.c.l.b16 %v4056
        %v4190 = vunpack.c.l.b16 %v4057
        %v4191 = vunpack.c.l.b16 %v4058
        %v4192 = vunpack.c.l.b16 %v4059
        %v4193 = vunpack.c.l.b16 %v4060
        %v4194 = vunpack.c.l.b16 %v4061
        %v4195 = vunpack.c.l.b16 %v4062
        %v4196 = vunpack.c.l.b16 %v4063
        %v4197 = vunpack.c.l.b16 %v4064
        %v4198 = vunpack.c.l.b16 %v4065
        %v4199 = vunpack.c.l.b16 %v4066
        %v4200 = vunpack.c.l.b16 %v4067
        %v4201 = vunpack.c.l.b16 %v4068
        %v4202 = vunpack.c.l.b16 %v4069
        %v4203 = vunpack.c.l.b16 %v4070
        %v4204 = vunpack.c.l.b16 %v4071
        %v4205 = vunpack.c.l.b16 %v4072
        %v4206 = vunpack.c.l.b16 %v4073
        %v4207 = vunpack.c.l.b16 %v4074
        %v4208 = vunpack.c.l.b16 %v4075
        %v4209 = vunpack.c.l.b16 %v4076
        %v4210 = vunpack.c.l.b16 %v4077
        %v4211 = vunpack.c.l.b16 %v4078
        %v4212 = vunpack.c.l.b16 %v4079
        %v4213 = vunpack.c.l.b16 %v4080
        %v4214 = vunpack.c.l.b16 %v4081
        %v4215 = vunpack.c.l.b16 %v4082
        %v4216 = vunpack.c.l.b16 %v4083
        %v4217 = vunpack.c.l.b16 %v4084
        %v4218 = vunpack.c.l.b16 %v4085
        %v4219 = vunpack.c.l.b16 %v4086
        %v4220 = vunpack.c.l.b16 %v4087
        %v4221 = vunpack.c.l.b16 %v4088
        %v4222 = vunpack.c.l.b16 %v4089
        %v4223 = vunpack.c.l.b16 %v4090
        %v4224 = vunpack.c.l.b16 %v4091
        %v4225 = vunpack.c.l.b16 %v4092
        %v4226 = vunpack.c.l.b16 %v4093
        %v4227 = vunpack.c.l.b16 %v4094
        %v4228 = vunpack.c.l.b16 %v4095
        %v4229 = vunpack.c.l.b16 %v4096
        %v4230 = vunpack.c.l.b16 %v4097
        %v4231 = vunpack.c.l.b16 %v4098
        %v4232 = vunpack.c.l.b16 %v4099
        %v4233 = vunpack.c.l.b16 %v4100
        %v4234 = vunpack.c.l.b16 %v4101
        %v4235 = vpack.c.b16 %v4172, %v4171
        %v4236 = vpack.c.b16 %v4174, %v4173
        %v4237 = vpack.c.b16 %v4176, %v4175
        %v4238 = vpack.c.b16 %v4178, %v4177
        %v4239 = vpack.c.b16 %v4180, %v4179
        %v4240 = vpack.c.b16 %v4182, %v4181
        %v4241 = vpack.c.b16 %v4184, %v4183
        %v4242 = vpack.c.b16 %v4186, %v4185
        %v4243 = vpack.c.b16 %v4188, %v4187
        %v4244 = vpack.c.b16 %v4190, %v4189
        %v4245 = vpack.c.b16 %v4192, %v4191
        %v4246 = vpack.c.b16 %v4194, %v4193
        %v4247 = vpack.c.b16 %v4196, %v4195
        %v4248 = vpack.c.b16 %v4198, %v4197
        %v4249 = vpack.c.b16 %v4200, %v4199
        %v4250 = vpack.c.b16 %v4202, %v4201
        %v4251 = vpack.c.b16 %v4204, %v4203
        %v4252 = vpack.c.b16 %v4206, %v4205
        %v4253 = vpack.c.b16 %v4208, %v4207
        %v4254 = vpack.c.b16 %v4210, %v4209
        %v4255 = vpack.c.b16 %v4212, %v4211
        %v4256 = vpack.c.b16 %v4214, %v4213
        %v4257 = vpack.c.b16 %v4216, %v4215
        %v4258 = vpack.c.b16 %v4218, %v4217
        %v4259 = vpack.c.b16 %v4220, %v4219
        %v4260 = vpack.c.b16 %v4222, %v4221
        %v4261 = vpack.c.b16 %v4224, %v4223
        %v4262 = vpack.c.b16 %v4226, %v4225
        %v4263 = vpack.c.b16 %v4228, %v4227
        %v4264 = vpack.c.b16 %v4230, %v4229
        %v4265 = vpack.c.b16 %v4232, %v4231
        %v4266 = vpack.c.b16 %v4234, %v4233
        %4299 = vmatpush.bf16.msra.mxu0 %v4242
        %4300 = vmatpush.bf16.msra.mxu0 %v4241
        %4301 = vmatpush.bf16.msra.mxu0 %v4240
        %4302 = vmatpush.bf16.msra.mxu0 %v4239
        %4303 = vmatpush.bf16.msra.mxu0 %v4238
        %4304 = vmatpush.bf16.msra.mxu0 %v4237
        %4305 = vmatpush.bf16.msra.mxu0 %v4236
        %4306 = vmatpush.bf16.msra.mxu0 %v4235
        %4307 = vmatmul.bf16.gmra.mxu0 %v4033
        %v4308 = vpop.f32.mrf.mxu0
        %v4309 = vadd.f32 %v4105, %v4308
        %v4310 = vpop.f32.mrf.mxu0
        %4311 = vdwg.mxu0
        %4312 = vmatpush.bf16.msra.mxu0 %v4250
        %4313 = vmatpush.bf16.msra.mxu0 %v4249
        %4314 = vmatpush.bf16.msra.mxu0 %v4248
        %4315 = vmatpush.bf16.msra.mxu0 %v4247
        %4316 = vmatpush.bf16.msra.mxu0 %v4246
        %4317 = vmatpush.bf16.msra.mxu0 %v4245
        %4318 = vmatpush.bf16.msra.mxu0 %v4244
        %4319 = vmatpush.bf16.msra.mxu0 %v4243
        %4320 = vmatmul.bf16.gmra.mxu0 %v4034
        %v4321 = vpop.f32.mrf.mxu0
        %v4322 = vadd.f32 %v4309, %v4321
        %v4323 = vpop.f32.mrf.mxu0
        %4324 = vdwg.mxu0
        %4325 = vmatpush.bf16.msra.mxu0 %v4258
        %4326 = vmatpush.bf16.msra.mxu0 %v4257
        %4327 = vmatpush.bf16.msra.mxu0 %v4256
        %4328 = vmatpush.bf16.msra.mxu0 %v4255
        %4329 = vmatpush.bf16.msra.mxu0 %v4254
        %4330 = vmatpush.bf16.msra.mxu0 %v4253
        %4331 = vmatpush.bf16.msra.mxu0 %v4252
        %4332 = vmatpush.bf16.msra.mxu0 %v4251
        %4333 = vmatmul.bf16.gmra.mxu0 %v4035
        %v4334 = vpop.f32.mrf.mxu0
        %v4335 = vadd.f32 %v4322, %v4334
        %v4336 = vpop.f32.mrf.mxu0
        %4337 = vdwg.mxu0
        %4338 = vmatpush.bf16.msra.mxu0 %v4266
        %4339 = vmatpush.bf16.msra.mxu0 %v4265
        %4340 = vmatpush.bf16.msra.mxu0 %v4264
        %4341 = vmatpush.bf16.msra.mxu0 %v4263
        %4342 = vmatpush.bf16.msra.mxu0 %v4262
        %4343 = vmatpush.bf16.msra.mxu0 %v4261
        %4344 = vmatpush.bf16.msra.mxu0 %v4260
        %4345 = vmatpush.bf16.msra.mxu0 %v4259
        %4346 = vmatmul.bf16.gmra.mxu0 %v4036
        %v4347 = vpop.f32.mrf.mxu0
        %v4348 = vadd.f32 %v4335, %v4347
        %v4349 = vpop.f32.mrf.mxu0
        %4350 = vdwg.mxu0
        %v4351 = vadd.f32 %v3739, %v4348
        %s4352 = scalar_lea.vmem %s1, 3
        %v4353 = vld [vmem:[%s4352] sm:$0x1]
        %s4354 = scalar_lea.vmem %s2, 3
        %v4355 = vld [vmem:[%s4354] sm:$0x1]
        %4356 = vadd.xlane.f32.xlu0 %v4351
        %v4357 = vpop.xlane.xlu0 %4356
        %v4358 = vmul.f32 %v4357, %v602
        %v4359 = vsub.f32 %v4351, %v4358
        %v4360 = vmul.f32 %v4359, %v4359
        %4361 = vadd.xlane.f32.xlu0 %v4360
        %v4362 = vpop.xlane.xlu0 %4361
        %v4363 = vmul.f32 %v4362, %v602
        %v4364 = vadd.f32 %v4363, 1e-05
        %v4365 = vrsqrt.pop %v4364
        %v4366 = vmul.f32 %v4365, %v4364
        %v4367 = vmul.f32 %v4366, %v4365
        %v4368 = vmul.f32 0.5, %v4367
        %v4369 = vsub.f32 1.5, %v4368
        %v4370 = vmul.f32 %v4365, %v4369
        %vm4371 = vweird.f32 %v4364
        %vm4372 = vweird.f32 %v4365
        %vm4373 = vmor %vm4371, %vm4372
        %v4374 = vsel %vm4373, %v4365, %v4370
        %v4375 = vmul.f32 %v4359, %v4374
        %v4377 = vperm.slane %v4353, 0
        %v4379 = vmul.f32 %v4375, %v4377
        %v4381 = vperm.slane %v4355, 0
        %v4383 = vadd.f32 %v4379, %v4381
        %v4384 = vpack.c.bf16 %v4383, %v4383
        %s4385 = scalar_lea.vmem [#allocation2], 576
        %v4386 = vld [vmem:[%s4385] sm:$0xff]
        %v4387 = vld [vmem:[%s4385 + $0x8] sm:$0xf]
        %v4388 = vld [vmem:[%s4385 + $0xc] sm:$0xff]
        %v4389 = vld [vmem:[%s4385 + $0x14] sm:$0xf]
        %v4390 = vld [vmem:[%s4385 + $0x18] sm:$0xff]
        %v4391 = vld [vmem:[%s4385 + $0x20] sm:$0xf]
        %v4392 = vld [vmem:[%s4385 + $0x24] sm:$0xff]
        %v4393 = vld [vmem:[%s4385 + $0x2c] sm:$0xf]
        %v4394 = vld [vmem:[%s4385 + $0x30] sm:$0xff]
        %v4395 = vld [vmem:[%s4385 + $0x38] sm:$0xf]
        %v4396 = vld [vmem:[%s4385 + $0x3c] sm:$0xff]
        %v4397 = vld [vmem:[%s4385 + $0x44] sm:$0xf]
        %v4398 = vld [vmem:[%s4385 + $0x48] sm:$0xff]
        %v4399 = vld [vmem:[%s4385 + $0x50] sm:$0xf]
        %v4400 = vld [vmem:[%s4385 + $0x54] sm:$0xff]
        %v4401 = vld [vmem:[%s4385 + $0x5c] sm:$0xf]
        %v4402 = vld [vmem:[%s4385 + $0x60] sm:$0xff]
        %v4403 = vld [vmem:[%s4385 + $0x68] sm:$0xf]
        %v4404 = vld [vmem:[%s4385 + $0x6c] sm:$0xff]
        %v4405 = vld [vmem:[%s4385 + $0x74] sm:$0xf]
        %v4406 = vld [vmem:[%s4385 + $0x78] sm:$0xff]
        %v4407 = vld [vmem:[%s4385 + $0x80] sm:$0xf]
        %v4408 = vld [vmem:[%s4385 + $0x84] sm:$0xff]
        %v4409 = vld [vmem:[%s4385 + $0x8c] sm:$0xf]
        %v4410 = vld [vmem:[%s4385 + $0x90] sm:$0xff]
        %v4411 = vld [vmem:[%s4385 + $0x98] sm:$0xf]
        %v4412 = vld [vmem:[%s4385 + $0x9c] sm:$0xff]
        %v4413 = vld [vmem:[%s4385 + $0xa4] sm:$0xf]
        %v4414 = vld [vmem:[%s4385 + $0xa8] sm:$0xff]
        %v4415 = vld [vmem:[%s4385 + $0xb0] sm:$0xf]
        %v4416 = vld [vmem:[%s4385 + $0xb4] sm:$0xff]
        %v4417 = vld [vmem:[%s4385 + $0xbc] sm:$0xf]
        %v4450 = vunpack.c.l.b16 %v4386
        %v4451 = vunpack.c.h.b16 %v4386
        %v4452 = vunpack.c.l.b16 %v4387
        %v4453 = vunpack.c.l.b16 %v4388
        %v4454 = vunpack.c.h.b16 %v4388
        %v4455 = vunpack.c.l.b16 %v4389
        %v4456 = vunpack.c.l.b16 %v4390
        %v4457 = vunpack.c.h.b16 %v4390
        %v4458 = vunpack.c.l.b16 %v4391
        %v4459 = vunpack.c.l.b16 %v4392
        %v4460 = vunpack.c.h.b16 %v4392
        %v4461 = vunpack.c.l.b16 %v4393
        %v4462 = vunpack.c.l.b16 %v4394
        %v4463 = vunpack.c.h.b16 %v4394
        %v4464 = vunpack.c.l.b16 %v4395
        %v4465 = vunpack.c.l.b16 %v4396
        %v4466 = vunpack.c.h.b16 %v4396
        %v4467 = vunpack.c.l.b16 %v4397
        %v4468 = vunpack.c.l.b16 %v4398
        %v4469 = vunpack.c.h.b16 %v4398
        %v4470 = vunpack.c.l.b16 %v4399
        %v4471 = vunpack.c.l.b16 %v4400
        %v4472 = vunpack.c.h.b16 %v4400
        %v4473 = vunpack.c.l.b16 %v4401
        %v4474 = vunpack.c.l.b16 %v4402
        %v4475 = vunpack.c.h.b16 %v4402
        %v4476 = vunpack.c.l.b16 %v4403
        %v4477 = vunpack.c.l.b16 %v4404
        %v4478 = vunpack.c.h.b16 %v4404
        %v4479 = vunpack.c.l.b16 %v4405
        %v4480 = vunpack.c.l.b16 %v4406
        %v4481 = vunpack.c.h.b16 %v4406
        %v4482 = vunpack.c.l.b16 %v4407
        %v4483 = vunpack.c.l.b16 %v4408
        %v4484 = vunpack.c.h.b16 %v4408
        %v4485 = vunpack.c.l.b16 %v4409
        %v4486 = vunpack.c.l.b16 %v4410
        %v4487 = vunpack.c.h.b16 %v4410
        %v4488 = vunpack.c.l.b16 %v4411
        %v4489 = vunpack.c.l.b16 %v4412
        %v4490 = vunpack.c.h.b16 %v4412
        %v4491 = vunpack.c.l.b16 %v4413
        %v4492 = vunpack.c.l.b16 %v4414
        %v4493 = vunpack.c.h.b16 %v4414
        %v4494 = vunpack.c.l.b16 %v4415
        %v4495 = vunpack.c.l.b16 %v4416
        %v4496 = vunpack.c.h.b16 %v4416
        %v4497 = vunpack.c.l.b16 %v4417
        %v4498 = vpack.c.b16 %v4453, %v4450
        %v4499 = vpack.c.b16 %v4454, %v4451
        %v4500 = vpack.c.b16 %v4455, %v4452
        %v4501 = vpack.c.b16 %v4459, %v4456
        %v4502 = vpack.c.b16 %v4460, %v4457
        %v4503 = vpack.c.b16 %v4461, %v4458
        %v4504 = vpack.c.b16 %v4465, %v4462
        %v4505 = vpack.c.b16 %v4466, %v4463
        %v4506 = vpack.c.b16 %v4467, %v4464
        %v4507 = vpack.c.b16 %v4471, %v4468
        %v4508 = vpack.c.b16 %v4472, %v4469
        %v4509 = vpack.c.b16 %v4473, %v4470
        %v4510 = vpack.c.b16 %v4477, %v4474
        %v4511 = vpack.c.b16 %v4478, %v4475
        %v4512 = vpack.c.b16 %v4479, %v4476
        %v4513 = vpack.c.b16 %v4483, %v4480
        %v4514 = vpack.c.b16 %v4484, %v4481
        %v4515 = vpack.c.b16 %v4485, %v4482
        %v4516 = vpack.c.b16 %v4489, %v4486
        %v4517 = vpack.c.b16 %v4490, %v4487
        %v4518 = vpack.c.b16 %v4491, %v4488
        %v4519 = vpack.c.b16 %v4495, %v4492
        %v4520 = vpack.c.b16 %v4496, %v4493
        %v4521 = vpack.c.b16 %v4497, %v4494
        %4546 = vmatpush.bf16.msra.mxu0 %v4519
        %4547 = vmatpush.bf16.msra.mxu0 %v4516
        %4548 = vmatpush.bf16.msra.mxu0 %v4513
        %4549 = vmatpush.bf16.msra.mxu0 %v4510
        %4550 = vmatpush.bf16.msra.mxu0 %v4507
        %4551 = vmatpush.bf16.msra.mxu0 %v4504
        %4552 = vmatpush.bf16.msra.mxu0 %v4501
        %4553 = vmatpush.bf16.msra.mxu0 %v4498
        %4554 = vmatmul.bf16.gmra.mxu0 %v4384
        %v4555 = vpop.f32.mrf.mxu0
        %v4556 = vadd.f32 0.0, %v4555
        %v4557 = vpop.f32.mrf.mxu0
        %4558 = vdwg.mxu0
        %4559 = vmatpush.bf16.msra.mxu0 %v4520
        %4560 = vmatpush.bf16.msra.mxu0 %v4517
        %4561 = vmatpush.bf16.msra.mxu0 %v4514
        %4562 = vmatpush.bf16.msra.mxu0 %v4511
        %4563 = vmatpush.bf16.msra.mxu0 %v4508
        %4564 = vmatpush.bf16.msra.mxu0 %v4505
        %4565 = vmatpush.bf16.msra.mxu0 %v4502
        %4566 = vmatpush.bf16.msra.mxu0 %v4499
        %4567 = vmatmul.bf16.gmra.mxu0 %v4384
        %v4568 = vpop.f32.mrf.mxu0
        %v4569 = vadd.f32 0.0, %v4568
        %v4570 = vpop.f32.mrf.mxu0
        %4571 = vdwg.mxu0
        %4572 = vmatpush.bf16.msra.mxu0 %v4521
        %4573 = vmatpush.bf16.msra.mxu0 %v4518
        %4574 = vmatpush.bf16.msra.mxu0 %v4515
        %4575 = vmatpush.bf16.msra.mxu0 %v4512
        %4576 = vmatpush.bf16.msra.mxu0 %v4509
        %4577 = vmatpush.bf16.msra.mxu0 %v4506
        %4578 = vmatpush.bf16.msra.mxu0 %v4503
        %4579 = vmatpush.bf16.msra.mxu0 %v4500
        %4580 = vmatmul.bf16.gmra.mxu0 %v4384
        %v4581 = vpop.f32.mrf.mxu0
        %v4582 = vadd.f32 0.0, %v4581
        %v4583 = vpop.f32.mrf.mxu0
        %4584 = vdwg.mxu0
        %v4586 = vsel %vm829, %v4556, 0
        %v4589 = vsel %vm829, %v4569, 0
        %4591 = vmatpush.xpose.msra.mxu0 0.0
        %4592 = vmatpush.xpose.msra.mxu0 0.0
        %4593 = vmatpush.xpose.msra.mxu0 0.0
        %4594 = vmatpush.xpose.msra.mxu0 0.0
        %4595 = vmatpush.xpose.msra.mxu0 0.0
        %4596 = vmatpush.xpose.msra.mxu0 0.0
        %4597 = vmatpush.xpose.msra.mxu0 0.0
        %4598 = vmatpush.xpose.msra.mxu0 0.0
        %4599 = vmatpush.xpose.msra.mxu0 0.0
        %4600 = vmatpush.xpose.msra.mxu0 0.0
        %4601 = vmatpush.xpose.msra.mxu0 0.0
        %4602 = vmatpush.xpose.msra.mxu0 0.0
        %4603 = vmatpush.xpose.msra.mxu0 0.0
        %4604 = vmatpush.xpose.msra.mxu0 0.0
        %4605 = vmatpush.xpose.msra.mxu0 0.0
        %4606 = vmatpush.xpose.msra.mxu0 %v4589
        %4607 = vmatmul.f32.gmra.mxu0 %v4586
        %v4608 = vpop.f32.mrf.mxu0
        %v4609 = vadd.f32 0.0, %v4608
        %4610 = vdwg.mxu0
        %v4611 = vmul.f32 %v4609, 0.088388346
        %v4612 = vadd.f32 %v4611, %v591
        %v4613 = vsel %vm858, %v4612, -inf
        %4614 = vmax.xlane.f32.xlu0 %v4613
        %v4615 = vpop.xlane.xlu0 %4614
        %v4616 = vsub.f32 %v4612, %v4615
        %v4617 = vmul.f32 %v4616, 1.442695
        %v4618 = vpow.pop %v4617
        %v4619 = vsel %vm858, %v4618, 0.0
        %4620 = vadd.xlane.f32.xlu0 %v4619
        %v4621 = vpop.xlane.xlu0 %4620
        %v4622 = vrcp.pop %v4621
        %v4623 = vmul.f32 %v4618, %v4622
        %v4625 = vsel %vm858, %v4623, 0
        %4627 = vmatpush.msra.mxu0 0.0
        %4628 = vmatpush.msra.mxu0 0.0
        %4629 = vmatpush.msra.mxu0 0.0
        %4630 = vmatpush.msra.mxu0 0.0
        %4631 = vmatpush.msra.mxu0 0.0
        %4632 = vmatpush.msra.mxu0 0.0
        %4633 = vmatpush.msra.mxu0 0.0
        %4634 = vmatpush.msra.mxu0 0.0
        %4635 = vmatpush.msra.mxu0 0.0
        %4636 = vmatpush.msra.mxu0 0.0
        %4637 = vmatpush.msra.mxu0 0.0
        %4638 = vmatpush.msra.mxu0 0.0
        %4639 = vmatpush.msra.mxu0 0.0
        %4640 = vmatpush.msra.mxu0 0.0
        %4641 = vmatpush.msra.mxu0 0.0
        %4642 = vmatpush.msra.mxu0 %v4582
        %4643 = vmatmul.f32.gmra.mxu0 %v4625
        %v4644 = vpop.f32.mrf.mxu0
        %v4645 = vadd.f32 0.0, %v4644
        %4646 = vdwg.mxu0
        %v4647 = vpack.c.bf16 %v4645, %v4645
        %s4648 = scalar_lea.vmem [#allocation5], 192
        %v4649 = vld [vmem:[%s4648] sm:$0xf]
        %v4650 = vld [vmem:[%s4648 + $0x4] sm:$0xf]
        %v4651 = vld [vmem:[%s4648 + $0x8] sm:$0xf]
        %v4652 = vld [vmem:[%s4648 + $0xc] sm:$0xf]
        %4653 = vrot.lane.b32.xlu0 %v4556, 96
        %v4654 = vpop.permute.xlu0 %4653
        %4655 = vrot.lane.b32.xlu0 %v4569, 96
        %v4656 = vpop.permute.xlu0 %4655
        %v4657 = vsel %vm829, %v4654, 0
        %v4659 = vsel %vm829, %v4656, 0
        %4661 = vmatpush.xpose.msra.mxu0 0.0
        %4662 = vmatpush.xpose.msra.mxu0 0.0
        %4663 = vmatpush.xpose.msra.mxu0 0.0
        %4664 = vmatpush.xpose.msra.mxu0 0.0
        %4665 = vmatpush.xpose.msra.mxu0 0.0
        %4666 = vmatpush.xpose.msra.mxu0 0.0
        %4667 = vmatpush.xpose.msra.mxu0 0.0
        %4668 = vmatpush.xpose.msra.mxu0 0.0
        %4669 = vmatpush.xpose.msra.mxu0 0.0
        %4670 = vmatpush.xpose.msra.mxu0 0.0
        %4671 = vmatpush.xpose.msra.mxu0 0.0
        %4672 = vmatpush.xpose.msra.mxu0 0.0
        %4673 = vmatpush.xpose.msra.mxu0 0.0
        %4674 = vmatpush.xpose.msra.mxu0 0.0
        %4675 = vmatpush.xpose.msra.mxu0 0.0
        %4676 = vmatpush.xpose.msra.mxu0 %v4659
        %4677 = vmatmul.f32.gmra.mxu0 %v4657
        %v4678 = vpop.f32.mrf.mxu0
        %v4679 = vadd.f32 0.0, %v4678
        %4680 = vdwg.mxu0
        %v4681 = vmul.f32 %v4679, 0.088388346
        %v4682 = vadd.f32 %v4681, %v591
        %v4683 = vsel %vm858, %v4682, -inf
        %4684 = vmax.xlane.f32.xlu0 %v4683
        %v4685 = vpop.xlane.xlu0 %4684
        %v4686 = vsub.f32 %v4682, %v4685
        %v4687 = vmul.f32 %v4686, 1.442695
        %v4688 = vpow.pop %v4687
        %v4689 = vsel %vm858, %v4688, 0.0
        %4690 = vadd.xlane.f32.xlu0 %v4689
        %v4691 = vpop.xlane.xlu0 %4690
        %v4692 = vrcp.pop %v4691
        %v4693 = vmul.f32 %v4688, %v4692
        %4695 = vrot.lane.b32.xlu0 %v4582, 96
        %v4696 = vpop.permute.xlu0 %4695
        %v4699 = vsel %vm858, %v4693, 0
        %4701 = vmatpush.msra.mxu0 0.0
        %4702 = vmatpush.msra.mxu0 0.0
        %4703 = vmatpush.msra.mxu0 0.0
        %4704 = vmatpush.msra.mxu0 0.0
        %4705 = vmatpush.msra.mxu0 0.0
        %4706 = vmatpush.msra.mxu0 0.0
        %4707 = vmatpush.msra.mxu0 0.0
        %4708 = vmatpush.msra.mxu0 0.0
        %4709 = vmatpush.msra.mxu0 0.0
        %4710 = vmatpush.msra.mxu0 0.0
        %4711 = vmatpush.msra.mxu0 0.0
        %4712 = vmatpush.msra.mxu0 0.0
        %4713 = vmatpush.msra.mxu0 0.0
        %4714 = vmatpush.msra.mxu0 0.0
        %4715 = vmatpush.msra.mxu0 0.0
        %4716 = vmatpush.msra.mxu0 %v4696
        %4717 = vmatmul.f32.gmra.mxu0 %v4699
        %v4718 = vpop.f32.mrf.mxu0
        %v4719 = vadd.f32 0.0, %v4718
        %4720 = vdwg.mxu0
        %v4721 = vpack.c.bf16 %v4719, %v4719
        %s4722 = scalar_lea.vmem [#allocation5], 208
        %v4723 = vld [vmem:[%s4722] sm:$0xf]
        %v4724 = vld [vmem:[%s4722 + $0x4] sm:$0xf]
        %v4725 = vld [vmem:[%s4722 + $0x8] sm:$0xf]
        %v4726 = vld [vmem:[%s4722 + $0xc] sm:$0xf]
        %v4731 = vunpack.c.l.b16 %v4723
        %v4732 = vunpack.c.l.b16 %v4724
        %v4733 = vunpack.c.l.b16 %v4725
        %v4734 = vunpack.c.l.b16 %v4726
        %v4735 = vpack.c.b16 %v4732, %v4731
        %v4736 = vpack.c.b16 %v4734, %v4733
        %v4740 = vsel %vm829, %v4721, 0
        %4742 = vmatpush.bf16.msra.mxu0 0
        %4743 = vmatpush.bf16.msra.mxu0 0
        %4744 = vmatpush.bf16.msra.mxu0 0
        %4745 = vmatpush.bf16.msra.mxu0 0
        %4746 = vmatpush.bf16.msra.mxu0 0
        %4747 = vmatpush.bf16.msra.mxu0 0
        %4748 = vmatpush.bf16.msra.mxu0 %v4736
        %4749 = vmatpush.bf16.msra.mxu0 %v4735
        %4750 = vmatmul.bf16.gmra.mxu0 %v4740
        %v4751 = vpop.f32.mrf.mxu0
        %v4752 = vadd.f32 0.0, %v4751
        %v4753 = vpop.f32.mrf.mxu0
        %4754 = vdwg.mxu0
        %v4759 = vunpack.c.l.b16 %v4649
        %v4760 = vunpack.c.l.b16 %v4650
        %v4761 = vunpack.c.l.b16 %v4651
        %v4762 = vunpack.c.l.b16 %v4652
        %v4763 = vpack.c.b16 %v4760, %v4759
        %v4764 = vpack.c.b16 %v4762, %v4761
        %v4768 = vsel %vm829, %v4647, 0
        %4770 = vmatpush.bf16.msra.mxu0 0
        %4771 = vmatpush.bf16.msra.mxu0 0
        %4772 = vmatpush.bf16.msra.mxu0 0
        %4773 = vmatpush.bf16.msra.mxu0 0
        %4774 = vmatpush.bf16.msra.mxu0 0
        %4775 = vmatpush.bf16.msra.mxu0 0
        %4776 = vmatpush.bf16.msra.mxu0 %v4764
        %4777 = vmatpush.bf16.msra.mxu0 %v4763
        %4778 = vmatmul.bf16.gmra.mxu0 %v4768
        %v4779 = vpop.f32.mrf.mxu0
        %v4780 = vadd.f32 %v4752, %v4779
        %v4781 = vpop.f32.mrf.mxu0
        %4782 = vdwg.mxu0
        %4783 = vrot.lane.b32.xlu0 %v4556, 64
        %v4784 = vpop.permute.xlu0 %4783
        %4785 = vrot.lane.b32.xlu0 %v4569, 64
        %v4786 = vpop.permute.xlu0 %4785
        %v4787 = vsel %vm829, %v4784, 0
        %v4789 = vsel %vm829, %v4786, 0
        %4791 = vmatpush.xpose.msra.mxu0 0.0
        %4792 = vmatpush.xpose.msra.mxu0 0.0
        %4793 = vmatpush.xpose.msra.mxu0 0.0
        %4794 = vmatpush.xpose.msra.mxu0 0.0
        %4795 = vmatpush.xpose.msra.mxu0 0.0
        %4796 = vmatpush.xpose.msra.mxu0 0.0
        %4797 = vmatpush.xpose.msra.mxu0 0.0
        %4798 = vmatpush.xpose.msra.mxu0 0.0
        %4799 = vmatpush.xpose.msra.mxu0 0.0
        %4800 = vmatpush.xpose.msra.mxu0 0.0
        %4801 = vmatpush.xpose.msra.mxu0 0.0
        %4802 = vmatpush.xpose.msra.mxu0 0.0
        %4803 = vmatpush.xpose.msra.mxu0 0.0
        %4804 = vmatpush.xpose.msra.mxu0 0.0
        %4805 = vmatpush.xpose.msra.mxu0 0.0
        %4806 = vmatpush.xpose.msra.mxu0 %v4789
        %4807 = vmatmul.f32.gmra.mxu0 %v4787
        %v4808 = vpop.f32.mrf.mxu0
        %v4809 = vadd.f32 0.0, %v4808
        %4810 = vdwg.mxu0
        %v4811 = vmul.f32 %v4809, 0.088388346
        %v4812 = vadd.f32 %v4811, %v591
        %v4813 = vsel %vm858, %v4812, -inf
        %4814 = vmax.xlane.f32.xlu0 %v4813
        %v4815 = vpop.xlane.xlu0 %4814
        %v4816 = vsub.f32 %v4812, %v4815
        %v4817 = vmul.f32 %v4816, 1.442695
        %v4818 = vpow.pop %v4817
        %v4819 = vsel %vm858, %v4818, 0.0
        %4820 = vadd.xlane.f32.xlu0 %v4819
        %v4821 = vpop.xlane.xlu0 %4820
        %v4822 = vrcp.pop %v4821
        %v4823 = vmul.f32 %v4818, %v4822
        %4824 = vrot.lane.b32.xlu0 %v4582, 64
        %v4825 = vpop.permute.xlu0 %4824
        %v4828 = vsel %vm858, %v4823, 0
        %4830 = vmatpush.msra.mxu0 0.0
        %4831 = vmatpush.msra.mxu0 0.0
        %4832 = vmatpush.msra.mxu0 0.0
        %4833 = vmatpush.msra.mxu0 0.0
        %4834 = vmatpush.msra.mxu0 0.0
        %4835 = vmatpush.msra.mxu0 0.0
        %4836 = vmatpush.msra.mxu0 0.0
        %4837 = vmatpush.msra.mxu0 0.0
        %4838 = vmatpush.msra.mxu0 0.0
        %4839 = vmatpush.msra.mxu0 0.0
        %4840 = vmatpush.msra.mxu0 0.0
        %4841 = vmatpush.msra.mxu0 0.0
        %4842 = vmatpush.msra.mxu0 0.0
        %4843 = vmatpush.msra.mxu0 0.0
        %4844 = vmatpush.msra.mxu0 0.0
        %4845 = vmatpush.msra.mxu0 %v4825
        %4846 = vmatmul.f32.gmra.mxu0 %v4828
        %v4847 = vpop.f32.mrf.mxu0
        %v4848 = vadd.f32 0.0, %v4847
        %4849 = vdwg.mxu0
        %v4850 = vpack.c.bf16 %v4848, %v4848
        %s4851 = scalar_lea.vmem [#allocation5], 224
        %v4852 = vld [vmem:[%s4851] sm:$0xf]
        %v4853 = vld [vmem:[%s4851 + $0x4] sm:$0xf]
        %v4854 = vld [vmem:[%s4851 + $0x8] sm:$0xf]
        %v4855 = vld [vmem:[%s4851 + $0xc] sm:$0xf]
        %v4860 = vunpack.c.l.b16 %v4852
        %v4861 = vunpack.c.l.b16 %v4853
        %v4862 = vunpack.c.l.b16 %v4854
        %v4863 = vunpack.c.l.b16 %v4855
        %v4864 = vpack.c.b16 %v4861, %v4860
        %v4865 = vpack.c.b16 %v4863, %v4862
        %v4869 = vsel %vm829, %v4850, 0
        %4871 = vmatpush.bf16.msra.mxu0 0
        %4872 = vmatpush.bf16.msra.mxu0 0
        %4873 = vmatpush.bf16.msra.mxu0 0
        %4874 = vmatpush.bf16.msra.mxu0 0
        %4875 = vmatpush.bf16.msra.mxu0 0
        %4876 = vmatpush.bf16.msra.mxu0 0
        %4877 = vmatpush.bf16.msra.mxu0 %v4865
        %4878 = vmatpush.bf16.msra.mxu0 %v4864
        %4879 = vmatmul.bf16.gmra.mxu0 %v4869
        %v4880 = vpop.f32.mrf.mxu0
        %v4881 = vadd.f32 0.0, %v4880
        %v4882 = vpop.f32.mrf.mxu0
        %4883 = vdwg.mxu0
        %v4884 = vadd.f32 %v4780, %v4881
        %4885 = vrot.lane.b32.xlu0 %v4556, 32
        %v4886 = vpop.permute.xlu0 %4885
        %4887 = vrot.lane.b32.xlu0 %v4569, 32
        %v4888 = vpop.permute.xlu0 %4887
        %v4889 = vsel %vm829, %v4886, 0
        %v4891 = vsel %vm829, %v4888, 0
        %4893 = vmatpush.xpose.msra.mxu0 0.0
        %4894 = vmatpush.xpose.msra.mxu0 0.0
        %4895 = vmatpush.xpose.msra.mxu0 0.0
        %4896 = vmatpush.xpose.msra.mxu0 0.0
        %4897 = vmatpush.xpose.msra.mxu0 0.0
        %4898 = vmatpush.xpose.msra.mxu0 0.0
        %4899 = vmatpush.xpose.msra.mxu0 0.0
        %4900 = vmatpush.xpose.msra.mxu0 0.0
        %4901 = vmatpush.xpose.msra.mxu0 0.0
        %4902 = vmatpush.xpose.msra.mxu0 0.0
        %4903 = vmatpush.xpose.msra.mxu0 0.0
        %4904 = vmatpush.xpose.msra.mxu0 0.0
        %4905 = vmatpush.xpose.msra.mxu0 0.0
        %4906 = vmatpush.xpose.msra.mxu0 0.0
        %4907 = vmatpush.xpose.msra.mxu0 0.0
        %4908 = vmatpush.xpose.msra.mxu0 %v4891
        %4909 = vmatmul.f32.gmra.mxu0 %v4889
        %v4910 = vpop.f32.mrf.mxu0
        %v4911 = vadd.f32 0.0, %v4910
        %4912 = vdwg.mxu0
        %v4913 = vmul.f32 %v4911, 0.088388346
        %v4914 = vadd.f32 %v4913, %v591
        %v4915 = vsel %vm858, %v4914, -inf
        %4916 = vmax.xlane.f32.xlu0 %v4915
        %v4917 = vpop.xlane.xlu0 %4916
        %v4918 = vsub.f32 %v4914, %v4917
        %v4919 = vmul.f32 %v4918, 1.442695
        %v4920 = vpow.pop %v4919
        %v4921 = vsel %vm858, %v4920, 0.0
        %4922 = vadd.xlane.f32.xlu0 %v4921
        %v4923 = vpop.xlane.xlu0 %4922
        %v4924 = vrcp.pop %v4923
        %v4925 = vmul.f32 %v4920, %v4924
        %4926 = vrot.lane.b32.xlu0 %v4582, 32
        %v4927 = vpop.permute.xlu0 %4926
        %v4930 = vsel %vm858, %v4925, 0
        %4932 = vmatpush.msra.mxu0 0.0
        %4933 = vmatpush.msra.mxu0 0.0
        %4934 = vmatpush.msra.mxu0 0.0
        %4935 = vmatpush.msra.mxu0 0.0
        %4936 = vmatpush.msra.mxu0 0.0
        %4937 = vmatpush.msra.mxu0 0.0
        %4938 = vmatpush.msra.mxu0 0.0
        %4939 = vmatpush.msra.mxu0 0.0
        %4940 = vmatpush.msra.mxu0 0.0
        %4941 = vmatpush.msra.mxu0 0.0
        %4942 = vmatpush.msra.mxu0 0.0
        %4943 = vmatpush.msra.mxu0 0.0
        %4944 = vmatpush.msra.mxu0 0.0
        %4945 = vmatpush.msra.mxu0 0.0
        %4946 = vmatpush.msra.mxu0 0.0
        %4947 = vmatpush.msra.mxu0 %v4927
        %4948 = vmatmul.f32.gmra.mxu0 %v4930
        %v4949 = vpop.f32.mrf.mxu0
        %v4950 = vadd.f32 0.0, %v4949
        %4951 = vdwg.mxu0
        %v4952 = vpack.c.bf16 %v4950, %v4950
        %s4953 = scalar_lea.vmem [#allocation5], 240
        %v4954 = vld [vmem:[%s4953] sm:$0xf]
        %v4955 = vld [vmem:[%s4953 + $0x4] sm:$0xf]
        %v4956 = vld [vmem:[%s4953 + $0x8] sm:$0xf]
        %v4957 = vld [vmem:[%s4953 + $0xc] sm:$0xf]
        %v4962 = vunpack.c.l.b16 %v4954
        %v4963 = vunpack.c.l.b16 %v4955
        %v4964 = vunpack.c.l.b16 %v4956
        %v4965 = vunpack.c.l.b16 %v4957
        %v4966 = vpack.c.b16 %v4963, %v4962
        %v4967 = vpack.c.b16 %v4965, %v4964
        %v4971 = vsel %vm829, %v4952, 0
        %4973 = vmatpush.bf16.msra.mxu0 0
        %4974 = vmatpush.bf16.msra.mxu0 0
        %4975 = vmatpush.bf16.msra.mxu0 0
        %4976 = vmatpush.bf16.msra.mxu0 0
        %4977 = vmatpush.bf16.msra.mxu0 0
        %4978 = vmatpush.bf16.msra.mxu0 0
        %4979 = vmatpush.bf16.msra.mxu0 %v4967
        %4980 = vmatpush.bf16.msra.mxu0 %v4966
        %4981 = vmatmul.bf16.gmra.mxu0 %v4971
        %v4982 = vpop.f32.mrf.mxu0
        %v4983 = vadd.f32 0.0, %v4982
        %v4984 = vpop.f32.mrf.mxu0
        %4985 = vdwg.mxu0
        %v4986 = vadd.f32 %v4884, %v4983
        %v4987 = vadd.f32 %v4351, %v4986
        %s4988 = scalar_lea.vmem %s5, 3
        %v4989 = vld [vmem:[%s4988] sm:$0x1]
        %v4991 = vperm.slane %v4989, 0
        %v4993 = vadd.f32 %v4987, %v4991
        %s4994 = scalar_lea.vmem %s6, 3
        %v4995 = vld [vmem:[%s4994] sm:$0x1]
        %s4996 = scalar_lea.vmem %s7, 3
        %v4997 = vld [vmem:[%s4996] sm:$0x1]
        %4998 = vadd.xlane.f32.xlu0 %v4993
        %v4999 = vpop.xlane.xlu0 %4998
        %v5000 = vmul.f32 %v4999, %v602
        %v5001 = vsub.f32 %v4993, %v5000
        %v5002 = vmul.f32 %v5001, %v5001
        %5003 = vadd.xlane.f32.xlu0 %v5002
        %v5004 = vpop.xlane.xlu0 %5003
        %v5005 = vmul.f32 %v5004, %v602
        %v5006 = vadd.f32 %v5005, 1e-05
        %v5007 = vrsqrt.pop %v5006
        %v5008 = vmul.f32 %v5007, %v5006
        %v5009 = vmul.f32 %v5008, %v5007
        %v5010 = vmul.f32 0.5, %v5009
        %v5011 = vsub.f32 1.5, %v5010
        %v5012 = vmul.f32 %v5007, %v5011
        %vm5013 = vweird.f32 %v5006
        %vm5014 = vweird.f32 %v5007
        %vm5015 = vmor %vm5013, %vm5014
        %v5016 = vsel %vm5015, %v5007, %v5012
        %v5017 = vmul.f32 %v5001, %v5016
        %v5019 = vperm.slane %v4995, 0
        %v5021 = vmul.f32 %v5017, %v5019
        %v5023 = vperm.slane %v4997, 0
        %v5025 = vadd.f32 %v5021, %v5023
        %v5026 = vpack.c.bf16 %v5025, %v5025
        %s5027 = scalar_lea.vmem [#allocation7], 768
        %v5028 = vld [vmem:[%s5027] sm:$0xff]
        %v5029 = vld [vmem:[%s5027 + $0x8] sm:$0xff]
        %v5030 = vld [vmem:[%s5027 + $0x10] sm:$0xff]
        %v5031 = vld [vmem:[%s5027 + $0x18] sm:$0xff]
        %v5032 = vld [vmem:[%s5027 + $0x20] sm:$0xff]
        %v5033 = vld [vmem:[%s5027 + $0x28] sm:$0xff]
        %v5034 = vld [vmem:[%s5027 + $0x30] sm:$0xff]
        %v5035 = vld [vmem:[%s5027 + $0x38] sm:$0xff]
        %v5036 = vld [vmem:[%s5027 + $0x40] sm:$0xff]
        %v5037 = vld [vmem:[%s5027 + $0x48] sm:$0xff]
        %v5038 = vld [vmem:[%s5027 + $0x50] sm:$0xff]
        %v5039 = vld [vmem:[%s5027 + $0x58] sm:$0xff]
        %v5040 = vld [vmem:[%s5027 + $0x60] sm:$0xff]
        %v5041 = vld [vmem:[%s5027 + $0x68] sm:$0xff]
        %v5042 = vld [vmem:[%s5027 + $0x70] sm:$0xff]
        %v5043 = vld [vmem:[%s5027 + $0x78] sm:$0xff]
        %v5044 = vld [vmem:[%s5027 + $0x80] sm:$0xff]
        %v5045 = vld [vmem:[%s5027 + $0x88] sm:$0xff]
        %v5046 = vld [vmem:[%s5027 + $0x90] sm:$0xff]
        %v5047 = vld [vmem:[%s5027 + $0x98] sm:$0xff]
        %v5048 = vld [vmem:[%s5027 + $0xa0] sm:$0xff]
        %v5049 = vld [vmem:[%s5027 + $0xa8] sm:$0xff]
        %v5050 = vld [vmem:[%s5027 + $0xb0] sm:$0xff]
        %v5051 = vld [vmem:[%s5027 + $0xb8] sm:$0xff]
        %v5052 = vld [vmem:[%s5027 + $0xc0] sm:$0xff]
        %v5053 = vld [vmem:[%s5027 + $0xc8] sm:$0xff]
        %v5054 = vld [vmem:[%s5027 + $0xd0] sm:$0xff]
        %v5055 = vld [vmem:[%s5027 + $0xd8] sm:$0xff]
        %v5056 = vld [vmem:[%s5027 + $0xe0] sm:$0xff]
        %v5057 = vld [vmem:[%s5027 + $0xe8] sm:$0xff]
        %v5058 = vld [vmem:[%s5027 + $0xf0] sm:$0xff]
        %v5059 = vld [vmem:[%s5027 + $0xf8] sm:$0xff]
        %s5060 = scalar_lea.vmem %s9, 12
        %v5061 = vld [vmem:[%s5060] sm:$0xf]
        %v5063 = vperm.slane %v5061, 0
        %v5064 = vperm.slane %v5061, 1
        %v5065 = vperm.slane %v5061, 2
        %v5066 = vperm.slane %v5061, 3
        %v5103 = vunpack.c.l.b16 %v5028
        %v5104 = vunpack.c.h.b16 %v5028
        %v5105 = vunpack.c.l.b16 %v5029
        %v5106 = vunpack.c.h.b16 %v5029
        %v5107 = vunpack.c.l.b16 %v5030
        %v5108 = vunpack.c.h.b16 %v5030
        %v5109 = vunpack.c.l.b16 %v5031
        %v5110 = vunpack.c.h.b16 %v5031
        %v5111 = vunpack.c.l.b16 %v5032
        %v5112 = vunpack.c.h.b16 %v5032
        %v5113 = vunpack.c.l.b16 %v5033
        %v5114 = vunpack.c.h.b16 %v5033
        %v5115 = vunpack.c.l.b16 %v5034
        %v5116 = vunpack.c.h.b16 %v5034
        %v5117 = vunpack.c.l.b16 %v5035
        %v5118 = vunpack.c.h.b16 %v5035
        %v5119 = vunpack.c.l.b16 %v5036
        %v5120 = vunpack.c.h.b16 %v5036
        %v5121 = vunpack.c.l.b16 %v5037
        %v5122 = vunpack.c.h.b16 %v5037
        %v5123 = vunpack.c.l.b16 %v5038
        %v5124 = vunpack.c.h.b16 %v5038
        %v5125 = vunpack.c.l.b16 %v5039
        %v5126 = vunpack.c.h.b16 %v5039
        %v5127 = vunpack.c.l.b16 %v5040
        %v5128 = vunpack.c.h.b16 %v5040
        %v5129 = vunpack.c.l.b16 %v5041
        %v5130 = vunpack.c.h.b16 %v5041
        %v5131 = vunpack.c.l.b16 %v5042
        %v5132 = vunpack.c.h.b16 %v5042
        %v5133 = vunpack.c.l.b16 %v5043
        %v5134 = vunpack.c.h.b16 %v5043
        %v5135 = vunpack.c.l.b16 %v5044
        %v5136 = vunpack.c.h.b16 %v5044
        %v5137 = vunpack.c.l.b16 %v5045
        %v5138 = vunpack.c.h.b16 %v5045
        %v5139 = vunpack.c.l.b16 %v5046
        %v5140 = vunpack.c.h.b16 %v5046
        %v5141 = vunpack.c.l.b16 %v5047
        %v5142 = vunpack.c.h.b16 %v5047
        %v5143 = vunpack.c.l.b16 %v5048
        %v5144 = vunpack.c.h.b16 %v5048
        %v5145 = vunpack.c.l.b16 %v5049
        %v5146 = vunpack.c.h.b16 %v5049
        %v5147 = vunpack.c.l.b16 %v5050
        %v5148 = vunpack.c.h.b16 %v5050
        %v5149 = vunpack.c.l.b16 %v5051
        %v5150 = vunpack.c.h.b16 %v5051
        %v5151 = vunpack.c.l.b16 %v5052
        %v5152 = vunpack.c.h.b16 %v5052
        %v5153 = vunpack.c.l.b16 %v5053
        %v5154 = vunpack.c.h.b16 %v5053
        %v5155 = vunpack.c.l.b16 %v5054
        %v5156 = vunpack.c.h.b16 %v5054
        %v5157 = vunpack.c.l.b16 %v5055
        %v5158 = vunpack.c.h.b16 %v5055
        %v5159 = vunpack.c.l.b16 %v5056
        %v5160 = vunpack.c.h.b16 %v5056
        %v5161 = vunpack.c.l.b16 %v5057
        %v5162 = vunpack.c.h.b16 %v5057
        %v5163 = vunpack.c.l.b16 %v5058
        %v5164 = vunpack.c.h.b16 %v5058
        %v5165 = vunpack.c.l.b16 %v5059
        %v5166 = vunpack.c.h.b16 %v5059
        %v5167 = vpack.c.b16 %v5107, %v5103
        %v5168 = vpack.c.b16 %v5108, %v5104
        %v5169 = vpack.c.b16 %v5109, %v5105
        %v5170 = vpack.c.b16 %v5110, %v5106
        %v5171 = vpack.c.b16 %v5115, %v5111
        %v5172 = vpack.c.b16 %v5116, %v5112
        %v5173 = vpack.c.b16 %v5117, %v5113
        %v5174 = vpack.c.b16 %v5118, %v5114
        %v5175 = vpack.c.b16 %v5123, %v5119
        %v5176 = vpack.c.b16 %v5124, %v5120
        %v5177 = vpack.c.b16 %v5125, %v5121
        %v5178 = vpack.c.b16 %v5126, %v5122
        %v5179 = vpack.c.b16 %v5131, %v5127
        %v5180 = vpack.c.b16 %v5132, %v5128
        %v5181 = vpack.c.b16 %v5133, %v5129
        %v5182 = vpack.c.b16 %v5134, %v5130
        %v5183 = vpack.c.b16 %v5139, %v5135
        %v5184 = vpack.c.b16 %v5140, %v5136
        %v5185 = vpack.c.b16 %v5141, %v5137
        %v5186 = vpack.c.b16 %v5142, %v5138
        %v5187 = vpack.c.b16 %v5147, %v5143
        %v5188 = vpack.c.b16 %v5148, %v5144
        %v5189 = vpack.c.b16 %v5149, %v5145
        %v5190 = vpack.c.b16 %v5150, %v5146
        %v5191 = vpack.c.b16 %v5155, %v5151
        %v5192 = vpack.c.b16 %v5156, %v5152
        %v5193 = vpack.c.b16 %v5157, %v5153
        %v5194 = vpack.c.b16 %v5158, %v5154
        %v5195 = vpack.c.b16 %v5163, %v5159
        %v5196 = vpack.c.b16 %v5164, %v5160
        %v5197 = vpack.c.b16 %v5165, %v5161
        %v5198 = vpack.c.b16 %v5166, %v5162
        %5231 = vmatpush.bf16.msra.mxu0 %v5195
        %5232 = vmatpush.bf16.msra.mxu0 %v5191
        %5233 = vmatpush.bf16.msra.mxu0 %v5187
        %5234 = vmatpush.bf16.msra.mxu0 %v5183
        %5235 = vmatpush.bf16.msra.mxu0 %v5179
        %5236 = vmatpush.bf16.msra.mxu0 %v5175
        %5237 = vmatpush.bf16.msra.mxu0 %v5171
        %5238 = vmatpush.bf16.msra.mxu0 %v5167
        %5239 = vmatmul.bf16.gmra.mxu0 %v5026
        %v5240 = vpop.f32.mrf.mxu0
        %v5241 = vadd.f32 %v5063, %v5240
        %v5242 = vpop.f32.mrf.mxu0
        %5243 = vdwg.mxu0
        %5244 = vmatpush.bf16.msra.mxu0 %v5196
        %5245 = vmatpush.bf16.msra.mxu0 %v5192
        %5246 = vmatpush.bf16.msra.mxu0 %v5188
        %5247 = vmatpush.bf16.msra.mxu0 %v5184
        %5248 = vmatpush.bf16.msra.mxu0 %v5180
        %5249 = vmatpush.bf16.msra.mxu0 %v5176
        %5250 = vmatpush.bf16.msra.mxu0 %v5172
        %5251 = vmatpush.bf16.msra.mxu0 %v5168
        %5252 = vmatmul.bf16.gmra.mxu0 %v5026
        %v5253 = vpop.f32.mrf.mxu0
        %v5254 = vadd.f32 %v5064, %v5253
        %v5255 = vpop.f32.mrf.mxu0
        %5256 = vdwg.mxu0
        %5257 = vmatpush.bf16.msra.mxu0 %v5197
        %5258 = vmatpush.bf16.msra.mxu0 %v5193
        %5259 = vmatpush.bf16.msra.mxu0 %v5189
        %5260 = vmatpush.bf16.msra.mxu0 %v5185
        %5261 = vmatpush.bf16.msra.mxu0 %v5181
        %5262 = vmatpush.bf16.msra.mxu0 %v5177
        %5263 = vmatpush.bf16.msra.mxu0 %v5173
        %5264 = vmatpush.bf16.msra.mxu0 %v5169
        %5265 = vmatmul.bf16.gmra.mxu0 %v5026
        %v5266 = vpop.f32.mrf.mxu0
        %v5267 = vadd.f32 %v5065, %v5266
        %v5268 = vpop.f32.mrf.mxu0
        %5269 = vdwg.mxu0
        %5270 = vmatpush.bf16.msra.mxu0 %v5198
        %5271 = vmatpush.bf16.msra.mxu0 %v5194
        %5272 = vmatpush.bf16.msra.mxu0 %v5190
        %5273 = vmatpush.bf16.msra.mxu0 %v5186
        %5274 = vmatpush.bf16.msra.mxu0 %v5182
        %5275 = vmatpush.bf16.msra.mxu0 %v5178
        %5276 = vmatpush.bf16.msra.mxu0 %v5174
        %5277 = vmatpush.bf16.msra.mxu0 %v5170
        %5278 = vmatmul.bf16.gmra.mxu0 %v5026
        %v5279 = vpop.f32.mrf.mxu0
        %v5280 = vadd.f32 %v5066, %v5279
        %v5281 = vpop.f32.mrf.mxu0
        %5282 = vdwg.mxu0
        %v5283 = vmax.f32 %v5241, 0.0
        %v5284 = vmax.f32 %v5254, 0.0
        %v5285 = vmax.f32 %v5267, 0.0
        %v5286 = vmax.f32 %v5280, 0.0
        %v5287 = vpack.c.bf16 %v5283, %v5283
        %v5288 = vpack.c.bf16 %v5284, %v5284
        %v5289 = vpack.c.bf16 %v5285, %v5285
        %v5290 = vpack.c.bf16 %v5286, %v5286
        %s5291 = scalar_lea.vmem [#allocation8], 768
        %v5292 = vld [vmem:[%s5291] sm:$0xf]
        %v5293 = vld [vmem:[%s5291 + $0x4] sm:$0xf]
        %v5294 = vld [vmem:[%s5291 + $0x8] sm:$0xf]
        %v5295 = vld [vmem:[%s5291 + $0xc] sm:$0xf]
        %v5296 = vld [vmem:[%s5291 + $0x10] sm:$0xf]
        %v5297 = vld [vmem:[%s5291 + $0x14] sm:$0xf]
        %v5298 = vld [vmem:[%s5291 + $0x18] sm:$0xf]
        %v5299 = vld [vmem:[%s5291 + $0x1c] sm:$0xf]
        %v5300 = vld [vmem:[%s5291 + $0x20] sm:$0xf]
        %v5301 = vld [vmem:[%s5291 + $0x24] sm:$0xf]
        %v5302 = vld [vmem:[%s5291 + $0x28] sm:$0xf]
        %v5303 = vld [vmem:[%s5291 + $0x2c] sm:$0xf]
        %v5304 = vld [vmem:[%s5291 + $0x30] sm:$0xf]
        %v5305 = vld [vmem:[%s5291 + $0x34] sm:$0xf]
        %v5306 = vld [vmem:[%s5291 + $0x38] sm:$0xf]
        %v5307 = vld [vmem:[%s5291 + $0x3c] sm:$0xf]
        %v5308 = vld [vmem:[%s5291 + $0x40] sm:$0xf]
        %v5309 = vld [vmem:[%s5291 + $0x44] sm:$0xf]
        %v5310 = vld [vmem:[%s5291 + $0x48] sm:$0xf]
        %v5311 = vld [vmem:[%s5291 + $0x4c] sm:$0xf]
        %v5312 = vld [vmem:[%s5291 + $0x50] sm:$0xf]
        %v5313 = vld [vmem:[%s5291 + $0x54] sm:$0xf]
        %v5314 = vld [vmem:[%s5291 + $0x58] sm:$0xf]
        %v5315 = vld [vmem:[%s5291 + $0x5c] sm:$0xf]
        %v5316 = vld [vmem:[%s5291 + $0x60] sm:$0xf]
        %v5317 = vld [vmem:[%s5291 + $0x64] sm:$0xf]
        %v5318 = vld [vmem:[%s5291 + $0x68] sm:$0xf]
        %v5319 = vld [vmem:[%s5291 + $0x6c] sm:$0xf]
        %v5320 = vld [vmem:[%s5291 + $0x70] sm:$0xf]
        %v5321 = vld [vmem:[%s5291 + $0x74] sm:$0xf]
        %v5322 = vld [vmem:[%s5291 + $0x78] sm:$0xf]
        %v5323 = vld [vmem:[%s5291 + $0x7c] sm:$0xf]
        %v5324 = vld [vmem:[%s5291 + $0x80] sm:$0xf]
        %v5325 = vld [vmem:[%s5291 + $0x84] sm:$0xf]
        %v5326 = vld [vmem:[%s5291 + $0x88] sm:$0xf]
        %v5327 = vld [vmem:[%s5291 + $0x8c] sm:$0xf]
        %v5328 = vld [vmem:[%s5291 + $0x90] sm:$0xf]
        %v5329 = vld [vmem:[%s5291 + $0x94] sm:$0xf]
        %v5330 = vld [vmem:[%s5291 + $0x98] sm:$0xf]
        %v5331 = vld [vmem:[%s5291 + $0x9c] sm:$0xf]
        %v5332 = vld [vmem:[%s5291 + $0xa0] sm:$0xf]
        %v5333 = vld [vmem:[%s5291 + $0xa4] sm:$0xf]
        %v5334 = vld [vmem:[%s5291 + $0xa8] sm:$0xf]
        %v5335 = vld [vmem:[%s5291 + $0xac] sm:$0xf]
        %v5336 = vld [vmem:[%s5291 + $0xb0] sm:$0xf]
        %v5337 = vld [vmem:[%s5291 + $0xb4] sm:$0xf]
        %v5338 = vld [vmem:[%s5291 + $0xb8] sm:$0xf]
        %v5339 = vld [vmem:[%s5291 + $0xbc] sm:$0xf]
        %v5340 = vld [vmem:[%s5291 + $0xc0] sm:$0xf]
        %v5341 = vld [vmem:[%s5291 + $0xc4] sm:$0xf]
        %v5342 = vld [vmem:[%s5291 + $0xc8] sm:$0xf]
        %v5343 = vld [vmem:[%s5291 + $0xcc] sm:$0xf]
        %v5344 = vld [vmem:[%s5291 + $0xd0] sm:$0xf]
        %v5345 = vld [vmem:[%s5291 + $0xd4] sm:$0xf]
        %v5346 = vld [vmem:[%s5291 + $0xd8] sm:$0xf]
        %v5347 = vld [vmem:[%s5291 + $0xdc] sm:$0xf]
        %v5348 = vld [vmem:[%s5291 + $0xe0] sm:$0xf]
        %v5349 = vld [vmem:[%s5291 + $0xe4] sm:$0xf]
        %v5350 = vld [vmem:[%s5291 + $0xe8] sm:$0xf]
        %v5351 = vld [vmem:[%s5291 + $0xec] sm:$0xf]
        %v5352 = vld [vmem:[%s5291 + $0xf0] sm:$0xf]
        %v5353 = vld [vmem:[%s5291 + $0xf4] sm:$0xf]
        %v5354 = vld [vmem:[%s5291 + $0xf8] sm:$0xf]
        %v5355 = vld [vmem:[%s5291 + $0xfc] sm:$0xf]
        %s5356 = scalar_lea.vmem %s11, 3
        %v5357 = vld [vmem:[%s5356] sm:$0x1]
        %v5359 = vperm.slane %v5357, 0
        %v5425 = vunpack.c.l.b16 %v5292
        %v5426 = vunpack.c.l.b16 %v5293
        %v5427 = vunpack.c.l.b16 %v5294
        %v5428 = vunpack.c.l.b16 %v5295
        %v5429 = vunpack.c.l.b16 %v5296
        %v5430 = vunpack.c.l.b16 %v5297
        %v5431 = vunpack.c.l.b16 %v5298
        %v5432 = vunpack.c.l.b16 %v5299
        %v5433 = vunpack.c.l.b16 %v5300
        %v5434 = vunpack.c.l.b16 %v5301
        %v5435 = vunpack.c.l.b16 %v5302
        %v5436 = vunpack.c.l.b16 %v5303
        %v5437 = vunpack.c.l.b16 %v5304
        %v5438 = vunpack.c.l.b16 %v5305
        %v5439 = vunpack.c.l.b16 %v5306
        %v5440 = vunpack.c.l.b16 %v5307
        %v5441 = vunpack.c.l.b16 %v5308
        %v5442 = vunpack.c.l.b16 %v5309
        %v5443 = vunpack.c.l.b16 %v5310
        %v5444 = vunpack.c.l.b16 %v5311
        %v5445 = vunpack.c.l.b16 %v5312
        %v5446 = vunpack.c.l.b16 %v5313
        %v5447 = vunpack.c.l.b16 %v5314
        %v5448 = vunpack.c.l.b16 %v5315
        %v5449 = vunpack.c.l.b16 %v5316
        %v5450 = vunpack.c.l.b16 %v5317
        %v5451 = vunpack.c.l.b16 %v5318
        %v5452 = vunpack.c.l.b16 %v5319
        %v5453 = vunpack.c.l.b16 %v5320
        %v5454 = vunpack.c.l.b16 %v5321
        %v5455 = vunpack.c.l.b16 %v5322
        %v5456 = vunpack.c.l.b16 %v5323
        %v5457 = vunpack.c.l.b16 %v5324
        %v5458 = vunpack.c.l.b16 %v5325
        %v5459 = vunpack.c.l.b16 %v5326
        %v5460 = vunpack.c.l.b16 %v5327
        %v5461 = vunpack.c.l.b16 %v5328
        %v5462 = vunpack.c.l.b16 %v5329
        %v5463 = vunpack.c.l.b16 %v5330
        %v5464 = vunpack.c.l.b16 %v5331
        %v5465 = vunpack.c.l.b16 %v5332
        %v5466 = vunpack.c.l.b16 %v5333
        %v5467 = vunpack.c.l.b16 %v5334
        %v5468 = vunpack.c.l.b16 %v5335
        %v5469 = vunpack.c.l.b16 %v5336
        %v5470 = vunpack.c.l.b16 %v5337
        %v5471 = vunpack.c.l.b16 %v5338
        %v5472 = vunpack.c.l.b16 %v5339
        %v5473 = vunpack.c.l.b16 %v5340
        %v5474 = vunpack.c.l.b16 %v5341
        %v5475 = vunpack.c.l.b16 %v5342
        %v5476 = vunpack.c.l.b16 %v5343
        %v5477 = vunpack.c.l.b16 %v5344
        %v5478 = vunpack.c.l.b16 %v5345
        %v5479 = vunpack.c.l.b16 %v5346
        %v5480 = vunpack.c.l.b16 %v5347
        %v5481 = vunpack.c.l.b16 %v5348
        %v5482 = vunpack.c.l.b16 %v5349
        %v5483 = vunpack.c.l.b16 %v5350
        %v5484 = vunpack.c.l.b16 %v5351
        %v5485 = vunpack.c.l.b16 %v5352
        %v5486 = vunpack.c.l.b16 %v5353
        %v5487 = vunpack.c.l.b16 %v5354
        %v5488 = vunpack.c.l.b16 %v5355
        %v5489 = vpack.c.b16 %v5426, %v5425
        %v5490 = vpack.c.b16 %v5428, %v5427
        %v5491 = vpack.c.b16 %v5430, %v5429
        %v5492 = vpack.c.b16 %v5432, %v5431
        %v5493 = vpack.c.b16 %v5434, %v5433
        %v5494 = vpack.c.b16 %v5436, %v5435
        %v5495 = vpack.c.b16 %v5438, %v5437
        %v5496 = vpack.c.b16 %v5440, %v5439
        %v5497 = vpack.c.b16 %v5442, %v5441
        %v5498 = vpack.c.b16 %v5444, %v5443
        %v5499 = vpack.c.b16 %v5446, %v5445
        %v5500 = vpack.c.b16 %v5448, %v5447
        %v5501 = vpack.c.b16 %v5450, %v5449
        %v5502 = vpack.c.b16 %v5452, %v5451
        %v5503 = vpack.c.b16 %v5454, %v5453
        %v5504 = vpack.c.b16 %v5456, %v5455
        %v5505 = vpack.c.b16 %v5458, %v5457
        %v5506 = vpack.c.b16 %v5460, %v5459
        %v5507 = vpack.c.b16 %v5462, %v5461
        %v5508 = vpack.c.b16 %v5464, %v5463
        %v5509 = vpack.c.b16 %v5466, %v5465
        %v5510 = vpack.c.b16 %v5468, %v5467
        %v5511 = vpack.c.b16 %v5470, %v5469
        %v5512 = vpack.c.b16 %v5472, %v5471
        %v5513 = vpack.c.b16 %v5474, %v5473
        %v5514 = vpack.c.b16 %v5476, %v5475
        %v5515 = vpack.c.b16 %v5478, %v5477
        %v5516 = vpack.c.b16 %v5480, %v5479
        %v5517 = vpack.c.b16 %v5482, %v5481
        %v5518 = vpack.c.b16 %v5484, %v5483
        %v5519 = vpack.c.b16 %v5486, %v5485
        %v5520 = vpack.c.b16 %v5488, %v5487
        %5553 = vmatpush.bf16.msra.mxu0 %v5496
        %5554 = vmatpush.bf16.msra.mxu0 %v5495
        %5555 = vmatpush.bf16.msra.mxu0 %v5494
        %5556 = vmatpush.bf16.msra.mxu0 %v5493
        %5557 = vmatpush.bf16.msra.mxu0 %v5492
        %5558 = vmatpush.bf16.msra.mxu0 %v5491
        %5559 = vmatpush.bf16.msra.mxu0 %v5490
        %5560 = vmatpush.bf16.msra.mxu0 %v5489
        %5561 = vmatmul.bf16.gmra.mxu0 %v5287
        %v5562 = vpop.f32.mrf.mxu0
        %v5563 = vadd.f32 %v5359, %v5562
        %v5564 = vpop.f32.mrf.mxu0
        %5565 = vdwg.mxu0
        %5566 = vmatpush.bf16.msra.mxu0 %v5504
        %5567 = vmatpush.bf16.msra.mxu0 %v5503
        %5568 = vmatpush.bf16.msra.mxu0 %v5502
        %5569 = vmatpush.bf16.msra.mxu0 %v5501
        %5570 = vmatpush.bf16.msra.mxu0 %v5500
        %5571 = vmatpush.bf16.msra.mxu0 %v5499
        %5572 = vmatpush.bf16.msra.mxu0 %v5498
        %5573 = vmatpush.bf16.msra.mxu0 %v5497
        %5574 = vmatmul.bf16.gmra.mxu0 %v5288
        %v5575 = vpop.f32.mrf.mxu0
        %v5576 = vadd.f32 %v5563, %v5575
        %v5577 = vpop.f32.mrf.mxu0
        %5578 = vdwg.mxu0
        %5579 = vmatpush.bf16.msra.mxu0 %v5512
        %5580 = vmatpush.bf16.msra.mxu0 %v5511
        %5581 = vmatpush.bf16.msra.mxu0 %v5510
        %5582 = vmatpush.bf16.msra.mxu0 %v5509
        %5583 = vmatpush.bf16.msra.mxu0 %v5508
        %5584 = vmatpush.bf16.msra.mxu0 %v5507
        %5585 = vmatpush.bf16.msra.mxu0 %v5506
        %5586 = vmatpush.bf16.msra.mxu0 %v5505
        %5587 = vmatmul.bf16.gmra.mxu0 %v5289
        %v5588 = vpop.f32.mrf.mxu0
        %v5589 = vadd.f32 %v5576, %v5588
        %v5590 = vpop.f32.mrf.mxu0
        %5591 = vdwg.mxu0
        %5592 = vmatpush.bf16.msra.mxu0 %v5520
        %5593 = vmatpush.bf16.msra.mxu0 %v5519
        %5594 = vmatpush.bf16.msra.mxu0 %v5518
        %5595 = vmatpush.bf16.msra.mxu0 %v5517
        %5596 = vmatpush.bf16.msra.mxu0 %v5516
        %5597 = vmatpush.bf16.msra.mxu0 %v5515
        %5598 = vmatpush.bf16.msra.mxu0 %v5514
        %5599 = vmatpush.bf16.msra.mxu0 %v5513
        %5600 = vmatmul.bf16.gmra.mxu0 %v5290
        %v5601 = vpop.f32.mrf.mxu0
        %v5602 = vadd.f32 %v5589, %v5601
        %v5603 = vpop.f32.mrf.mxu0
        %5604 = vdwg.mxu0
        %v5605 = vadd.f32 %v4993, %v5602
        %v5606 = vld [vmem:[%s12] sm:$0x1]
        %v5607 = vld [vmem:[%s13] sm:$0x1]
        %5608 = vadd.xlane.f32.xlu0 %v5605
        %v5609 = vpop.xlane.xlu0 %5608
        %v5610 = vmul.f32 %v5609, %v602
        %v5611 = vsub.f32 %v5605, %v5610
        %v5612 = vmul.f32 %v5611, %v5611
        %5613 = vadd.xlane.f32.xlu0 %v5612
        %v5614 = vpop.xlane.xlu0 %5613
        %v5615 = vmul.f32 %v5614, %v602
        %v5616 = vadd.f32 %v5615, 1e-05
        %v5617 = vrsqrt.pop %v5616
        %v5618 = vmul.f32 %v5617, %v5616
        %v5619 = vmul.f32 %v5618, %v5617
        %v5620 = vmul.f32 0.5, %v5619
        %v5621 = vsub.f32 1.5, %v5620
        %v5622 = vmul.f32 %v5617, %v5621
        %vm5623 = vweird.f32 %v5616
        %vm5624 = vweird.f32 %v5617
        %vm5625 = vmor %vm5623, %vm5624
        %v5626 = vsel %vm5625, %v5617, %v5622
        %v5627 = vmul.f32 %v5611, %v5626
        %v5629 = vperm.slane %v5606, 0
        %v5631 = vmul.f32 %v5627, %v5629
        %v5633 = vperm.slane %v5607, 0
        %v5635 = vadd.f32 %v5631, %v5633
        %v5636 = vpack.c.bf16 %v5635, %v5635
        %v5637 = vld [vmem:[%s14] sm:$0xf]
        %v5638 = vld [vmem:[%s14 + $0x4] sm:$0xf]
        %v5639 = vld [vmem:[%s14 + $0x8] sm:$0xf]
        %v5640 = vld [vmem:[%s14 + $0xc] sm:$0xf]
        %v5641 = vld [vmem:[%s14 + $0x10] sm:$0xf]
        %v5642 = vld [vmem:[%s14 + $0x14] sm:$0xf]
        %v5643 = vld [vmem:[%s14 + $0x18] sm:$0xf]
        %v5644 = vld [vmem:[%s14 + $0x1c] sm:$0xf]
        %v5645 = vld [vmem:[%s14 + $0x20] sm:$0xf]
        %v5646 = vld [vmem:[%s14 + $0x24] sm:$0xf]
        %v5647 = vld [vmem:[%s14 + $0x28] sm:$0xf]
        %v5648 = vld [vmem:[%s14 + $0x2c] sm:$0xf]
        %v5649 = vld [vmem:[%s14 + $0x30] sm:$0xf]
        %v5650 = vld [vmem:[%s14 + $0x34] sm:$0xf]
        %v5651 = vld [vmem:[%s14 + $0x38] sm:$0xf]
        %v5652 = vld [vmem:[%s14 + $0x3c] sm:$0xf]
        %v5653 = vld [vmem:[%s15] sm:$0x1]
        %v5655 = vperm.slane %v5653, 0
        %v5673 = vunpack.c.l.b16 %v5637
        %v5674 = vunpack.c.l.b16 %v5638
        %v5675 = vunpack.c.l.b16 %v5639
        %v5676 = vunpack.c.l.b16 %v5640
        %v5677 = vunpack.c.l.b16 %v5641
        %v5678 = vunpack.c.l.b16 %v5642
        %v5679 = vunpack.c.l.b16 %v5643
        %v5680 = vunpack.c.l.b16 %v5644
        %v5681 = vunpack.c.l.b16 %v5645
        %v5682 = vunpack.c.l.b16 %v5646
        %v5683 = vunpack.c.l.b16 %v5647
        %v5684 = vunpack.c.l.b16 %v5648
        %v5685 = vunpack.c.l.b16 %v5649
        %v5686 = vunpack.c.l.b16 %v5650
        %v5687 = vunpack.c.l.b16 %v5651
        %v5688 = vunpack.c.l.b16 %v5652
        %v5689 = vpack.c.b16 %v5674, %v5673
        %v5690 = vpack.c.b16 %v5676, %v5675
        %v5691 = vpack.c.b16 %v5678, %v5677
        %v5692 = vpack.c.b16 %v5680, %v5679
        %v5693 = vpack.c.b16 %v5682, %v5681
        %v5694 = vpack.c.b16 %v5684, %v5683
        %v5695 = vpack.c.b16 %v5686, %v5685
        %v5696 = vpack.c.b16 %v5688, %v5687
        %5705 = vmatpush.bf16.msra.mxu0 %v5696
        %5706 = vmatpush.bf16.msra.mxu0 %v5695
        %5707 = vmatpush.bf16.msra.mxu0 %v5694
        %5708 = vmatpush.bf16.msra.mxu0 %v5693
        %5709 = vmatpush.bf16.msra.mxu0 %v5692
        %5710 = vmatpush.bf16.msra.mxu0 %v5691
        %5711 = vmatpush.bf16.msra.mxu0 %v5690
        %5712 = vmatpush.bf16.msra.mxu0 %v5689
        %5713 = vmatmul.bf16.gmra.mxu0 %v5636
        %v5714 = vpop.f32.mrf.mxu0
        %v5715 = vadd.f32 %v5655, %v5714
        %v5716 = vpop.f32.mrf.mxu0
        %5717 = vdwg.mxu0
        %5718 = vst [vmem:[%s579] sm:$0xff] %v5715
        %s5719 = sand.u32 %s382, 1
        %s5720 = scalar_lea.sflag [#allocation4], %s5719
        %s5721 = sand.u32 %s382, 1
        %s5722 = smul.addr %s5721, 8
        %s5723 = scalar_lea.vmem [#allocation10], %s5722
        // Predicated region
        $region101: #{transformer_forward.1} parent=83 // pred_check
          %p5724 = pneg %p392
        $region102: #{transformer_forward.1} parent=83 // pred_check_branch
          %5726 = sbr.rel (%p5724) target = $region104
        $region103: #{transformer_forward.1} parent=83 // pred_region
          %5728 = vsyncadd %s5720, 0
          %s5729 = smul.addr %s33, 8
          %s5730 = scalar_lea.hbm %s16, %s5729
          %s5732 = sshll.u32 %s5723, 4
          %s5733 = int_to_ptr.vmem [resolvable:$true] %s5732
          %s5734 = sshll.u32 %s5730, 4
          %s5735 = int_to_ptr.hbm [resolvable:$true] %s5734
          %5737 = dma.vmem_to_hbm [thread:$0]  %s5733, 128, %s5735, %s5720
        $region104: #{transformer_forward.1} parent=83 // pred_fallthru
          _
      $region84: #{transformer_forward.1} parent=5 // pred_fallthru
        _
      %p5738 = scmp.le.s32.totalorder 2, %s28
      // Predicated region
      $region105: #{transformer_forward.1} parent=5 // pred_check
        %p5739 = pneg %p5738
      $region106: #{transformer_forward.1} parent=5 // pred_check_branch
        %5741 = sbr.rel (%p5739) target = $region108
      $region107: #{transformer_forward.1} parent=5 // pred_region
        %s5742 = ssub.s32 %s28, 2
        // Predicated region
        $region109: #{transformer_forward.1} parent=107 // pred_check
          %p5743 = pneg %p398
        $region110: #{transformer_forward.1} parent=107 // pred_check_branch
          %5745 = sbr.rel (%p5743) target = $region112
        $region111: #{transformer_forward.1} parent=107 // pred_region
          %s5746 = sand.u32 %s383, 1
          %s5747 = scalar_lea.sflag [#allocation4], %s5746
          %s5748 = sand.u32 %s383, 1
          %s5749 = smul.addr %s5748, 8
          %s5750 = scalar_lea.vmem [#allocation10], %s5749
          %5752 = dma.done %s5747, 128
        $region112: #{transformer_forward.1} parent=107 // pred_fallthru
          _
      $region108: #{transformer_forward.1} parent=5 // pred_fallthru
        _
    $region6: #{transformer_forward.1} parent=1 // loop_footer
      %s32 = sadd.s32 1, %s28
    $region7: #{transformer_forward.1} parent=1 // loop_footer_branch
      %27 = sbr.rel target = $region3
    $region8: #{transformer_forward.1} parent=1 // loop_exit
      _
    %5753 = vsyncpa [#allocation3], 1
    %s5754 = scalar_lea.sflag [#allocation3], 1
    %5755 = vsyncpa %s5754, 1
    %5756 = vsyncpa [#allocation6], 1
    %5757 = vsyncpa [#allocation9], 1
    %5758 = vsyncpa [#allocation4], 1
    %s5759 = scalar_lea.sflag [#allocation4], 1
    %5760 = vsyncpa %s5759, 1

</llo_original>
